<compile_context>
chip_gen: v7x
topology: tpu7x:2x2x1
jax: 0.10.0
libtpu: 0.0.40
codegen_flags: <defaults>
</compile_context>

<pallas_src>
import jax
import jax.numpy as jnp
from jax.experimental import pallas as pl
from jax.experimental.pallas import tpu as pltpu

LANE = 128       # TPU lane width; channels are padded to a multiple of this.
_BF16_SUB = 16   # bf16 sublane tile; left halo of pad scratch rounded to this.


def _round_up(x, m):
    return (x + m - 1) // m * m


# ----------------------------------------------------------------------------
# Pallas kernel (nb images per grid step)
# ----------------------------------------------------------------------------
def basic_block_kernel(x_ref, s1_ref, b1_ref, w1_ref, s2_ref, b2_ref, w2_ref,
                       o_ref, pad_ref, col_ref, y_ref):
    """Fused pre-activation BasicBlock for a block of `nb` images.

    x_ref  : (nb, H, W, Cp)          f32 input
    s*/b*  : (1, Cp)                 folded BN scale / shift, f32
    w*_ref : (9*Cp, Cp)              bf16 conv3x3 weights, im2col layout:
                                     row = (3*ky + kx)*Cp + cin, col = cout
    o_ref  : (nb, H, W, Cp)          f32 output
    pad_ref: (nb, H+2, LP+W+1, Cp)   bf16 scratch; interior starts at the
                                     sublane-aligned column LP (shared by convs)
    col_ref: (nb, H, W, 9*Cp)        bf16 scratch, im2col patches (shared)
    y_ref  : (nb, H, W, Cp)          f32 scratch for conv outputs (bounds the
                                     live range of the big f32 intermediates)
    """
    NB, H, W, Cp = x_ref.shape
    LP = _BF16_SUB

    # Zero only the border cells the 3x3 taps actually read; the interior is
    # fully rewritten before each conv. (Done every step: scratch is
    # uninitialized and under megacore each core owns its own copy.)
    zrow = jnp.zeros((NB, 1, W + 2, Cp), jnp.bfloat16)
    zcol = jnp.zeros((NB, H + 2, 1, Cp), jnp.bfloat16)
    pad_ref[:, 0:1, LP - 1:LP + W + 1, :] = zrow
    pad_ref[:, H + 1:H + 2, LP - 1:LP + W + 1, :] = zrow
    pad_ref[:, :, LP - 1:LP, :] = zcol
    pad_ref[:, :, LP + W:LP + W + 1, :] = zcol

    def conv3x3(w_ref):
        # im2col gather: ONE read + ONE write per tap (no reshape temp); the
        # destination lane offset k*Cp is a multiple of 128 -> unmasked stores.
        for dy in range(3):
            for dx in range(3):
                k = 3 * dy + dx
                col_ref[:, :, :, k * Cp:(k + 1) * Cp] = (
                    pad_ref[:, dy:dy + H, LP - 1 + dx:LP - 1 + dx + W, :])
        # One MXU matmul with contraction depth K = 9*Cp over all nb*H*W
        # output pixels. The reshape is a free view when W % 16 == 0.
        col = col_ref[...].reshape(NB * H * W, 9 * Cp)
        y = jnp.dot(col, w_ref[...], preferred_element_type=jnp.float32)
        # Park the f32 result in VMEM scratch so it is not live in vregs
        # across the next gather.
        y_ref[...] = y.reshape(NB, H, W, Cp)

    # --- BN1 + ReLU (f32 VPU math), cast to bf16 only for the MXU.
    #     Interior store starts at the sublane-aligned column LP. ---
    pad_ref[:, 1:H + 1, LP:LP + W, :] = jnp.maximum(
        x_ref[...] * s1_ref[0, :] + b1_ref[0, :], 0.0).astype(jnp.bfloat16)
    conv3x3(w1_ref)                              # conv1: 3x3, stride 1, pad 1

    # --- BN2 + ReLU ---
    pad_ref[:, 1:H + 1, LP:LP + W, :] = jnp.maximum(
        y_ref[...] * s2_ref[0, :] + b2_ref[0, :], 0.0).astype(jnp.bfloat16)
    conv3x3(w2_ref)                              # conv2: 3x3, stride 1, pad 1

    # --- residual add: x re-read from VMEM (short live range). ---
    # TODO(synk): optionally keep the residual stream in bf16 (halves DMA);
    #             kept f32 here for training-parity safety.
    o_ref[...] = x_ref[...] + y_ref[...]


# ----------------------------------------------------------------------------
# Per-generation sizing heuristics
# ----------------------------------------------------------------------------
def _vmem_budget_bytes():
    try:
        kind = jax.devices()[0].device_kind.lower()
    except Exception:
        return 48 * 1024 * 1024
    if "v5" in kind or "v6" in kind:
        return 100 * 1024 * 1024      # 128 MiB physical VMEM -> use most of it
    return 48 * 1024 * 1024           # v7x (64 MiB physical) / unknown: headroom


def _kernel_vmem_bytes(nb, H, W, Cp):
    pad = nb * (H + 2) * (W + _BF16_SUB + 1) * Cp * 2
    col = nb * H * W * 9 * Cp * 2
    y = nb * H * W * Cp * 4
    io = 2 * 2 * nb * H * W * Cp * 4          # x + out blocks, double-buffered
    wts = 2 * 2 * 9 * Cp * Cp * 2             # two conv weights
    bn = 4 * 2 * Cp * 4
    return pad + col + y + io + wts + bn


def _pick_batch_block(N, H, W, Cp, budget):
    """Largest nb dividing N that fits the VMEM budget while keeping >= 2 grid
    steps (megacore split / pipelining want at least two steps)."""
    best = 1
    for nb in range(1, N + 1):
        if N % nb:
            continue
        if N // nb < min(2, N):
            continue
        if _kernel_vmem_bytes(nb, H, W, Cp) <= int(budget * 0.75):
            best = nb
    return best


# ----------------------------------------------------------------------------
# One-time (init-time) parameter packing
# ----------------------------------------------------------------------------
def fold_batchnorm(gamma, beta, running_mean, running_var, eps=1e-5):
    scale = gamma / jnp.sqrt(running_var + eps)
    shift = beta - running_mean * scale
    return scale, shift


def prepare_basic_block_params(scale1, shift1, w1_oihw, scale2, shift2, w2_oihw):
    """Pack BN scale/shift and conv weights into the lane-dense layout the
    kernel expects. Done ONCE at init; padded channels are zero so they stay
    exactly zero end-to-end."""
    c_in, c_out = w1_oihw.shape[1], w2_oihw.shape[0]
    assert c_in == c_out == w1_oihw.shape[0] == w2_oihw.shape[1], (
        "TODO(synk): stride != 1 / downsample (projection) not supported")
    Cp = _round_up(c_in, LANE)

    def prep_bn(v):
        return jnp.pad(v.astype(jnp.float32), (0, Cp - v.shape[0])).reshape(1, Cp)

    def prep_w(w_oihw):
        co, ci = w_oihw.shape[0], w_oihw.shape[1]
        wp = jnp.pad(w_oihw.astype(jnp.float32),
                     ((0, Cp - co), (0, Cp - ci), (0, 0), (0, 0)))
        # (Cout,Cin,3,3) -> (3,3,Cin,Cout) -> (9*Cp, Cp): row=(3*ky+kx)*Cp+cin
        return jnp.transpose(wp, (2, 3, 1, 0)).reshape(9 * Cp, Cp).astype(jnp.bfloat16)

    return (prep_bn(scale1), prep_bn(shift1), prep_w(w1_oihw),
            prep_bn(scale2), prep_bn(shift2), prep_w(w2_oihw))


# ----------------------------------------------------------------------------
# Production entry point: channel-padded NHWC in / out (no per-call pad/slice)
# ----------------------------------------------------------------------------
@jax.jit
def basic_block_pallas_padded_nhwc(x, s1, b1, w1, s2, b2, w2):
    """x: (N, H, W, Cp) f32 with Cp % 128 == 0 and padded channels zero.
    Params from prepare_basic_block_params. Returns (N, H, W, Cp) f32 with the
    padded channels still exactly zero (so blocks can be chained)."""
    N, H, W, Cp = x.shape
    assert Cp % LANE == 0, "channels must be pre-padded to a multiple of 128"

    budget = _vmem_budget_bytes()
    nb = _pick_batch_block(N, H, W, Cp, budget)

    img_spec = pl.BlockSpec((nb, H, W, Cp), lambda n: (n, 0, 0, 0))
    vec_spec = pl.BlockSpec((1, Cp), lambda n: (0, 0))
    wgt_spec = pl.BlockSpec((9 * Cp, Cp), lambda n: (0, 0))

    return pl.pallas_call(
        basic_block_kernel,
        out_shape=jax.ShapeDtypeStruct((N, H, W, Cp), jnp.float32),
        grid_spec=pltpu.PrefetchScalarGridSpec(
            num_scalar_prefetch=0,
            grid=(N // nb,),
            in_specs=[
                img_spec,                       # x
                vec_spec, vec_spec, wgt_spec,   # scale1, shift1, w1 (resident)
                vec_spec, vec_spec, wgt_spec,   # scale2, shift2, w2 (resident)
            ],
            out_specs=img_spec,
            scratch_shapes=[
                pltpu.VMEM((nb, H + 2, W + _BF16_SUB + 1, Cp), jnp.bfloat16),
                pltpu.VMEM((nb, H, W, 9 * Cp), jnp.bfloat16),
                pltpu.VMEM((nb, H, W, Cp), jnp.float32),
            ],
        ),
        compiler_params=pltpu.CompilerParams(
            dimension_semantics=("parallel",),
            vmem_limit_bytes=budget,
        ),
    )(x, s1, b1, w1, s2, b2, w2)


def basic_block_pallas_nchw(x_nchw, scale1, shift1, w1, scale2, shift2, w2):
    """Test-only NCHW wrapper matching the PyTorch interface. In a real ResNet
    trunk keep activations channel-padded NHWC across blocks and call
    basic_block_pallas_padded_nhwc directly (no per-block pad/transpose)."""
    C = x_nchw.shape[1]
    Cp = _round_up(C, LANE)
    params = prepare_basic_block_params(scale1, shift1, w1, scale2, shift2, w2)
    x_p = jnp.pad(jnp.transpose(x_nchw.astype(jnp.float32), (0, 2, 3, 1)),
                  ((0, 0), (0, 0), (0, 0), (0, Cp - C)))
    out_p = basic_block_pallas_padded_nhwc(x_p, *params)
    return jnp.transpose(out_p[..., :C], (0, 3, 1, 2))


# ----------------------------------------------------------------------------
# Pure-JAX reference (same mixed precision as the kernel: bf16 conv operands,
# f32 accumulation, f32 BN/ReLU/residual)
# ----------------------------------------------------------------------------
def basic_block_ref(x_nchw, scale1, shift1, w1_oihw, scale2, shift2, w2_oihw):
    def bn_relu(h, s, b):
        return jnp.maximum(h * s[None, :, None, None] + b[None, :, None, None],
                           0.0)

    def conv(h, w):
        return jax.lax.conv_general_dilated(
            h.astype(jnp.bfloat16), w.astype(jnp.bfloat16),
            window_strides=(1, 1), padding=((1, 1), (1, 1)),
            dimension_numbers=("NCHW", "OIHW", "NCHW"),
            preferred_element_type=jnp.float32)

    r = bn_relu(x_nchw, scale1, shift1)
    r = conv(r, w1_oihw)
    r = bn_relu(r, scale2, shift2)
    r = conv(r, w2_oihw)
    return x_nchw + r


# ----------------------------------------------------------------------------
# Main
# ----------------------------------------------------------------------------
if __name__ == "__main__":
    key = jax.random.PRNGKey(0)
    (kx, kg1, kb1, km1, kv1, kw1,
     kg2, kb2, km2, kv2, kw2) = jax.random.split(key, 11)

    N, C, H, W = 2, 4, 16, 16   # inplanes = planes = 4, stride = 1
    eps = 1e-5

    x = jax.random.normal(kx, (N, C, H, W), jnp.float32)

    # BN1 params (over inplanes), folded to scale/shift (eval mode)
    gamma1 = 1.0 + 0.1 * jax.random.normal(kg1, (C,), jnp.float32)
    beta1 = 0.1 * jax.random.normal(kb1, (C,), jnp.float32)
    mean1 = 0.1 * jax.random.normal(km1, (C,), jnp.float32)
    var1 = jnp.abs(jax.random.normal(kv1, (C,), jnp.float32)) + 0.5
    scale1, shift1 = fold_batchnorm(gamma1, beta1, mean1, var1, eps)

    # conv1: conv3x3(inplanes, planes), bias=False
    w1 = 0.2 * jax.random.normal(kw1, (C, C, 3, 3), jnp.float32)

    # BN2 params (over planes)
    gamma2 = 1.0 + 0.1 * jax.random.normal(kg2, (C,), jnp.float32)
    beta2 = 0.1 * jax.random.normal(kb2, (C,), jnp.float32)
    mean2 = 0.1 * jax.random.normal(km2, (C,), jnp.float32)
    var2 = jnp.abs(jax.random.normal(kv2, (C,), jnp.float32)) + 0.5
    scale2, shift2 = fold_batchnorm(gamma2, beta2, mean2, var2, eps)

    # conv2: conv3x3(planes, planes), bias=False
    w2 = 0.2 * jax.random.normal(kw2, (C, C, 3, 3), jnp.float32)

    out = basic_block_pallas_nchw(x, scale1, shift1, w1, scale2, shift2, w2)
    out = jax.block_until_ready(out)

    ref = basic_block_ref(x, scale1, shift1, w1, scale2, shift2, w2)
    assert out.shape == (N, C, H, W)
    max_err = float(jnp.max(jnp.abs(out - ref)))
    assert jnp.allclose(out, ref, atol=1e-2, rtol=1e-2), (
        f"mismatch vs reference (max abs err {max_err})")

    print("KERNEL_OK")
</pallas_src>

<mosaic_0001>
module attributes {stable_mosaic.version = 11 : i64} {
  func.func @basic_block_kernel(%arg0: i32, %arg1: memref<1x16x16x128xf32, #tpu.memory_space<vmem>>, %arg2: memref<1x128xf32, #tpu.memory_space<vmem>>, %arg3: memref<1x128xf32, #tpu.memory_space<vmem>>, %arg4: memref<1152x128xbf16, #tpu.memory_space<vmem>>, %arg5: memref<1x128xf32, #tpu.memory_space<vmem>>, %arg6: memref<1x128xf32, #tpu.memory_space<vmem>>, %arg7: memref<1152x128xbf16, #tpu.memory_space<vmem>>, %arg8: memref<1x16x16x128xf32, #tpu.memory_space<vmem>>, %arg9: memref<1x18x33x128xbf16, #tpu.memory_space<vmem>>, %arg10: memref<1x16x16x1152xbf16, #tpu.memory_space<vmem>>, %arg11: memref<1x16x16x128xf32, #tpu.memory_space<vmem>>) attributes {dimension_semantics = [#tpu.dimension_semantics<parallel>], iteration_bounds = array<i64: 2>, scalar_prefetch = 0 : i64, scratch_operands = 3 : i64, tpu.core_type = #tpu.core_type<tc>, window_params = [{transform_indices = @transform_0, window_bounds = array<i64: 1, 16, 16, 128>}, {pipeline_mode = #tpu.pipeline_mode<synchronous>, transform_indices = @transform_1, window_bounds = array<i64: 1, 128>}, {pipeline_mode = #tpu.pipeline_mode<synchronous>, transform_indices = @transform_2, window_bounds = array<i64: 1, 128>}, {pipeline_mode = #tpu.pipeline_mode<synchronous>, transform_indices = @transform_3, window_bounds = array<i64: 1152, 128>}, {pipeline_mode = #tpu.pipeline_mode<synchronous>, transform_indices = @transform_4, window_bounds = array<i64: 1, 128>}, {pipeline_mode = #tpu.pipeline_mode<synchronous>, transform_indices = @transform_5, window_bounds = array<i64: 1, 128>}, {pipeline_mode = #tpu.pipeline_mode<synchronous>, transform_indices = @transform_6, window_bounds = array<i64: 1152, 128>}, {transform_indices = @transform_7, window_bounds = array<i64: 1, 16, 16, 128>}]} {
    %cst = arith.constant 0.000000e+00 : bf16
    %0 = vector.broadcast %cst : bf16 to vector<1x1x18x128xbf16>
    %cst_0 = arith.constant 0.000000e+00 : bf16
    %1 = vector.broadcast %cst_0 : bf16 to vector<1x18x1x128xbf16>
    %c0 = arith.constant 0 : index
    %c0_1 = arith.constant 0 : index
    %c15 = arith.constant 15 : index
    %c0_2 = arith.constant 0 : index
    %2 = vector.load %arg9[%c0, %c0_1, %c15, %c0_2] : memref<1x18x33x128xbf16, #tpu.memory_space<vmem>>, vector<1x1x18x128xbf16>
    tpu.vector_store %arg9[%c0, %c0_1, %c15, %c0_2], %0 {strides = array<i32>} : memref<1x18x33x128xbf16, #tpu.memory_space<vmem>>, vector<1x1x18x128xbf16>,
    %c0_3 = arith.constant 0 : index
    %c17 = arith.constant 17 : index
    %c15_4 = arith.constant 15 : index
    %c0_5 = arith.constant 0 : index
    %3 = vector.load %arg9[%c0_3, %c17, %c15_4, %c0_5] : memref<1x18x33x128xbf16, #tpu.memory_space<vmem>>, vector<1x1x18x128xbf16>
    tpu.vector_store %arg9[%c0_3, %c17, %c15_4, %c0_5], %0 {strides = array<i32>} : memref<1x18x33x128xbf16, #tpu.memory_space<vmem>>, vector<1x1x18x128xbf16>,
    %c0_6 = arith.constant 0 : index
    %c0_7 = arith.constant 0 : index
    %c15_8 = arith.constant 15 : index
    %c0_9 = arith.constant 0 : index
    %4 = vector.load %arg9[%c0_6, %c0_7, %c15_8, %c0_9] : memref<1x18x33x128xbf16, #tpu.memory_space<vmem>>, vector<1x18x1x128xbf16>
    tpu.vector_store %arg9[%c0_6, %c0_7, %c15_8, %c0_9], %1 {strides = array<i32>} : memref<1x18x33x128xbf16, #tpu.memory_space<vmem>>, vector<1x18x1x128xbf16>,
    %c0_10 = arith.constant 0 : index
    %c0_11 = arith.constant 0 : index
    %c32 = arith.constant 32 : index
    %c0_12 = arith.constant 0 : index
    %5 = vector.load %arg9[%c0_10, %c0_11, %c32, %c0_12] : memref<1x18x33x128xbf16, #tpu.memory_space<vmem>>, vector<1x18x1x128xbf16>
    tpu.vector_store %arg9[%c0_10, %c0_11, %c32, %c0_12], %1 {strides = array<i32>} : memref<1x18x33x128xbf16, #tpu.memory_space<vmem>>, vector<1x18x1x128xbf16>,
    %c0_13 = arith.constant 0 : index
    %c0_14 = arith.constant 0 : index
    %c0_15 = arith.constant 0 : index
    %c0_16 = arith.constant 0 : index
    %6 = vector.load %arg1[%c0_13, %c0_14, %c0_15, %c0_16] : memref<1x16x16x128xf32, #tpu.memory_space<vmem>>, vector<1x16x16x128xf32>
    %c0_17 = arith.constant 0 : index
    %c0_18 = arith.constant 0 : index
    %7 = vector.load %arg2[%c0_17, %c0_18] : memref<1x128xf32, #tpu.memory_space<vmem>>, vector<1x128xf32>
    %8 = vector.shape_cast %7 : vector<1x128xf32> to vector<128xf32>
    %9 = vector.shape_cast %8 : vector<128xf32> to vector<1x1x1x128xf32>
    %10 = vector.broadcast %9 : vector<1x1x1x128xf32> to vector<1x16x16x128xf32>
    %11 = arith.mulf %6, %10 : vector<1x16x16x128xf32>
    %c0_19 = arith.constant 0 : index
    %c0_20 = arith.constant 0 : index
    %12 = vector.load %arg3[%c0_19, %c0_20] : memref<1x128xf32, #tpu.memory_space<vmem>>, vector<1x128xf32>
    %13 = vector.shape_cast %12 : vector<1x128xf32> to vector<128xf32>
    %14 = vector.shape_cast %13 : vector<128xf32> to vector<1x1x1x128xf32>
    %15 = vector.broadcast %14 : vector<1x1x1x128xf32> to vector<1x16x16x128xf32>
    %16 = arith.addf %11, %15 : vector<1x16x16x128xf32>
    %cst_21 = arith.constant 0.000000e+00 : f32
    %17 = vector.broadcast %cst_21 : f32 to vector<1x16x16x128xf32>
    %18 = arith.maximumf %16, %17 : vector<1x16x16x128xf32>
    %19 = arith.truncf %18 : vector<1x16x16x128xf32> to vector<1x16x16x128xbf16>
    %c0_22 = arith.constant 0 : index
    %c1 = arith.constant 1 : index
    %c16 = arith.constant 16 : index
    %c0_23 = arith.constant 0 : index
    %20 = vector.load %arg9[%c0_22, %c1, %c16, %c0_23] : memref<1x18x33x128xbf16, #tpu.memory_space<vmem>>, vector<1x16x16x128xbf16>
    tpu.vector_store %arg9[%c0_22, %c1, %c16, %c0_23], %19 {strides = array<i32>} : memref<1x18x33x128xbf16, #tpu.memory_space<vmem>>, vector<1x16x16x128xbf16>,
    %c0_24 = arith.constant 0 : index
    %c0_25 = arith.constant 0 : index
    %c15_26 = arith.constant 15 : index
    %c0_27 = arith.constant 0 : index
    %21 = vector.load %arg9[%c0_24, %c0_25, %c15_26, %c0_27] : memref<1x18x33x128xbf16, #tpu.memory_space<vmem>>, vector<1x16x16x128xbf16>
    %c0_28 = arith.constant 0 : index
    %c0_29 = arith.constant 0 : index
    %c0_30 = arith.constant 0 : index
    %c0_31 = arith.constant 0 : index
    %22 = vector.load %arg10[%c0_28, %c0_29, %c0_30, %c0_31] : memref<1x16x16x1152xbf16, #tpu.memory_space<vmem>>, vector<1x16x16x128xbf16>
    tpu.vector_store %arg10[%c0_28, %c0_29, %c0_30, %c0_31], %21 {strides = array<i32>} : memref<1x16x16x1152xbf16, #tpu.memory_space<vmem>>, vector<1x16x16x128xbf16>,
    %c0_32 = arith.constant 0 : index
    %c0_33 = arith.constant 0 : index
    %c16_34 = arith.constant 16 : index
    %c0_35 = arith.constant 0 : index
    %23 = vector.load %arg9[%c0_32, %c0_33, %c16_34, %c0_35] : memref<1x18x33x128xbf16, #tpu.memory_space<vmem>>, vector<1x16x16x128xbf16>
    %c0_36 = arith.constant 0 : index
    %c0_37 = arith.constant 0 : index
    %c0_38 = arith.constant 0 : index
    %c128 = arith.constant 128 : index
    %24 = vector.load %arg10[%c0_36, %c0_37, %c0_38, %c128] : memref<1x16x16x1152xbf16, #tpu.memory_space<vmem>>, vector<1x16x16x128xbf16>
    tpu.vector_store %arg10[%c0_36, %c0_37, %c0_38, %c128], %23 {strides = array<i32>} : memref<1x16x16x1152xbf16, #tpu.memory_space<vmem>>, vector<1x16x16x128xbf16>,
    %c0_39 = arith.constant 0 : index
    %c0_40 = arith.constant 0 : index
    %c17_41 = arith.constant 17 : index
    %c0_42 = arith.constant 0 : index
    %25 = vector.load %arg9[%c0_39, %c0_40, %c17_41, %c0_42] : memref<1x18x33x128xbf16, #tpu.memory_space<vmem>>, vector<1x16x16x128xbf16>
    %c0_43 = arith.constant 0 : index
    %c0_44 = arith.constant 0 : index
    %c0_45 = arith.constant 0 : index
    %c256 = arith.constant 256 : index
    %26 = vector.load %arg10[%c0_43, %c0_44, %c0_45, %c256] : memref<1x16x16x1152xbf16, #tpu.memory_space<vmem>>, vector<1x16x16x128xbf16>
    tpu.vector_store %arg10[%c0_43, %c0_44, %c0_45, %c256], %25 {strides = array<i32>} : memref<1x16x16x1152xbf16, #tpu.memory_space<vmem>>, vector<1x16x16x128xbf16>,
    %c0_46 = arith.constant 0 : index
    %c1_47 = arith.constant 1 : index
    %c15_48 = arith.constant 15 : index
    %c0_49 = arith.constant 0 : index
    %27 = vector.load %arg9[%c0_46, %c1_47, %c15_48, %c0_49] : memref<1x18x33x128xbf16, #tpu.memory_space<vmem>>, vector<1x16x16x128xbf16>
    %c0_50 = arith.constant 0 : index
    %c0_51 = arith.constant 0 : index
    %c0_52 = arith.constant 0 : index
    %c384 = arith.constant 384 : index
    %28 = vector.load %arg10[%c0_50, %c0_51, %c0_52, %c384] : memref<1x16x16x1152xbf16, #tpu.memory_space<vmem>>, vector<1x16x16x128xbf16>
    tpu.vector_store %arg10[%c0_50, %c0_51, %c0_52, %c384], %27 {strides = array<i32>} : memref<1x16x16x1152xbf16, #tpu.memory_space<vmem>>, vector<1x16x16x128xbf16>,
    %c0_53 = arith.constant 0 : index
    %c1_54 = arith.constant 1 : index
    %c16_55 = arith.constant 16 : index
    %c0_56 = arith.constant 0 : index
    %29 = vector.load %arg9[%c0_53, %c1_54, %c16_55, %c0_56] : memref<1x18x33x128xbf16, #tpu.memory_space<vmem>>, vector<1x16x16x128xbf16>
    %c0_57 = arith.constant 0 : index
    %c0_58 = arith.constant 0 : index
    %c0_59 = arith.constant 0 : index
    %c512 = arith.constant 512 : index
    %30 = vector.load %arg10[%c0_57, %c0_58, %c0_59, %c512] : memref<1x16x16x1152xbf16, #tpu.memory_space<vmem>>, vector<1x16x16x128xbf16>
    tpu.vector_store %arg10[%c0_57, %c0_58, %c0_59, %c512], %29 {strides = array<i32>} : memref<1x16x16x1152xbf16, #tpu.memory_space<vmem>>, vector<1x16x16x128xbf16>,
    %c0_60 = arith.constant 0 : index
    %c1_61 = arith.constant 1 : index
    %c17_62 = arith.constant 17 : index
    %c0_63 = arith.constant 0 : index
    %31 = vector.load %arg9[%c0_60, %c1_61, %c17_62, %c0_63] : memref<1x18x33x128xbf16, #tpu.memory_space<vmem>>, vector<1x16x16x128xbf16>
    %c0_64 = arith.constant 0 : index
    %c0_65 = arith.constant 0 : index
    %c0_66 = arith.constant 0 : index
    %c640 = arith.constant 640 : index
    %32 = vector.load %arg10[%c0_64, %c0_65, %c0_66, %c640] : memref<1x16x16x1152xbf16, #tpu.memory_space<vmem>>, vector<1x16x16x128xbf16>
    tpu.vector_store %arg10[%c0_64, %c0_65, %c0_66, %c640], %31 {strides = array<i32>} : memref<1x16x16x1152xbf16, #tpu.memory_space<vmem>>, vector<1x16x16x128xbf16>,
    %c0_67 = arith.constant 0 : index
    %c2 = arith.constant 2 : index
    %c15_68 = arith.constant 15 : index
    %c0_69 = arith.constant 0 : index
    %33 = vector.load %arg9[%c0_67, %c2, %c15_68, %c0_69] : memref<1x18x33x128xbf16, #tpu.memory_space<vmem>>, vector<1x16x16x128xbf16>
    %c0_70 = arith.constant 0 : index
    %c0_71 = arith.constant 0 : index
    %c0_72 = arith.constant 0 : index
    %c768 = arith.constant 768 : index
    %34 = vector.load %arg10[%c0_70, %c0_71, %c0_72, %c768] : memref<1x16x16x1152xbf16, #tpu.memory_space<vmem>>, vector<1x16x16x128xbf16>
    tpu.vector_store %arg10[%c0_70, %c0_71, %c0_72, %c768], %33 {strides = array<i32>} : memref<1x16x16x1152xbf16, #tpu.memory_space<vmem>>, vector<1x16x16x128xbf16>,
    %c0_73 = arith.constant 0 : index
    %c2_74 = arith.constant 2 : index
    %c16_75 = arith.constant 16 : index
    %c0_76 = arith.constant 0 : index
    %35 = vector.load %arg9[%c0_73, %c2_74, %c16_75, %c0_76] : memref<1x18x33x128xbf16, #tpu.memory_space<vmem>>, vector<1x16x16x128xbf16>
    %c0_77 = arith.constant 0 : index
    %c0_78 = arith.constant 0 : index
    %c0_79 = arith.constant 0 : index
    %c896 = arith.constant 896 : index
    %36 = vector.load %arg10[%c0_77, %c0_78, %c0_79, %c896] : memref<1x16x16x1152xbf16, #tpu.memory_space<vmem>>, vector<1x16x16x128xbf16>
    tpu.vector_store %arg10[%c0_77, %c0_78, %c0_79, %c896], %35 {strides = array<i32>} : memref<1x16x16x1152xbf16, #tpu.memory_space<vmem>>, vector<1x16x16x128xbf16>,
    %c0_80 = arith.constant 0 : index
    %c2_81 = arith.constant 2 : index
    %c17_82 = arith.constant 17 : index
    %c0_83 = arith.constant 0 : index
    %37 = vector.load %arg9[%c0_80, %c2_81, %c17_82, %c0_83] : memref<1x18x33x128xbf16, #tpu.memory_space<vmem>>, vector<1x16x16x128xbf16>
    %c0_84 = arith.constant 0 : index
    %c0_85 = arith.constant 0 : index
    %c0_86 = arith.constant 0 : index
    %c1024 = arith.constant 1024 : index
    %38 = vector.load %arg10[%c0_84, %c0_85, %c0_86, %c1024] : memref<1x16x16x1152xbf16, #tpu.memory_space<vmem>>, vector<1x16x16x128xbf16>
    tpu.vector_store %arg10[%c0_84, %c0_85, %c0_86, %c1024], %37 {strides = array<i32>} : memref<1x16x16x1152xbf16, #tpu.memory_space<vmem>>, vector<1x16x16x128xbf16>,
    %c0_87 = arith.constant 0 : index
    %c0_88 = arith.constant 0 : index
    %c0_89 = arith.constant 0 : index
    %c0_90 = arith.constant 0 : index
    %39 = vector.load %arg10[%c0_87, %c0_88, %c0_89, %c0_90] : memref<1x16x16x1152xbf16, #tpu.memory_space<vmem>>, vector<1x16x16x1152xbf16>
    %40 = vector.shape_cast %39 : vector<1x16x16x1152xbf16> to vector<256x1152xbf16>
    %c0_91 = arith.constant 0 : index
    %c0_92 = arith.constant 0 : index
    %41 = vector.load %arg4[%c0_91, %c0_92] : memref<1152x128xbf16, #tpu.memory_space<vmem>>, vector<1152x128xbf16>
    %cst_93 = arith.constant dense<0.000000e+00> : vector<256x128xf32>
    %42 = tpu.matmul %40, %41, %cst_93 {dimension_numbers = #tpu.dot_dimension_numbers<[1], [0], [0], [1], [0, 0, 1, 1], [], []>} : vector<256x1152xbf16>, vector<1152x128xbf16>, vector<256x128xf32> -> vector<256x128xf32>
    %43 = vector.shape_cast %42 : vector<256x128xf32> to vector<1x16x16x128xf32>
    %c0_94 = arith.constant 0 : index
    %c0_95 = arith.constant 0 : index
    %c0_96 = arith.constant 0 : index
    %c0_97 = arith.constant 0 : index
    %44 = vector.load %arg11[%c0_94, %c0_95, %c0_96, %c0_97] : memref<1x16x16x128xf32, #tpu.memory_space<vmem>>, vector<1x16x16x128xf32>
    tpu.vector_store %arg11[%c0_94, %c0_95, %c0_96, %c0_97], %43 {strides = array<i32>} : memref<1x16x16x128xf32, #tpu.memory_space<vmem>>, vector<1x16x16x128xf32>,
    %c0_98 = arith.constant 0 : index
    %c0_99 = arith.constant 0 : index
    %c0_100 = arith.constant 0 : index
    %c0_101 = arith.constant 0 : index
    %45 = vector.load %arg11[%c0_98, %c0_99, %c0_100, %c0_101] : memref<1x16x16x128xf32, #tpu.memory_space<vmem>>, vector<1x16x16x128xf32>
    %c0_102 = arith.constant 0 : index
    %c0_103 = arith.constant 0 : index
    %46 = vector.load %arg5[%c0_102, %c0_103] : memref<1x128xf32, #tpu.memory_space<vmem>>, vector<1x128xf32>
    %47 = vector.shape_cast %46 : vector<1x128xf32> to vector<128xf32>
    %48 = vector.shape_cast %47 : vector<128xf32> to vector<1x1x1x128xf32>
    %49 = vector.broadcast %48 : vector<1x1x1x128xf32> to vector<1x16x16x128xf32>
    %50 = arith.mulf %45, %49 : vector<1x16x16x128xf32>
    %c0_104 = arith.constant 0 : index
    %c0_105 = arith.constant 0 : index
    %51 = vector.load %arg6[%c0_104, %c0_105] : memref<1x128xf32, #tpu.memory_space<vmem>>, vector<1x128xf32>
    %52 = vector.shape_cast %51 : vector<1x128xf32> to vector<128xf32>
    %53 = vector.shape_cast %52 : vector<128xf32> to vector<1x1x1x128xf32>
    %54 = vector.broadcast %53 : vector<1x1x1x128xf32> to vector<1x16x16x128xf32>
    %55 = arith.addf %50, %54 : vector<1x16x16x128xf32>
    %cst_106 = arith.constant 0.000000e+00 : f32
    %56 = vector.broadcast %cst_106 : f32 to vector<1x16x16x128xf32>
    %57 = arith.maximumf %55, %56 : vector<1x16x16x128xf32>
    %58 = arith.truncf %57 : vector<1x16x16x128xf32> to vector<1x16x16x128xbf16>
    %c0_107 = arith.constant 0 : index
    %c1_108 = arith.constant 1 : index
    %c16_109 = arith.constant 16 : index
    %c0_110 = arith.constant 0 : index
    %59 = vector.load %arg9[%c0_107, %c1_108, %c16_109, %c0_110] : memref<1x18x33x128xbf16, #tpu.memory_space<vmem>>, vector<1x16x16x128xbf16>
    tpu.vector_store %arg9[%c0_107, %c1_108, %c16_109, %c0_110], %58 {strides = array<i32>} : memref<1x18x33x128xbf16, #tpu.memory_space<vmem>>, vector<1x16x16x128xbf16>,
    %c0_111 = arith.constant 0 : index
    %c0_112 = arith.constant 0 : index
    %c15_113 = arith.constant 15 : index
    %c0_114 = arith.constant 0 : index
    %60 = vector.load %arg9[%c0_111, %c0_112, %c15_113, %c0_114] : memref<1x18x33x128xbf16, #tpu.memory_space<vmem>>, vector<1x16x16x128xbf16>
    %c0_115 = arith.constant 0 : index
    %c0_116 = arith.constant 0 : index
    %c0_117 = arith.constant 0 : index
    %c0_118 = arith.constant 0 : index
    %61 = vector.load %arg10[%c0_115, %c0_116, %c0_117, %c0_118] : memref<1x16x16x1152xbf16, #tpu.memory_space<vmem>>, vector<1x16x16x128xbf16>
    tpu.vector_store %arg10[%c0_115, %c0_116, %c0_117, %c0_118], %60 {strides = array<i32>} : memref<1x16x16x1152xbf16, #tpu.memory_space<vmem>>, vector<1x16x16x128xbf16>,
    %c0_119 = arith.constant 0 : index
    %c0_120 = arith.constant 0 : index
    %c16_121 = arith.constant 16 : index
    %c0_122 = arith.constant 0 : index
    %62 = vector.load %arg9[%c0_119, %c0_120, %c16_121, %c0_122] : memref<1x18x33x128xbf16, #tpu.memory_space<vmem>>, vector<1x16x16x128xbf16>
    %c0_123 = arith.constant 0 : index
    %c0_124 = arith.constant 0 : index
    %c0_125 = arith.constant 0 : index
    %c128_126 = arith.constant 128 : index
    %63 = vector.load %arg10[%c0_123, %c0_124, %c0_125, %c128_126] : memref<1x16x16x1152xbf16, #tpu.memory_space<vmem>>, vector<1x16x16x128xbf16>
    tpu.vector_store %arg10[%c0_123, %c0_124, %c0_125, %c128_126], %62 {strides = array<i32>} : memref<1x16x16x1152xbf16, #tpu.memory_space<vmem>>, vector<1x16x16x128xbf16>,
    %c0_127 = arith.constant 0 : index
    %c0_128 = arith.constant 0 : index
    %c17_129 = arith.constant 17 : index
    %c0_130 = arith.constant 0 : index
    %64 = vector.load %arg9[%c0_127, %c0_128, %c17_129, %c0_130] : memref<1x18x33x128xbf16, #tpu.memory_space<vmem>>, vector<1x16x16x128xbf16>
    %c0_131 = arith.constant 0 : index
    %c0_132 = arith.constant 0 : index
    %c0_133 = arith.constant 0 : index
    %c256_134 = arith.constant 256 : index
    %65 = vector.load %arg10[%c0_131, %c0_132, %c0_133, %c256_134] : memref<1x16x16x1152xbf16, #tpu.memory_space<vmem>>, vector<1x16x16x128xbf16>
    tpu.vector_store %arg10[%c0_131, %c0_132, %c0_133, %c256_134], %64 {strides = array<i32>} : memref<1x16x16x1152xbf16, #tpu.memory_space<vmem>>, vector<1x16x16x128xbf16>,
    %c0_135 = arith.constant 0 : index
    %c1_136 = arith.constant 1 : index
    %c15_137 = arith.constant 15 : index
    %c0_138 = arith.constant 0 : index
    %66 = vector.load %arg9[%c0_135, %c1_136, %c15_137, %c0_138] : memref<1x18x33x128xbf16, #tpu.memory_space<vmem>>, vector<1x16x16x128xbf16>
    %c0_139 = arith.constant 0 : index
    %c0_140 = arith.constant 0 : index
    %c0_141 = arith.constant 0 : index
    %c384_142 = arith.constant 384 : index
    %67 = vector.load %arg10[%c0_139, %c0_140, %c0_141, %c384_142] : memref<1x16x16x1152xbf16, #tpu.memory_space<vmem>>, vector<1x16x16x128xbf16>
    tpu.vector_store %arg10[%c0_139, %c0_140, %c0_141, %c384_142], %66 {strides = array<i32>} : memref<1x16x16x1152xbf16, #tpu.memory_space<vmem>>, vector<1x16x16x128xbf16>,
    %c0_143 = arith.constant 0 : index
    %c1_144 = arith.constant 1 : index
    %c16_145 = arith.constant 16 : index
    %c0_146 = arith.constant 0 : index
    %68 = vector.load %arg9[%c0_143, %c1_144, %c16_145, %c0_146] : memref<1x18x33x128xbf16, #tpu.memory_space<vmem>>, vector<1x16x16x128xbf16>
    %c0_147 = arith.constant 0 : index
    %c0_148 = arith.constant 0 : index
    %c0_149 = arith.constant 0 : index
    %c512_150 = arith.constant 512 : index
    %69 = vector.load %arg10[%c0_147, %c0_148, %c0_149, %c512_150] : memref<1x16x16x1152xbf16, #tpu.memory_space<vmem>>, vector<1x16x16x128xbf16>
    tpu.vector_store %arg10[%c0_147, %c0_148, %c0_149, %c512_150], %68 {strides = array<i32>} : memref<1x16x16x1152xbf16, #tpu.memory_space<vmem>>, vector<1x16x16x128xbf16>,
    %c0_151 = arith.constant 0 : index
    %c1_152 = arith.constant 1 : index
    %c17_153 = arith.constant 17 : index
    %c0_154 = arith.constant 0 : index
    %70 = vector.load %arg9[%c0_151, %c1_152, %c17_153, %c0_154] : memref<1x18x33x128xbf16, #tpu.memory_space<vmem>>, vector<1x16x16x128xbf16>
    %c0_155 = arith.constant 0 : index
    %c0_156 = arith.constant 0 : index
    %c0_157 = arith.constant 0 : index
    %c640_158 = arith.constant 640 : index
    %71 = vector.load %arg10[%c0_155, %c0_156, %c0_157, %c640_158] : memref<1x16x16x1152xbf16, #tpu.memory_space<vmem>>, vector<1x16x16x128xbf16>
    tpu.vector_store %arg10[%c0_155, %c0_156, %c0_157, %c640_158], %70 {strides = array<i32>} : memref<1x16x16x1152xbf16, #tpu.memory_space<vmem>>, vector<1x16x16x128xbf16>,
    %c0_159 = arith.constant 0 : index
    %c2_160 = arith.constant 2 : index
    %c15_161 = arith.constant 15 : index
    %c0_162 = arith.constant 0 : index
    %72 = vector.load %arg9[%c0_159, %c2_160, %c15_161, %c0_162] : memref<1x18x33x128xbf16, #tpu.memory_space<vmem>>, vector<1x16x16x128xbf16>
    %c0_163 = arith.constant 0 : index
    %c0_164 = arith.constant 0 : index
    %c0_165 = arith.constant 0 : index
    %c768_166 = arith.constant 768 : index
    %73 = vector.load %arg10[%c0_163, %c0_164, %c0_165, %c768_166] : memref<1x16x16x1152xbf16, #tpu.memory_space<vmem>>, vector<1x16x16x128xbf16>
    tpu.vector_store %arg10[%c0_163, %c0_164, %c0_165, %c768_166], %72 {strides = array<i32>} : memref<1x16x16x1152xbf16, #tpu.memory_space<vmem>>, vector<1x16x16x128xbf16>,
    %c0_167 = arith.constant 0 : index
    %c2_168 = arith.constant 2 : index
    %c16_169 = arith.constant 16 : index
    %c0_170 = arith.constant 0 : index
    %74 = vector.load %arg9[%c0_167, %c2_168, %c16_169, %c0_170] : memref<1x18x33x128xbf16, #tpu.memory_space<vmem>>, vector<1x16x16x128xbf16>
    %c0_171 = arith.constant 0 : index
    %c0_172 = arith.constant 0 : index
    %c0_173 = arith.constant 0 : index
    %c896_174 = arith.constant 896 : index
    %75 = vector.load %arg10[%c0_171, %c0_172, %c0_173, %c896_174] : memref<1x16x16x1152xbf16, #tpu.memory_space<vmem>>, vector<1x16x16x128xbf16>
    tpu.vector_store %arg10[%c0_171, %c0_172, %c0_173, %c896_174], %74 {strides = array<i32>} : memref<1x16x16x1152xbf16, #tpu.memory_space<vmem>>, vector<1x16x16x128xbf16>,
    %c0_175 = arith.constant 0 : index
    %c2_176 = arith.constant 2 : index
    %c17_177 = arith.constant 17 : index
    %c0_178 = arith.constant 0 : index
    %76 = vector.load %arg9[%c0_175, %c2_176, %c17_177, %c0_178] : memref<1x18x33x128xbf16, #tpu.memory_space<vmem>>, vector<1x16x16x128xbf16>
    %c0_179 = arith.constant 0 : index
    %c0_180 = arith.constant 0 : index
    %c0_181 = arith.constant 0 : index
    %c1024_182 = arith.constant 1024 : index
    %77 = vector.load %arg10[%c0_179, %c0_180, %c0_181, %c1024_182] : memref<1x16x16x1152xbf16, #tpu.memory_space<vmem>>, vector<1x16x16x128xbf16>
    tpu.vector_store %arg10[%c0_179, %c0_180, %c0_181, %c1024_182], %76 {strides = array<i32>} : memref<1x16x16x1152xbf16, #tpu.memory_space<vmem>>, vector<1x16x16x128xbf16>,
    %c0_183 = arith.constant 0 : index
    %c0_184 = arith.constant 0 : index
    %c0_185 = arith.constant 0 : index
    %c0_186 = arith.constant 0 : index
    %78 = vector.load %arg10[%c0_183, %c0_184, %c0_185, %c0_186] : memref<1x16x16x1152xbf16, #tpu.memory_space<vmem>>, vector<1x16x16x1152xbf16>
    %79 = vector.shape_cast %78 : vector<1x16x16x1152xbf16> to vector<256x1152xbf16>
    %c0_187 = arith.constant 0 : index
    %c0_188 = arith.constant 0 : index
    %80 = vector.load %arg7[%c0_187, %c0_188] : memref<1152x128xbf16, #tpu.memory_space<vmem>>, vector<1152x128xbf16>
    %cst_189 = arith.constant dense<0.000000e+00> : vector<256x128xf32>
    %81 = tpu.matmul %79, %80, %cst_189 {dimension_numbers = #tpu.dot_dimension_numbers<[1], [0], [0], [1], [0, 0, 1, 1], [], []>} : vector<256x1152xbf16>, vector<1152x128xbf16>, vector<256x128xf32> -> vector<256x128xf32>
    %82 = vector.shape_cast %81 : vector<256x128xf32> to vector<1x16x16x128xf32>
    %c0_190 = arith.constant 0 : index
    %c0_191 = arith.constant 0 : index
    %c0_192 = arith.constant 0 : index
    %c0_193 = arith.constant 0 : index
    %83 = vector.load %arg11[%c0_190, %c0_191, %c0_192, %c0_193] : memref<1x16x16x128xf32, #tpu.memory_space<vmem>>, vector<1x16x16x128xf32>
    tpu.vector_store %arg11[%c0_190, %c0_191, %c0_192, %c0_193], %82 {strides = array<i32>} : memref<1x16x16x128xf32, #tpu.memory_space<vmem>>, vector<1x16x16x128xf32>,
    %c0_194 = arith.constant 0 : index
    %c0_195 = arith.constant 0 : index
    %c0_196 = arith.constant 0 : index
    %c0_197 = arith.constant 0 : index
    %84 = vector.load %arg1[%c0_194, %c0_195, %c0_196, %c0_197] : memref<1x16x16x128xf32, #tpu.memory_space<vmem>>, vector<1x16x16x128xf32>
    %c0_198 = arith.constant 0 : index
    %c0_199 = arith.constant 0 : index
    %c0_200 = arith.constant 0 : index
    %c0_201 = arith.constant 0 : index
    %85 = vector.load %arg11[%c0_198, %c0_199, %c0_200, %c0_201] : memref<1x16x16x128xf32, #tpu.memory_space<vmem>>, vector<1x16x16x128xf32>
    %86 = arith.addf %84, %85 : vector<1x16x16x128xf32>
    %c0_202 = arith.constant 0 : index
    %c0_203 = arith.constant 0 : index
    %c0_204 = arith.constant 0 : index
    %c0_205 = arith.constant 0 : index
    %87 = vector.load %arg8[%c0_202, %c0_203, %c0_204, %c0_205] : memref<1x16x16x128xf32, #tpu.memory_space<vmem>>, vector<1x16x16x128xf32>
    tpu.vector_store %arg8[%c0_202, %c0_203, %c0_204, %c0_205], %86 {strides = array<i32>} : memref<1x16x16x128xf32, #tpu.memory_space<vmem>>, vector<1x16x16x128xf32>,
    return
  }
  func.func @transform_0(%arg0: i32) -> (i32, i32, i32, i32) {
    %c0_i32 = arith.constant 0 : i32
    %c0_i32_0 = arith.constant 0 : i32
    %c0_i32_1 = arith.constant 0 : i32
    %c0_i32_2 = arith.constant 0 : i32
    return %arg0, %c0_i32, %c0_i32_0, %c0_i32_1 : i32, i32, i32, i32
  }
  func.func @transform_1(%arg0: i32) -> (i32, i32) {
    %c0_i32 = arith.constant 0 : i32
    %c0_i32_0 = arith.constant 0 : i32
    %c0_i32_1 = arith.constant 0 : i32
    return %c0_i32, %c0_i32_0 : i32, i32
  }
  func.func @transform_2(%arg0: i32) -> (i32, i32) {
    %c0_i32 = arith.constant 0 : i32
    %c0_i32_0 = arith.constant 0 : i32
    %c0_i32_1 = arith.constant 0 : i32
    return %c0_i32, %c0_i32_0 : i32, i32
  }
  func.func @transform_3(%arg0: i32) -> (i32, i32) {
    %c0_i32 = arith.constant 0 : i32
    %c0_i32_0 = arith.constant 0 : i32
    %c0_i32_1 = arith.constant 0 : i32
    return %c0_i32, %c0_i32_0 : i32, i32
  }
  func.func @transform_4(%arg0: i32) -> (i32, i32) {
    %c0_i32 = arith.constant 0 : i32
    %c0_i32_0 = arith.constant 0 : i32
    %c0_i32_1 = arith.constant 0 : i32
    return %c0_i32, %c0_i32_0 : i32, i32
  }
  func.func @transform_5(%arg0: i32) -> (i32, i32) {
    %c0_i32 = arith.constant 0 : i32
    %c0_i32_0 = arith.constant 0 : i32
    %c0_i32_1 = arith.constant 0 : i32
    return %c0_i32, %c0_i32_0 : i32, i32
  }
  func.func @transform_6(%arg0: i32) -> (i32, i32) {
    %c0_i32 = arith.constant 0 : i32
    %c0_i32_0 = arith.constant 0 : i32
    %c0_i32_1 = arith.constant 0 : i32
    return %c0_i32, %c0_i32_0 : i32, i32
  }
  func.func @transform_7(%arg0: i32) -> (i32, i32, i32, i32) {
    %c0_i32 = arith.constant 0 : i32
    %c0_i32_0 = arith.constant 0 : i32
    %c0_i32_1 = arith.constant 0 : i32
    %c0_i32_2 = arith.constant 0 : i32
    return %arg0, %c0_i32, %c0_i32_0, %c0_i32_1 : i32, i32, i32, i32
  }
}

</mosaic_0001>

<llo_original>
// kernel: basic_block_pallas_padded_nhwc.1
$region0: #{basic_block_pallas_padded_nhwc.1}
  #allocation0 [shape = 'u32[]', space=smem, size = 0x4, offset = 0x4, fixed_abs, tag = 'smem constant byte address 0x4 - core index']
  #allocation1 [shape = 'u32[144,128]{1,0:T(1,128)}', space=vmem, size = 0x12000, scoped, tag = 'internal scratch']
  #allocation2 [shape = 'bf16[1,18,33,128]{3,2,1,0:T(8,128)(2,1)}', space=vmem, size = 0x2d000, scoped, tag = 'scratch operand']
  #allocation3 [shape = 'bf16[1,16,16,1152]{3,2,1,0:T(16,128)(2,1)}', space=vmem, size = 0x90000, scoped, tag = 'scratch operand']
  #allocation4 [shape = 'f32[1,16,16,128]{3,2,1,0:T(8,128)}', space=vmem, size = 0x20000, scoped, tag = 'scratch operand']
  %s0 = inlined_call_operand.hbm [shape: f32[2,16,16,128], index: 0, kind: input, shape index: {}]
  %s1 = inlined_call_operand.vmem [shape: f32[1,128], index: 1, kind: input, shape index: {}]
  %s2 = inlined_call_operand.vmem [shape: f32[1,128], index: 2, kind: input, shape index: {}]
  %s3 = inlined_call_operand.hbm [shape: bf16[1152,128], index: 3, kind: input, shape index: {}]
  %s4 = inlined_call_operand.vmem [shape: f32[1,128], index: 4, kind: input, shape index: {}]
  %s5 = inlined_call_operand.vmem [shape: f32[1,128], index: 5, kind: input, shape index: {}]
  %s6 = inlined_call_operand.hbm [shape: bf16[1152,128], index: 6, kind: input, shape index: {}]
  %s7 = inlined_call_operand.hbm [shape: f32[2,16,16,128], index: 7, kind: output, shape index: {}]
  %s8 = sld [smem:[#allocation0]]
  $region73: #{basic_block_pallas_padded_nhwc.1} parent=0
    _
  %s10 = ssub.s32 1, %s8
  %s11 = scalar_select 0, %s10, %s8
  $region1: #{basic_block_pallas_padded_nhwc.1} parent=0
    #allocation5 [shape = 'u8[262144]{0}', space=vmem, size = 0x40000, scoped, tag = 'input window, operand 0']
    #allocation6 [shape = 's32[2]{0}', space=sflag, size = 0x8, scoped, tag = 'scoped memory for basic_block_pallas_padded_nhwc.1']
    #allocation7 [shape = 's32[2]{0}', space=sflag, size = 0x8, scoped, tag = 'scoped memory for basic_block_pallas_padded_nhwc.1']
    #allocation8 [shape = 'u8[294912]{0}', space=vmem, size = 0x48000, scoped, tag = 'input window, operand 3, single buffered']
    #allocation9 [shape = 's32[1]{0}', space=sflag, size = 0x4, scoped, tag = 'scoped memory for basic_block_pallas_padded_nhwc.1']
    #allocation10 [shape = 'u8[294912]{0}', space=vmem, size = 0x48000, scoped, tag = 'input window, operand 6, single buffered']
    #allocation11 [shape = 'u8[262144]{0}', space=vmem, size = 0x40000, scoped, tag = 'output window, operand 0']
    %12 = vsyncpa [#allocation6], 0
    %s13 = scalar_lea.sflag [#allocation6], 1
    %14 = vsyncpa %s13, 0
    %15 = vsyncpa [#allocation9], 0
    %16 = vsyncpa [#allocation7], 0
    %s17 = scalar_lea.sflag [#allocation7], 1
    %18 = vsyncpa %s17, 0
    loop: start=0, step=1, limit=4
    $region2: #{basic_block_pallas_padded_nhwc.1} parent=1 // loop_pre_header
      _
    $region3: #{basic_block_pallas_padded_nhwc.1} parent=1 // loop_header
      %s20 = sphi 0, %s24
      %p21 = scmp.ge.s32.totalorder %s20, 4
      %s30 = sphi 0, %s32
      %s33 = sphi 0, %s30
      %s34 = sphi 0, %s33
      %s50 = sphi 0, %s34
      %s54 = sphi 0, %s54
      %s56 = sphi 0, %s54
      %s57 = sphi 0, %s56
      %s71 = sphi 0, %s57
      %s75 = sphi 0, %s75
      %s77 = sphi 0, %s75
      %s78 = sphi 0, %s77
      %s92 = sphi 0, %s78
      %s96 = sphi 0, %s96
      %s98 = sphi 0, %s96
      %s99 = sphi 0, %s98
      %s113 = sphi 0, %s99
      %s117 = sphi 0, %s117
      %s119 = sphi 0, %s117
      %s120 = sphi 0, %s119
      %s134 = sphi 0, %s120
      %s138 = sphi 0, %s138
      %s140 = sphi 0, %s138
      %s141 = sphi 0, %s140
      %s155 = sphi 0, %s141
      %s159 = sphi 0, %s159
      %s161 = sphi 0, %s159
      %s162 = sphi 0, %s161
      %s176 = sphi 0, %s162
      %s182 = sphi 0, %s184
      %s185 = sphi 0, %s182
      %s186 = sphi 0, %s185
      %s202 = sphi 0, %s186
    $region4: #{basic_block_pallas_padded_nhwc.1} parent=1 // loop_header_branch
      %23 = sbr.rel (%p21) target = $region8
    $region5: #{basic_block_pallas_padded_nhwc.1} parent=1 // loop_body
      %s25 = ssub.s32 %s20, 1
      %s26 = ssub.s32 %s20, 2
      %s27 = sadd.s32 %s20, 1
      %s28 = ssub.s32 %s20, %s27
      %p29 = scmp.eq.s32.totalorder %s28, 0
      %s31 = sadd.s32 %s30, 1
      %s32 = scalar_select %p29, %s30, %s31
      %p35 = pneg %p29
      %p36 = scmp.eq.s32.totalorder %s20, 1
      %p37 = por %p35, %p36
      %p38 = scmp.ne.s32.totalorder %s30, %s33
      %p39 = scmp.eq.s32.totalorder %s20, 0
      %p40 = por %p38, %p39
      %p41 = scmp.ne.s32.totalorder %s30, %s33
      %p42 = scmp.eq.s32.totalorder %s25, 1
      %p43 = por %p41, %p42
      %p44 = scmp.ne.s32.totalorder %s33, %s34
      %p45 = scmp.eq.s32.totalorder %s25, 0
      %p46 = por %p44, %p45
      %p47 = scmp.ne.s32.totalorder %s33, %s34
      %p48 = scmp.eq.s32.totalorder %s26, 1
      %p49 = por %p47, %p48
      %p51 = scmp.ne.s32.totalorder %s34, %s50
      %p52 = scmp.eq.s32.totalorder %s26, 0
      %p53 = por %p51, %p52
      %s55 = sadd.s32 %s54, 1
      %p58 = scmp.eq.s32.totalorder %s20, 1
      %p59 = scmp.ne.s32.totalorder %s54, %s56
      %p60 = scmp.eq.s32.totalorder %s20, 0
      %p61 = por %p59, %p60
      %p62 = scmp.ne.s32.totalorder %s54, %s56
      %p63 = scmp.eq.s32.totalorder %s25, 1
      %p64 = por %p62, %p63
      %p65 = scmp.ne.s32.totalorder %s56, %s57
      %p66 = scmp.eq.s32.totalorder %s25, 0
      %p67 = por %p65, %p66
      %p68 = scmp.ne.s32.totalorder %s56, %s57
      %p69 = scmp.eq.s32.totalorder %s26, 1
      %p70 = por %p68, %p69
      %p72 = scmp.ne.s32.totalorder %s57, %s71
      %p73 = scmp.eq.s32.totalorder %s26, 0
      %p74 = por %p72, %p73
      %s76 = sadd.s32 %s75, 1
      %p79 = scmp.eq.s32.totalorder %s20, 1
      %p80 = scmp.ne.s32.totalorder %s75, %s77
      %p81 = scmp.eq.s32.totalorder %s20, 0
      %p82 = por %p80, %p81
      %p83 = scmp.ne.s32.totalorder %s75, %s77
      %p84 = scmp.eq.s32.totalorder %s25, 1
      %p85 = por %p83, %p84
      %p86 = scmp.ne.s32.totalorder %s77, %s78
      %p87 = scmp.eq.s32.totalorder %s25, 0
      %p88 = por %p86, %p87
      %p89 = scmp.ne.s32.totalorder %s77, %s78
      %p90 = scmp.eq.s32.totalorder %s26, 1
      %p91 = por %p89, %p90
      %p93 = scmp.ne.s32.totalorder %s78, %s92
      %p94 = scmp.eq.s32.totalorder %s26, 0
      %p95 = por %p93, %p94
      %s97 = sadd.s32 %s96, 1
      %p100 = scmp.eq.s32.totalorder %s20, 1
      %p101 = scmp.ne.s32.totalorder %s96, %s98
      %p102 = scmp.eq.s32.totalorder %s20, 0
      %p103 = por %p101, %p102
      %p104 = scmp.ne.s32.totalorder %s96, %s98
      %p105 = scmp.eq.s32.totalorder %s25, 1
      %p106 = por %p104, %p105
      %p107 = scmp.ne.s32.totalorder %s98, %s99
      %p108 = scmp.eq.s32.totalorder %s25, 0
      %p109 = por %p107, %p108
      %p110 = scmp.ne.s32.totalorder %s98, %s99
      %p111 = scmp.eq.s32.totalorder %s26, 1
      %p112 = por %p110, %p111
      %p114 = scmp.ne.s32.totalorder %s99, %s113
      %p115 = scmp.eq.s32.totalorder %s26, 0
      %p116 = por %p114, %p115
      %s118 = sadd.s32 %s117, 1
      %p121 = scmp.eq.s32.totalorder %s20, 1
      %p122 = scmp.ne.s32.totalorder %s117, %s119
      %p123 = scmp.eq.s32.totalorder %s20, 0
      %p124 = por %p122, %p123
      %p125 = scmp.ne.s32.totalorder %s117, %s119
      %p126 = scmp.eq.s32.totalorder %s25, 1
      %p127 = por %p125, %p126
      %p128 = scmp.ne.s32.totalorder %s119, %s120
      %p129 = scmp.eq.s32.totalorder %s25, 0
      %p130 = por %p128, %p129
      %p131 = scmp.ne.s32.totalorder %s119, %s120
      %p132 = scmp.eq.s32.totalorder %s26, 1
      %p133 = por %p131, %p132
      %p135 = scmp.ne.s32.totalorder %s120, %s134
      %p136 = scmp.eq.s32.totalorder %s26, 0
      %p137 = por %p135, %p136
      %s139 = sadd.s32 %s138, 1
      %p142 = scmp.eq.s32.totalorder %s20, 1
      %p143 = scmp.ne.s32.totalorder %s138, %s140
      %p144 = scmp.eq.s32.totalorder %s20, 0
      %p145 = por %p143, %p144
      %p146 = scmp.ne.s32.totalorder %s138, %s140
      %p147 = scmp.eq.s32.totalorder %s25, 1
      %p148 = por %p146, %p147
      %p149 = scmp.ne.s32.totalorder %s140, %s141
      %p150 = scmp.eq.s32.totalorder %s25, 0
      %p151 = por %p149, %p150
      %p152 = scmp.ne.s32.totalorder %s140, %s141
      %p153 = scmp.eq.s32.totalorder %s26, 1
      %p154 = por %p152, %p153
      %p156 = scmp.ne.s32.totalorder %s141, %s155
      %p157 = scmp.eq.s32.totalorder %s26, 0
      %p158 = por %p156, %p157
      %s160 = sadd.s32 %s159, 1
      %p163 = scmp.eq.s32.totalorder %s20, 1
      %p164 = scmp.ne.s32.totalorder %s159, %s161
      %p165 = scmp.eq.s32.totalorder %s20, 0
      %p166 = por %p164, %p165
      %p167 = scmp.ne.s32.totalorder %s159, %s161
      %p168 = scmp.eq.s32.totalorder %s25, 1
      %p169 = por %p167, %p168
      %p170 = scmp.ne.s32.totalorder %s161, %s162
      %p171 = scmp.eq.s32.totalorder %s25, 0
      %p172 = por %p170, %p171
      %p173 = scmp.ne.s32.totalorder %s161, %s162
      %p174 = scmp.eq.s32.totalorder %s26, 1
      %p175 = por %p173, %p174
      %p177 = scmp.ne.s32.totalorder %s162, %s176
      %p178 = scmp.eq.s32.totalorder %s26, 0
      %p179 = por %p177, %p178
      %s180 = ssub.s32 %s20, %s27
      %p181 = scmp.eq.s32.totalorder %s180, 0
      %s183 = sadd.s32 %s182, 1
      %s184 = scalar_select %p181, %s182, %s183
      %p187 = pneg %p181
      %p188 = scmp.eq.s32.totalorder %s20, 1
      %p189 = por %p187, %p188
      %p190 = scmp.ne.s32.totalorder %s182, %s185
      %p191 = scmp.eq.s32.totalorder %s20, 0
      %p192 = por %p190, %p191
      %p193 = scmp.ne.s32.totalorder %s182, %s185
      %p194 = scmp.eq.s32.totalorder %s25, 1
      %p195 = por %p193, %p194
      %p196 = scmp.ne.s32.totalorder %s185, %s186
      %p197 = scmp.eq.s32.totalorder %s25, 0
      %p198 = por %p196, %p197
      %p199 = scmp.ne.s32.totalorder %s185, %s186
      %p200 = scmp.eq.s32.totalorder %s26, 1
      %p201 = por %p199, %p200
      %p203 = scmp.ne.s32.totalorder %s186, %s202
      %p204 = scmp.eq.s32.totalorder %s26, 0
      %p205 = por %p203, %p204
      %p206 = scmp.le.s32.totalorder 1, %s20
      %p207 = scmp.lt.s32.totalorder %s20, 3
      %p208 = pnand %p206, %p207
      %p209 = pneg %p208
      // Predicated region
      $region9: #{basic_block_pallas_padded_nhwc.1} parent=5 // pred_check
        _
      $region10: #{basic_block_pallas_padded_nhwc.1} parent=5 // pred_check_branch
        %211 = sbr.rel (%p208) target = $region12
      $region11: #{basic_block_pallas_padded_nhwc.1} parent=5 // pred_region
        %s212 = ssub.s32 %s20, 1
        // Predicated region
        $region13: #{basic_block_pallas_padded_nhwc.1} parent=11 // pred_check
          %p213 = pneg %p67
        $region14: #{basic_block_pallas_padded_nhwc.1} parent=11 // pred_check_branch
          %215 = sbr.rel (%p213) target = $region16
        $region15: #{basic_block_pallas_padded_nhwc.1} parent=11 // pred_region
          _
        $region16: #{basic_block_pallas_padded_nhwc.1} parent=11 // pred_fallthru
          _
        // Predicated region
        $region17: #{basic_block_pallas_padded_nhwc.1} parent=11 // pred_check
          %p216 = pneg %p88
        $region18: #{basic_block_pallas_padded_nhwc.1} parent=11 // pred_check_branch
          %218 = sbr.rel (%p216) target = $region20
        $region19: #{basic_block_pallas_padded_nhwc.1} parent=11 // pred_region
          _
        $region20: #{basic_block_pallas_padded_nhwc.1} parent=11 // pred_fallthru
          _
        // Predicated region
        $region21: #{basic_block_pallas_padded_nhwc.1} parent=11 // pred_check
          %p219 = pneg %p109
        $region22: #{basic_block_pallas_padded_nhwc.1} parent=11 // pred_check_branch
          %221 = sbr.rel (%p219) target = $region24
        $region23: #{basic_block_pallas_padded_nhwc.1} parent=11 // pred_region
          %s223 = ssub.s32 9216, 9216
          %224 = vsyncadd [#allocation9], %s223
          %s225 = sshll.u32 [#allocation8], 4
          %s226 = int_to_ptr.vmem [resolvable:$true] %s225
          %231 = dma.hbm_to_vmem [thread:$0]  %s3, 9216, %s226, [#allocation9], 64, 64, 4
        $region24: #{basic_block_pallas_padded_nhwc.1} parent=11 // pred_fallthru
          _
        // Predicated region
        $region25: #{basic_block_pallas_padded_nhwc.1} parent=11 // pred_check
          %p232 = pneg %p130
        $region26: #{basic_block_pallas_padded_nhwc.1} parent=11 // pred_check_branch
          %234 = sbr.rel (%p232) target = $region28
        $region27: #{basic_block_pallas_padded_nhwc.1} parent=11 // pred_region
          _
        $region28: #{basic_block_pallas_padded_nhwc.1} parent=11 // pred_fallthru
          _
        // Predicated region
        $region29: #{basic_block_pallas_padded_nhwc.1} parent=11 // pred_check
          %p235 = pneg %p151
        $region30: #{basic_block_pallas_padded_nhwc.1} parent=11 // pred_check_branch
          %237 = sbr.rel (%p235) target = $region32
        $region31: #{basic_block_pallas_padded_nhwc.1} parent=11 // pred_region
          _
        $region32: #{basic_block_pallas_padded_nhwc.1} parent=11 // pred_fallthru
          _
        // Predicated region
        $region33: #{basic_block_pallas_padded_nhwc.1} parent=11 // pred_check
          %p238 = pneg %p172
        $region34: #{basic_block_pallas_padded_nhwc.1} parent=11 // pred_check_branch
          %240 = sbr.rel (%p238) target = $region36
        $region35: #{basic_block_pallas_padded_nhwc.1} parent=11 // pred_region
          %s242 = ssub.s32 9216, 9216
          %243 = vsyncadd [#allocation9], %s242
          %s244 = sshll.u32 [#allocation10], 4
          %s245 = int_to_ptr.vmem [resolvable:$true] %s244
          %250 = dma.hbm_to_vmem [thread:$0]  %s6, 9216, %s245, [#allocation9], 64, 64, 4
        $region36: #{basic_block_pallas_padded_nhwc.1} parent=11 // pred_fallthru
          _
      $region12: #{basic_block_pallas_padded_nhwc.1} parent=5 // pred_fallthru
        _
      %p251 = scmp.lt.s32.totalorder %s20, 2
      // Predicated region
      $region37: #{basic_block_pallas_padded_nhwc.1} parent=5 // pred_check
        %p252 = pneg %p251
      $region38: #{basic_block_pallas_padded_nhwc.1} parent=5 // pred_check_branch
        %254 = sbr.rel (%p252) target = $region40
      $region39: #{basic_block_pallas_padded_nhwc.1} parent=5 // pred_region
        // Predicated region
        $region41: #{basic_block_pallas_padded_nhwc.1} parent=39 // pred_check
          %p255 = pneg %p40
        $region42: #{basic_block_pallas_padded_nhwc.1} parent=39 // pred_check_branch
          %257 = sbr.rel (%p255) target = $region44
        $region43: #{basic_block_pallas_padded_nhwc.1} parent=39 // pred_region
          %s258 = sand.u32 %s30, 1
          %s259 = scalar_lea.sflag [#allocation6], %s258
          %s260 = sand.u32 %s30, 1
          %s261 = smul.addr %s260, 256
          %s262 = scalar_lea.vmem [#allocation5], %s261
          %s264 = ssub.s32 4096, 4096
          %265 = vsyncadd %s259, %s264
          %s266 = smul.addr %s20, 32
          %s267 = smul.addr %s266, 128
          %s268 = scalar_lea.hbm %s0, %s267
          %s269 = sshll.u32 %s262, 4
          %s270 = int_to_ptr.vmem [resolvable:$true] %s269
          %275 = dma.hbm_to_vmem [thread:$0]  %s268, 4096, %s270, %s259, 128, 128, 8
        $region44: #{basic_block_pallas_padded_nhwc.1} parent=39 // pred_fallthru
          _
      $region40: #{basic_block_pallas_padded_nhwc.1} parent=5 // pred_fallthru
        _
      %p276 = scmp.le.s32.totalorder 1, %s20
      %p277 = scmp.lt.s32.totalorder %s20, 3
      %p278 = pnand %p276, %p277
      %p279 = pneg %p278
      // Predicated region
      $region45: #{basic_block_pallas_padded_nhwc.1} parent=5 // pred_check
        _
      $region46: #{basic_block_pallas_padded_nhwc.1} parent=5 // pred_check_branch
        %281 = sbr.rel (%p278) target = $region48
      $region47: #{basic_block_pallas_padded_nhwc.1} parent=5 // pred_region
        %s282 = ssub.s32 %s20, 1
        %s283 = sand.u32 %s33, 1
        %s284 = scalar_lea.sflag [#allocation6], %s283
        %s285 = sand.u32 %s33, 1
        %s286 = smul.addr %s285, 256
        %s287 = scalar_lea.vmem [#allocation5], %s286
        // Predicated region
        $region49: #{basic_block_pallas_padded_nhwc.1} parent=47 // pred_check
          %p288 = pneg %p46
        $region50: #{basic_block_pallas_padded_nhwc.1} parent=47 // pred_check_branch
          %290 = sbr.rel (%p288) target = $region52
        $region51: #{basic_block_pallas_padded_nhwc.1} parent=47 // pred_region
          %291 = dma.done %s284, 4096
        $region52: #{basic_block_pallas_padded_nhwc.1} parent=47 // pred_fallthru
          _
        // Predicated region
        $region53: #{basic_block_pallas_padded_nhwc.1} parent=47 // pred_check
          %p292 = pneg %p109
        $region54: #{basic_block_pallas_padded_nhwc.1} parent=47 // pred_check_branch
          %294 = sbr.rel (%p292) target = $region56
        $region55: #{basic_block_pallas_padded_nhwc.1} parent=47 // pred_region
          %295 = dma.done [#allocation9], 9216
        $region56: #{basic_block_pallas_padded_nhwc.1} parent=47 // pred_fallthru
          _
        // Predicated region
        $region57: #{basic_block_pallas_padded_nhwc.1} parent=47 // pred_check
          %p296 = pneg %p172
        $region58: #{basic_block_pallas_padded_nhwc.1} parent=47 // pred_check_branch
          %298 = sbr.rel (%p296) target = $region60
        $region59: #{basic_block_pallas_padded_nhwc.1} parent=47 // pred_region
          %299 = dma.done [#allocation9], 9216
        $region60: #{basic_block_pallas_padded_nhwc.1} parent=47 // pred_fallthru
          _
        %s300 = sand.u32 %s33, 1
        %s301 = scalar_lea.sflag [#allocation6], %s300
        %s302 = sand.u32 %s33, 1
        %s303 = smul.addr %s302, 256
        %s304 = scalar_lea.vmem [#allocation5], %s303
        %p305 = pneg %p46
        %p306 = pneg %p43
        %p307 = pneg %p67
        %p308 = pneg %p64
        %p309 = pneg %p88
        %p310 = pneg %p85
        %p311 = pneg %p109
        %p312 = pneg %p106
        %p313 = pneg %p130
        %p314 = pneg %p127
        %p315 = pneg %p151
        %p316 = pneg %p148
        %p317 = pneg %p172
        %p318 = pneg %p169
        %p319 = pneg %p198
        %p320 = pneg %p195
        %s321 = sand.u32 %s185, 1
        %s322 = scalar_lea.sflag [#allocation7], %s321
        %s323 = sand.u32 %s185, 1
        %s324 = smul.addr %s323, 256
        %s325 = scalar_lea.vmem [#allocation11], %s324
        %vm327 = vcmask 1043459
        %vm328 = vsmask.f32 7950
        %vm329 = vmand %vm327, %vm328
        %v330 = vld [vmem:[#allocation2 + $0x4] sm:$0x8]
        %v331 = vsel %vm329, 0, %v330
        %332 = vst [vmem:[#allocation2 + $0x4] sm:$0x8] %v331
        %333 = vst [vmem:[#allocation2 + $0x8] sm:$0xf] 0
        %334 = vst [vmem:[#allocation2 + $0xc] sm:$0xf] 0
        %vm335 = vcmask 1040384
        %vm336 = vsmask.f32 256
        %vm337 = vmand %vm335, %vm336
        %v338 = vld [vmem:[#allocation2 + $0x10] sm:$0x1]
        %v339 = vsel %vm337, 0, %v338
        %340 = vst [vmem:[#allocation2 + $0x10] sm:$0x1] %v339
        %s341 = scalar_lea.vmem [#allocation2], 340
        %v342 = vld [vmem:[%s341 + $0x4] sm:$0x8]
        %v343 = vsel %vm329, 0, %v342
        %344 = vst [vmem:[%s341 + $0x4] sm:$0x8] %v343
        %345 = vst [vmem:[%s341 + $0x8] sm:$0xf] 0
        %346 = vst [vmem:[%s341 + $0xc] sm:$0xf] 0
        %v347 = vld [vmem:[%s341 + $0x10] sm:$0x1]
        %v348 = vsel %vm337, 0, %v347
        %349 = vst [vmem:[%s341 + $0x10] sm:$0x1] %v348
        %v350 = vld [vmem:[#allocation2 + $0x4] sm:$0x8]
        %v351 = vsel %vm329, 0, %v350
        %352 = vst [vmem:[#allocation2 + $0x4] sm:$0x8] %v351
        %v353 = vld [vmem:[#allocation2 + $0x18] sm:$0x8]
        %v354 = vsel %vm329, 0, %v353
        %355 = vst [vmem:[#allocation2 + $0x18] sm:$0x8] %v354
        %v356 = vld [vmem:[#allocation2 + $0x2c] sm:$0x8]
        %v357 = vsel %vm329, 0, %v356
        %358 = vst [vmem:[#allocation2 + $0x2c] sm:$0x8] %v357
        %v359 = vld [vmem:[#allocation2 + $0x40] sm:$0x8]
        %v360 = vsel %vm329, 0, %v359
        %361 = vst [vmem:[#allocation2 + $0x40] sm:$0x8] %v360
        %v362 = vld [vmem:[#allocation2 + $0x54] sm:$0x8]
        %v363 = vsel %vm329, 0, %v362
        %364 = vst [vmem:[#allocation2 + $0x54] sm:$0x8] %v363
        %v365 = vld [vmem:[#allocation2 + $0x68] sm:$0x8]
        %v366 = vsel %vm329, 0, %v365
        %367 = vst [vmem:[#allocation2 + $0x68] sm:$0x8] %v366
        %v368 = vld [vmem:[#allocation2 + $0x7c] sm:$0x8]
        %v369 = vsel %vm329, 0, %v368
        %370 = vst [vmem:[#allocation2 + $0x7c] sm:$0x8] %v369
        %v371 = vld [vmem:[#allocation2 + $0x90] sm:$0x8]
        %v372 = vsel %vm329, 0, %v371
        %373 = vst [vmem:[#allocation2 + $0x90] sm:$0x8] %v372
        %v374 = vld [vmem:[#allocation2 + $0xa4] sm:$0x8]
        %v375 = vsel %vm329, 0, %v374
        %376 = vst [vmem:[#allocation2 + $0xa4] sm:$0x8] %v375
        %v377 = vld [vmem:[#allocation2 + $0xb8] sm:$0x8]
        %v378 = vsel %vm329, 0, %v377
        %379 = vst [vmem:[#allocation2 + $0xb8] sm:$0x8] %v378
        %v380 = vld [vmem:[#allocation2 + $0xcc] sm:$0x8]
        %v381 = vsel %vm329, 0, %v380
        %382 = vst [vmem:[#allocation2 + $0xcc] sm:$0x8] %v381
        %v383 = vld [vmem:[#allocation2 + $0xe0] sm:$0x8]
        %v384 = vsel %vm329, 0, %v383
        %385 = vst [vmem:[#allocation2 + $0xe0] sm:$0x8] %v384
        %v386 = vld [vmem:[#allocation2 + $0xf4] sm:$0x8]
        %v387 = vsel %vm329, 0, %v386
        %388 = vst [vmem:[#allocation2 + $0xf4] sm:$0x8] %v387
        %v389 = vld [vmem:[#allocation2 + $0x108] sm:$0x8]
        %v390 = vsel %vm329, 0, %v389
        %391 = vst [vmem:[#allocation2 + $0x108] sm:$0x8] %v390
        %v392 = vld [vmem:[#allocation2 + $0x11c] sm:$0x8]
        %v393 = vsel %vm329, 0, %v392
        %394 = vst [vmem:[#allocation2 + $0x11c] sm:$0x8] %v393
        %v395 = vld [vmem:[#allocation2 + $0x130] sm:$0x8]
        %v396 = vsel %vm329, 0, %v395
        %397 = vst [vmem:[#allocation2 + $0x130] sm:$0x8] %v396
        %v398 = vld [vmem:[#allocation2 + $0x144] sm:$0x8]
        %v399 = vsel %vm329, 0, %v398
        %400 = vst [vmem:[#allocation2 + $0x144] sm:$0x8] %v399
        %v401 = vld [vmem:[#allocation2 + $0x158] sm:$0x8]
        %v402 = vsel %vm329, 0, %v401
        %403 = vst [vmem:[#allocation2 + $0x158] sm:$0x8] %v402
        %v404 = vld [vmem:[#allocation2 + $0x10] sm:$0x1]
        %v405 = vsel %vm337, 0, %v404
        %406 = vst [vmem:[#allocation2 + $0x10] sm:$0x1] %v405
        %v407 = vld [vmem:[#allocation2 + $0x24] sm:$0x1]
        %v408 = vsel %vm337, 0, %v407
        %409 = vst [vmem:[#allocation2 + $0x24] sm:$0x1] %v408
        %v410 = vld [vmem:[#allocation2 + $0x38] sm:$0x1]
        %v411 = vsel %vm337, 0, %v410
        %412 = vst [vmem:[#allocation2 + $0x38] sm:$0x1] %v411
        %v413 = vld [vmem:[#allocation2 + $0x4c] sm:$0x1]
        %v414 = vsel %vm337, 0, %v413
        %415 = vst [vmem:[#allocation2 + $0x4c] sm:$0x1] %v414
        %v416 = vld [vmem:[#allocation2 + $0x60] sm:$0x1]
        %v417 = vsel %vm337, 0, %v416
        %418 = vst [vmem:[#allocation2 + $0x60] sm:$0x1] %v417
        %v419 = vld [vmem:[#allocation2 + $0x74] sm:$0x1]
        %v420 = vsel %vm337, 0, %v419
        %421 = vst [vmem:[#allocation2 + $0x74] sm:$0x1] %v420
        %v422 = vld [vmem:[#allocation2 + $0x88] sm:$0x1]
        %v423 = vsel %vm337, 0, %v422
        %424 = vst [vmem:[#allocation2 + $0x88] sm:$0x1] %v423
        %v425 = vld [vmem:[#allocation2 + $0x9c] sm:$0x1]
        %v426 = vsel %vm337, 0, %v425
        %427 = vst [vmem:[#allocation2 + $0x9c] sm:$0x1] %v426
        %v428 = vld [vmem:[#allocation2 + $0xb0] sm:$0x1]
        %v429 = vsel %vm337, 0, %v428
        %430 = vst [vmem:[#allocation2 + $0xb0] sm:$0x1] %v429
        %v431 = vld [vmem:[#allocation2 + $0xc4] sm:$0x1]
        %v432 = vsel %vm337, 0, %v431
        %433 = vst [vmem:[#allocation2 + $0xc4] sm:$0x1] %v432
        %v434 = vld [vmem:[#allocation2 + $0xd8] sm:$0x1]
        %v435 = vsel %vm337, 0, %v434
        %436 = vst [vmem:[#allocation2 + $0xd8] sm:$0x1] %v435
        %v437 = vld [vmem:[#allocation2 + $0xec] sm:$0x1]
        %v438 = vsel %vm337, 0, %v437
        %439 = vst [vmem:[#allocation2 + $0xec] sm:$0x1] %v438
        %v440 = vld [vmem:[#allocation2 + $0x100] sm:$0x1]
        %v441 = vsel %vm337, 0, %v440
        %442 = vst [vmem:[#allocation2 + $0x100] sm:$0x1] %v441
        %v443 = vld [vmem:[#allocation2 + $0x114] sm:$0x1]
        %v444 = vsel %vm337, 0, %v443
        %445 = vst [vmem:[#allocation2 + $0x114] sm:$0x1] %v444
        %v446 = vld [vmem:[#allocation2 + $0x128] sm:$0x1]
        %v447 = vsel %vm337, 0, %v446
        %448 = vst [vmem:[#allocation2 + $0x128] sm:$0x1] %v447
        %v449 = vld [vmem:[#allocation2 + $0x13c] sm:$0x1]
        %v450 = vsel %vm337, 0, %v449
        %451 = vst [vmem:[#allocation2 + $0x13c] sm:$0x1] %v450
        %v452 = vld [vmem:[#allocation2 + $0x150] sm:$0x1]
        %v453 = vsel %vm337, 0, %v452
        %454 = vst [vmem:[#allocation2 + $0x150] sm:$0x1] %v453
        %v455 = vld [vmem:[#allocation2 + $0x164] sm:$0x1]
        %v456 = vsel %vm337, 0, %v455
        %457 = vst [vmem:[#allocation2 + $0x164] sm:$0x1] %v456
        %v458 = vld [vmem:[%s287] sm:$0xff]
        %v459 = vld [vmem:[%s287 + $0x8] sm:$0xff]
        %v460 = vld [vmem:[%s287 + $0x10] sm:$0xff]
        %v461 = vld [vmem:[%s287 + $0x18] sm:$0xff]
        %v462 = vld [vmem:[%s287 + $0x20] sm:$0xff]
        %v463 = vld [vmem:[%s287 + $0x28] sm:$0xff]
        %v464 = vld [vmem:[%s287 + $0x30] sm:$0xff]
        %v465 = vld [vmem:[%s287 + $0x38] sm:$0xff]
        %v466 = vld [vmem:[%s287 + $0x40] sm:$0xff]
        %v467 = vld [vmem:[%s287 + $0x48] sm:$0xff]
        %v468 = vld [vmem:[%s287 + $0x50] sm:$0xff]
        %v469 = vld [vmem:[%s287 + $0x58] sm:$0xff]
        %v470 = vld [vmem:[%s287 + $0x60] sm:$0xff]
        %v471 = vld [vmem:[%s287 + $0x68] sm:$0xff]
        %v472 = vld [vmem:[%s287 + $0x70] sm:$0xff]
        %v473 = vld [vmem:[%s287 + $0x78] sm:$0xff]
        %v474 = vld [vmem:[%s287 + $0x80] sm:$0xff]
        %v475 = vld [vmem:[%s287 + $0x88] sm:$0xff]
        %v476 = vld [vmem:[%s287 + $0x90] sm:$0xff]
        %v477 = vld [vmem:[%s287 + $0x98] sm:$0xff]
        %v478 = vld [vmem:[%s287 + $0xa0] sm:$0xff]
        %v479 = vld [vmem:[%s287 + $0xa8] sm:$0xff]
        %v480 = vld [vmem:[%s287 + $0xb0] sm:$0xff]
        %v481 = vld [vmem:[%s287 + $0xb8] sm:$0xff]
        %v482 = vld [vmem:[%s287 + $0xc0] sm:$0xff]
        %v483 = vld [vmem:[%s287 + $0xc8] sm:$0xff]
        %v484 = vld [vmem:[%s287 + $0xd0] sm:$0xff]
        %v485 = vld [vmem:[%s287 + $0xd8] sm:$0xff]
        %v486 = vld [vmem:[%s287 + $0xe0] sm:$0xff]
        %v487 = vld [vmem:[%s287 + $0xe8] sm:$0xff]
        %v488 = vld [vmem:[%s287 + $0xf0] sm:$0xff]
        %v489 = vld [vmem:[%s287 + $0xf8] sm:$0xff]
        %v490 = vld [vmem:[%s1] sm:$0x1]
        %v492 = vlaneseq
        %v493 = vshrl.u32 %v492, 7
        %v494 = vsub.s32 0, %v493
        %v495 = vrot.slane %v490, %v494
        %v497 = vmul.f32 %v458, %v495
        %v498 = vmul.f32 %v459, %v495
        %v499 = vmul.f32 %v460, %v495
        %v500 = vmul.f32 %v461, %v495
        %v501 = vmul.f32 %v462, %v495
        %v502 = vmul.f32 %v463, %v495
        %v503 = vmul.f32 %v464, %v495
        %v504 = vmul.f32 %v465, %v495
        %v505 = vmul.f32 %v466, %v495
        %v506 = vmul.f32 %v467, %v495
        %v507 = vmul.f32 %v468, %v495
        %v508 = vmul.f32 %v469, %v495
        %v509 = vmul.f32 %v470, %v495
        %v510 = vmul.f32 %v471, %v495
        %v511 = vmul.f32 %v472, %v495
        %v512 = vmul.f32 %v473, %v495
        %v513 = vmul.f32 %v474, %v495
        %v514 = vmul.f32 %v475, %v495
        %v515 = vmul.f32 %v476, %v495
        %v516 = vmul.f32 %v477, %v495
        %v517 = vmul.f32 %v478, %v495
        %v518 = vmul.f32 %v479, %v495
        %v519 = vmul.f32 %v480, %v495
        %v520 = vmul.f32 %v481, %v495
        %v521 = vmul.f32 %v482, %v495
        %v522 = vmul.f32 %v483, %v495
        %v523 = vmul.f32 %v484, %v495
        %v524 = vmul.f32 %v485, %v495
        %v525 = vmul.f32 %v486, %v495
        %v526 = vmul.f32 %v487, %v495
        %v527 = vmul.f32 %v488, %v495
        %v528 = vmul.f32 %v489, %v495
        %v529 = vld [vmem:[%s2] sm:$0x1]
        %v531 = vlaneseq
        %v532 = vshrl.u32 %v531, 7
        %v533 = vsub.s32 0, %v532
        %v534 = vrot.slane %v529, %v533
        %v536 = vadd.f32 %v497, %v534
        %v537 = vadd.f32 %v498, %v534
        %v538 = vadd.f32 %v499, %v534
        %v539 = vadd.f32 %v500, %v534
        %v540 = vadd.f32 %v501, %v534
        %v541 = vadd.f32 %v502, %v534
        %v542 = vadd.f32 %v503, %v534
        %v543 = vadd.f32 %v504, %v534
        %v544 = vadd.f32 %v505, %v534
        %v545 = vadd.f32 %v506, %v534
        %v546 = vadd.f32 %v507, %v534
        %v547 = vadd.f32 %v508, %v534
        %v548 = vadd.f32 %v509, %v534
        %v549 = vadd.f32 %v510, %v534
        %v550 = vadd.f32 %v511, %v534
        %v551 = vadd.f32 %v512, %v534
        %v552 = vadd.f32 %v513, %v534
        %v553 = vadd.f32 %v514, %v534
        %v554 = vadd.f32 %v515, %v534
        %v555 = vadd.f32 %v516, %v534
        %v556 = vadd.f32 %v517, %v534
        %v557 = vadd.f32 %v518, %v534
        %v558 = vadd.f32 %v519, %v534
        %v559 = vadd.f32 %v520, %v534
        %v560 = vadd.f32 %v521, %v534
        %v561 = vadd.f32 %v522, %v534
        %v562 = vadd.f32 %v523, %v534
        %v563 = vadd.f32 %v524, %v534
        %v564 = vadd.f32 %v525, %v534
        %v565 = vadd.f32 %v526, %v534
        %v566 = vadd.f32 %v527, %v534
        %v567 = vadd.f32 %v528, %v534
        %v568 = vmax.f32 %v536, 0.0
        %v569 = vmax.f32 %v537, 0.0
        %v570 = vmax.f32 %v538, 0.0
        %v571 = vmax.f32 %v539, 0.0
        %v572 = vmax.f32 %v540, 0.0
        %v573 = vmax.f32 %v541, 0.0
        %v574 = vmax.f32 %v542, 0.0
        %v575 = vmax.f32 %v543, 0.0
        %v576 = vmax.f32 %v544, 0.0
        %v577 = vmax.f32 %v545, 0.0
        %v578 = vmax.f32 %v546, 0.0
        %v579 = vmax.f32 %v547, 0.0
        %v580 = vmax.f32 %v548, 0.0
        %v581 = vmax.f32 %v549, 0.0
        %v582 = vmax.f32 %v550, 0.0
        %v583 = vmax.f32 %v551, 0.0
        %v584 = vmax.f32 %v552, 0.0
        %v585 = vmax.f32 %v553, 0.0
        %v586 = vmax.f32 %v554, 0.0
        %v587 = vmax.f32 %v555, 0.0
        %v588 = vmax.f32 %v556, 0.0
        %v589 = vmax.f32 %v557, 0.0
        %v590 = vmax.f32 %v558, 0.0
        %v591 = vmax.f32 %v559, 0.0
        %v592 = vmax.f32 %v560, 0.0
        %v593 = vmax.f32 %v561, 0.0
        %v594 = vmax.f32 %v562, 0.0
        %v595 = vmax.f32 %v563, 0.0
        %v596 = vmax.f32 %v564, 0.0
        %v597 = vmax.f32 %v565, 0.0
        %v598 = vmax.f32 %v566, 0.0
        %v599 = vmax.f32 %v567, 0.0
        %v600 = vpack.c.bf16 %v569, %v568
        %v601 = vpack.c.bf16 %v571, %v570
        %v602 = vpack.c.bf16 %v573, %v572
        %v603 = vpack.c.bf16 %v575, %v574
        %v604 = vpack.c.bf16 %v577, %v576
        %v605 = vpack.c.bf16 %v579, %v578
        %v606 = vpack.c.bf16 %v581, %v580
        %v607 = vpack.c.bf16 %v583, %v582
        %v608 = vpack.c.bf16 %v585, %v584
        %v609 = vpack.c.bf16 %v587, %v586
        %v610 = vpack.c.bf16 %v589, %v588
        %v611 = vpack.c.bf16 %v591, %v590
        %v612 = vpack.c.bf16 %v593, %v592
        %v613 = vpack.c.bf16 %v595, %v594
        %v614 = vpack.c.bf16 %v597, %v596
        %v615 = vpack.c.bf16 %v599, %v598
        %v632 = vunpack.c.l.b16 %v600
        %v633 = vunpack.c.h.b16 %v600
        %v634 = vunpack.c.l.b16 %v601
        %v635 = vunpack.c.h.b16 %v601
        %v636 = vunpack.c.l.b16 %v602
        %v637 = vunpack.c.h.b16 %v602
        %v638 = vunpack.c.l.b16 %v603
        %v639 = vunpack.c.h.b16 %v603
        %v640 = vunpack.c.l.b16 %v604
        %v641 = vunpack.c.h.b16 %v604
        %v642 = vunpack.c.l.b16 %v605
        %v643 = vunpack.c.h.b16 %v605
        %v644 = vunpack.c.l.b16 %v606
        %v645 = vunpack.c.h.b16 %v606
        %v646 = vunpack.c.l.b16 %v607
        %v647 = vunpack.c.h.b16 %v607
        %v648 = vunpack.c.l.b16 %v608
        %v649 = vunpack.c.h.b16 %v608
        %v650 = vunpack.c.l.b16 %v609
        %v651 = vunpack.c.h.b16 %v609
        %v652 = vunpack.c.l.b16 %v610
        %v653 = vunpack.c.h.b16 %v610
        %v654 = vunpack.c.l.b16 %v611
        %v655 = vunpack.c.h.b16 %v611
        %v656 = vunpack.c.l.b16 %v612
        %v657 = vunpack.c.h.b16 %v612
        %v658 = vunpack.c.l.b16 %v613
        %v659 = vunpack.c.h.b16 %v613
        %v660 = vunpack.c.l.b16 %v614
        %v661 = vunpack.c.h.b16 %v614
        %v662 = vunpack.c.l.b16 %v615
        %v663 = vunpack.c.h.b16 %v615
        %v664 = vpack.c.b16 %v632, %v632
        %v665 = vpack.c.b16 %v633, %v633
        %v666 = vpack.c.b16 %v634, %v634
        %v667 = vpack.c.b16 %v635, %v635
        %v668 = vpack.c.b16 %v636, %v636
        %v669 = vpack.c.b16 %v637, %v637
        %v670 = vpack.c.b16 %v638, %v638
        %v671 = vpack.c.b16 %v639, %v639
        %v672 = vpack.c.b16 %v640, %v640
        %v673 = vpack.c.b16 %v641, %v641
        %v674 = vpack.c.b16 %v642, %v642
        %v675 = vpack.c.b16 %v643, %v643
        %v676 = vpack.c.b16 %v644, %v644
        %v677 = vpack.c.b16 %v645, %v645
        %v678 = vpack.c.b16 %v646, %v646
        %v679 = vpack.c.b16 %v647, %v647
        %v680 = vpack.c.b16 %v648, %v648
        %v681 = vpack.c.b16 %v649, %v649
        %v682 = vpack.c.b16 %v650, %v650
        %v683 = vpack.c.b16 %v651, %v651
        %v684 = vpack.c.b16 %v652, %v652
        %v685 = vpack.c.b16 %v653, %v653
        %v686 = vpack.c.b16 %v654, %v654
        %v687 = vpack.c.b16 %v655, %v655
        %v688 = vpack.c.b16 %v656, %v656
        %v689 = vpack.c.b16 %v657, %v657
        %v690 = vpack.c.b16 %v658, %v658
        %v691 = vpack.c.b16 %v659, %v659
        %v692 = vpack.c.b16 %v660, %v660
        %v693 = vpack.c.b16 %v661, %v661
        %v694 = vpack.c.b16 %v662, %v662
        %v695 = vpack.c.b16 %v663, %v663
        %s728 = scalar_lea.vmem [#allocation2], 20
        %729 = vst [vmem:[%s728 + $0x8] sm:$0xf] %v664
        %730 = vst [vmem:[%s728 + $0xc] sm:$0xf] %v665
        %731 = vst [vmem:[%s728 + $0x1c] sm:$0xf] %v666
        %732 = vst [vmem:[%s728 + $0x20] sm:$0xf] %v667
        %733 = vst [vmem:[%s728 + $0x30] sm:$0xf] %v668
        %734 = vst [vmem:[%s728 + $0x34] sm:$0xf] %v669
        %735 = vst [vmem:[%s728 + $0x44] sm:$0xf] %v670
        %736 = vst [vmem:[%s728 + $0x48] sm:$0xf] %v671
        %737 = vst [vmem:[%s728 + $0x58] sm:$0xf] %v672
        %738 = vst [vmem:[%s728 + $0x5c] sm:$0xf] %v673
        %739 = vst [vmem:[%s728 + $0x6c] sm:$0xf] %v674
        %740 = vst [vmem:[%s728 + $0x70] sm:$0xf] %v675
        %741 = vst [vmem:[%s728 + $0x80] sm:$0xf] %v676
        %742 = vst [vmem:[%s728 + $0x84] sm:$0xf] %v677
        %743 = vst [vmem:[%s728 + $0x94] sm:$0xf] %v678
        %744 = vst [vmem:[%s728 + $0x98] sm:$0xf] %v679
        %745 = vst [vmem:[%s728 + $0xa8] sm:$0xf] %v680
        %746 = vst [vmem:[%s728 + $0xac] sm:$0xf] %v681
        %747 = vst [vmem:[%s728 + $0xbc] sm:$0xf] %v682
        %748 = vst [vmem:[%s728 + $0xc0] sm:$0xf] %v683
        %749 = vst [vmem:[%s728 + $0xd0] sm:$0xf] %v684
        %750 = vst [vmem:[%s728 + $0xd4] sm:$0xf] %v685
        %751 = vst [vmem:[%s728 + $0xe4] sm:$0xf] %v686
        %752 = vst [vmem:[%s728 + $0xe8] sm:$0xf] %v687
        %753 = vst [vmem:[%s728 + $0xf8] sm:$0xf] %v688
        %754 = vst [vmem:[%s728 + $0xfc] sm:$0xf] %v689
        %755 = vst [vmem:[%s728 + $0x10c] sm:$0xf] %v690
        %756 = vst [vmem:[%s728 + $0x110] sm:$0xf] %v691
        %757 = vst [vmem:[%s728 + $0x120] sm:$0xf] %v692
        %758 = vst [vmem:[%s728 + $0x124] sm:$0xf] %v693
        %759 = vst [vmem:[%s728 + $0x134] sm:$0xf] %v694
        %760 = vst [vmem:[%s728 + $0x138] sm:$0xf] %v695
        %v761 = vld [vmem:[#allocation2 + $0x4] sm:$0x8]
        %v762 = vld [vmem:[#allocation2 + $0x8] sm:$0xf]
        %v763 = vld [vmem:[#allocation2 + $0xc] sm:$0xf]
        %v764 = vld [vmem:[#allocation2 + $0x18] sm:$0x8]
        %v765 = vld [vmem:[#allocation2 + $0x1c] sm:$0xf]
        %v766 = vld [vmem:[#allocation2 + $0x20] sm:$0xf]
        %v767 = vld [vmem:[#allocation2 + $0x2c] sm:$0x8]
        %v768 = vld [vmem:[#allocation2 + $0x30] sm:$0xf]
        %v769 = vld [vmem:[#allocation2 + $0x34] sm:$0xf]
        %v770 = vld [vmem:[#allocation2 + $0x40] sm:$0x8]
        %v771 = vld [vmem:[#allocation2 + $0x44] sm:$0xf]
        %v772 = vld [vmem:[#allocation2 + $0x48] sm:$0xf]
        %v773 = vld [vmem:[#allocation2 + $0x54] sm:$0x8]
        %v774 = vld [vmem:[#allocation2 + $0x58] sm:$0xf]
        %v775 = vld [vmem:[#allocation2 + $0x5c] sm:$0xf]
        %v776 = vld [vmem:[#allocation2 + $0x68] sm:$0x8]
        %v777 = vld [vmem:[#allocation2 + $0x6c] sm:$0xf]
        %v778 = vld [vmem:[#allocation2 + $0x70] sm:$0xf]
        %v779 = vld [vmem:[#allocation2 + $0x7c] sm:$0x8]
        %v780 = vld [vmem:[#allocation2 + $0x80] sm:$0xf]
        %v781 = vld [vmem:[#allocation2 + $0x84] sm:$0xf]
        %v782 = vld [vmem:[#allocation2 + $0x90] sm:$0x8]
        %v783 = vld [vmem:[#allocation2 + $0x94] sm:$0xf]
        %v784 = vld [vmem:[#allocation2 + $0x98] sm:$0xf]
        %v785 = vld [vmem:[#allocation2 + $0xa4] sm:$0x8]
        %v786 = vld [vmem:[#allocation2 + $0xa8] sm:$0xf]
        %v787 = vld [vmem:[#allocation2 + $0xac] sm:$0xf]
        %v788 = vld [vmem:[#allocation2 + $0xb8] sm:$0x8]
        %v789 = vld [vmem:[#allocation2 + $0xbc] sm:$0xf]
        %v790 = vld [vmem:[#allocation2 + $0xc0] sm:$0xf]
        %v791 = vld [vmem:[#allocation2 + $0xcc] sm:$0x8]
        %v792 = vld [vmem:[#allocation2 + $0xd0] sm:$0xf]
        %v793 = vld [vmem:[#allocation2 + $0xd4] sm:$0xf]
        %v794 = vld [vmem:[#allocation2 + $0xe0] sm:$0x8]
        %v795 = vld [vmem:[#allocation2 + $0xe4] sm:$0xf]
        %v796 = vld [vmem:[#allocation2 + $0xe8] sm:$0xf]
        %v797 = vld [vmem:[#allocation2 + $0xf4] sm:$0x8]
        %v798 = vld [vmem:[#allocation2 + $0xf8] sm:$0xf]
        %v799 = vld [vmem:[#allocation2 + $0xfc] sm:$0xf]
        %v800 = vld [vmem:[#allocation2 + $0x108] sm:$0x8]
        %v801 = vld [vmem:[#allocation2 + $0x10c] sm:$0xf]
        %v802 = vld [vmem:[#allocation2 + $0x110] sm:$0xf]
        %v803 = vld [vmem:[#allocation2 + $0x11c] sm:$0x8]
        %v804 = vld [vmem:[#allocation2 + $0x120] sm:$0xf]
        %v805 = vld [vmem:[#allocation2 + $0x124] sm:$0xf]
        %v806 = vld [vmem:[#allocation2 + $0x130] sm:$0x8]
        %v807 = vld [vmem:[#allocation2 + $0x134] sm:$0xf]
        %v808 = vld [vmem:[#allocation2 + $0x138] sm:$0xf]
        %v857 = vunpack.c.l.b16 %v761
        %v858 = vunpack.c.l.b16 %v762
        %v859 = vunpack.c.l.b16 %v763
        %v860 = vunpack.c.l.b16 %v764
        %v861 = vunpack.c.l.b16 %v765
        %v862 = vunpack.c.l.b16 %v766
        %v863 = vunpack.c.l.b16 %v767
        %v864 = vunpack.c.l.b16 %v768
        %v865 = vunpack.c.l.b16 %v769
        %v866 = vunpack.c.l.b16 %v770
        %v867 = vunpack.c.l.b16 %v771
        %v868 = vunpack.c.l.b16 %v772
        %v869 = vunpack.c.l.b16 %v773
        %v870 = vunpack.c.l.b16 %v774
        %v871 = vunpack.c.l.b16 %v775
        %v872 = vunpack.c.l.b16 %v776
        %v873 = vunpack.c.l.b16 %v777
        %v874 = vunpack.c.l.b16 %v778
        %v875 = vunpack.c.l.b16 %v779
        %v876 = vunpack.c.l.b16 %v780
        %v877 = vunpack.c.l.b16 %v781
        %v878 = vunpack.c.l.b16 %v782
        %v879 = vunpack.c.l.b16 %v783
        %v880 = vunpack.c.l.b16 %v784
        %v881 = vunpack.c.l.b16 %v785
        %v882 = vunpack.c.l.b16 %v786
        %v883 = vunpack.c.l.b16 %v787
        %v884 = vunpack.c.l.b16 %v788
        %v885 = vunpack.c.l.b16 %v789
        %v886 = vunpack.c.l.b16 %v790
        %v887 = vunpack.c.l.b16 %v791
        %v888 = vunpack.c.l.b16 %v792
        %v889 = vunpack.c.l.b16 %v793
        %v890 = vunpack.c.l.b16 %v794
        %v891 = vunpack.c.l.b16 %v795
        %v892 = vunpack.c.l.b16 %v796
        %v893 = vunpack.c.l.b16 %v797
        %v894 = vunpack.c.l.b16 %v798
        %v895 = vunpack.c.l.b16 %v799
        %v896 = vunpack.c.l.b16 %v800
        %v897 = vunpack.c.l.b16 %v801
        %v898 = vunpack.c.l.b16 %v802
        %v899 = vunpack.c.l.b16 %v803
        %v900 = vunpack.c.l.b16 %v804
        %v901 = vunpack.c.l.b16 %v805
        %v902 = vunpack.c.l.b16 %v806
        %v903 = vunpack.c.l.b16 %v807
        %v904 = vunpack.c.l.b16 %v808
        %v905 = vpack.c.b16 %v858, %v857
        %v906 = vpack.c.b16 %v859, %v859
        %v907 = vpack.c.b16 %v861, %v860
        %v908 = vpack.c.b16 %v862, %v862
        %v909 = vpack.c.b16 %v864, %v863
        %v910 = vpack.c.b16 %v865, %v865
        %v911 = vpack.c.b16 %v867, %v866
        %v912 = vpack.c.b16 %v868, %v868
        %v913 = vpack.c.b16 %v870, %v869
        %v914 = vpack.c.b16 %v871, %v871
        %v915 = vpack.c.b16 %v873, %v872
        %v916 = vpack.c.b16 %v874, %v874
        %v917 = vpack.c.b16 %v876, %v875
        %v918 = vpack.c.b16 %v877, %v877
        %v919 = vpack.c.b16 %v879, %v878
        %v920 = vpack.c.b16 %v880, %v880
        %v921 = vpack.c.b16 %v882, %v881
        %v922 = vpack.c.b16 %v883, %v883
        %v923 = vpack.c.b16 %v885, %v884
        %v924 = vpack.c.b16 %v886, %v886
        %v925 = vpack.c.b16 %v888, %v887
        %v926 = vpack.c.b16 %v889, %v889
        %v927 = vpack.c.b16 %v891, %v890
        %v928 = vpack.c.b16 %v892, %v892
        %v929 = vpack.c.b16 %v894, %v893
        %v930 = vpack.c.b16 %v895, %v895
        %v931 = vpack.c.b16 %v897, %v896
        %v932 = vpack.c.b16 %v898, %v898
        %v933 = vpack.c.b16 %v900, %v899
        %v934 = vpack.c.b16 %v901, %v901
        %v935 = vpack.c.b16 %v903, %v902
        %v936 = vpack.c.b16 %v904, %v904
        %vm937 = vsmask.f32 4352
        %v939 = vshrl.u32 %v905, 16
        %v941 = vrot.slane %v939, 3
        %v942 = vshll.u32 %v905, 16
        %v944 = vrot.slane %v942, 4
        %v945 = vor.u32 %v941, %v944
        %v947 = vshrl.u32 %v906, 16
        %v949 = vrot.slane %v947, 3
        %v950 = vshll.u32 %v906, 16
        %v952 = vrot.slane %v950, 4
        %v953 = vor.u32 %v949, %v952
        %v954 = vsel %vm937, %v945, %v953
        %v956 = vshrl.u32 %v907, 16
        %v958 = vrot.slane %v956, 3
        %v959 = vshll.u32 %v907, 16
        %v961 = vrot.slane %v959, 4
        %v962 = vor.u32 %v958, %v961
        %v964 = vshrl.u32 %v908, 16
        %v966 = vrot.slane %v964, 3
        %v967 = vshll.u32 %v908, 16
        %v969 = vrot.slane %v967, 4
        %v970 = vor.u32 %v966, %v969
        %v971 = vsel %vm937, %v962, %v970
        %v973 = vshrl.u32 %v909, 16
        %v975 = vrot.slane %v973, 3
        %v976 = vshll.u32 %v909, 16
        %v978 = vrot.slane %v976, 4
        %v979 = vor.u32 %v975, %v978
        %v981 = vshrl.u32 %v910, 16
        %v983 = vrot.slane %v981, 3
        %v984 = vshll.u32 %v910, 16
        %v986 = vrot.slane %v984, 4
        %v987 = vor.u32 %v983, %v986
        %v988 = vsel %vm937, %v979, %v987
        %v990 = vshrl.u32 %v911, 16
        %v992 = vrot.slane %v990, 3
        %v993 = vshll.u32 %v911, 16
        %v995 = vrot.slane %v993, 4
        %v996 = vor.u32 %v992, %v995
        %v998 = vshrl.u32 %v912, 16
        %v1000 = vrot.slane %v998, 3
        %v1001 = vshll.u32 %v912, 16
        %v1003 = vrot.slane %v1001, 4
        %v1004 = vor.u32 %v1000, %v1003
        %v1005 = vsel %vm937, %v996, %v1004
        %v1007 = vshrl.u32 %v913, 16
        %v1009 = vrot.slane %v1007, 3
        %v1010 = vshll.u32 %v913, 16
        %v1012 = vrot.slane %v1010, 4
        %v1013 = vor.u32 %v1009, %v1012
        %v1015 = vshrl.u32 %v914, 16
        %v1017 = vrot.slane %v1015, 3
        %v1018 = vshll.u32 %v914, 16
        %v1020 = vrot.slane %v1018, 4
        %v1021 = vor.u32 %v1017, %v1020
        %v1022 = vsel %vm937, %v1013, %v1021
        %v1024 = vshrl.u32 %v915, 16
        %v1026 = vrot.slane %v1024, 3
        %v1027 = vshll.u32 %v915, 16
        %v1029 = vrot.slane %v1027, 4
        %v1030 = vor.u32 %v1026, %v1029
        %v1032 = vshrl.u32 %v916, 16
        %v1034 = vrot.slane %v1032, 3
        %v1035 = vshll.u32 %v916, 16
        %v1037 = vrot.slane %v1035, 4
        %v1038 = vor.u32 %v1034, %v1037
        %v1039 = vsel %vm937, %v1030, %v1038
        %v1041 = vshrl.u32 %v917, 16
        %v1043 = vrot.slane %v1041, 3
        %v1044 = vshll.u32 %v917, 16
        %v1046 = vrot.slane %v1044, 4
        %v1047 = vor.u32 %v1043, %v1046
        %v1049 = vshrl.u32 %v918, 16
        %v1051 = vrot.slane %v1049, 3
        %v1052 = vshll.u32 %v918, 16
        %v1054 = vrot.slane %v1052, 4
        %v1055 = vor.u32 %v1051, %v1054
        %v1056 = vsel %vm937, %v1047, %v1055
        %v1058 = vshrl.u32 %v919, 16
        %v1060 = vrot.slane %v1058, 3
        %v1061 = vshll.u32 %v919, 16
        %v1063 = vrot.slane %v1061, 4
        %v1064 = vor.u32 %v1060, %v1063
        %v1066 = vshrl.u32 %v920, 16
        %v1068 = vrot.slane %v1066, 3
        %v1069 = vshll.u32 %v920, 16
        %v1071 = vrot.slane %v1069, 4
        %v1072 = vor.u32 %v1068, %v1071
        %v1073 = vsel %vm937, %v1064, %v1072
        %v1075 = vshrl.u32 %v921, 16
        %v1077 = vrot.slane %v1075, 3
        %v1078 = vshll.u32 %v921, 16
        %v1080 = vrot.slane %v1078, 4
        %v1081 = vor.u32 %v1077, %v1080
        %v1083 = vshrl.u32 %v922, 16
        %v1085 = vrot.slane %v1083, 3
        %v1086 = vshll.u32 %v922, 16
        %v1088 = vrot.slane %v1086, 4
        %v1089 = vor.u32 %v1085, %v1088
        %v1090 = vsel %vm937, %v1081, %v1089
        %v1092 = vshrl.u32 %v923, 16
        %v1094 = vrot.slane %v1092, 3
        %v1095 = vshll.u32 %v923, 16
        %v1097 = vrot.slane %v1095, 4
        %v1098 = vor.u32 %v1094, %v1097
        %v1100 = vshrl.u32 %v924, 16
        %v1102 = vrot.slane %v1100, 3
        %v1103 = vshll.u32 %v924, 16
        %v1105 = vrot.slane %v1103, 4
        %v1106 = vor.u32 %v1102, %v1105
        %v1107 = vsel %vm937, %v1098, %v1106
        %v1109 = vshrl.u32 %v925, 16
        %v1111 = vrot.slane %v1109, 3
        %v1112 = vshll.u32 %v925, 16
        %v1114 = vrot.slane %v1112, 4
        %v1115 = vor.u32 %v1111, %v1114
        %v1117 = vshrl.u32 %v926, 16
        %v1119 = vrot.slane %v1117, 3
        %v1120 = vshll.u32 %v926, 16
        %v1122 = vrot.slane %v1120, 4
        %v1123 = vor.u32 %v1119, %v1122
        %v1124 = vsel %vm937, %v1115, %v1123
        %v1126 = vshrl.u32 %v927, 16
        %v1128 = vrot.slane %v1126, 3
        %v1129 = vshll.u32 %v927, 16
        %v1131 = vrot.slane %v1129, 4
        %v1132 = vor.u32 %v1128, %v1131
        %v1134 = vshrl.u32 %v928, 16
        %v1136 = vrot.slane %v1134, 3
        %v1137 = vshll.u32 %v928, 16
        %v1139 = vrot.slane %v1137, 4
        %v1140 = vor.u32 %v1136, %v1139
        %v1141 = vsel %vm937, %v1132, %v1140
        %v1143 = vshrl.u32 %v929, 16
        %v1145 = vrot.slane %v1143, 3
        %v1146 = vshll.u32 %v929, 16
        %v1148 = vrot.slane %v1146, 4
        %v1149 = vor.u32 %v1145, %v1148
        %v1151 = vshrl.u32 %v930, 16
        %v1153 = vrot.slane %v1151, 3
        %v1154 = vshll.u32 %v930, 16
        %v1156 = vrot.slane %v1154, 4
        %v1157 = vor.u32 %v1153, %v1156
        %v1158 = vsel %vm937, %v1149, %v1157
        %v1160 = vshrl.u32 %v931, 16
        %v1162 = vrot.slane %v1160, 3
        %v1163 = vshll.u32 %v931, 16
        %v1165 = vrot.slane %v1163, 4
        %v1166 = vor.u32 %v1162, %v1165
        %v1168 = vshrl.u32 %v932, 16
        %v1170 = vrot.slane %v1168, 3
        %v1171 = vshll.u32 %v932, 16
        %v1173 = vrot.slane %v1171, 4
        %v1174 = vor.u32 %v1170, %v1173
        %v1175 = vsel %vm937, %v1166, %v1174
        %v1177 = vshrl.u32 %v933, 16
        %v1179 = vrot.slane %v1177, 3
        %v1180 = vshll.u32 %v933, 16
        %v1182 = vrot.slane %v1180, 4
        %v1183 = vor.u32 %v1179, %v1182
        %v1185 = vshrl.u32 %v934, 16
        %v1187 = vrot.slane %v1185, 3
        %v1188 = vshll.u32 %v934, 16
        %v1190 = vrot.slane %v1188, 4
        %v1191 = vor.u32 %v1187, %v1190
        %v1192 = vsel %vm937, %v1183, %v1191
        %v1194 = vshrl.u32 %v935, 16
        %v1196 = vrot.slane %v1194, 3
        %v1197 = vshll.u32 %v935, 16
        %v1199 = vrot.slane %v1197, 4
        %v1200 = vor.u32 %v1196, %v1199
        %v1202 = vshrl.u32 %v936, 16
        %v1204 = vrot.slane %v1202, 3
        %v1205 = vshll.u32 %v936, 16
        %v1207 = vrot.slane %v1205, 4
        %v1208 = vor.u32 %v1204, %v1207
        %v1209 = vsel %vm937, %v1200, %v1208
        %1226 = vst [vmem:[#allocation3] sm:$0xff] %v954
        %1227 = vst [vmem:[#allocation3 + $0x48] sm:$0xff] %v971
        %1228 = vst [vmem:[#allocation3 + $0x90] sm:$0xff] %v988
        %1229 = vst [vmem:[#allocation3 + $0xd8] sm:$0xff] %v1005
        %1230 = vst [vmem:[#allocation3 + $0x120] sm:$0xff] %v1022
        %1231 = vst [vmem:[#allocation3 + $0x168] sm:$0xff] %v1039
        %1232 = vst [vmem:[#allocation3 + $0x1b0] sm:$0xff] %v1056
        %1233 = vst [vmem:[#allocation3 + $0x1f8] sm:$0xff] %v1073
        %1234 = vst [vmem:[#allocation3 + $0x240] sm:$0xff] %v1090
        %1235 = vst [vmem:[#allocation3 + $0x288] sm:$0xff] %v1107
        %1236 = vst [vmem:[#allocation3 + $0x2d0] sm:$0xff] %v1124
        %1237 = vst [vmem:[#allocation3 + $0x318] sm:$0xff] %v1141
        %1238 = vst [vmem:[#allocation3 + $0x360] sm:$0xff] %v1158
        %1239 = vst [vmem:[#allocation3 + $0x3a8] sm:$0xff] %v1175
        %1240 = vst [vmem:[#allocation3 + $0x3f0] sm:$0xff] %v1192
        %1241 = vst [vmem:[#allocation3 + $0x438] sm:$0xff] %v1209
        %v1242 = vld [vmem:[#allocation2 + $0x8] sm:$0xf]
        %v1243 = vld [vmem:[#allocation2 + $0xc] sm:$0xf]
        %v1244 = vld [vmem:[#allocation2 + $0x1c] sm:$0xf]
        %v1245 = vld [vmem:[#allocation2 + $0x20] sm:$0xf]
        %v1246 = vld [vmem:[#allocation2 + $0x30] sm:$0xf]
        %v1247 = vld [vmem:[#allocation2 + $0x34] sm:$0xf]
        %v1248 = vld [vmem:[#allocation2 + $0x44] sm:$0xf]
        %v1249 = vld [vmem:[#allocation2 + $0x48] sm:$0xf]
        %v1250 = vld [vmem:[#allocation2 + $0x58] sm:$0xf]
        %v1251 = vld [vmem:[#allocation2 + $0x5c] sm:$0xf]
        %v1252 = vld [vmem:[#allocation2 + $0x6c] sm:$0xf]
        %v1253 = vld [vmem:[#allocation2 + $0x70] sm:$0xf]
        %v1254 = vld [vmem:[#allocation2 + $0x80] sm:$0xf]
        %v1255 = vld [vmem:[#allocation2 + $0x84] sm:$0xf]
        %v1256 = vld [vmem:[#allocation2 + $0x94] sm:$0xf]
        %v1257 = vld [vmem:[#allocation2 + $0x98] sm:$0xf]
        %v1258 = vld [vmem:[#allocation2 + $0xa8] sm:$0xf]
        %v1259 = vld [vmem:[#allocation2 + $0xac] sm:$0xf]
        %v1260 = vld [vmem:[#allocation2 + $0xbc] sm:$0xf]
        %v1261 = vld [vmem:[#allocation2 + $0xc0] sm:$0xf]
        %v1262 = vld [vmem:[#allocation2 + $0xd0] sm:$0xf]
        %v1263 = vld [vmem:[#allocation2 + $0xd4] sm:$0xf]
        %v1264 = vld [vmem:[#allocation2 + $0xe4] sm:$0xf]
        %v1265 = vld [vmem:[#allocation2 + $0xe8] sm:$0xf]
        %v1266 = vld [vmem:[#allocation2 + $0xf8] sm:$0xf]
        %v1267 = vld [vmem:[#allocation2 + $0xfc] sm:$0xf]
        %v1268 = vld [vmem:[#allocation2 + $0x10c] sm:$0xf]
        %v1269 = vld [vmem:[#allocation2 + $0x110] sm:$0xf]
        %v1270 = vld [vmem:[#allocation2 + $0x120] sm:$0xf]
        %v1271 = vld [vmem:[#allocation2 + $0x124] sm:$0xf]
        %v1272 = vld [vmem:[#allocation2 + $0x134] sm:$0xf]
        %v1273 = vld [vmem:[#allocation2 + $0x138] sm:$0xf]
        %v1306 = vunpack.c.l.b16 %v1242
        %v1307 = vunpack.c.l.b16 %v1243
        %v1308 = vunpack.c.l.b16 %v1244
        %v1309 = vunpack.c.l.b16 %v1245
        %v1310 = vunpack.c.l.b16 %v1246
        %v1311 = vunpack.c.l.b16 %v1247
        %v1312 = vunpack.c.l.b16 %v1248
        %v1313 = vunpack.c.l.b16 %v1249
        %v1314 = vunpack.c.l.b16 %v1250
        %v1315 = vunpack.c.l.b16 %v1251
        %v1316 = vunpack.c.l.b16 %v1252
        %v1317 = vunpack.c.l.b16 %v1253
        %v1318 = vunpack.c.l.b16 %v1254
        %v1319 = vunpack.c.l.b16 %v1255
        %v1320 = vunpack.c.l.b16 %v1256
        %v1321 = vunpack.c.l.b16 %v1257
        %v1322 = vunpack.c.l.b16 %v1258
        %v1323 = vunpack.c.l.b16 %v1259
        %v1324 = vunpack.c.l.b16 %v1260
        %v1325 = vunpack.c.l.b16 %v1261
        %v1326 = vunpack.c.l.b16 %v1262
        %v1327 = vunpack.c.l.b16 %v1263
        %v1328 = vunpack.c.l.b16 %v1264
        %v1329 = vunpack.c.l.b16 %v1265
        %v1330 = vunpack.c.l.b16 %v1266
        %v1331 = vunpack.c.l.b16 %v1267
        %v1332 = vunpack.c.l.b16 %v1268
        %v1333 = vunpack.c.l.b16 %v1269
        %v1334 = vunpack.c.l.b16 %v1270
        %v1335 = vunpack.c.l.b16 %v1271
        %v1336 = vunpack.c.l.b16 %v1272
        %v1337 = vunpack.c.l.b16 %v1273
        %v1338 = vpack.c.b16 %v1307, %v1306
        %v1339 = vpack.c.b16 %v1309, %v1308
        %v1340 = vpack.c.b16 %v1311, %v1310
        %v1341 = vpack.c.b16 %v1313, %v1312
        %v1342 = vpack.c.b16 %v1315, %v1314
        %v1343 = vpack.c.b16 %v1317, %v1316
        %v1344 = vpack.c.b16 %v1319, %v1318
        %v1345 = vpack.c.b16 %v1321, %v1320
        %v1346 = vpack.c.b16 %v1323, %v1322
        %v1347 = vpack.c.b16 %v1325, %v1324
        %v1348 = vpack.c.b16 %v1327, %v1326
        %v1349 = vpack.c.b16 %v1329, %v1328
        %v1350 = vpack.c.b16 %v1331, %v1330
        %v1351 = vpack.c.b16 %v1333, %v1332
        %v1352 = vpack.c.b16 %v1335, %v1334
        %v1353 = vpack.c.b16 %v1337, %v1336
        %1370 = vst [vmem:[#allocation3 + $0x8] sm:$0xff] %v1338
        %1371 = vst [vmem:[#allocation3 + $0x50] sm:$0xff] %v1339
        %1372 = vst [vmem:[#allocation3 + $0x98] sm:$0xff] %v1340
        %1373 = vst [vmem:[#allocation3 + $0xe0] sm:$0xff] %v1341
        %1374 = vst [vmem:[#allocation3 + $0x128] sm:$0xff] %v1342
        %1375 = vst [vmem:[#allocation3 + $0x170] sm:$0xff] %v1343
        %1376 = vst [vmem:[#allocation3 + $0x1b8] sm:$0xff] %v1344
        %1377 = vst [vmem:[#allocation3 + $0x200] sm:$0xff] %v1345
        %1378 = vst [vmem:[#allocation3 + $0x248] sm:$0xff] %v1346
        %1379 = vst [vmem:[#allocation3 + $0x290] sm:$0xff] %v1347
        %1380 = vst [vmem:[#allocation3 + $0x2d8] sm:$0xff] %v1348
        %1381 = vst [vmem:[#allocation3 + $0x320] sm:$0xff] %v1349
        %1382 = vst [vmem:[#allocation3 + $0x368] sm:$0xff] %v1350
        %1383 = vst [vmem:[#allocation3 + $0x3b0] sm:$0xff] %v1351
        %1384 = vst [vmem:[#allocation3 + $0x3f8] sm:$0xff] %v1352
        %1385 = vst [vmem:[#allocation3 + $0x440] sm:$0xff] %v1353
        %v1386 = vld [vmem:[#allocation2 + $0x8] sm:$0xf]
        %v1387 = vld [vmem:[#allocation2 + $0xc] sm:$0xf]
        %v1388 = vld [vmem:[#allocation2 + $0x10] sm:$0x1]
        %v1389 = vld [vmem:[#allocation2 + $0x1c] sm:$0xf]
        %v1390 = vld [vmem:[#allocation2 + $0x20] sm:$0xf]
        %v1391 = vld [vmem:[#allocation2 + $0x24] sm:$0x1]
        %v1392 = vld [vmem:[#allocation2 + $0x30] sm:$0xf]
        %v1393 = vld [vmem:[#allocation2 + $0x34] sm:$0xf]
        %v1394 = vld [vmem:[#allocation2 + $0x38] sm:$0x1]
        %v1395 = vld [vmem:[#allocation2 + $0x44] sm:$0xf]
        %v1396 = vld [vmem:[#allocation2 + $0x48] sm:$0xf]
        %v1397 = vld [vmem:[#allocation2 + $0x4c] sm:$0x1]
        %v1398 = vld [vmem:[#allocation2 + $0x58] sm:$0xf]
        %v1399 = vld [vmem:[#allocation2 + $0x5c] sm:$0xf]
        %v1400 = vld [vmem:[#allocation2 + $0x60] sm:$0x1]
        %v1401 = vld [vmem:[#allocation2 + $0x6c] sm:$0xf]
        %v1402 = vld [vmem:[#allocation2 + $0x70] sm:$0xf]
        %v1403 = vld [vmem:[#allocation2 + $0x74] sm:$0x1]
        %v1404 = vld [vmem:[#allocation2 + $0x80] sm:$0xf]
        %v1405 = vld [vmem:[#allocation2 + $0x84] sm:$0xf]
        %v1406 = vld [vmem:[#allocation2 + $0x88] sm:$0x1]
        %v1407 = vld [vmem:[#allocation2 + $0x94] sm:$0xf]
        %v1408 = vld [vmem:[#allocation2 + $0x98] sm:$0xf]
        %v1409 = vld [vmem:[#allocation2 + $0x9c] sm:$0x1]
        %v1410 = vld [vmem:[#allocation2 + $0xa8] sm:$0xf]
        %v1411 = vld [vmem:[#allocation2 + $0xac] sm:$0xf]
        %v1412 = vld [vmem:[#allocation2 + $0xb0] sm:$0x1]
        %v1413 = vld [vmem:[#allocation2 + $0xbc] sm:$0xf]
        %v1414 = vld [vmem:[#allocation2 + $0xc0] sm:$0xf]
        %v1415 = vld [vmem:[#allocation2 + $0xc4] sm:$0x1]
        %v1416 = vld [vmem:[#allocation2 + $0xd0] sm:$0xf]
        %v1417 = vld [vmem:[#allocation2 + $0xd4] sm:$0xf]
        %v1418 = vld [vmem:[#allocation2 + $0xd8] sm:$0x1]
        %v1419 = vld [vmem:[#allocation2 + $0xe4] sm:$0xf]
        %v1420 = vld [vmem:[#allocation2 + $0xe8] sm:$0xf]
        %v1421 = vld [vmem:[#allocation2 + $0xec] sm:$0x1]
        %v1422 = vld [vmem:[#allocation2 + $0xf8] sm:$0xf]
        %v1423 = vld [vmem:[#allocation2 + $0xfc] sm:$0xf]
        %v1424 = vld [vmem:[#allocation2 + $0x100] sm:$0x1]
        %v1425 = vld [vmem:[#allocation2 + $0x10c] sm:$0xf]
        %v1426 = vld [vmem:[#allocation2 + $0x110] sm:$0xf]
        %v1427 = vld [vmem:[#allocation2 + $0x114] sm:$0x1]
        %v1428 = vld [vmem:[#allocation2 + $0x120] sm:$0xf]
        %v1429 = vld [vmem:[#allocation2 + $0x124] sm:$0xf]
        %v1430 = vld [vmem:[#allocation2 + $0x128] sm:$0x1]
        %v1431 = vld [vmem:[#allocation2 + $0x134] sm:$0xf]
        %v1432 = vld [vmem:[#allocation2 + $0x138] sm:$0xf]
        %v1433 = vld [vmem:[#allocation2 + $0x13c] sm:$0x1]
        %v1482 = vunpack.c.l.b16 %v1386
        %v1483 = vunpack.c.l.b16 %v1387
        %v1484 = vunpack.c.l.b16 %v1388
        %v1485 = vunpack.c.l.b16 %v1389
        %v1486 = vunpack.c.l.b16 %v1390
        %v1487 = vunpack.c.l.b16 %v1391
        %v1488 = vunpack.c.l.b16 %v1392
        %v1489 = vunpack.c.l.b16 %v1393
        %v1490 = vunpack.c.l.b16 %v1394
        %v1491 = vunpack.c.l.b16 %v1395
        %v1492 = vunpack.c.l.b16 %v1396
        %v1493 = vunpack.c.l.b16 %v1397
        %v1494 = vunpack.c.l.b16 %v1398
        %v1495 = vunpack.c.l.b16 %v1399
        %v1496 = vunpack.c.l.b16 %v1400
        %v1497 = vunpack.c.l.b16 %v1401
        %v1498 = vunpack.c.l.b16 %v1402
        %v1499 = vunpack.c.l.b16 %v1403
        %v1500 = vunpack.c.l.b16 %v1404
        %v1501 = vunpack.c.l.b16 %v1405
        %v1502 = vunpack.c.l.b16 %v1406
        %v1503 = vunpack.c.l.b16 %v1407
        %v1504 = vunpack.c.l.b16 %v1408
        %v1505 = vunpack.c.l.b16 %v1409
        %v1506 = vunpack.c.l.b16 %v1410
        %v1507 = vunpack.c.l.b16 %v1411
        %v1508 = vunpack.c.l.b16 %v1412
        %v1509 = vunpack.c.l.b16 %v1413
        %v1510 = vunpack.c.l.b16 %v1414
        %v1511 = vunpack.c.l.b16 %v1415
        %v1512 = vunpack.c.l.b16 %v1416
        %v1513 = vunpack.c.l.b16 %v1417
        %v1514 = vunpack.c.l.b16 %v1418
        %v1515 = vunpack.c.l.b16 %v1419
        %v1516 = vunpack.c.l.b16 %v1420
        %v1517 = vunpack.c.l.b16 %v1421
        %v1518 = vunpack.c.l.b16 %v1422
        %v1519 = vunpack.c.l.b16 %v1423
        %v1520 = vunpack.c.l.b16 %v1424
        %v1521 = vunpack.c.l.b16 %v1425
        %v1522 = vunpack.c.l.b16 %v1426
        %v1523 = vunpack.c.l.b16 %v1427
        %v1524 = vunpack.c.l.b16 %v1428
        %v1525 = vunpack.c.l.b16 %v1429
        %v1526 = vunpack.c.l.b16 %v1430
        %v1527 = vunpack.c.l.b16 %v1431
        %v1528 = vunpack.c.l.b16 %v1432
        %v1529 = vunpack.c.l.b16 %v1433
        %v1530 = vpack.c.b16 %v1483, %v1482
        %v1531 = vpack.c.b16 %v1484, %v1484
        %v1532 = vpack.c.b16 %v1486, %v1485
        %v1533 = vpack.c.b16 %v1487, %v1487
        %v1534 = vpack.c.b16 %v1489, %v1488
        %v1535 = vpack.c.b16 %v1490, %v1490
        %v1536 = vpack.c.b16 %v1492, %v1491
        %v1537 = vpack.c.b16 %v1493, %v1493
        %v1538 = vpack.c.b16 %v1495, %v1494
        %v1539 = vpack.c.b16 %v1496, %v1496
        %v1540 = vpack.c.b16 %v1498, %v1497
        %v1541 = vpack.c.b16 %v1499, %v1499
        %v1542 = vpack.c.b16 %v1501, %v1500
        %v1543 = vpack.c.b16 %v1502, %v1502
        %v1544 = vpack.c.b16 %v1504, %v1503
        %v1545 = vpack.c.b16 %v1505, %v1505
        %v1546 = vpack.c.b16 %v1507, %v1506
        %v1547 = vpack.c.b16 %v1508, %v1508
        %v1548 = vpack.c.b16 %v1510, %v1509
        %v1549 = vpack.c.b16 %v1511, %v1511
        %v1550 = vpack.c.b16 %v1513, %v1512
        %v1551 = vpack.c.b16 %v1514, %v1514
        %v1552 = vpack.c.b16 %v1516, %v1515
        %v1553 = vpack.c.b16 %v1517, %v1517
        %v1554 = vpack.c.b16 %v1519, %v1518
        %v1555 = vpack.c.b16 %v1520, %v1520
        %v1556 = vpack.c.b16 %v1522, %v1521
        %v1557 = vpack.c.b16 %v1523, %v1523
        %v1558 = vpack.c.b16 %v1525, %v1524
        %v1559 = vpack.c.b16 %v1526, %v1526
        %v1560 = vpack.c.b16 %v1528, %v1527
        %v1561 = vpack.c.b16 %v1529, %v1529
        %vm1562 = vsmask.f32 7424
        %v1564 = vshrl.u32 %v1530, 16
        %v1566 = vshll.u32 %v1530, 16
        %v1568 = vrot.slane %v1566, 1
        %v1569 = vor.u32 %v1564, %v1568
        %v1571 = vshll.u32 %v1531, 16
        %v1573 = vrot.slane %v1571, 1
        %v1574 = vsel %vm1562, %v1569, %v1573
        %v1576 = vshrl.u32 %v1532, 16
        %v1578 = vshll.u32 %v1532, 16
        %v1580 = vrot.slane %v1578, 1
        %v1581 = vor.u32 %v1576, %v1580
        %v1583 = vshll.u32 %v1533, 16
        %v1585 = vrot.slane %v1583, 1
        %v1586 = vsel %vm1562, %v1581, %v1585
        %v1588 = vshrl.u32 %v1534, 16
        %v1590 = vshll.u32 %v1534, 16
        %v1592 = vrot.slane %v1590, 1
        %v1593 = vor.u32 %v1588, %v1592
        %v1595 = vshll.u32 %v1535, 16
        %v1597 = vrot.slane %v1595, 1
        %v1598 = vsel %vm1562, %v1593, %v1597
        %v1600 = vshrl.u32 %v1536, 16
        %v1602 = vshll.u32 %v1536, 16
        %v1604 = vrot.slane %v1602, 1
        %v1605 = vor.u32 %v1600, %v1604
        %v1607 = vshll.u32 %v1537, 16
        %v1609 = vrot.slane %v1607, 1
        %v1610 = vsel %vm1562, %v1605, %v1609
        %v1612 = vshrl.u32 %v1538, 16
        %v1614 = vshll.u32 %v1538, 16
        %v1616 = vrot.slane %v1614, 1
        %v1617 = vor.u32 %v1612, %v1616
        %v1619 = vshll.u32 %v1539, 16
        %v1621 = vrot.slane %v1619, 1
        %v1622 = vsel %vm1562, %v1617, %v1621
        %v1624 = vshrl.u32 %v1540, 16
        %v1626 = vshll.u32 %v1540, 16
        %v1628 = vrot.slane %v1626, 1
        %v1629 = vor.u32 %v1624, %v1628
        %v1631 = vshll.u32 %v1541, 16
        %v1633 = vrot.slane %v1631, 1
        %v1634 = vsel %vm1562, %v1629, %v1633
        %v1636 = vshrl.u32 %v1542, 16
        %v1638 = vshll.u32 %v1542, 16
        %v1640 = vrot.slane %v1638, 1
        %v1641 = vor.u32 %v1636, %v1640
        %v1643 = vshll.u32 %v1543, 16
        %v1645 = vrot.slane %v1643, 1
        %v1646 = vsel %vm1562, %v1641, %v1645
        %v1648 = vshrl.u32 %v1544, 16
        %v1650 = vshll.u32 %v1544, 16
        %v1652 = vrot.slane %v1650, 1
        %v1653 = vor.u32 %v1648, %v1652
        %v1655 = vshll.u32 %v1545, 16
        %v1657 = vrot.slane %v1655, 1
        %v1658 = vsel %vm1562, %v1653, %v1657
        %v1660 = vshrl.u32 %v1546, 16
        %v1662 = vshll.u32 %v1546, 16
        %v1664 = vrot.slane %v1662, 1
        %v1665 = vor.u32 %v1660, %v1664
        %v1667 = vshll.u32 %v1547, 16
        %v1669 = vrot.slane %v1667, 1
        %v1670 = vsel %vm1562, %v1665, %v1669
        %v1672 = vshrl.u32 %v1548, 16
        %v1674 = vshll.u32 %v1548, 16
        %v1676 = vrot.slane %v1674, 1
        %v1677 = vor.u32 %v1672, %v1676
        %v1679 = vshll.u32 %v1549, 16
        %v1681 = vrot.slane %v1679, 1
        %v1682 = vsel %vm1562, %v1677, %v1681
        %v1684 = vshrl.u32 %v1550, 16
        %v1686 = vshll.u32 %v1550, 16
        %v1688 = vrot.slane %v1686, 1
        %v1689 = vor.u32 %v1684, %v1688
        %v1691 = vshll.u32 %v1551, 16
        %v1693 = vrot.slane %v1691, 1
        %v1694 = vsel %vm1562, %v1689, %v1693
        %v1696 = vshrl.u32 %v1552, 16
        %v1698 = vshll.u32 %v1552, 16
        %v1700 = vrot.slane %v1698, 1
        %v1701 = vor.u32 %v1696, %v1700
        %v1703 = vshll.u32 %v1553, 16
        %v1705 = vrot.slane %v1703, 1
        %v1706 = vsel %vm1562, %v1701, %v1705
        %v1708 = vshrl.u32 %v1554, 16
        %v1710 = vshll.u32 %v1554, 16
        %v1712 = vrot.slane %v1710, 1
        %v1713 = vor.u32 %v1708, %v1712
        %v1715 = vshll.u32 %v1555, 16
        %v1717 = vrot.slane %v1715, 1
        %v1718 = vsel %vm1562, %v1713, %v1717
        %v1720 = vshrl.u32 %v1556, 16
        %v1722 = vshll.u32 %v1556, 16
        %v1724 = vrot.slane %v1722, 1
        %v1725 = vor.u32 %v1720, %v1724
        %v1727 = vshll.u32 %v1557, 16
        %v1729 = vrot.slane %v1727, 1
        %v1730 = vsel %vm1562, %v1725, %v1729
        %v1732 = vshrl.u32 %v1558, 16
        %v1734 = vshll.u32 %v1558, 16
        %v1736 = vrot.slane %v1734, 1
        %v1737 = vor.u32 %v1732, %v1736
        %v1739 = vshll.u32 %v1559, 16
        %v1741 = vrot.slane %v1739, 1
        %v1742 = vsel %vm1562, %v1737, %v1741
        %v1744 = vshrl.u32 %v1560, 16
        %v1746 = vshll.u32 %v1560, 16
        %v1748 = vrot.slane %v1746, 1
        %v1749 = vor.u32 %v1744, %v1748
        %v1751 = vshll.u32 %v1561, 16
        %v1753 = vrot.slane %v1751, 1
        %v1754 = vsel %vm1562, %v1749, %v1753
        %1771 = vst [vmem:[#allocation3 + $0x10] sm:$0xff] %v1574
        %1772 = vst [vmem:[#allocation3 + $0x58] sm:$0xff] %v1586
        %1773 = vst [vmem:[#allocation3 + $0xa0] sm:$0xff] %v1598
        %1774 = vst [vmem:[#allocation3 + $0xe8] sm:$0xff] %v1610
        %1775 = vst [vmem:[#allocation3 + $0x130] sm:$0xff] %v1622
        %1776 = vst [vmem:[#allocation3 + $0x178] sm:$0xff] %v1634
        %1777 = vst [vmem:[#allocation3 + $0x1c0] sm:$0xff] %v1646
        %1778 = vst [vmem:[#allocation3 + $0x208] sm:$0xff] %v1658
        %1779 = vst [vmem:[#allocation3 + $0x250] sm:$0xff] %v1670
        %1780 = vst [vmem:[#allocation3 + $0x298] sm:$0xff] %v1682
        %1781 = vst [vmem:[#allocation3 + $0x2e0] sm:$0xff] %v1694
        %1782 = vst [vmem:[#allocation3 + $0x328] sm:$0xff] %v1706
        %1783 = vst [vmem:[#allocation3 + $0x370] sm:$0xff] %v1718
        %1784 = vst [vmem:[#allocation3 + $0x3b8] sm:$0xff] %v1730
        %1785 = vst [vmem:[#allocation3 + $0x400] sm:$0xff] %v1742
        %1786 = vst [vmem:[#allocation3 + $0x448] sm:$0xff] %v1754
        %v1787 = vld [vmem:[%s728 + $0x4] sm:$0x8]
        %v1788 = vld [vmem:[%s728 + $0x8] sm:$0xf]
        %v1789 = vld [vmem:[%s728 + $0xc] sm:$0xf]
        %v1790 = vld [vmem:[%s728 + $0x18] sm:$0x8]
        %v1791 = vld [vmem:[%s728 + $0x1c] sm:$0xf]
        %v1792 = vld [vmem:[%s728 + $0x20] sm:$0xf]
        %v1793 = vld [vmem:[%s728 + $0x2c] sm:$0x8]
        %v1794 = vld [vmem:[%s728 + $0x30] sm:$0xf]
        %v1795 = vld [vmem:[%s728 + $0x34] sm:$0xf]
        %v1796 = vld [vmem:[%s728 + $0x40] sm:$0x8]
        %v1797 = vld [vmem:[%s728 + $0x44] sm:$0xf]
        %v1798 = vld [vmem:[%s728 + $0x48] sm:$0xf]
        %v1799 = vld [vmem:[%s728 + $0x54] sm:$0x8]
        %v1800 = vld [vmem:[%s728 + $0x58] sm:$0xf]
        %v1801 = vld [vmem:[%s728 + $0x5c] sm:$0xf]
        %v1802 = vld [vmem:[%s728 + $0x68] sm:$0x8]
        %v1803 = vld [vmem:[%s728 + $0x6c] sm:$0xf]
        %v1804 = vld [vmem:[%s728 + $0x70] sm:$0xf]
        %v1805 = vld [vmem:[%s728 + $0x7c] sm:$0x8]
        %v1806 = vld [vmem:[%s728 + $0x80] sm:$0xf]
        %v1807 = vld [vmem:[%s728 + $0x84] sm:$0xf]
        %v1808 = vld [vmem:[%s728 + $0x90] sm:$0x8]
        %v1809 = vld [vmem:[%s728 + $0x94] sm:$0xf]
        %v1810 = vld [vmem:[%s728 + $0x98] sm:$0xf]
        %v1811 = vld [vmem:[%s728 + $0xa4] sm:$0x8]
        %v1812 = vld [vmem:[%s728 + $0xa8] sm:$0xf]
        %v1813 = vld [vmem:[%s728 + $0xac] sm:$0xf]
        %v1814 = vld [vmem:[%s728 + $0xb8] sm:$0x8]
        %v1815 = vld [vmem:[%s728 + $0xbc] sm:$0xf]
        %v1816 = vld [vmem:[%s728 + $0xc0] sm:$0xf]
        %v1817 = vld [vmem:[%s728 + $0xcc] sm:$0x8]
        %v1818 = vld [vmem:[%s728 + $0xd0] sm:$0xf]
        %v1819 = vld [vmem:[%s728 + $0xd4] sm:$0xf]
        %v1820 = vld [vmem:[%s728 + $0xe0] sm:$0x8]
        %v1821 = vld [vmem:[%s728 + $0xe4] sm:$0xf]
        %v1822 = vld [vmem:[%s728 + $0xe8] sm:$0xf]
        %v1823 = vld [vmem:[%s728 + $0xf4] sm:$0x8]
        %v1824 = vld [vmem:[%s728 + $0xf8] sm:$0xf]
        %v1825 = vld [vmem:[%s728 + $0xfc] sm:$0xf]
        %v1826 = vld [vmem:[%s728 + $0x108] sm:$0x8]
        %v1827 = vld [vmem:[%s728 + $0x10c] sm:$0xf]
        %v1828 = vld [vmem:[%s728 + $0x110] sm:$0xf]
        %v1829 = vld [vmem:[%s728 + $0x11c] sm:$0x8]
        %v1830 = vld [vmem:[%s728 + $0x120] sm:$0xf]
        %v1831 = vld [vmem:[%s728 + $0x124] sm:$0xf]
        %v1832 = vld [vmem:[%s728 + $0x130] sm:$0x8]
        %v1833 = vld [vmem:[%s728 + $0x134] sm:$0xf]
        %v1834 = vld [vmem:[%s728 + $0x138] sm:$0xf]
        %v1883 = vunpack.c.l.b16 %v1787
        %v1884 = vunpack.c.l.b16 %v1788
        %v1885 = vunpack.c.l.b16 %v1789
        %v1886 = vunpack.c.l.b16 %v1790
        %v1887 = vunpack.c.l.b16 %v1791
        %v1888 = vunpack.c.l.b16 %v1792
        %v1889 = vunpack.c.l.b16 %v1793
        %v1890 = vunpack.c.l.b16 %v1794
        %v1891 = vunpack.c.l.b16 %v1795
        %v1892 = vunpack.c.l.b16 %v1796
        %v1893 = vunpack.c.l.b16 %v1797
        %v1894 = vunpack.c.l.b16 %v1798
        %v1895 = vunpack.c.l.b16 %v1799
        %v1896 = vunpack.c.l.b16 %v1800
        %v1897 = vunpack.c.l.b16 %v1801
        %v1898 = vunpack.c.l.b16 %v1802
        %v1899 = vunpack.c.l.b16 %v1803
        %v1900 = vunpack.c.l.b16 %v1804
        %v1901 = vunpack.c.l.b16 %v1805
        %v1902 = vunpack.c.l.b16 %v1806
        %v1903 = vunpack.c.l.b16 %v1807
        %v1904 = vunpack.c.l.b16 %v1808
        %v1905 = vunpack.c.l.b16 %v1809
        %v1906 = vunpack.c.l.b16 %v1810
        %v1907 = vunpack.c.l.b16 %v1811
        %v1908 = vunpack.c.l.b16 %v1812
        %v1909 = vunpack.c.l.b16 %v1813
        %v1910 = vunpack.c.l.b16 %v1814
        %v1911 = vunpack.c.l.b16 %v1815
        %v1912 = vunpack.c.l.b16 %v1816
        %v1913 = vunpack.c.l.b16 %v1817
        %v1914 = vunpack.c.l.b16 %v1818
        %v1915 = vunpack.c.l.b16 %v1819
        %v1916 = vunpack.c.l.b16 %v1820
        %v1917 = vunpack.c.l.b16 %v1821
        %v1918 = vunpack.c.l.b16 %v1822
        %v1919 = vunpack.c.l.b16 %v1823
        %v1920 = vunpack.c.l.b16 %v1824
        %v1921 = vunpack.c.l.b16 %v1825
        %v1922 = vunpack.c.l.b16 %v1826
        %v1923 = vunpack.c.l.b16 %v1827
        %v1924 = vunpack.c.l.b16 %v1828
        %v1925 = vunpack.c.l.b16 %v1829
        %v1926 = vunpack.c.l.b16 %v1830
        %v1927 = vunpack.c.l.b16 %v1831
        %v1928 = vunpack.c.l.b16 %v1832
        %v1929 = vunpack.c.l.b16 %v1833
        %v1930 = vunpack.c.l.b16 %v1834
        %v1931 = vpack.c.b16 %v1884, %v1883
        %v1932 = vpack.c.b16 %v1885, %v1885
        %v1933 = vpack.c.b16 %v1887, %v1886
        %v1934 = vpack.c.b16 %v1888, %v1888
        %v1935 = vpack.c.b16 %v1890, %v1889
        %v1936 = vpack.c.b16 %v1891, %v1891
        %v1937 = vpack.c.b16 %v1893, %v1892
        %v1938 = vpack.c.b16 %v1894, %v1894
        %v1939 = vpack.c.b16 %v1896, %v1895
        %v1940 = vpack.c.b16 %v1897, %v1897
        %v1941 = vpack.c.b16 %v1899, %v1898
        %v1942 = vpack.c.b16 %v1900, %v1900
        %v1943 = vpack.c.b16 %v1902, %v1901
        %v1944 = vpack.c.b16 %v1903, %v1903
        %v1945 = vpack.c.b16 %v1905, %v1904
        %v1946 = vpack.c.b16 %v1906, %v1906
        %v1947 = vpack.c.b16 %v1908, %v1907
        %v1948 = vpack.c.b16 %v1909, %v1909
        %v1949 = vpack.c.b16 %v1911, %v1910
        %v1950 = vpack.c.b16 %v1912, %v1912
        %v1951 = vpack.c.b16 %v1914, %v1913
        %v1952 = vpack.c.b16 %v1915, %v1915
        %v1953 = vpack.c.b16 %v1917, %v1916
        %v1954 = vpack.c.b16 %v1918, %v1918
        %v1955 = vpack.c.b16 %v1920, %v1919
        %v1956 = vpack.c.b16 %v1921, %v1921
        %v1957 = vpack.c.b16 %v1923, %v1922
        %v1958 = vpack.c.b16 %v1924, %v1924
        %v1959 = vpack.c.b16 %v1926, %v1925
        %v1960 = vpack.c.b16 %v1927, %v1927
        %v1961 = vpack.c.b16 %v1929, %v1928
        %v1962 = vpack.c.b16 %v1930, %v1930
        %v1964 = vshrl.u32 %v1931, 16
        %v1966 = vrot.slane %v1964, 3
        %v1967 = vshll.u32 %v1931, 16
        %v1969 = vrot.slane %v1967, 4
        %v1970 = vor.u32 %v1966, %v1969
        %v1972 = vshrl.u32 %v1932, 16
        %v1974 = vrot.slane %v1972, 3
        %v1975 = vshll.u32 %v1932, 16
        %v1977 = vrot.slane %v1975, 4
        %v1978 = vor.u32 %v1974, %v1977
        %v1979 = vsel %vm937, %v1970, %v1978
        %v1981 = vshrl.u32 %v1933, 16
        %v1983 = vrot.slane %v1981, 3
        %v1984 = vshll.u32 %v1933, 16
        %v1986 = vrot.slane %v1984, 4
        %v1987 = vor.u32 %v1983, %v1986
        %v1989 = vshrl.u32 %v1934, 16
        %v1991 = vrot.slane %v1989, 3
        %v1992 = vshll.u32 %v1934, 16
        %v1994 = vrot.slane %v1992, 4
        %v1995 = vor.u32 %v1991, %v1994
        %v1996 = vsel %vm937, %v1987, %v1995
        %v1998 = vshrl.u32 %v1935, 16
        %v2000 = vrot.slane %v1998, 3
        %v2001 = vshll.u32 %v1935, 16
        %v2003 = vrot.slane %v2001, 4
        %v2004 = vor.u32 %v2000, %v2003
        %v2006 = vshrl.u32 %v1936, 16
        %v2008 = vrot.slane %v2006, 3
        %v2009 = vshll.u32 %v1936, 16
        %v2011 = vrot.slane %v2009, 4
        %v2012 = vor.u32 %v2008, %v2011
        %v2013 = vsel %vm937, %v2004, %v2012
        %v2015 = vshrl.u32 %v1937, 16
        %v2017 = vrot.slane %v2015, 3
        %v2018 = vshll.u32 %v1937, 16
        %v2020 = vrot.slane %v2018, 4
        %v2021 = vor.u32 %v2017, %v2020
        %v2023 = vshrl.u32 %v1938, 16
        %v2025 = vrot.slane %v2023, 3
        %v2026 = vshll.u32 %v1938, 16
        %v2028 = vrot.slane %v2026, 4
        %v2029 = vor.u32 %v2025, %v2028
        %v2030 = vsel %vm937, %v2021, %v2029
        %v2032 = vshrl.u32 %v1939, 16
        %v2034 = vrot.slane %v2032, 3
        %v2035 = vshll.u32 %v1939, 16
        %v2037 = vrot.slane %v2035, 4
        %v2038 = vor.u32 %v2034, %v2037
        %v2040 = vshrl.u32 %v1940, 16
        %v2042 = vrot.slane %v2040, 3
        %v2043 = vshll.u32 %v1940, 16
        %v2045 = vrot.slane %v2043, 4
        %v2046 = vor.u32 %v2042, %v2045
        %v2047 = vsel %vm937, %v2038, %v2046
        %v2049 = vshrl.u32 %v1941, 16
        %v2051 = vrot.slane %v2049, 3
        %v2052 = vshll.u32 %v1941, 16
        %v2054 = vrot.slane %v2052, 4
        %v2055 = vor.u32 %v2051, %v2054
        %v2057 = vshrl.u32 %v1942, 16
        %v2059 = vrot.slane %v2057, 3
        %v2060 = vshll.u32 %v1942, 16
        %v2062 = vrot.slane %v2060, 4
        %v2063 = vor.u32 %v2059, %v2062
        %v2064 = vsel %vm937, %v2055, %v2063
        %v2066 = vshrl.u32 %v1943, 16
        %v2068 = vrot.slane %v2066, 3
        %v2069 = vshll.u32 %v1943, 16
        %v2071 = vrot.slane %v2069, 4
        %v2072 = vor.u32 %v2068, %v2071
        %v2074 = vshrl.u32 %v1944, 16
        %v2076 = vrot.slane %v2074, 3
        %v2077 = vshll.u32 %v1944, 16
        %v2079 = vrot.slane %v2077, 4
        %v2080 = vor.u32 %v2076, %v2079
        %v2081 = vsel %vm937, %v2072, %v2080
        %v2083 = vshrl.u32 %v1945, 16
        %v2085 = vrot.slane %v2083, 3
        %v2086 = vshll.u32 %v1945, 16
        %v2088 = vrot.slane %v2086, 4
        %v2089 = vor.u32 %v2085, %v2088
        %v2091 = vshrl.u32 %v1946, 16
        %v2093 = vrot.slane %v2091, 3
        %v2094 = vshll.u32 %v1946, 16
        %v2096 = vrot.slane %v2094, 4
        %v2097 = vor.u32 %v2093, %v2096
        %v2098 = vsel %vm937, %v2089, %v2097
        %v2100 = vshrl.u32 %v1947, 16
        %v2102 = vrot.slane %v2100, 3
        %v2103 = vshll.u32 %v1947, 16
        %v2105 = vrot.slane %v2103, 4
        %v2106 = vor.u32 %v2102, %v2105
        %v2108 = vshrl.u32 %v1948, 16
        %v2110 = vrot.slane %v2108, 3
        %v2111 = vshll.u32 %v1948, 16
        %v2113 = vrot.slane %v2111, 4
        %v2114 = vor.u32 %v2110, %v2113
        %v2115 = vsel %vm937, %v2106, %v2114
        %v2117 = vshrl.u32 %v1949, 16
        %v2119 = vrot.slane %v2117, 3
        %v2120 = vshll.u32 %v1949, 16
        %v2122 = vrot.slane %v2120, 4
        %v2123 = vor.u32 %v2119, %v2122
        %v2125 = vshrl.u32 %v1950, 16
        %v2127 = vrot.slane %v2125, 3
        %v2128 = vshll.u32 %v1950, 16
        %v2130 = vrot.slane %v2128, 4
        %v2131 = vor.u32 %v2127, %v2130
        %v2132 = vsel %vm937, %v2123, %v2131
        %v2134 = vshrl.u32 %v1951, 16
        %v2136 = vrot.slane %v2134, 3
        %v2137 = vshll.u32 %v1951, 16
        %v2139 = vrot.slane %v2137, 4
        %v2140 = vor.u32 %v2136, %v2139
        %v2142 = vshrl.u32 %v1952, 16
        %v2144 = vrot.slane %v2142, 3
        %v2145 = vshll.u32 %v1952, 16
        %v2147 = vrot.slane %v2145, 4
        %v2148 = vor.u32 %v2144, %v2147
        %v2149 = vsel %vm937, %v2140, %v2148
        %v2151 = vshrl.u32 %v1953, 16
        %v2153 = vrot.slane %v2151, 3
        %v2154 = vshll.u32 %v1953, 16
        %v2156 = vrot.slane %v2154, 4
        %v2157 = vor.u32 %v2153, %v2156
        %v2159 = vshrl.u32 %v1954, 16
        %v2161 = vrot.slane %v2159, 3
        %v2162 = vshll.u32 %v1954, 16
        %v2164 = vrot.slane %v2162, 4
        %v2165 = vor.u32 %v2161, %v2164
        %v2166 = vsel %vm937, %v2157, %v2165
        %v2168 = vshrl.u32 %v1955, 16
        %v2170 = vrot.slane %v2168, 3
        %v2171 = vshll.u32 %v1955, 16
        %v2173 = vrot.slane %v2171, 4
        %v2174 = vor.u32 %v2170, %v2173
        %v2176 = vshrl.u32 %v1956, 16
        %v2178 = vrot.slane %v2176, 3
        %v2179 = vshll.u32 %v1956, 16
        %v2181 = vrot.slane %v2179, 4
        %v2182 = vor.u32 %v2178, %v2181
        %v2183 = vsel %vm937, %v2174, %v2182
        %v2185 = vshrl.u32 %v1957, 16
        %v2187 = vrot.slane %v2185, 3
        %v2188 = vshll.u32 %v1957, 16
        %v2190 = vrot.slane %v2188, 4
        %v2191 = vor.u32 %v2187, %v2190
        %v2193 = vshrl.u32 %v1958, 16
        %v2195 = vrot.slane %v2193, 3
        %v2196 = vshll.u32 %v1958, 16
        %v2198 = vrot.slane %v2196, 4
        %v2199 = vor.u32 %v2195, %v2198
        %v2200 = vsel %vm937, %v2191, %v2199
        %v2202 = vshrl.u32 %v1959, 16
        %v2204 = vrot.slane %v2202, 3
        %v2205 = vshll.u32 %v1959, 16
        %v2207 = vrot.slane %v2205, 4
        %v2208 = vor.u32 %v2204, %v2207
        %v2210 = vshrl.u32 %v1960, 16
        %v2212 = vrot.slane %v2210, 3
        %v2213 = vshll.u32 %v1960, 16
        %v2215 = vrot.slane %v2213, 4
        %v2216 = vor.u32 %v2212, %v2215
        %v2217 = vsel %vm937, %v2208, %v2216
        %v2219 = vshrl.u32 %v1961, 16
        %v2221 = vrot.slane %v2219, 3
        %v2222 = vshll.u32 %v1961, 16
        %v2224 = vrot.slane %v2222, 4
        %v2225 = vor.u32 %v2221, %v2224
        %v2227 = vshrl.u32 %v1962, 16
        %v2229 = vrot.slane %v2227, 3
        %v2230 = vshll.u32 %v1962, 16
        %v2232 = vrot.slane %v2230, 4
        %v2233 = vor.u32 %v2229, %v2232
        %v2234 = vsel %vm937, %v2225, %v2233
        %2251 = vst [vmem:[#allocation3 + $0x18] sm:$0xff] %v1979
        %2252 = vst [vmem:[#allocation3 + $0x60] sm:$0xff] %v1996
        %2253 = vst [vmem:[#allocation3 + $0xa8] sm:$0xff] %v2013
        %2254 = vst [vmem:[#allocation3 + $0xf0] sm:$0xff] %v2030
        %2255 = vst [vmem:[#allocation3 + $0x138] sm:$0xff] %v2047
        %2256 = vst [vmem:[#allocation3 + $0x180] sm:$0xff] %v2064
        %2257 = vst [vmem:[#allocation3 + $0x1c8] sm:$0xff] %v2081
        %2258 = vst [vmem:[#allocation3 + $0x210] sm:$0xff] %v2098
        %2259 = vst [vmem:[#allocation3 + $0x258] sm:$0xff] %v2115
        %2260 = vst [vmem:[#allocation3 + $0x2a0] sm:$0xff] %v2132
        %2261 = vst [vmem:[#allocation3 + $0x2e8] sm:$0xff] %v2149
        %2262 = vst [vmem:[#allocation3 + $0x330] sm:$0xff] %v2166
        %2263 = vst [vmem:[#allocation3 + $0x378] sm:$0xff] %v2183
        %2264 = vst [vmem:[#allocation3 + $0x3c0] sm:$0xff] %v2200
        %2265 = vst [vmem:[#allocation3 + $0x408] sm:$0xff] %v2217
        %2266 = vst [vmem:[#allocation3 + $0x450] sm:$0xff] %v2234
        %v2267 = vld [vmem:[%s728 + $0x8] sm:$0xf]
        %v2268 = vld [vmem:[%s728 + $0xc] sm:$0xf]
        %v2269 = vld [vmem:[%s728 + $0x1c] sm:$0xf]
        %v2270 = vld [vmem:[%s728 + $0x20] sm:$0xf]
        %v2271 = vld [vmem:[%s728 + $0x30] sm:$0xf]
        %v2272 = vld [vmem:[%s728 + $0x34] sm:$0xf]
        %v2273 = vld [vmem:[%s728 + $0x44] sm:$0xf]
        %v2274 = vld [vmem:[%s728 + $0x48] sm:$0xf]
        %v2275 = vld [vmem:[%s728 + $0x58] sm:$0xf]
        %v2276 = vld [vmem:[%s728 + $0x5c] sm:$0xf]
        %v2277 = vld [vmem:[%s728 + $0x6c] sm:$0xf]
        %v2278 = vld [vmem:[%s728 + $0x70] sm:$0xf]
        %v2279 = vld [vmem:[%s728 + $0x80] sm:$0xf]
        %v2280 = vld [vmem:[%s728 + $0x84] sm:$0xf]
        %v2281 = vld [vmem:[%s728 + $0x94] sm:$0xf]
        %v2282 = vld [vmem:[%s728 + $0x98] sm:$0xf]
        %v2283 = vld [vmem:[%s728 + $0xa8] sm:$0xf]
        %v2284 = vld [vmem:[%s728 + $0xac] sm:$0xf]
        %v2285 = vld [vmem:[%s728 + $0xbc] sm:$0xf]
        %v2286 = vld [vmem:[%s728 + $0xc0] sm:$0xf]
        %v2287 = vld [vmem:[%s728 + $0xd0] sm:$0xf]
        %v2288 = vld [vmem:[%s728 + $0xd4] sm:$0xf]
        %v2289 = vld [vmem:[%s728 + $0xe4] sm:$0xf]
        %v2290 = vld [vmem:[%s728 + $0xe8] sm:$0xf]
        %v2291 = vld [vmem:[%s728 + $0xf8] sm:$0xf]
        %v2292 = vld [vmem:[%s728 + $0xfc] sm:$0xf]
        %v2293 = vld [vmem:[%s728 + $0x10c] sm:$0xf]
        %v2294 = vld [vmem:[%s728 + $0x110] sm:$0xf]
        %v2295 = vld [vmem:[%s728 + $0x120] sm:$0xf]
        %v2296 = vld [vmem:[%s728 + $0x124] sm:$0xf]
        %v2297 = vld [vmem:[%s728 + $0x134] sm:$0xf]
        %v2298 = vld [vmem:[%s728 + $0x138] sm:$0xf]
        %v2331 = vunpack.c.l.b16 %v2267
        %v2332 = vunpack.c.l.b16 %v2268
        %v2333 = vunpack.c.l.b16 %v2269
        %v2334 = vunpack.c.l.b16 %v2270
        %v2335 = vunpack.c.l.b16 %v2271
        %v2336 = vunpack.c.l.b16 %v2272
        %v2337 = vunpack.c.l.b16 %v2273
        %v2338 = vunpack.c.l.b16 %v2274
        %v2339 = vunpack.c.l.b16 %v2275
        %v2340 = vunpack.c.l.b16 %v2276
        %v2341 = vunpack.c.l.b16 %v2277
        %v2342 = vunpack.c.l.b16 %v2278
        %v2343 = vunpack.c.l.b16 %v2279
        %v2344 = vunpack.c.l.b16 %v2280
        %v2345 = vunpack.c.l.b16 %v2281
        %v2346 = vunpack.c.l.b16 %v2282
        %v2347 = vunpack.c.l.b16 %v2283
        %v2348 = vunpack.c.l.b16 %v2284
        %v2349 = vunpack.c.l.b16 %v2285
        %v2350 = vunpack.c.l.b16 %v2286
        %v2351 = vunpack.c.l.b16 %v2287
        %v2352 = vunpack.c.l.b16 %v2288
        %v2353 = vunpack.c.l.b16 %v2289
        %v2354 = vunpack.c.l.b16 %v2290
        %v2355 = vunpack.c.l.b16 %v2291
        %v2356 = vunpack.c.l.b16 %v2292
        %v2357 = vunpack.c.l.b16 %v2293
        %v2358 = vunpack.c.l.b16 %v2294
        %v2359 = vunpack.c.l.b16 %v2295
        %v2360 = vunpack.c.l.b16 %v2296
        %v2361 = vunpack.c.l.b16 %v2297
        %v2362 = vunpack.c.l.b16 %v2298
        %v2363 = vpack.c.b16 %v2332, %v2331
        %v2364 = vpack.c.b16 %v2334, %v2333
        %v2365 = vpack.c.b16 %v2336, %v2335
        %v2366 = vpack.c.b16 %v2338, %v2337
        %v2367 = vpack.c.b16 %v2340, %v2339
        %v2368 = vpack.c.b16 %v2342, %v2341
        %v2369 = vpack.c.b16 %v2344, %v2343
        %v2370 = vpack.c.b16 %v2346, %v2345
        %v2371 = vpack.c.b16 %v2348, %v2347
        %v2372 = vpack.c.b16 %v2350, %v2349
        %v2373 = vpack.c.b16 %v2352, %v2351
        %v2374 = vpack.c.b16 %v2354, %v2353
        %v2375 = vpack.c.b16 %v2356, %v2355
        %v2376 = vpack.c.b16 %v2358, %v2357
        %v2377 = vpack.c.b16 %v2360, %v2359
        %v2378 = vpack.c.b16 %v2362, %v2361
        %2395 = vst [vmem:[#allocation3 + $0x20] sm:$0xff] %v2363
        %2396 = vst [vmem:[#allocation3 + $0x68] sm:$0xff] %v2364
        %2397 = vst [vmem:[#allocation3 + $0xb0] sm:$0xff] %v2365
        %2398 = vst [vmem:[#allocation3 + $0xf8] sm:$0xff] %v2366
        %2399 = vst [vmem:[#allocation3 + $0x140] sm:$0xff] %v2367
        %2400 = vst [vmem:[#allocation3 + $0x188] sm:$0xff] %v2368
        %2401 = vst [vmem:[#allocation3 + $0x1d0] sm:$0xff] %v2369
        %2402 = vst [vmem:[#allocation3 + $0x218] sm:$0xff] %v2370
        %2403 = vst [vmem:[#allocation3 + $0x260] sm:$0xff] %v2371
        %2404 = vst [vmem:[#allocation3 + $0x2a8] sm:$0xff] %v2372
        %2405 = vst [vmem:[#allocation3 + $0x2f0] sm:$0xff] %v2373
        %2406 = vst [vmem:[#allocation3 + $0x338] sm:$0xff] %v2374
        %2407 = vst [vmem:[#allocation3 + $0x380] sm:$0xff] %v2375
        %2408 = vst [vmem:[#allocation3 + $0x3c8] sm:$0xff] %v2376
        %2409 = vst [vmem:[#allocation3 + $0x410] sm:$0xff] %v2377
        %2410 = vst [vmem:[#allocation3 + $0x458] sm:$0xff] %v2378
        %v2411 = vld [vmem:[%s728 + $0x8] sm:$0xf]
        %v2412 = vld [vmem:[%s728 + $0xc] sm:$0xf]
        %v2413 = vld [vmem:[%s728 + $0x10] sm:$0x1]
        %v2414 = vld [vmem:[%s728 + $0x1c] sm:$0xf]
        %v2415 = vld [vmem:[%s728 + $0x20] sm:$0xf]
        %v2416 = vld [vmem:[%s728 + $0x24] sm:$0x1]
        %v2417 = vld [vmem:[%s728 + $0x30] sm:$0xf]
        %v2418 = vld [vmem:[%s728 + $0x34] sm:$0xf]
        %v2419 = vld [vmem:[%s728 + $0x38] sm:$0x1]
        %v2420 = vld [vmem:[%s728 + $0x44] sm:$0xf]
        %v2421 = vld [vmem:[%s728 + $0x48] sm:$0xf]
        %v2422 = vld [vmem:[%s728 + $0x4c] sm:$0x1]
        %v2423 = vld [vmem:[%s728 + $0x58] sm:$0xf]
        %v2424 = vld [vmem:[%s728 + $0x5c] sm:$0xf]
        %v2425 = vld [vmem:[%s728 + $0x60] sm:$0x1]
        %v2426 = vld [vmem:[%s728 + $0x6c] sm:$0xf]
        %v2427 = vld [vmem:[%s728 + $0x70] sm:$0xf]
        %v2428 = vld [vmem:[%s728 + $0x74] sm:$0x1]
        %v2429 = vld [vmem:[%s728 + $0x80] sm:$0xf]
        %v2430 = vld [vmem:[%s728 + $0x84] sm:$0xf]
        %v2431 = vld [vmem:[%s728 + $0x88] sm:$0x1]
        %v2432 = vld [vmem:[%s728 + $0x94] sm:$0xf]
        %v2433 = vld [vmem:[%s728 + $0x98] sm:$0xf]
        %v2434 = vld [vmem:[%s728 + $0x9c] sm:$0x1]
        %v2435 = vld [vmem:[%s728 + $0xa8] sm:$0xf]
        %v2436 = vld [vmem:[%s728 + $0xac] sm:$0xf]
        %v2437 = vld [vmem:[%s728 + $0xb0] sm:$0x1]
        %v2438 = vld [vmem:[%s728 + $0xbc] sm:$0xf]
        %v2439 = vld [vmem:[%s728 + $0xc0] sm:$0xf]
        %v2440 = vld [vmem:[%s728 + $0xc4] sm:$0x1]
        %v2441 = vld [vmem:[%s728 + $0xd0] sm:$0xf]
        %v2442 = vld [vmem:[%s728 + $0xd4] sm:$0xf]
        %v2443 = vld [vmem:[%s728 + $0xd8] sm:$0x1]
        %v2444 = vld [vmem:[%s728 + $0xe4] sm:$0xf]
        %v2445 = vld [vmem:[%s728 + $0xe8] sm:$0xf]
        %v2446 = vld [vmem:[%s728 + $0xec] sm:$0x1]
        %v2447 = vld [vmem:[%s728 + $0xf8] sm:$0xf]
        %v2448 = vld [vmem:[%s728 + $0xfc] sm:$0xf]
        %v2449 = vld [vmem:[%s728 + $0x100] sm:$0x1]
        %v2450 = vld [vmem:[%s728 + $0x10c] sm:$0xf]
        %v2451 = vld [vmem:[%s728 + $0x110] sm:$0xf]
        %v2452 = vld [vmem:[%s728 + $0x114] sm:$0x1]
        %v2453 = vld [vmem:[%s728 + $0x120] sm:$0xf]
        %v2454 = vld [vmem:[%s728 + $0x124] sm:$0xf]
        %v2455 = vld [vmem:[%s728 + $0x128] sm:$0x1]
        %v2456 = vld [vmem:[%s728 + $0x134] sm:$0xf]
        %v2457 = vld [vmem:[%s728 + $0x138] sm:$0xf]
        %v2458 = vld [vmem:[%s728 + $0x13c] sm:$0x1]
        %v2507 = vunpack.c.l.b16 %v2411
        %v2508 = vunpack.c.l.b16 %v2412
        %v2509 = vunpack.c.l.b16 %v2413
        %v2510 = vunpack.c.l.b16 %v2414
        %v2511 = vunpack.c.l.b16 %v2415
        %v2512 = vunpack.c.l.b16 %v2416
        %v2513 = vunpack.c.l.b16 %v2417
        %v2514 = vunpack.c.l.b16 %v2418
        %v2515 = vunpack.c.l.b16 %v2419
        %v2516 = vunpack.c.l.b16 %v2420
        %v2517 = vunpack.c.l.b16 %v2421
        %v2518 = vunpack.c.l.b16 %v2422
        %v2519 = vunpack.c.l.b16 %v2423
        %v2520 = vunpack.c.l.b16 %v2424
        %v2521 = vunpack.c.l.b16 %v2425
        %v2522 = vunpack.c.l.b16 %v2426
        %v2523 = vunpack.c.l.b16 %v2427
        %v2524 = vunpack.c.l.b16 %v2428
        %v2525 = vunpack.c.l.b16 %v2429
        %v2526 = vunpack.c.l.b16 %v2430
        %v2527 = vunpack.c.l.b16 %v2431
        %v2528 = vunpack.c.l.b16 %v2432
        %v2529 = vunpack.c.l.b16 %v2433
        %v2530 = vunpack.c.l.b16 %v2434
        %v2531 = vunpack.c.l.b16 %v2435
        %v2532 = vunpack.c.l.b16 %v2436
        %v2533 = vunpack.c.l.b16 %v2437
        %v2534 = vunpack.c.l.b16 %v2438
        %v2535 = vunpack.c.l.b16 %v2439
        %v2536 = vunpack.c.l.b16 %v2440
        %v2537 = vunpack.c.l.b16 %v2441
        %v2538 = vunpack.c.l.b16 %v2442
        %v2539 = vunpack.c.l.b16 %v2443
        %v2540 = vunpack.c.l.b16 %v2444
        %v2541 = vunpack.c.l.b16 %v2445
        %v2542 = vunpack.c.l.b16 %v2446
        %v2543 = vunpack.c.l.b16 %v2447
        %v2544 = vunpack.c.l.b16 %v2448
        %v2545 = vunpack.c.l.b16 %v2449
        %v2546 = vunpack.c.l.b16 %v2450
        %v2547 = vunpack.c.l.b16 %v2451
        %v2548 = vunpack.c.l.b16 %v2452
        %v2549 = vunpack.c.l.b16 %v2453
        %v2550 = vunpack.c.l.b16 %v2454
        %v2551 = vunpack.c.l.b16 %v2455
        %v2552 = vunpack.c.l.b16 %v2456
        %v2553 = vunpack.c.l.b16 %v2457
        %v2554 = vunpack.c.l.b16 %v2458
        %v2555 = vpack.c.b16 %v2508, %v2507
        %v2556 = vpack.c.b16 %v2509, %v2509
        %v2557 = vpack.c.b16 %v2511, %v2510
        %v2558 = vpack.c.b16 %v2512, %v2512
        %v2559 = vpack.c.b16 %v2514, %v2513
        %v2560 = vpack.c.b16 %v2515, %v2515
        %v2561 = vpack.c.b16 %v2517, %v2516
        %v2562 = vpack.c.b16 %v2518, %v2518
        %v2563 = vpack.c.b16 %v2520, %v2519
        %v2564 = vpack.c.b16 %v2521, %v2521
        %v2565 = vpack.c.b16 %v2523, %v2522
        %v2566 = vpack.c.b16 %v2524, %v2524
        %v2567 = vpack.c.b16 %v2526, %v2525
        %v2568 = vpack.c.b16 %v2527, %v2527
        %v2569 = vpack.c.b16 %v2529, %v2528
        %v2570 = vpack.c.b16 %v2530, %v2530
        %v2571 = vpack.c.b16 %v2532, %v2531
        %v2572 = vpack.c.b16 %v2533, %v2533
        %v2573 = vpack.c.b16 %v2535, %v2534
        %v2574 = vpack.c.b16 %v2536, %v2536
        %v2575 = vpack.c.b16 %v2538, %v2537
        %v2576 = vpack.c.b16 %v2539, %v2539
        %v2577 = vpack.c.b16 %v2541, %v2540
        %v2578 = vpack.c.b16 %v2542, %v2542
        %v2579 = vpack.c.b16 %v2544, %v2543
        %v2580 = vpack.c.b16 %v2545, %v2545
        %v2581 = vpack.c.b16 %v2547, %v2546
        %v2582 = vpack.c.b16 %v2548, %v2548
        %v2583 = vpack.c.b16 %v2550, %v2549
        %v2584 = vpack.c.b16 %v2551, %v2551
        %v2585 = vpack.c.b16 %v2553, %v2552
        %v2586 = vpack.c.b16 %v2554, %v2554
        %v2588 = vshrl.u32 %v2555, 16
        %v2590 = vshll.u32 %v2555, 16
        %v2592 = vrot.slane %v2590, 1
        %v2593 = vor.u32 %v2588, %v2592
        %v2595 = vshll.u32 %v2556, 16
        %v2597 = vrot.slane %v2595, 1
        %v2598 = vsel %vm1562, %v2593, %v2597
        %v2600 = vshrl.u32 %v2557, 16
        %v2602 = vshll.u32 %v2557, 16
        %v2604 = vrot.slane %v2602, 1
        %v2605 = vor.u32 %v2600, %v2604
        %v2607 = vshll.u32 %v2558, 16
        %v2609 = vrot.slane %v2607, 1
        %v2610 = vsel %vm1562, %v2605, %v2609
        %v2612 = vshrl.u32 %v2559, 16
        %v2614 = vshll.u32 %v2559, 16
        %v2616 = vrot.slane %v2614, 1
        %v2617 = vor.u32 %v2612, %v2616
        %v2619 = vshll.u32 %v2560, 16
        %v2621 = vrot.slane %v2619, 1
        %v2622 = vsel %vm1562, %v2617, %v2621
        %v2624 = vshrl.u32 %v2561, 16
        %v2626 = vshll.u32 %v2561, 16
        %v2628 = vrot.slane %v2626, 1
        %v2629 = vor.u32 %v2624, %v2628
        %v2631 = vshll.u32 %v2562, 16
        %v2633 = vrot.slane %v2631, 1
        %v2634 = vsel %vm1562, %v2629, %v2633
        %v2636 = vshrl.u32 %v2563, 16
        %v2638 = vshll.u32 %v2563, 16
        %v2640 = vrot.slane %v2638, 1
        %v2641 = vor.u32 %v2636, %v2640
        %v2643 = vshll.u32 %v2564, 16
        %v2645 = vrot.slane %v2643, 1
        %v2646 = vsel %vm1562, %v2641, %v2645
        %v2648 = vshrl.u32 %v2565, 16
        %v2650 = vshll.u32 %v2565, 16
        %v2652 = vrot.slane %v2650, 1
        %v2653 = vor.u32 %v2648, %v2652
        %v2655 = vshll.u32 %v2566, 16
        %v2657 = vrot.slane %v2655, 1
        %v2658 = vsel %vm1562, %v2653, %v2657
        %v2660 = vshrl.u32 %v2567, 16
        %v2662 = vshll.u32 %v2567, 16
        %v2664 = vrot.slane %v2662, 1
        %v2665 = vor.u32 %v2660, %v2664
        %v2667 = vshll.u32 %v2568, 16
        %v2669 = vrot.slane %v2667, 1
        %v2670 = vsel %vm1562, %v2665, %v2669
        %v2672 = vshrl.u32 %v2569, 16
        %v2674 = vshll.u32 %v2569, 16
        %v2676 = vrot.slane %v2674, 1
        %v2677 = vor.u32 %v2672, %v2676
        %v2679 = vshll.u32 %v2570, 16
        %v2681 = vrot.slane %v2679, 1
        %v2682 = vsel %vm1562, %v2677, %v2681
        %v2684 = vshrl.u32 %v2571, 16
        %v2686 = vshll.u32 %v2571, 16
        %v2688 = vrot.slane %v2686, 1
        %v2689 = vor.u32 %v2684, %v2688
        %v2691 = vshll.u32 %v2572, 16
        %v2693 = vrot.slane %v2691, 1
        %v2694 = vsel %vm1562, %v2689, %v2693
        %v2696 = vshrl.u32 %v2573, 16
        %v2698 = vshll.u32 %v2573, 16
        %v2700 = vrot.slane %v2698, 1
        %v2701 = vor.u32 %v2696, %v2700
        %v2703 = vshll.u32 %v2574, 16
        %v2705 = vrot.slane %v2703, 1
        %v2706 = vsel %vm1562, %v2701, %v2705
        %v2708 = vshrl.u32 %v2575, 16
        %v2710 = vshll.u32 %v2575, 16
        %v2712 = vrot.slane %v2710, 1
        %v2713 = vor.u32 %v2708, %v2712
        %v2715 = vshll.u32 %v2576, 16
        %v2717 = vrot.slane %v2715, 1
        %v2718 = vsel %vm1562, %v2713, %v2717
        %v2720 = vshrl.u32 %v2577, 16
        %v2722 = vshll.u32 %v2577, 16
        %v2724 = vrot.slane %v2722, 1
        %v2725 = vor.u32 %v2720, %v2724
        %v2727 = vshll.u32 %v2578, 16
        %v2729 = vrot.slane %v2727, 1
        %v2730 = vsel %vm1562, %v2725, %v2729
        %v2732 = vshrl.u32 %v2579, 16
        %v2734 = vshll.u32 %v2579, 16
        %v2736 = vrot.slane %v2734, 1
        %v2737 = vor.u32 %v2732, %v2736
        %v2739 = vshll.u32 %v2580, 16
        %v2741 = vrot.slane %v2739, 1
        %v2742 = vsel %vm1562, %v2737, %v2741
        %v2744 = vshrl.u32 %v2581, 16
        %v2746 = vshll.u32 %v2581, 16
        %v2748 = vrot.slane %v2746, 1
        %v2749 = vor.u32 %v2744, %v2748
        %v2751 = vshll.u32 %v2582, 16
        %v2753 = vrot.slane %v2751, 1
        %v2754 = vsel %vm1562, %v2749, %v2753
        %v2756 = vshrl.u32 %v2583, 16
        %v2758 = vshll.u32 %v2583, 16
        %v2760 = vrot.slane %v2758, 1
        %v2761 = vor.u32 %v2756, %v2760
        %v2763 = vshll.u32 %v2584, 16
        %v2765 = vrot.slane %v2763, 1
        %v2766 = vsel %vm1562, %v2761, %v2765
        %v2768 = vshrl.u32 %v2585, 16
        %v2770 = vshll.u32 %v2585, 16
        %v2772 = vrot.slane %v2770, 1
        %v2773 = vor.u32 %v2768, %v2772
        %v2775 = vshll.u32 %v2586, 16
        %v2777 = vrot.slane %v2775, 1
        %v2778 = vsel %vm1562, %v2773, %v2777
        %2795 = vst [vmem:[#allocation3 + $0x28] sm:$0xff] %v2598
        %2796 = vst [vmem:[#allocation3 + $0x70] sm:$0xff] %v2610
        %2797 = vst [vmem:[#allocation3 + $0xb8] sm:$0xff] %v2622
        %2798 = vst [vmem:[#allocation3 + $0x100] sm:$0xff] %v2634
        %2799 = vst [vmem:[#allocation3 + $0x148] sm:$0xff] %v2646
        %2800 = vst [vmem:[#allocation3 + $0x190] sm:$0xff] %v2658
        %2801 = vst [vmem:[#allocation3 + $0x1d8] sm:$0xff] %v2670
        %2802 = vst [vmem:[#allocation3 + $0x220] sm:$0xff] %v2682
        %2803 = vst [vmem:[#allocation3 + $0x268] sm:$0xff] %v2694
        %2804 = vst [vmem:[#allocation3 + $0x2b0] sm:$0xff] %v2706
        %2805 = vst [vmem:[#allocation3 + $0x2f8] sm:$0xff] %v2718
        %2806 = vst [vmem:[#allocation3 + $0x340] sm:$0xff] %v2730
        %2807 = vst [vmem:[#allocation3 + $0x388] sm:$0xff] %v2742
        %2808 = vst [vmem:[#allocation3 + $0x3d0] sm:$0xff] %v2754
        %2809 = vst [vmem:[#allocation3 + $0x418] sm:$0xff] %v2766
        %2810 = vst [vmem:[#allocation3 + $0x460] sm:$0xff] %v2778
        %s2811 = scalar_lea.vmem [#allocation2], 40
        %v2812 = vld [vmem:[%s2811 + $0x4] sm:$0x8]
        %v2813 = vld [vmem:[%s2811 + $0x8] sm:$0xf]
        %v2814 = vld [vmem:[%s2811 + $0xc] sm:$0xf]
        %v2815 = vld [vmem:[%s2811 + $0x18] sm:$0x8]
        %v2816 = vld [vmem:[%s2811 + $0x1c] sm:$0xf]
        %v2817 = vld [vmem:[%s2811 + $0x20] sm:$0xf]
        %v2818 = vld [vmem:[%s2811 + $0x2c] sm:$0x8]
        %v2819 = vld [vmem:[%s2811 + $0x30] sm:$0xf]
        %v2820 = vld [vmem:[%s2811 + $0x34] sm:$0xf]
        %v2821 = vld [vmem:[%s2811 + $0x40] sm:$0x8]
        %v2822 = vld [vmem:[%s2811 + $0x44] sm:$0xf]
        %v2823 = vld [vmem:[%s2811 + $0x48] sm:$0xf]
        %v2824 = vld [vmem:[%s2811 + $0x54] sm:$0x8]
        %v2825 = vld [vmem:[%s2811 + $0x58] sm:$0xf]
        %v2826 = vld [vmem:[%s2811 + $0x5c] sm:$0xf]
        %v2827 = vld [vmem:[%s2811 + $0x68] sm:$0x8]
        %v2828 = vld [vmem:[%s2811 + $0x6c] sm:$0xf]
        %v2829 = vld [vmem:[%s2811 + $0x70] sm:$0xf]
        %v2830 = vld [vmem:[%s2811 + $0x7c] sm:$0x8]
        %v2831 = vld [vmem:[%s2811 + $0x80] sm:$0xf]
        %v2832 = vld [vmem:[%s2811 + $0x84] sm:$0xf]
        %v2833 = vld [vmem:[%s2811 + $0x90] sm:$0x8]
        %v2834 = vld [vmem:[%s2811 + $0x94] sm:$0xf]
        %v2835 = vld [vmem:[%s2811 + $0x98] sm:$0xf]
        %v2836 = vld [vmem:[%s2811 + $0xa4] sm:$0x8]
        %v2837 = vld [vmem:[%s2811 + $0xa8] sm:$0xf]
        %v2838 = vld [vmem:[%s2811 + $0xac] sm:$0xf]
        %v2839 = vld [vmem:[%s2811 + $0xb8] sm:$0x8]
        %v2840 = vld [vmem:[%s2811 + $0xbc] sm:$0xf]
        %v2841 = vld [vmem:[%s2811 + $0xc0] sm:$0xf]
        %v2842 = vld [vmem:[%s2811 + $0xcc] sm:$0x8]
        %v2843 = vld [vmem:[%s2811 + $0xd0] sm:$0xf]
        %v2844 = vld [vmem:[%s2811 + $0xd4] sm:$0xf]
        %v2845 = vld [vmem:[%s2811 + $0xe0] sm:$0x8]
        %v2846 = vld [vmem:[%s2811 + $0xe4] sm:$0xf]
        %v2847 = vld [vmem:[%s2811 + $0xe8] sm:$0xf]
        %v2848 = vld [vmem:[%s2811 + $0xf4] sm:$0x8]
        %v2849 = vld [vmem:[%s2811 + $0xf8] sm:$0xf]
        %v2850 = vld [vmem:[%s2811 + $0xfc] sm:$0xf]
        %v2851 = vld [vmem:[%s2811 + $0x108] sm:$0x8]
        %v2852 = vld [vmem:[%s2811 + $0x10c] sm:$0xf]
        %v2853 = vld [vmem:[%s2811 + $0x110] sm:$0xf]
        %v2854 = vld [vmem:[%s2811 + $0x11c] sm:$0x8]
        %v2855 = vld [vmem:[%s2811 + $0x120] sm:$0xf]
        %v2856 = vld [vmem:[%s2811 + $0x124] sm:$0xf]
        %v2857 = vld [vmem:[%s2811 + $0x130] sm:$0x8]
        %v2858 = vld [vmem:[%s2811 + $0x134] sm:$0xf]
        %v2859 = vld [vmem:[%s2811 + $0x138] sm:$0xf]
        %v2908 = vunpack.c.l.b16 %v2812
        %v2909 = vunpack.c.l.b16 %v2813
        %v2910 = vunpack.c.l.b16 %v2814
        %v2911 = vunpack.c.l.b16 %v2815
        %v2912 = vunpack.c.l.b16 %v2816
        %v2913 = vunpack.c.l.b16 %v2817
        %v2914 = vunpack.c.l.b16 %v2818
        %v2915 = vunpack.c.l.b16 %v2819
        %v2916 = vunpack.c.l.b16 %v2820
        %v2917 = vunpack.c.l.b16 %v2821
        %v2918 = vunpack.c.l.b16 %v2822
        %v2919 = vunpack.c.l.b16 %v2823
        %v2920 = vunpack.c.l.b16 %v2824
        %v2921 = vunpack.c.l.b16 %v2825
        %v2922 = vunpack.c.l.b16 %v2826
        %v2923 = vunpack.c.l.b16 %v2827
        %v2924 = vunpack.c.l.b16 %v2828
        %v2925 = vunpack.c.l.b16 %v2829
        %v2926 = vunpack.c.l.b16 %v2830
        %v2927 = vunpack.c.l.b16 %v2831
        %v2928 = vunpack.c.l.b16 %v2832
        %v2929 = vunpack.c.l.b16 %v2833
        %v2930 = vunpack.c.l.b16 %v2834
        %v2931 = vunpack.c.l.b16 %v2835
        %v2932 = vunpack.c.l.b16 %v2836
        %v2933 = vunpack.c.l.b16 %v2837
        %v2934 = vunpack.c.l.b16 %v2838
        %v2935 = vunpack.c.l.b16 %v2839
        %v2936 = vunpack.c.l.b16 %v2840
        %v2937 = vunpack.c.l.b16 %v2841
        %v2938 = vunpack.c.l.b16 %v2842
        %v2939 = vunpack.c.l.b16 %v2843
        %v2940 = vunpack.c.l.b16 %v2844
        %v2941 = vunpack.c.l.b16 %v2845
        %v2942 = vunpack.c.l.b16 %v2846
        %v2943 = vunpack.c.l.b16 %v2847
        %v2944 = vunpack.c.l.b16 %v2848
        %v2945 = vunpack.c.l.b16 %v2849
        %v2946 = vunpack.c.l.b16 %v2850
        %v2947 = vunpack.c.l.b16 %v2851
        %v2948 = vunpack.c.l.b16 %v2852
        %v2949 = vunpack.c.l.b16 %v2853
        %v2950 = vunpack.c.l.b16 %v2854
        %v2951 = vunpack.c.l.b16 %v2855
        %v2952 = vunpack.c.l.b16 %v2856
        %v2953 = vunpack.c.l.b16 %v2857
        %v2954 = vunpack.c.l.b16 %v2858
        %v2955 = vunpack.c.l.b16 %v2859
        %v2956 = vpack.c.b16 %v2909, %v2908
        %v2957 = vpack.c.b16 %v2910, %v2910
        %v2958 = vpack.c.b16 %v2912, %v2911
        %v2959 = vpack.c.b16 %v2913, %v2913
        %v2960 = vpack.c.b16 %v2915, %v2914
        %v2961 = vpack.c.b16 %v2916, %v2916
        %v2962 = vpack.c.b16 %v2918, %v2917
        %v2963 = vpack.c.b16 %v2919, %v2919
        %v2964 = vpack.c.b16 %v2921, %v2920
        %v2965 = vpack.c.b16 %v2922, %v2922
        %v2966 = vpack.c.b16 %v2924, %v2923
        %v2967 = vpack.c.b16 %v2925, %v2925
        %v2968 = vpack.c.b16 %v2927, %v2926
        %v2969 = vpack.c.b16 %v2928, %v2928
        %v2970 = vpack.c.b16 %v2930, %v2929
        %v2971 = vpack.c.b16 %v2931, %v2931
        %v2972 = vpack.c.b16 %v2933, %v2932
        %v2973 = vpack.c.b16 %v2934, %v2934
        %v2974 = vpack.c.b16 %v2936, %v2935
        %v2975 = vpack.c.b16 %v2937, %v2937
        %v2976 = vpack.c.b16 %v2939, %v2938
        %v2977 = vpack.c.b16 %v2940, %v2940
        %v2978 = vpack.c.b16 %v2942, %v2941
        %v2979 = vpack.c.b16 %v2943, %v2943
        %v2980 = vpack.c.b16 %v2945, %v2944
        %v2981 = vpack.c.b16 %v2946, %v2946
        %v2982 = vpack.c.b16 %v2948, %v2947
        %v2983 = vpack.c.b16 %v2949, %v2949
        %v2984 = vpack.c.b16 %v2951, %v2950
        %v2985 = vpack.c.b16 %v2952, %v2952
        %v2986 = vpack.c.b16 %v2954, %v2953
        %v2987 = vpack.c.b16 %v2955, %v2955
        %v2989 = vshrl.u32 %v2956, 16
        %v2991 = vrot.slane %v2989, 3
        %v2992 = vshll.u32 %v2956, 16
        %v2994 = vrot.slane %v2992, 4
        %v2995 = vor.u32 %v2991, %v2994
        %v2997 = vshrl.u32 %v2957, 16
        %v2999 = vrot.slane %v2997, 3
        %v3000 = vshll.u32 %v2957, 16
        %v3002 = vrot.slane %v3000, 4
        %v3003 = vor.u32 %v2999, %v3002
        %v3004 = vsel %vm937, %v2995, %v3003
        %v3006 = vshrl.u32 %v2958, 16
        %v3008 = vrot.slane %v3006, 3
        %v3009 = vshll.u32 %v2958, 16
        %v3011 = vrot.slane %v3009, 4
        %v3012 = vor.u32 %v3008, %v3011
        %v3014 = vshrl.u32 %v2959, 16
        %v3016 = vrot.slane %v3014, 3
        %v3017 = vshll.u32 %v2959, 16
        %v3019 = vrot.slane %v3017, 4
        %v3020 = vor.u32 %v3016, %v3019
        %v3021 = vsel %vm937, %v3012, %v3020
        %v3023 = vshrl.u32 %v2960, 16
        %v3025 = vrot.slane %v3023, 3
        %v3026 = vshll.u32 %v2960, 16
        %v3028 = vrot.slane %v3026, 4
        %v3029 = vor.u32 %v3025, %v3028
        %v3031 = vshrl.u32 %v2961, 16
        %v3033 = vrot.slane %v3031, 3
        %v3034 = vshll.u32 %v2961, 16
        %v3036 = vrot.slane %v3034, 4
        %v3037 = vor.u32 %v3033, %v3036
        %v3038 = vsel %vm937, %v3029, %v3037
        %v3040 = vshrl.u32 %v2962, 16
        %v3042 = vrot.slane %v3040, 3
        %v3043 = vshll.u32 %v2962, 16
        %v3045 = vrot.slane %v3043, 4
        %v3046 = vor.u32 %v3042, %v3045
        %v3048 = vshrl.u32 %v2963, 16
        %v3050 = vrot.slane %v3048, 3
        %v3051 = vshll.u32 %v2963, 16
        %v3053 = vrot.slane %v3051, 4
        %v3054 = vor.u32 %v3050, %v3053
        %v3055 = vsel %vm937, %v3046, %v3054
        %v3057 = vshrl.u32 %v2964, 16
        %v3059 = vrot.slane %v3057, 3
        %v3060 = vshll.u32 %v2964, 16
        %v3062 = vrot.slane %v3060, 4
        %v3063 = vor.u32 %v3059, %v3062
        %v3065 = vshrl.u32 %v2965, 16
        %v3067 = vrot.slane %v3065, 3
        %v3068 = vshll.u32 %v2965, 16
        %v3070 = vrot.slane %v3068, 4
        %v3071 = vor.u32 %v3067, %v3070
        %v3072 = vsel %vm937, %v3063, %v3071
        %v3074 = vshrl.u32 %v2966, 16
        %v3076 = vrot.slane %v3074, 3
        %v3077 = vshll.u32 %v2966, 16
        %v3079 = vrot.slane %v3077, 4
        %v3080 = vor.u32 %v3076, %v3079
        %v3082 = vshrl.u32 %v2967, 16
        %v3084 = vrot.slane %v3082, 3
        %v3085 = vshll.u32 %v2967, 16
        %v3087 = vrot.slane %v3085, 4
        %v3088 = vor.u32 %v3084, %v3087
        %v3089 = vsel %vm937, %v3080, %v3088
        %v3091 = vshrl.u32 %v2968, 16
        %v3093 = vrot.slane %v3091, 3
        %v3094 = vshll.u32 %v2968, 16
        %v3096 = vrot.slane %v3094, 4
        %v3097 = vor.u32 %v3093, %v3096
        %v3099 = vshrl.u32 %v2969, 16
        %v3101 = vrot.slane %v3099, 3
        %v3102 = vshll.u32 %v2969, 16
        %v3104 = vrot.slane %v3102, 4
        %v3105 = vor.u32 %v3101, %v3104
        %v3106 = vsel %vm937, %v3097, %v3105
        %v3108 = vshrl.u32 %v2970, 16
        %v3110 = vrot.slane %v3108, 3
        %v3111 = vshll.u32 %v2970, 16
        %v3113 = vrot.slane %v3111, 4
        %v3114 = vor.u32 %v3110, %v3113
        %v3116 = vshrl.u32 %v2971, 16
        %v3118 = vrot.slane %v3116, 3
        %v3119 = vshll.u32 %v2971, 16
        %v3121 = vrot.slane %v3119, 4
        %v3122 = vor.u32 %v3118, %v3121
        %v3123 = vsel %vm937, %v3114, %v3122
        %v3125 = vshrl.u32 %v2972, 16
        %v3127 = vrot.slane %v3125, 3
        %v3128 = vshll.u32 %v2972, 16
        %v3130 = vrot.slane %v3128, 4
        %v3131 = vor.u32 %v3127, %v3130
        %v3133 = vshrl.u32 %v2973, 16
        %v3135 = vrot.slane %v3133, 3
        %v3136 = vshll.u32 %v2973, 16
        %v3138 = vrot.slane %v3136, 4
        %v3139 = vor.u32 %v3135, %v3138
        %v3140 = vsel %vm937, %v3131, %v3139
        %v3142 = vshrl.u32 %v2974, 16
        %v3144 = vrot.slane %v3142, 3
        %v3145 = vshll.u32 %v2974, 16
        %v3147 = vrot.slane %v3145, 4
        %v3148 = vor.u32 %v3144, %v3147
        %v3150 = vshrl.u32 %v2975, 16
        %v3152 = vrot.slane %v3150, 3
        %v3153 = vshll.u32 %v2975, 16
        %v3155 = vrot.slane %v3153, 4
        %v3156 = vor.u32 %v3152, %v3155
        %v3157 = vsel %vm937, %v3148, %v3156
        %v3159 = vshrl.u32 %v2976, 16
        %v3161 = vrot.slane %v3159, 3
        %v3162 = vshll.u32 %v2976, 16
        %v3164 = vrot.slane %v3162, 4
        %v3165 = vor.u32 %v3161, %v3164
        %v3167 = vshrl.u32 %v2977, 16
        %v3169 = vrot.slane %v3167, 3
        %v3170 = vshll.u32 %v2977, 16
        %v3172 = vrot.slane %v3170, 4
        %v3173 = vor.u32 %v3169, %v3172
        %v3174 = vsel %vm937, %v3165, %v3173
        %v3176 = vshrl.u32 %v2978, 16
        %v3178 = vrot.slane %v3176, 3
        %v3179 = vshll.u32 %v2978, 16
        %v3181 = vrot.slane %v3179, 4
        %v3182 = vor.u32 %v3178, %v3181
        %v3184 = vshrl.u32 %v2979, 16
        %v3186 = vrot.slane %v3184, 3
        %v3187 = vshll.u32 %v2979, 16
        %v3189 = vrot.slane %v3187, 4
        %v3190 = vor.u32 %v3186, %v3189
        %v3191 = vsel %vm937, %v3182, %v3190
        %v3193 = vshrl.u32 %v2980, 16
        %v3195 = vrot.slane %v3193, 3
        %v3196 = vshll.u32 %v2980, 16
        %v3198 = vrot.slane %v3196, 4
        %v3199 = vor.u32 %v3195, %v3198
        %v3201 = vshrl.u32 %v2981, 16
        %v3203 = vrot.slane %v3201, 3
        %v3204 = vshll.u32 %v2981, 16
        %v3206 = vrot.slane %v3204, 4
        %v3207 = vor.u32 %v3203, %v3206
        %v3208 = vsel %vm937, %v3199, %v3207
        %v3210 = vshrl.u32 %v2982, 16
        %v3212 = vrot.slane %v3210, 3
        %v3213 = vshll.u32 %v2982, 16
        %v3215 = vrot.slane %v3213, 4
        %v3216 = vor.u32 %v3212, %v3215
        %v3218 = vshrl.u32 %v2983, 16
        %v3220 = vrot.slane %v3218, 3
        %v3221 = vshll.u32 %v2983, 16
        %v3223 = vrot.slane %v3221, 4
        %v3224 = vor.u32 %v3220, %v3223
        %v3225 = vsel %vm937, %v3216, %v3224
        %v3227 = vshrl.u32 %v2984, 16
        %v3229 = vrot.slane %v3227, 3
        %v3230 = vshll.u32 %v2984, 16
        %v3232 = vrot.slane %v3230, 4
        %v3233 = vor.u32 %v3229, %v3232
        %v3235 = vshrl.u32 %v2985, 16
        %v3237 = vrot.slane %v3235, 3
        %v3238 = vshll.u32 %v2985, 16
        %v3240 = vrot.slane %v3238, 4
        %v3241 = vor.u32 %v3237, %v3240
        %v3242 = vsel %vm937, %v3233, %v3241
        %v3244 = vshrl.u32 %v2986, 16
        %v3246 = vrot.slane %v3244, 3
        %v3247 = vshll.u32 %v2986, 16
        %v3249 = vrot.slane %v3247, 4
        %v3250 = vor.u32 %v3246, %v3249
        %v3252 = vshrl.u32 %v2987, 16
        %v3254 = vrot.slane %v3252, 3
        %v3255 = vshll.u32 %v2987, 16
        %v3257 = vrot.slane %v3255, 4
        %v3258 = vor.u32 %v3254, %v3257
        %v3259 = vsel %vm937, %v3250, %v3258
        %3276 = vst [vmem:[#allocation3 + $0x30] sm:$0xff] %v3004
        %3277 = vst [vmem:[#allocation3 + $0x78] sm:$0xff] %v3021
        %3278 = vst [vmem:[#allocation3 + $0xc0] sm:$0xff] %v3038
        %3279 = vst [vmem:[#allocation3 + $0x108] sm:$0xff] %v3055
        %3280 = vst [vmem:[#allocation3 + $0x150] sm:$0xff] %v3072
        %3281 = vst [vmem:[#allocation3 + $0x198] sm:$0xff] %v3089
        %3282 = vst [vmem:[#allocation3 + $0x1e0] sm:$0xff] %v3106
        %3283 = vst [vmem:[#allocation3 + $0x228] sm:$0xff] %v3123
        %3284 = vst [vmem:[#allocation3 + $0x270] sm:$0xff] %v3140
        %3285 = vst [vmem:[#allocation3 + $0x2b8] sm:$0xff] %v3157
        %3286 = vst [vmem:[#allocation3 + $0x300] sm:$0xff] %v3174
        %3287 = vst [vmem:[#allocation3 + $0x348] sm:$0xff] %v3191
        %3288 = vst [vmem:[#allocation3 + $0x390] sm:$0xff] %v3208
        %3289 = vst [vmem:[#allocation3 + $0x3d8] sm:$0xff] %v3225
        %3290 = vst [vmem:[#allocation3 + $0x420] sm:$0xff] %v3242
        %3291 = vst [vmem:[#allocation3 + $0x468] sm:$0xff] %v3259
        %v3292 = vld [vmem:[%s2811 + $0x8] sm:$0xf]
        %v3293 = vld [vmem:[%s2811 + $0xc] sm:$0xf]
        %v3294 = vld [vmem:[%s2811 + $0x1c] sm:$0xf]
        %v3295 = vld [vmem:[%s2811 + $0x20] sm:$0xf]
        %v3296 = vld [vmem:[%s2811 + $0x30] sm:$0xf]
        %v3297 = vld [vmem:[%s2811 + $0x34] sm:$0xf]
        %v3298 = vld [vmem:[%s2811 + $0x44] sm:$0xf]
        %v3299 = vld [vmem:[%s2811 + $0x48] sm:$0xf]
        %v3300 = vld [vmem:[%s2811 + $0x58] sm:$0xf]
        %v3301 = vld [vmem:[%s2811 + $0x5c] sm:$0xf]
        %v3302 = vld [vmem:[%s2811 + $0x6c] sm:$0xf]
        %v3303 = vld [vmem:[%s2811 + $0x70] sm:$0xf]
        %v3304 = vld [vmem:[%s2811 + $0x80] sm:$0xf]
        %v3305 = vld [vmem:[%s2811 + $0x84] sm:$0xf]
        %v3306 = vld [vmem:[%s2811 + $0x94] sm:$0xf]
        %v3307 = vld [vmem:[%s2811 + $0x98] sm:$0xf]
        %v3308 = vld [vmem:[%s2811 + $0xa8] sm:$0xf]
        %v3309 = vld [vmem:[%s2811 + $0xac] sm:$0xf]
        %v3310 = vld [vmem:[%s2811 + $0xbc] sm:$0xf]
        %v3311 = vld [vmem:[%s2811 + $0xc0] sm:$0xf]
        %v3312 = vld [vmem:[%s2811 + $0xd0] sm:$0xf]
        %v3313 = vld [vmem:[%s2811 + $0xd4] sm:$0xf]
        %v3314 = vld [vmem:[%s2811 + $0xe4] sm:$0xf]
        %v3315 = vld [vmem:[%s2811 + $0xe8] sm:$0xf]
        %v3316 = vld [vmem:[%s2811 + $0xf8] sm:$0xf]
        %v3317 = vld [vmem:[%s2811 + $0xfc] sm:$0xf]
        %v3318 = vld [vmem:[%s2811 + $0x10c] sm:$0xf]
        %v3319 = vld [vmem:[%s2811 + $0x110] sm:$0xf]
        %v3320 = vld [vmem:[%s2811 + $0x120] sm:$0xf]
        %v3321 = vld [vmem:[%s2811 + $0x124] sm:$0xf]
        %v3322 = vld [vmem:[%s2811 + $0x134] sm:$0xf]
        %v3323 = vld [vmem:[%s2811 + $0x138] sm:$0xf]
        %v3356 = vunpack.c.l.b16 %v3292
        %v3357 = vunpack.c.l.b16 %v3293
        %v3358 = vunpack.c.l.b16 %v3294
        %v3359 = vunpack.c.l.b16 %v3295
        %v3360 = vunpack.c.l.b16 %v3296
        %v3361 = vunpack.c.l.b16 %v3297
        %v3362 = vunpack.c.l.b16 %v3298
        %v3363 = vunpack.c.l.b16 %v3299
        %v3364 = vunpack.c.l.b16 %v3300
        %v3365 = vunpack.c.l.b16 %v3301
        %v3366 = vunpack.c.l.b16 %v3302
        %v3367 = vunpack.c.l.b16 %v3303
        %v3368 = vunpack.c.l.b16 %v3304
        %v3369 = vunpack.c.l.b16 %v3305
        %v3370 = vunpack.c.l.b16 %v3306
        %v3371 = vunpack.c.l.b16 %v3307
        %v3372 = vunpack.c.l.b16 %v3308
        %v3373 = vunpack.c.l.b16 %v3309
        %v3374 = vunpack.c.l.b16 %v3310
        %v3375 = vunpack.c.l.b16 %v3311
        %v3376 = vunpack.c.l.b16 %v3312
        %v3377 = vunpack.c.l.b16 %v3313
        %v3378 = vunpack.c.l.b16 %v3314
        %v3379 = vunpack.c.l.b16 %v3315
        %v3380 = vunpack.c.l.b16 %v3316
        %v3381 = vunpack.c.l.b16 %v3317
        %v3382 = vunpack.c.l.b16 %v3318
        %v3383 = vunpack.c.l.b16 %v3319
        %v3384 = vunpack.c.l.b16 %v3320
        %v3385 = vunpack.c.l.b16 %v3321
        %v3386 = vunpack.c.l.b16 %v3322
        %v3387 = vunpack.c.l.b16 %v3323
        %v3388 = vpack.c.b16 %v3357, %v3356
        %v3389 = vpack.c.b16 %v3359, %v3358
        %v3390 = vpack.c.b16 %v3361, %v3360
        %v3391 = vpack.c.b16 %v3363, %v3362
        %v3392 = vpack.c.b16 %v3365, %v3364
        %v3393 = vpack.c.b16 %v3367, %v3366
        %v3394 = vpack.c.b16 %v3369, %v3368
        %v3395 = vpack.c.b16 %v3371, %v3370
        %v3396 = vpack.c.b16 %v3373, %v3372
        %v3397 = vpack.c.b16 %v3375, %v3374
        %v3398 = vpack.c.b16 %v3377, %v3376
        %v3399 = vpack.c.b16 %v3379, %v3378
        %v3400 = vpack.c.b16 %v3381, %v3380
        %v3401 = vpack.c.b16 %v3383, %v3382
        %v3402 = vpack.c.b16 %v3385, %v3384
        %v3403 = vpack.c.b16 %v3387, %v3386
        %3420 = vst [vmem:[#allocation3 + $0x38] sm:$0xff] %v3388
        %3421 = vst [vmem:[#allocation3 + $0x80] sm:$0xff] %v3389
        %3422 = vst [vmem:[#allocation3 + $0xc8] sm:$0xff] %v3390
        %3423 = vst [vmem:[#allocation3 + $0x110] sm:$0xff] %v3391
        %3424 = vst [vmem:[#allocation3 + $0x158] sm:$0xff] %v3392
        %3425 = vst [vmem:[#allocation3 + $0x1a0] sm:$0xff] %v3393
        %3426 = vst [vmem:[#allocation3 + $0x1e8] sm:$0xff] %v3394
        %3427 = vst [vmem:[#allocation3 + $0x230] sm:$0xff] %v3395
        %3428 = vst [vmem:[#allocation3 + $0x278] sm:$0xff] %v3396
        %3429 = vst [vmem:[#allocation3 + $0x2c0] sm:$0xff] %v3397
        %3430 = vst [vmem:[#allocation3 + $0x308] sm:$0xff] %v3398
        %3431 = vst [vmem:[#allocation3 + $0x350] sm:$0xff] %v3399
        %3432 = vst [vmem:[#allocation3 + $0x398] sm:$0xff] %v3400
        %3433 = vst [vmem:[#allocation3 + $0x3e0] sm:$0xff] %v3401
        %3434 = vst [vmem:[#allocation3 + $0x428] sm:$0xff] %v3402
        %3435 = vst [vmem:[#allocation3 + $0x470] sm:$0xff] %v3403
        %v3436 = vld [vmem:[%s2811 + $0x8] sm:$0xf]
        %v3437 = vld [vmem:[%s2811 + $0xc] sm:$0xf]
        %v3438 = vld [vmem:[%s2811 + $0x10] sm:$0x1]
        %v3439 = vld [vmem:[%s2811 + $0x1c] sm:$0xf]
        %v3440 = vld [vmem:[%s2811 + $0x20] sm:$0xf]
        %v3441 = vld [vmem:[%s2811 + $0x24] sm:$0x1]
        %v3442 = vld [vmem:[%s2811 + $0x30] sm:$0xf]
        %v3443 = vld [vmem:[%s2811 + $0x34] sm:$0xf]
        %v3444 = vld [vmem:[%s2811 + $0x38] sm:$0x1]
        %v3445 = vld [vmem:[%s2811 + $0x44] sm:$0xf]
        %v3446 = vld [vmem:[%s2811 + $0x48] sm:$0xf]
        %v3447 = vld [vmem:[%s2811 + $0x4c] sm:$0x1]
        %v3448 = vld [vmem:[%s2811 + $0x58] sm:$0xf]
        %v3449 = vld [vmem:[%s2811 + $0x5c] sm:$0xf]
        %v3450 = vld [vmem:[%s2811 + $0x60] sm:$0x1]
        %v3451 = vld [vmem:[%s2811 + $0x6c] sm:$0xf]
        %v3452 = vld [vmem:[%s2811 + $0x70] sm:$0xf]
        %v3453 = vld [vmem:[%s2811 + $0x74] sm:$0x1]
        %v3454 = vld [vmem:[%s2811 + $0x80] sm:$0xf]
        %v3455 = vld [vmem:[%s2811 + $0x84] sm:$0xf]
        %v3456 = vld [vmem:[%s2811 + $0x88] sm:$0x1]
        %v3457 = vld [vmem:[%s2811 + $0x94] sm:$0xf]
        %v3458 = vld [vmem:[%s2811 + $0x98] sm:$0xf]
        %v3459 = vld [vmem:[%s2811 + $0x9c] sm:$0x1]
        %v3460 = vld [vmem:[%s2811 + $0xa8] sm:$0xf]
        %v3461 = vld [vmem:[%s2811 + $0xac] sm:$0xf]
        %v3462 = vld [vmem:[%s2811 + $0xb0] sm:$0x1]
        %v3463 = vld [vmem:[%s2811 + $0xbc] sm:$0xf]
        %v3464 = vld [vmem:[%s2811 + $0xc0] sm:$0xf]
        %v3465 = vld [vmem:[%s2811 + $0xc4] sm:$0x1]
        %v3466 = vld [vmem:[%s2811 + $0xd0] sm:$0xf]
        %v3467 = vld [vmem:[%s2811 + $0xd4] sm:$0xf]
        %v3468 = vld [vmem:[%s2811 + $0xd8] sm:$0x1]
        %v3469 = vld [vmem:[%s2811 + $0xe4] sm:$0xf]
        %v3470 = vld [vmem:[%s2811 + $0xe8] sm:$0xf]
        %v3471 = vld [vmem:[%s2811 + $0xec] sm:$0x1]
        %v3472 = vld [vmem:[%s2811 + $0xf8] sm:$0xf]
        %v3473 = vld [vmem:[%s2811 + $0xfc] sm:$0xf]
        %v3474 = vld [vmem:[%s2811 + $0x100] sm:$0x1]
        %v3475 = vld [vmem:[%s2811 + $0x10c] sm:$0xf]
        %v3476 = vld [vmem:[%s2811 + $0x110] sm:$0xf]
        %v3477 = vld [vmem:[%s2811 + $0x114] sm:$0x1]
        %v3478 = vld [vmem:[%s2811 + $0x120] sm:$0xf]
        %v3479 = vld [vmem:[%s2811 + $0x124] sm:$0xf]
        %v3480 = vld [vmem:[%s2811 + $0x128] sm:$0x1]
        %v3481 = vld [vmem:[%s2811 + $0x134] sm:$0xf]
        %v3482 = vld [vmem:[%s2811 + $0x138] sm:$0xf]
        %v3483 = vld [vmem:[%s2811 + $0x13c] sm:$0x1]
        %v3532 = vunpack.c.l.b16 %v3436
        %v3533 = vunpack.c.l.b16 %v3437
        %v3534 = vunpack.c.l.b16 %v3438
        %v3535 = vunpack.c.l.b16 %v3439
        %v3536 = vunpack.c.l.b16 %v3440
        %v3537 = vunpack.c.l.b16 %v3441
        %v3538 = vunpack.c.l.b16 %v3442
        %v3539 = vunpack.c.l.b16 %v3443
        %v3540 = vunpack.c.l.b16 %v3444
        %v3541 = vunpack.c.l.b16 %v3445
        %v3542 = vunpack.c.l.b16 %v3446
        %v3543 = vunpack.c.l.b16 %v3447
        %v3544 = vunpack.c.l.b16 %v3448
        %v3545 = vunpack.c.l.b16 %v3449
        %v3546 = vunpack.c.l.b16 %v3450
        %v3547 = vunpack.c.l.b16 %v3451
        %v3548 = vunpack.c.l.b16 %v3452
        %v3549 = vunpack.c.l.b16 %v3453
        %v3550 = vunpack.c.l.b16 %v3454
        %v3551 = vunpack.c.l.b16 %v3455
        %v3552 = vunpack.c.l.b16 %v3456
        %v3553 = vunpack.c.l.b16 %v3457
        %v3554 = vunpack.c.l.b16 %v3458
        %v3555 = vunpack.c.l.b16 %v3459
        %v3556 = vunpack.c.l.b16 %v3460
        %v3557 = vunpack.c.l.b16 %v3461
        %v3558 = vunpack.c.l.b16 %v3462
        %v3559 = vunpack.c.l.b16 %v3463
        %v3560 = vunpack.c.l.b16 %v3464
        %v3561 = vunpack.c.l.b16 %v3465
        %v3562 = vunpack.c.l.b16 %v3466
        %v3563 = vunpack.c.l.b16 %v3467
        %v3564 = vunpack.c.l.b16 %v3468
        %v3565 = vunpack.c.l.b16 %v3469
        %v3566 = vunpack.c.l.b16 %v3470
        %v3567 = vunpack.c.l.b16 %v3471
        %v3568 = vunpack.c.l.b16 %v3472
        %v3569 = vunpack.c.l.b16 %v3473
        %v3570 = vunpack.c.l.b16 %v3474
        %v3571 = vunpack.c.l.b16 %v3475
        %v3572 = vunpack.c.l.b16 %v3476
        %v3573 = vunpack.c.l.b16 %v3477
        %v3574 = vunpack.c.l.b16 %v3478
        %v3575 = vunpack.c.l.b16 %v3479
        %v3576 = vunpack.c.l.b16 %v3480
        %v3577 = vunpack.c.l.b16 %v3481
        %v3578 = vunpack.c.l.b16 %v3482
        %v3579 = vunpack.c.l.b16 %v3483
        %v3580 = vpack.c.b16 %v3533, %v3532
        %v3581 = vpack.c.b16 %v3534, %v3534
        %v3582 = vpack.c.b16 %v3536, %v3535
        %v3583 = vpack.c.b16 %v3537, %v3537
        %v3584 = vpack.c.b16 %v3539, %v3538
        %v3585 = vpack.c.b16 %v3540, %v3540
        %v3586 = vpack.c.b16 %v3542, %v3541
        %v3587 = vpack.c.b16 %v3543, %v3543
        %v3588 = vpack.c.b16 %v3545, %v3544
        %v3589 = vpack.c.b16 %v3546, %v3546
        %v3590 = vpack.c.b16 %v3548, %v3547
        %v3591 = vpack.c.b16 %v3549, %v3549
        %v3592 = vpack.c.b16 %v3551, %v3550
        %v3593 = vpack.c.b16 %v3552, %v3552
        %v3594 = vpack.c.b16 %v3554, %v3553
        %v3595 = vpack.c.b16 %v3555, %v3555
        %v3596 = vpack.c.b16 %v3557, %v3556
        %v3597 = vpack.c.b16 %v3558, %v3558
        %v3598 = vpack.c.b16 %v3560, %v3559
        %v3599 = vpack.c.b16 %v3561, %v3561
        %v3600 = vpack.c.b16 %v3563, %v3562
        %v3601 = vpack.c.b16 %v3564, %v3564
        %v3602 = vpack.c.b16 %v3566, %v3565
        %v3603 = vpack.c.b16 %v3567, %v3567
        %v3604 = vpack.c.b16 %v3569, %v3568
        %v3605 = vpack.c.b16 %v3570, %v3570
        %v3606 = vpack.c.b16 %v3572, %v3571
        %v3607 = vpack.c.b16 %v3573, %v3573
        %v3608 = vpack.c.b16 %v3575, %v3574
        %v3609 = vpack.c.b16 %v3576, %v3576
        %v3610 = vpack.c.b16 %v3578, %v3577
        %v3611 = vpack.c.b16 %v3579, %v3579
        %v3613 = vshrl.u32 %v3580, 16
        %v3615 = vshll.u32 %v3580, 16
        %v3617 = vrot.slane %v3615, 1
        %v3618 = vor.u32 %v3613, %v3617
        %v3620 = vshll.u32 %v3581, 16
        %v3622 = vrot.slane %v3620, 1
        %v3623 = vsel %vm1562, %v3618, %v3622
        %v3625 = vshrl.u32 %v3582, 16
        %v3627 = vshll.u32 %v3582, 16
        %v3629 = vrot.slane %v3627, 1
        %v3630 = vor.u32 %v3625, %v3629
        %v3632 = vshll.u32 %v3583, 16
        %v3634 = vrot.slane %v3632, 1
        %v3635 = vsel %vm1562, %v3630, %v3634
        %v3637 = vshrl.u32 %v3584, 16
        %v3639 = vshll.u32 %v3584, 16
        %v3641 = vrot.slane %v3639, 1
        %v3642 = vor.u32 %v3637, %v3641
        %v3644 = vshll.u32 %v3585, 16
        %v3646 = vrot.slane %v3644, 1
        %v3647 = vsel %vm1562, %v3642, %v3646
        %v3649 = vshrl.u32 %v3586, 16
        %v3651 = vshll.u32 %v3586, 16
        %v3653 = vrot.slane %v3651, 1
        %v3654 = vor.u32 %v3649, %v3653
        %v3656 = vshll.u32 %v3587, 16
        %v3658 = vrot.slane %v3656, 1
        %v3659 = vsel %vm1562, %v3654, %v3658
        %v3661 = vshrl.u32 %v3588, 16
        %v3663 = vshll.u32 %v3588, 16
        %v3665 = vrot.slane %v3663, 1
        %v3666 = vor.u32 %v3661, %v3665
        %v3668 = vshll.u32 %v3589, 16
        %v3670 = vrot.slane %v3668, 1
        %v3671 = vsel %vm1562, %v3666, %v3670
        %v3673 = vshrl.u32 %v3590, 16
        %v3675 = vshll.u32 %v3590, 16
        %v3677 = vrot.slane %v3675, 1
        %v3678 = vor.u32 %v3673, %v3677
        %v3680 = vshll.u32 %v3591, 16
        %v3682 = vrot.slane %v3680, 1
        %v3683 = vsel %vm1562, %v3678, %v3682
        %v3685 = vshrl.u32 %v3592, 16
        %v3687 = vshll.u32 %v3592, 16
        %v3689 = vrot.slane %v3687, 1
        %v3690 = vor.u32 %v3685, %v3689
        %v3692 = vshll.u32 %v3593, 16
        %v3694 = vrot.slane %v3692, 1
        %v3695 = vsel %vm1562, %v3690, %v3694
        %v3697 = vshrl.u32 %v3594, 16
        %v3699 = vshll.u32 %v3594, 16
        %v3701 = vrot.slane %v3699, 1
        %v3702 = vor.u32 %v3697, %v3701
        %v3704 = vshll.u32 %v3595, 16
        %v3706 = vrot.slane %v3704, 1
        %v3707 = vsel %vm1562, %v3702, %v3706
        %v3709 = vshrl.u32 %v3596, 16
        %v3711 = vshll.u32 %v3596, 16
        %v3713 = vrot.slane %v3711, 1
        %v3714 = vor.u32 %v3709, %v3713
        %v3716 = vshll.u32 %v3597, 16
        %v3718 = vrot.slane %v3716, 1
        %v3719 = vsel %vm1562, %v3714, %v3718
        %v3721 = vshrl.u32 %v3598, 16
        %v3723 = vshll.u32 %v3598, 16
        %v3725 = vrot.slane %v3723, 1
        %v3726 = vor.u32 %v3721, %v3725
        %v3728 = vshll.u32 %v3599, 16
        %v3730 = vrot.slane %v3728, 1
        %v3731 = vsel %vm1562, %v3726, %v3730
        %v3733 = vshrl.u32 %v3600, 16
        %v3735 = vshll.u32 %v3600, 16
        %v3737 = vrot.slane %v3735, 1
        %v3738 = vor.u32 %v3733, %v3737
        %v3740 = vshll.u32 %v3601, 16
        %v3742 = vrot.slane %v3740, 1
        %v3743 = vsel %vm1562, %v3738, %v3742
        %v3745 = vshrl.u32 %v3602, 16
        %v3747 = vshll.u32 %v3602, 16
        %v3749 = vrot.slane %v3747, 1
        %v3750 = vor.u32 %v3745, %v3749
        %v3752 = vshll.u32 %v3603, 16
        %v3754 = vrot.slane %v3752, 1
        %v3755 = vsel %vm1562, %v3750, %v3754
        %v3757 = vshrl.u32 %v3604, 16
        %v3759 = vshll.u32 %v3604, 16
        %v3761 = vrot.slane %v3759, 1
        %v3762 = vor.u32 %v3757, %v3761
        %v3764 = vshll.u32 %v3605, 16
        %v3766 = vrot.slane %v3764, 1
        %v3767 = vsel %vm1562, %v3762, %v3766
        %v3769 = vshrl.u32 %v3606, 16
        %v3771 = vshll.u32 %v3606, 16
        %v3773 = vrot.slane %v3771, 1
        %v3774 = vor.u32 %v3769, %v3773
        %v3776 = vshll.u32 %v3607, 16
        %v3778 = vrot.slane %v3776, 1
        %v3779 = vsel %vm1562, %v3774, %v3778
        %v3781 = vshrl.u32 %v3608, 16
        %v3783 = vshll.u32 %v3608, 16
        %v3785 = vrot.slane %v3783, 1
        %v3786 = vor.u32 %v3781, %v3785
        %v3788 = vshll.u32 %v3609, 16
        %v3790 = vrot.slane %v3788, 1
        %v3791 = vsel %vm1562, %v3786, %v3790
        %v3793 = vshrl.u32 %v3610, 16
        %v3795 = vshll.u32 %v3610, 16
        %v3797 = vrot.slane %v3795, 1
        %v3798 = vor.u32 %v3793, %v3797
        %v3800 = vshll.u32 %v3611, 16
        %v3802 = vrot.slane %v3800, 1
        %v3803 = vsel %vm1562, %v3798, %v3802
        %3820 = vst [vmem:[#allocation3 + $0x40] sm:$0xff] %v3623
        %3821 = vst [vmem:[#allocation3 + $0x88] sm:$0xff] %v3635
        %3822 = vst [vmem:[#allocation3 + $0xd0] sm:$0xff] %v3647
        %3823 = vst [vmem:[#allocation3 + $0x118] sm:$0xff] %v3659
        %3824 = vst [vmem:[#allocation3 + $0x160] sm:$0xff] %v3671
        %3825 = vst [vmem:[#allocation3 + $0x1a8] sm:$0xff] %v3683
        %3826 = vst [vmem:[#allocation3 + $0x1f0] sm:$0xff] %v3695
        %3827 = vst [vmem:[#allocation3 + $0x238] sm:$0xff] %v3707
        %3828 = vst [vmem:[#allocation3 + $0x280] sm:$0xff] %v3719
        %3829 = vst [vmem:[#allocation3 + $0x2c8] sm:$0xff] %v3731
        %3830 = vst [vmem:[#allocation3 + $0x310] sm:$0xff] %v3743
        %3831 = vst [vmem:[#allocation3 + $0x358] sm:$0xff] %v3755
        %3832 = vst [vmem:[#allocation3 + $0x3a0] sm:$0xff] %v3767
        %3833 = vst [vmem:[#allocation3 + $0x3e8] sm:$0xff] %v3779
        %3834 = vst [vmem:[#allocation3 + $0x430] sm:$0xff] %v3791
        %3835 = vst [vmem:[#allocation3 + $0x478] sm:$0xff] %v3803
        %v3836 = vld [vmem:[#allocation3] sm:$0xff]
        %v3837 = vld [vmem:[#allocation3 + $0x8] sm:$0xff]
        %v3838 = vld [vmem:[#allocation3 + $0x10] sm:$0xff]
        %v3839 = vld [vmem:[#allocation3 + $0x18] sm:$0xff]
        %v3840 = vld [vmem:[#allocation3 + $0x20] sm:$0xff]
        %v3841 = vld [vmem:[#allocation3 + $0x28] sm:$0xff]
        %v3842 = vld [vmem:[#allocation3 + $0x30] sm:$0xff]
        %v3843 = vld [vmem:[#allocation3 + $0x38] sm:$0xff]
        %v3844 = vld [vmem:[#allocation3 + $0x40] sm:$0xff]
        %v3845 = vld [vmem:[#allocation3 + $0x48] sm:$0xff]
        %v3846 = vld [vmem:[#allocation3 + $0x50] sm:$0xff]
        %v3847 = vld [vmem:[#allocation3 + $0x58] sm:$0xff]
        %v3848 = vld [vmem:[#allocation3 + $0x60] sm:$0xff]
        %v3849 = vld [vmem:[#allocation3 + $0x68] sm:$0xff]
        %v3850 = vld [vmem:[#allocation3 + $0x70] sm:$0xff]
        %v3851 = vld [vmem:[#allocation3 + $0x78] sm:$0xff]
        %v3852 = vld [vmem:[#allocation3 + $0x80] sm:$0xff]
        %v3853 = vld [vmem:[#allocation3 + $0x88] sm:$0xff]
        %v3854 = vld [vmem:[#allocation3 + $0x90] sm:$0xff]
        %v3855 = vld [vmem:[#allocation3 + $0x98] sm:$0xff]
        %v3856 = vld [vmem:[#allocation3 + $0xa0] sm:$0xff]
        %v3857 = vld [vmem:[#allocation3 + $0xa8] sm:$0xff]
        %v3858 = vld [vmem:[#allocation3 + $0xb0] sm:$0xff]
        %v3859 = vld [vmem:[#allocation3 + $0xb8] sm:$0xff]
        %v3860 = vld [vmem:[#allocation3 + $0xc0] sm:$0xff]
        %v3861 = vld [vmem:[#allocation3 + $0xc8] sm:$0xff]
        %v3862 = vld [vmem:[#allocation3 + $0xd0] sm:$0xff]
        %v3863 = vld [vmem:[#allocation3 + $0xd8] sm:$0xff]
        %v3864 = vld [vmem:[#allocation3 + $0xe0] sm:$0xff]
        %v3865 = vld [vmem:[#allocation3 + $0xe8] sm:$0xff]
        %v3866 = vld [vmem:[#allocation3 + $0xf0] sm:$0xff]
        %v3867 = vld [vmem:[#allocation3 + $0xf8] sm:$0xff]
        %v3868 = vld [vmem:[#allocation3 + $0x100] sm:$0xff]
        %v3869 = vld [vmem:[#allocation3 + $0x108] sm:$0xff]
        %v3870 = vld [vmem:[#allocation3 + $0x110] sm:$0xff]
        %v3871 = vld [vmem:[#allocation3 + $0x118] sm:$0xff]
        %v3872 = vld [vmem:[#allocation3 + $0x120] sm:$0xff]
        %v3873 = vld [vmem:[#allocation3 + $0x128] sm:$0xff]
        %v3874 = vld [vmem:[#allocation3 + $0x130] sm:$0xff]
        %v3875 = vld [vmem:[#allocation3 + $0x138] sm:$0xff]
        %v3876 = vld [vmem:[#allocation3 + $0x140] sm:$0xff]
        %v3877 = vld [vmem:[#allocation3 + $0x148] sm:$0xff]
        %v3878 = vld [vmem:[#allocation3 + $0x150] sm:$0xff]
        %v3879 = vld [vmem:[#allocation3 + $0x158] sm:$0xff]
        %v3880 = vld [vmem:[#allocation3 + $0x160] sm:$0xff]
        %v3881 = vld [vmem:[#allocation3 + $0x168] sm:$0xff]
        %v3882 = vld [vmem:[#allocation3 + $0x170] sm:$0xff]
        %v3883 = vld [vmem:[#allocation3 + $0x178] sm:$0xff]
        %v3884 = vld [vmem:[#allocation3 + $0x180] sm:$0xff]
        %v3885 = vld [vmem:[#allocation3 + $0x188] sm:$0xff]
        %v3886 = vld [vmem:[#allocation3 + $0x190] sm:$0xff]
        %v3887 = vld [vmem:[#allocation3 + $0x198] sm:$0xff]
        %v3888 = vld [vmem:[#allocation3 + $0x1a0] sm:$0xff]
        %v3889 = vld [vmem:[#allocation3 + $0x1a8] sm:$0xff]
        %v3890 = vld [vmem:[#allocation3 + $0x1b0] sm:$0xff]
        %v3891 = vld [vmem:[#allocation3 + $0x1b8] sm:$0xff]
        %v3892 = vld [vmem:[#allocation3 + $0x1c0] sm:$0xff]
        %v3893 = vld [vmem:[#allocation3 + $0x1c8] sm:$0xff]
        %v3894 = vld [vmem:[#allocation3 + $0x1d0] sm:$0xff]
        %v3895 = vld [vmem:[#allocation3 + $0x1d8] sm:$0xff]
        %v3896 = vld [vmem:[#allocation3 + $0x1e0] sm:$0xff]
        %v3897 = vld [vmem:[#allocation3 + $0x1e8] sm:$0xff]
        %v3898 = vld [vmem:[#allocation3 + $0x1f0] sm:$0xff]
        %v3899 = vld [vmem:[#allocation3 + $0x1f8] sm:$0xff]
        %v3900 = vld [vmem:[#allocation3 + $0x200] sm:$0xff]
        %v3901 = vld [vmem:[#allocation3 + $0x208] sm:$0xff]
        %v3902 = vld [vmem:[#allocation3 + $0x210] sm:$0xff]
        %v3903 = vld [vmem:[#allocation3 + $0x218] sm:$0xff]
        %v3904 = vld [vmem:[#allocation3 + $0x220] sm:$0xff]
        %v3905 = vld [vmem:[#allocation3 + $0x228] sm:$0xff]
        %v3906 = vld [vmem:[#allocation3 + $0x230] sm:$0xff]
        %v3907 = vld [vmem:[#allocation3 + $0x238] sm:$0xff]
        %v3908 = vld [vmem:[#allocation3 + $0x240] sm:$0xff]
        %v3909 = vld [vmem:[#allocation3 + $0x248] sm:$0xff]
        %v3910 = vld [vmem:[#allocation3 + $0x250] sm:$0xff]
        %v3911 = vld [vmem:[#allocation3 + $0x258] sm:$0xff]
        %v3912 = vld [vmem:[#allocation3 + $0x260] sm:$0xff]
        %v3913 = vld [vmem:[#allocation3 + $0x268] sm:$0xff]
        %v3914 = vld [vmem:[#allocation3 + $0x270] sm:$0xff]
        %v3915 = vld [vmem:[#allocation3 + $0x278] sm:$0xff]
        %v3916 = vld [vmem:[#allocation3 + $0x280] sm:$0xff]
        %v3917 = vld [vmem:[#allocation3 + $0x288] sm:$0xff]
        %v3918 = vld [vmem:[#allocation3 + $0x290] sm:$0xff]
        %v3919 = vld [vmem:[#allocation3 + $0x298] sm:$0xff]
        %v3920 = vld [vmem:[#allocation3 + $0x2a0] sm:$0xff]
        %v3921 = vld [vmem:[#allocation3 + $0x2a8] sm:$0xff]
        %v3922 = vld [vmem:[#allocation3 + $0x2b0] sm:$0xff]
        %v3923 = vld [vmem:[#allocation3 + $0x2b8] sm:$0xff]
        %v3924 = vld [vmem:[#allocation3 + $0x2c0] sm:$0xff]
        %v3925 = vld [vmem:[#allocation3 + $0x2c8] sm:$0xff]
        %v3926 = vld [vmem:[#allocation3 + $0x2d0] sm:$0xff]
        %v3927 = vld [vmem:[#allocation3 + $0x2d8] sm:$0xff]
        %v3928 = vld [vmem:[#allocation3 + $0x2e0] sm:$0xff]
        %v3929 = vld [vmem:[#allocation3 + $0x2e8] sm:$0xff]
        %v3930 = vld [vmem:[#allocation3 + $0x2f0] sm:$0xff]
        %v3931 = vld [vmem:[#allocation3 + $0x2f8] sm:$0xff]
        %v3932 = vld [vmem:[#allocation3 + $0x300] sm:$0xff]
        %v3933 = vld [vmem:[#allocation3 + $0x308] sm:$0xff]
        %v3934 = vld [vmem:[#allocation3 + $0x310] sm:$0xff]
        %v3935 = vld [vmem:[#allocation3 + $0x318] sm:$0xff]
        %v3936 = vld [vmem:[#allocation3 + $0x320] sm:$0xff]
        %v3937 = vld [vmem:[#allocation3 + $0x328] sm:$0xff]
        %v3938 = vld [vmem:[#allocation3 + $0x330] sm:$0xff]
        %v3939 = vld [vmem:[#allocation3 + $0x338] sm:$0xff]
        %v3940 = vld [vmem:[#allocation3 + $0x340] sm:$0xff]
        %v3941 = vld [vmem:[#allocation3 + $0x348] sm:$0xff]
        %v3942 = vld [vmem:[#allocation3 + $0x350] sm:$0xff]
        %v3943 = vld [vmem:[#allocation3 + $0x358] sm:$0xff]
        %v3944 = vld [vmem:[#allocation3 + $0x360] sm:$0xff]
        %v3945 = vld [vmem:[#allocation3 + $0x368] sm:$0xff]
        %v3946 = vld [vmem:[#allocation3 + $0x370] sm:$0xff]
        %v3947 = vld [vmem:[#allocation3 + $0x378] sm:$0xff]
        %v3948 = vld [vmem:[#allocation3 + $0x380] sm:$0xff]
        %v3949 = vld [vmem:[#allocation3 + $0x388] sm:$0xff]
        %v3950 = vld [vmem:[#allocation3 + $0x390] sm:$0xff]
        %v3951 = vld [vmem:[#allocation3 + $0x398] sm:$0xff]
        %v3952 = vld [vmem:[#allocation3 + $0x3a0] sm:$0xff]
        %v3953 = vld [vmem:[#allocation3 + $0x3a8] sm:$0xff]
        %v3954 = vld [vmem:[#allocation3 + $0x3b0] sm:$0xff]
        %v3955 = vld [vmem:[#allocation3 + $0x3b8] sm:$0xff]
        %v3956 = vld [vmem:[#allocation3 + $0x3c0] sm:$0xff]
        %v3957 = vld [vmem:[#allocation3 + $0x3c8] sm:$0xff]
        %v3958 = vld [vmem:[#allocation3 + $0x3d0] sm:$0xff]
        %v3959 = vld [vmem:[#allocation3 + $0x3d8] sm:$0xff]
        %v3960 = vld [vmem:[#allocation3 + $0x3e0] sm:$0xff]
        %v3961 = vld [vmem:[#allocation3 + $0x3e8] sm:$0xff]
        %v3962 = vld [vmem:[#allocation3 + $0x3f0] sm:$0xff]
        %v3963 = vld [vmem:[#allocation3 + $0x3f8] sm:$0xff]
        %v3964 = vld [vmem:[#allocation3 + $0x400] sm:$0xff]
        %v3965 = vld [vmem:[#allocation3 + $0x408] sm:$0xff]
        %v3966 = vld [vmem:[#allocation3 + $0x410] sm:$0xff]
        %v3967 = vld [vmem:[#allocation3 + $0x418] sm:$0xff]
        %v3968 = vld [vmem:[#allocation3 + $0x420] sm:$0xff]
        %v3969 = vld [vmem:[#allocation3 + $0x428] sm:$0xff]
        %v3970 = vld [vmem:[#allocation3 + $0x430] sm:$0xff]
        %v3971 = vld [vmem:[#allocation3 + $0x438] sm:$0xff]
        %v3972 = vld [vmem:[#allocation3 + $0x440] sm:$0xff]
        %v3973 = vld [vmem:[#allocation3 + $0x448] sm:$0xff]
        %v3974 = vld [vmem:[#allocation3 + $0x450] sm:$0xff]
        %v3975 = vld [vmem:[#allocation3 + $0x458] sm:$0xff]
        %v3976 = vld [vmem:[#allocation3 + $0x460] sm:$0xff]
        %v3977 = vld [vmem:[#allocation3 + $0x468] sm:$0xff]
        %v3978 = vld [vmem:[#allocation3 + $0x470] sm:$0xff]
        %v3979 = vld [vmem:[#allocation3 + $0x478] sm:$0xff]
        %v3980 = vld [vmem:[#allocation8] sm:$0xf]
        %v3981 = vld [vmem:[#allocation8 + $0x4] sm:$0xf]
        %v3982 = vld [vmem:[#allocation8 + $0x8] sm:$0xf]
        %v3983 = vld [vmem:[#allocation8 + $0xc] sm:$0xf]
        %v3984 = vld [vmem:[#allocation8 + $0x10] sm:$0xf]
        %v3985 = vld [vmem:[#allocation8 + $0x14] sm:$0xf]
        %v3986 = vld [vmem:[#allocation8 + $0x18] sm:$0xf]
        %v3987 = vld [vmem:[#allocation8 + $0x1c] sm:$0xf]
        %v3988 = vld [vmem:[#allocation8 + $0x20] sm:$0xf]
        %v3989 = vld [vmem:[#allocation8 + $0x24] sm:$0xf]
        %v3990 = vld [vmem:[#allocation8 + $0x28] sm:$0xf]
        %v3991 = vld [vmem:[#allocation8 + $0x2c] sm:$0xf]
        %v3992 = vld [vmem:[#allocation8 + $0x30] sm:$0xf]
        %v3993 = vld [vmem:[#allocation8 + $0x34] sm:$0xf]
        %v3994 = vld [vmem:[#allocation8 + $0x38] sm:$0xf]
        %v3995 = vld [vmem:[#allocation8 + $0x3c] sm:$0xf]
        %v3996 = vld [vmem:[#allocation8 + $0x40] sm:$0xf]
        %v3997 = vld [vmem:[#allocation8 + $0x44] sm:$0xf]
        %v3998 = vld [vmem:[#allocation8 + $0x48] sm:$0xf]
        %v3999 = vld [vmem:[#allocation8 + $0x4c] sm:$0xf]
        %v4000 = vld [vmem:[#allocation8 + $0x50] sm:$0xf]
        %v4001 = vld [vmem:[#allocation8 + $0x54] sm:$0xf]
        %v4002 = vld [vmem:[#allocation8 + $0x58] sm:$0xf]
        %v4003 = vld [vmem:[#allocation8 + $0x5c] sm:$0xf]
        %v4004 = vld [vmem:[#allocation8 + $0x60] sm:$0xf]
        %v4005 = vld [vmem:[#allocation8 + $0x64] sm:$0xf]
        %v4006 = vld [vmem:[#allocation8 + $0x68] sm:$0xf]
        %v4007 = vld [vmem:[#allocation8 + $0x6c] sm:$0xf]
        %v4008 = vld [vmem:[#allocation8 + $0x70] sm:$0xf]
        %v4009 = vld [vmem:[#allocation8 + $0x74] sm:$0xf]
        %v4010 = vld [vmem:[#allocation8 + $0x78] sm:$0xf]
        %v4011 = vld [vmem:[#allocation8 + $0x7c] sm:$0xf]
        %v4012 = vld [vmem:[#allocation8 + $0x80] sm:$0xf]
        %v4013 = vld [vmem:[#allocation8 + $0x84] sm:$0xf]
        %v4014 = vld [vmem:[#allocation8 + $0x88] sm:$0xf]
        %v4015 = vld [vmem:[#allocation8 + $0x8c] sm:$0xf]
        %v4016 = vld [vmem:[#allocation8 + $0x90] sm:$0xf]
        %v4017 = vld [vmem:[#allocation8 + $0x94] sm:$0xf]
        %v4018 = vld [vmem:[#allocation8 + $0x98] sm:$0xf]
        %v4019 = vld [vmem:[#allocation8 + $0x9c] sm:$0xf]
        %v4020 = vld [vmem:[#allocation8 + $0xa0] sm:$0xf]
        %v4021 = vld [vmem:[#allocation8 + $0xa4] sm:$0xf]
        %v4022 = vld [vmem:[#allocation8 + $0xa8] sm:$0xf]
        %v4023 = vld [vmem:[#allocation8 + $0xac] sm:$0xf]
        %v4024 = vld [vmem:[#allocation8 + $0xb0] sm:$0xf]
        %v4025 = vld [vmem:[#allocation8 + $0xb4] sm:$0xf]
        %v4026 = vld [vmem:[#allocation8 + $0xb8] sm:$0xf]
        %v4027 = vld [vmem:[#allocation8 + $0xbc] sm:$0xf]
        %v4028 = vld [vmem:[#allocation8 + $0xc0] sm:$0xf]
        %v4029 = vld [vmem:[#allocation8 + $0xc4] sm:$0xf]
        %v4030 = vld [vmem:[#allocation8 + $0xc8] sm:$0xf]
        %v4031 = vld [vmem:[#allocation8 + $0xcc] sm:$0xf]
        %v4032 = vld [vmem:[#allocation8 + $0xd0] sm:$0xf]
        %v4033 = vld [vmem:[#allocation8 + $0xd4] sm:$0xf]
        %v4034 = vld [vmem:[#allocation8 + $0xd8] sm:$0xf]
        %v4035 = vld [vmem:[#allocation8 + $0xdc] sm:$0xf]
        %v4036 = vld [vmem:[#allocation8 + $0xe0] sm:$0xf]
        %v4037 = vld [vmem:[#allocation8 + $0xe4] sm:$0xf]
        %v4038 = vld [vmem:[#allocation8 + $0xe8] sm:$0xf]
        %v4039 = vld [vmem:[#allocation8 + $0xec] sm:$0xf]
        %v4040 = vld [vmem:[#allocation8 + $0xf0] sm:$0xf]
        %v4041 = vld [vmem:[#allocation8 + $0xf4] sm:$0xf]
        %v4042 = vld [vmem:[#allocation8 + $0xf8] sm:$0xf]
        %v4043 = vld [vmem:[#allocation8 + $0xfc] sm:$0xf]
        %v4044 = vld [vmem:[#allocation8 + $0x100] sm:$0xf]
        %v4045 = vld [vmem:[#allocation8 + $0x104] sm:$0xf]
        %v4046 = vld [vmem:[#allocation8 + $0x108] sm:$0xf]
        %v4047 = vld [vmem:[#allocation8 + $0x10c] sm:$0xf]
        %v4048 = vld [vmem:[#allocation8 + $0x110] sm:$0xf]
        %v4049 = vld [vmem:[#allocation8 + $0x114] sm:$0xf]
        %v4050 = vld [vmem:[#allocation8 + $0x118] sm:$0xf]
        %v4051 = vld [vmem:[#allocation8 + $0x11c] sm:$0xf]
        %v4052 = vld [vmem:[#allocation8 + $0x120] sm:$0xf]
        %v4053 = vld [vmem:[#allocation8 + $0x124] sm:$0xf]
        %v4054 = vld [vmem:[#allocation8 + $0x128] sm:$0xf]
        %v4055 = vld [vmem:[#allocation8 + $0x12c] sm:$0xf]
        %v4056 = vld [vmem:[#allocation8 + $0x130] sm:$0xf]
        %v4057 = vld [vmem:[#allocation8 + $0x134] sm:$0xf]
        %v4058 = vld [vmem:[#allocation8 + $0x138] sm:$0xf]
        %v4059 = vld [vmem:[#allocation8 + $0x13c] sm:$0xf]
        %v4060 = vld [vmem:[#allocation8 + $0x140] sm:$0xf]
        %v4061 = vld [vmem:[#allocation8 + $0x144] sm:$0xf]
        %v4062 = vld [vmem:[#allocation8 + $0x148] sm:$0xf]
        %v4063 = vld [vmem:[#allocation8 + $0x14c] sm:$0xf]
        %v4064 = vld [vmem:[#allocation8 + $0x150] sm:$0xf]
        %v4065 = vld [vmem:[#allocation8 + $0x154] sm:$0xf]
        %v4066 = vld [vmem:[#allocation8 + $0x158] sm:$0xf]
        %v4067 = vld [vmem:[#allocation8 + $0x15c] sm:$0xf]
        %v4068 = vld [vmem:[#allocation8 + $0x160] sm:$0xf]
        %v4069 = vld [vmem:[#allocation8 + $0x164] sm:$0xf]
        %v4070 = vld [vmem:[#allocation8 + $0x168] sm:$0xf]
        %v4071 = vld [vmem:[#allocation8 + $0x16c] sm:$0xf]
        %v4072 = vld [vmem:[#allocation8 + $0x170] sm:$0xf]
        %v4073 = vld [vmem:[#allocation8 + $0x174] sm:$0xf]
        %v4074 = vld [vmem:[#allocation8 + $0x178] sm:$0xf]
        %v4075 = vld [vmem:[#allocation8 + $0x17c] sm:$0xf]
        %v4076 = vld [vmem:[#allocation8 + $0x180] sm:$0xf]
        %v4077 = vld [vmem:[#allocation8 + $0x184] sm:$0xf]
        %v4078 = vld [vmem:[#allocation8 + $0x188] sm:$0xf]
        %v4079 = vld [vmem:[#allocation8 + $0x18c] sm:$0xf]
        %v4080 = vld [vmem:[#allocation8 + $0x190] sm:$0xf]
        %v4081 = vld [vmem:[#allocation8 + $0x194] sm:$0xf]
        %v4082 = vld [vmem:[#allocation8 + $0x198] sm:$0xf]
        %v4083 = vld [vmem:[#allocation8 + $0x19c] sm:$0xf]
        %v4084 = vld [vmem:[#allocation8 + $0x1a0] sm:$0xf]
        %v4085 = vld [vmem:[#allocation8 + $0x1a4] sm:$0xf]
        %v4086 = vld [vmem:[#allocation8 + $0x1a8] sm:$0xf]
        %v4087 = vld [vmem:[#allocation8 + $0x1ac] sm:$0xf]
        %v4088 = vld [vmem:[#allocation8 + $0x1b0] sm:$0xf]
        %v4089 = vld [vmem:[#allocation8 + $0x1b4] sm:$0xf]
        %v4090 = vld [vmem:[#allocation8 + $0x1b8] sm:$0xf]
        %v4091 = vld [vmem:[#allocation8 + $0x1bc] sm:$0xf]
        %v4092 = vld [vmem:[#allocation8 + $0x1c0] sm:$0xf]
        %v4093 = vld [vmem:[#allocation8 + $0x1c4] sm:$0xf]
        %v4094 = vld [vmem:[#allocation8 + $0x1c8] sm:$0xf]
        %v4095 = vld [vmem:[#allocation8 + $0x1cc] sm:$0xf]
        %v4096 = vld [vmem:[#allocation8 + $0x1d0] sm:$0xf]
        %v4097 = vld [vmem:[#allocation8 + $0x1d4] sm:$0xf]
        %v4098 = vld [vmem:[#allocation8 + $0x1d8] sm:$0xf]
        %v4099 = vld [vmem:[#allocation8 + $0x1dc] sm:$0xf]
        %v4100 = vld [vmem:[#allocation8 + $0x1e0] sm:$0xf]
        %v4101 = vld [vmem:[#allocation8 + $0x1e4] sm:$0xf]
        %v4102 = vld [vmem:[#allocation8 + $0x1e8] sm:$0xf]
        %v4103 = vld [vmem:[#allocation8 + $0x1ec] sm:$0xf]
        %v4104 = vld [vmem:[#allocation8 + $0x1f0] sm:$0xf]
        %v4105 = vld [vmem:[#allocation8 + $0x1f4] sm:$0xf]
        %v4106 = vld [vmem:[#allocation8 + $0x1f8] sm:$0xf]
        %v4107 = vld [vmem:[#allocation8 + $0x1fc] sm:$0xf]
        %v4108 = vld [vmem:[#allocation8 + $0x200] sm:$0xf]
        %v4109 = vld [vmem:[#allocation8 + $0x204] sm:$0xf]
        %v4110 = vld [vmem:[#allocation8 + $0x208] sm:$0xf]
        %v4111 = vld [vmem:[#allocation8 + $0x20c] sm:$0xf]
        %v4112 = vld [vmem:[#allocation8 + $0x210] sm:$0xf]
        %v4113 = vld [vmem:[#allocation8 + $0x214] sm:$0xf]
        %v4114 = vld [vmem:[#allocation8 + $0x218] sm:$0xf]
        %v4115 = vld [vmem:[#allocation8 + $0x21c] sm:$0xf]
        %v4116 = vld [vmem:[#allocation8 + $0x220] sm:$0xf]
        %v4117 = vld [vmem:[#allocation8 + $0x224] sm:$0xf]
        %v4118 = vld [vmem:[#allocation8 + $0x228] sm:$0xf]
        %v4119 = vld [vmem:[#allocation8 + $0x22c] sm:$0xf]
        %v4120 = vld [vmem:[#allocation8 + $0x230] sm:$0xf]
        %v4121 = vld [vmem:[#allocation8 + $0x234] sm:$0xf]
        %v4122 = vld [vmem:[#allocation8 + $0x238] sm:$0xf]
        %v4123 = vld [vmem:[#allocation8 + $0x23c] sm:$0xf]
        %v4268 = vunpack.c.l.b16 %v3980
        %v4269 = vunpack.c.l.b16 %v3981
        %v4270 = vunpack.c.l.b16 %v3982
        %v4271 = vunpack.c.l.b16 %v3983
        %v4272 = vunpack.c.l.b16 %v3984
        %v4273 = vunpack.c.l.b16 %v3985
        %v4274 = vunpack.c.l.b16 %v3986
        %v4275 = vunpack.c.l.b16 %v3987
        %v4276 = vunpack.c.l.b16 %v3988
        %v4277 = vunpack.c.l.b16 %v3989
        %v4278 = vunpack.c.l.b16 %v3990
        %v4279 = vunpack.c.l.b16 %v3991
        %v4280 = vunpack.c.l.b16 %v3992
        %v4281 = vunpack.c.l.b16 %v3993
        %v4282 = vunpack.c.l.b16 %v3994
        %v4283 = vunpack.c.l.b16 %v3995
        %v4284 = vunpack.c.l.b16 %v3996
        %v4285 = vunpack.c.l.b16 %v3997
        %v4286 = vunpack.c.l.b16 %v3998
        %v4287 = vunpack.c.l.b16 %v3999
        %v4288 = vunpack.c.l.b16 %v4000
        %v4289 = vunpack.c.l.b16 %v4001
        %v4290 = vunpack.c.l.b16 %v4002
        %v4291 = vunpack.c.l.b16 %v4003
        %v4292 = vunpack.c.l.b16 %v4004
        %v4293 = vunpack.c.l.b16 %v4005
        %v4294 = vunpack.c.l.b16 %v4006
        %v4295 = vunpack.c.l.b16 %v4007
        %v4296 = vunpack.c.l.b16 %v4008
        %v4297 = vunpack.c.l.b16 %v4009
        %v4298 = vunpack.c.l.b16 %v4010
        %v4299 = vunpack.c.l.b16 %v4011
        %v4300 = vunpack.c.l.b16 %v4012
        %v4301 = vunpack.c.l.b16 %v4013
        %v4302 = vunpack.c.l.b16 %v4014
        %v4303 = vunpack.c.l.b16 %v4015
        %v4304 = vunpack.c.l.b16 %v4016
        %v4305 = vunpack.c.l.b16 %v4017
        %v4306 = vunpack.c.l.b16 %v4018
        %v4307 = vunpack.c.l.b16 %v4019
        %v4308 = vunpack.c.l.b16 %v4020
        %v4309 = vunpack.c.l.b16 %v4021
        %v4310 = vunpack.c.l.b16 %v4022
        %v4311 = vunpack.c.l.b16 %v4023
        %v4312 = vunpack.c.l.b16 %v4024
        %v4313 = vunpack.c.l.b16 %v4025
        %v4314 = vunpack.c.l.b16 %v4026
        %v4315 = vunpack.c.l.b16 %v4027
        %v4316 = vunpack.c.l.b16 %v4028
        %v4317 = vunpack.c.l.b16 %v4029
        %v4318 = vunpack.c.l.b16 %v4030
        %v4319 = vunpack.c.l.b16 %v4031
        %v4320 = vunpack.c.l.b16 %v4032
        %v4321 = vunpack.c.l.b16 %v4033
        %v4322 = vunpack.c.l.b16 %v4034
        %v4323 = vunpack.c.l.b16 %v4035
        %v4324 = vunpack.c.l.b16 %v4036
        %v4325 = vunpack.c.l.b16 %v4037
        %v4326 = vunpack.c.l.b16 %v4038
        %v4327 = vunpack.c.l.b16 %v4039
        %v4328 = vunpack.c.l.b16 %v4040
        %v4329 = vunpack.c.l.b16 %v4041
        %v4330 = vunpack.c.l.b16 %v4042
        %v4331 = vunpack.c.l.b16 %v4043
        %v4332 = vunpack.c.l.b16 %v4044
        %v4333 = vunpack.c.l.b16 %v4045
        %v4334 = vunpack.c.l.b16 %v4046
        %v4335 = vunpack.c.l.b16 %v4047
        %v4336 = vunpack.c.l.b16 %v4048
        %v4337 = vunpack.c.l.b16 %v4049
        %v4338 = vunpack.c.l.b16 %v4050
        %v4339 = vunpack.c.l.b16 %v4051
        %v4340 = vunpack.c.l.b16 %v4052
        %v4341 = vunpack.c.l.b16 %v4053
        %v4342 = vunpack.c.l.b16 %v4054
        %v4343 = vunpack.c.l.b16 %v4055
        %v4344 = vunpack.c.l.b16 %v4056
        %v4345 = vunpack.c.l.b16 %v4057
        %v4346 = vunpack.c.l.b16 %v4058
        %v4347 = vunpack.c.l.b16 %v4059
        %v4348 = vunpack.c.l.b16 %v4060
        %v4349 = vunpack.c.l.b16 %v4061
        %v4350 = vunpack.c.l.b16 %v4062
        %v4351 = vunpack.c.l.b16 %v4063
        %v4352 = vunpack.c.l.b16 %v4064
        %v4353 = vunpack.c.l.b16 %v4065
        %v4354 = vunpack.c.l.b16 %v4066
        %v4355 = vunpack.c.l.b16 %v4067
        %v4356 = vunpack.c.l.b16 %v4068
        %v4357 = vunpack.c.l.b16 %v4069
        %v4358 = vunpack.c.l.b16 %v4070
        %v4359 = vunpack.c.l.b16 %v4071
        %v4360 = vunpack.c.l.b16 %v4072
        %v4361 = vunpack.c.l.b16 %v4073
        %v4362 = vunpack.c.l.b16 %v4074
        %v4363 = vunpack.c.l.b16 %v4075
        %v4364 = vunpack.c.l.b16 %v4076
        %v4365 = vunpack.c.l.b16 %v4077
        %v4366 = vunpack.c.l.b16 %v4078
        %v4367 = vunpack.c.l.b16 %v4079
        %v4368 = vunpack.c.l.b16 %v4080
        %v4369 = vunpack.c.l.b16 %v4081
        %v4370 = vunpack.c.l.b16 %v4082
        %v4371 = vunpack.c.l.b16 %v4083
        %v4372 = vunpack.c.l.b16 %v4084
        %v4373 = vunpack.c.l.b16 %v4085
        %v4374 = vunpack.c.l.b16 %v4086
        %v4375 = vunpack.c.l.b16 %v4087
        %v4376 = vunpack.c.l.b16 %v4088
        %v4377 = vunpack.c.l.b16 %v4089
        %v4378 = vunpack.c.l.b16 %v4090
        %v4379 = vunpack.c.l.b16 %v4091
        %v4380 = vunpack.c.l.b16 %v4092
        %v4381 = vunpack.c.l.b16 %v4093
        %v4382 = vunpack.c.l.b16 %v4094
        %v4383 = vunpack.c.l.b16 %v4095
        %v4384 = vunpack.c.l.b16 %v4096
        %v4385 = vunpack.c.l.b16 %v4097
        %v4386 = vunpack.c.l.b16 %v4098
        %v4387 = vunpack.c.l.b16 %v4099
        %v4388 = vunpack.c.l.b16 %v4100
        %v4389 = vunpack.c.l.b16 %v4101
        %v4390 = vunpack.c.l.b16 %v4102
        %v4391 = vunpack.c.l.b16 %v4103
        %v4392 = vunpack.c.l.b16 %v4104
        %v4393 = vunpack.c.l.b16 %v4105
        %v4394 = vunpack.c.l.b16 %v4106
        %v4395 = vunpack.c.l.b16 %v4107
        %v4396 = vunpack.c.l.b16 %v4108
        %v4397 = vunpack.c.l.b16 %v4109
        %v4398 = vunpack.c.l.b16 %v4110
        %v4399 = vunpack.c.l.b16 %v4111
        %v4400 = vunpack.c.l.b16 %v4112
        %v4401 = vunpack.c.l.b16 %v4113
        %v4402 = vunpack.c.l.b16 %v4114
        %v4403 = vunpack.c.l.b16 %v4115
        %v4404 = vunpack.c.l.b16 %v4116
        %v4405 = vunpack.c.l.b16 %v4117
        %v4406 = vunpack.c.l.b16 %v4118
        %v4407 = vunpack.c.l.b16 %v4119
        %v4408 = vunpack.c.l.b16 %v4120
        %v4409 = vunpack.c.l.b16 %v4121
        %v4410 = vunpack.c.l.b16 %v4122
        %v4411 = vunpack.c.l.b16 %v4123
        %v4412 = vpack.c.b16 %v4269, %v4268
        %v4413 = vpack.c.b16 %v4271, %v4270
        %v4414 = vpack.c.b16 %v4273, %v4272
        %v4415 = vpack.c.b16 %v4275, %v4274
        %v4416 = vpack.c.b16 %v4277, %v4276
        %v4417 = vpack.c.b16 %v4279, %v4278
        %v4418 = vpack.c.b16 %v4281, %v4280
        %v4419 = vpack.c.b16 %v4283, %v4282
        %v4420 = vpack.c.b16 %v4285, %v4284
        %v4421 = vpack.c.b16 %v4287, %v4286
        %v4422 = vpack.c.b16 %v4289, %v4288
        %v4423 = vpack.c.b16 %v4291, %v4290
        %v4424 = vpack.c.b16 %v4293, %v4292
        %v4425 = vpack.c.b16 %v4295, %v4294
        %v4426 = vpack.c.b16 %v4297, %v4296
        %v4427 = vpack.c.b16 %v4299, %v4298
        %v4428 = vpack.c.b16 %v4301, %v4300
        %v4429 = vpack.c.b16 %v4303, %v4302
        %v4430 = vpack.c.b16 %v4305, %v4304
        %v4431 = vpack.c.b16 %v4307, %v4306
        %v4432 = vpack.c.b16 %v4309, %v4308
        %v4433 = vpack.c.b16 %v4311, %v4310
        %v4434 = vpack.c.b16 %v4313, %v4312
        %v4435 = vpack.c.b16 %v4315, %v4314
        %v4436 = vpack.c.b16 %v4317, %v4316
        %v4437 = vpack.c.b16 %v4319, %v4318
        %v4438 = vpack.c.b16 %v4321, %v4320
        %v4439 = vpack.c.b16 %v4323, %v4322
        %v4440 = vpack.c.b16 %v4325, %v4324
        %v4441 = vpack.c.b16 %v4327, %v4326
        %v4442 = vpack.c.b16 %v4329, %v4328
        %v4443 = vpack.c.b16 %v4331, %v4330
        %v4444 = vpack.c.b16 %v4333, %v4332
        %v4445 = vpack.c.b16 %v4335, %v4334
        %v4446 = vpack.c.b16 %v4337, %v4336
        %v4447 = vpack.c.b16 %v4339, %v4338
        %v4448 = vpack.c.b16 %v4341, %v4340
        %v4449 = vpack.c.b16 %v4343, %v4342
        %v4450 = vpack.c.b16 %v4345, %v4344
        %v4451 = vpack.c.b16 %v4347, %v4346
        %v4452 = vpack.c.b16 %v4349, %v4348
        %v4453 = vpack.c.b16 %v4351, %v4350
        %v4454 = vpack.c.b16 %v4353, %v4352
        %v4455 = vpack.c.b16 %v4355, %v4354
        %v4456 = vpack.c.b16 %v4357, %v4356
        %v4457 = vpack.c.b16 %v4359, %v4358
        %v4458 = vpack.c.b16 %v4361, %v4360
        %v4459 = vpack.c.b16 %v4363, %v4362
        %v4460 = vpack.c.b16 %v4365, %v4364
        %v4461 = vpack.c.b16 %v4367, %v4366
        %v4462 = vpack.c.b16 %v4369, %v4368
        %v4463 = vpack.c.b16 %v4371, %v4370
        %v4464 = vpack.c.b16 %v4373, %v4372
        %v4465 = vpack.c.b16 %v4375, %v4374
        %v4466 = vpack.c.b16 %v4377, %v4376
        %v4467 = vpack.c.b16 %v4379, %v4378
        %v4468 = vpack.c.b16 %v4381, %v4380
        %v4469 = vpack.c.b16 %v4383, %v4382
        %v4470 = vpack.c.b16 %v4385, %v4384
        %v4471 = vpack.c.b16 %v4387, %v4386
        %v4472 = vpack.c.b16 %v4389, %v4388
        %v4473 = vpack.c.b16 %v4391, %v4390
        %v4474 = vpack.c.b16 %v4393, %v4392
        %v4475 = vpack.c.b16 %v4395, %v4394
        %v4476 = vpack.c.b16 %v4397, %v4396
        %v4477 = vpack.c.b16 %v4399, %v4398
        %v4478 = vpack.c.b16 %v4401, %v4400
        %v4479 = vpack.c.b16 %v4403, %v4402
        %v4480 = vpack.c.b16 %v4405, %v4404
        %v4481 = vpack.c.b16 %v4407, %v4406
        %v4482 = vpack.c.b16 %v4409, %v4408
        %v4483 = vpack.c.b16 %v4411, %v4410
        %4556 = vmatprep.subr.bf16.mxu0 0
        %4557 = vmatpush1.bf16.msra.mxu0 %v4412
        %4558 = vmatprep.subr.bf16.mxu0 0
        %4559 = vmatpush1.bf16.msra.mxu0 %v4413
        %4560 = vmatprep.subr.bf16.mxu0 0
        %4561 = vmatpush1.bf16.msra.mxu0 %v4414
        %4562 = vmatprep.subr.bf16.mxu0 0
        %4563 = vmatpush1.bf16.msra.mxu0 %v4415
        %4564 = vmatprep.subr.bf16.mxu0 0
        %4565 = vmatpush1.bf16.msra.mxu0 %v4416
        %4566 = vmatprep.subr.bf16.mxu0 0
        %4567 = vmatpush1.bf16.msra.mxu0 %v4417
        %4568 = vmatprep.subr.bf16.mxu0 0
        %4569 = vmatpush1.bf16.msra.mxu0 %v4418
        %4570 = vmatprep.subr.bf16.mxu0 0
        %4571 = vmatpush1.bf16.msra.mxu0 %v4419
        %4572 = vmatprep.subr.bf16.mxu0 0
        %4573 = vmatpush1.bf16.msra.mxu0 %v4420
        %4574 = vmatprep.subr.bf16.mxu0 0
        %4575 = vmatpush1.bf16.msra.mxu0 %v4421
        %4576 = vmatprep.subr.bf16.mxu0 0
        %4577 = vmatpush1.bf16.msra.mxu0 %v4422
        %4578 = vmatprep.subr.bf16.mxu0 0
        %4579 = vmatpush1.bf16.msra.mxu0 %v4423
        %4580 = vmatprep.subr.bf16.mxu0 0
        %4581 = vmatpush1.bf16.msra.mxu0 %v4424
        %4582 = vmatprep.subr.bf16.mxu0 0
        %4583 = vmatpush1.bf16.msra.mxu0 %v4425
        %4584 = vmatprep.subr.bf16.mxu0 0
        %4585 = vmatpush1.bf16.msra.mxu0 %v4426
        %4586 = vmatprep.subr.bf16.mxu0 0
        %4587 = vmatpush1.bf16.msra.mxu0 %v4427
        %4588 = vmatprep.mubr.bf16.mxu0 %v3837
        %4589 = vmatmul.mubr.bf16.gmra.mrb[0].mxu0 %v3836
        %v4590 = vpop.f32.mrb[0].mxu0
        %v4591 = vadd.f32 0.0, %v4590
        %v4592 = vpop.f32.mrb[0].mxu0
        %v4593 = vpop.f32.mrb[0].mxu0
        %v4594 = vadd.f32 0.0, %v4593
        %v4595 = vpop.f32.mrb[0].mxu0
        %4596 = vmatprep.mubr.bf16.mxu0 %v3846
        %4597 = vmatmul.mubr.bf16.gmra.mrb[0].mxu0 %v3845
        %v4598 = vpop.f32.mrb[0].mxu0
        %v4599 = vadd.f32 0.0, %v4598
        %v4600 = vpop.f32.mrb[0].mxu0
        %v4601 = vpop.f32.mrb[0].mxu0
        %v4602 = vadd.f32 0.0, %v4601
        %v4603 = vpop.f32.mrb[0].mxu0
        %4604 = vmatprep.mubr.bf16.mxu0 %v3855
        %4605 = vmatmul.mubr.bf16.gmra.mrb[0].mxu0 %v3854
        %v4606 = vpop.f32.mrb[0].mxu0
        %v4607 = vadd.f32 0.0, %v4606
        %v4608 = vpop.f32.mrb[0].mxu0
        %v4609 = vpop.f32.mrb[0].mxu0
        %v4610 = vadd.f32 0.0, %v4609
        %v4611 = vpop.f32.mrb[0].mxu0
        %4612 = vmatprep.mubr.bf16.mxu0 %v3864
        %4613 = vmatmul.mubr.bf16.gmra.mrb[0].mxu0 %v3863
        %v4614 = vpop.f32.mrb[0].mxu0
        %v4615 = vadd.f32 0.0, %v4614
        %v4616 = vpop.f32.mrb[0].mxu0
        %v4617 = vpop.f32.mrb[0].mxu0
        %v4618 = vadd.f32 0.0, %v4617
        %v4619 = vpop.f32.mrb[0].mxu0
        %4620 = vmatprep.mubr.bf16.mxu0 %v3873
        %4621 = vmatmul.mubr.bf16.gmra.mrb[0].mxu0 %v3872
        %v4622 = vpop.f32.mrb[0].mxu0
        %v4623 = vadd.f32 0.0, %v4622
        %v4624 = vpop.f32.mrb[0].mxu0
        %v4625 = vpop.f32.mrb[0].mxu0
        %v4626 = vadd.f32 0.0, %v4625
        %v4627 = vpop.f32.mrb[0].mxu0
        %4628 = vmatprep.mubr.bf16.mxu0 %v3882
        %4629 = vmatmul.mubr.bf16.gmra.mrb[0].mxu0 %v3881
        %v4630 = vpop.f32.mrb[0].mxu0
        %v4631 = vadd.f32 0.0, %v4630
        %v4632 = vpop.f32.mrb[0].mxu0
        %v4633 = vpop.f32.mrb[0].mxu0
        %v4634 = vadd.f32 0.0, %v4633
        %v4635 = vpop.f32.mrb[0].mxu0
        %4636 = vmatprep.mubr.bf16.mxu0 %v3891
        %4637 = vmatmul.mubr.bf16.gmra.mrb[0].mxu0 %v3890
        %v4638 = vpop.f32.mrb[0].mxu0
        %v4639 = vadd.f32 0.0, %v4638
        %v4640 = vpop.f32.mrb[0].mxu0
        %v4641 = vpop.f32.mrb[0].mxu0
        %v4642 = vadd.f32 0.0, %v4641
        %v4643 = vpop.f32.mrb[0].mxu0
        %4644 = vmatprep.mubr.bf16.mxu0 %v3900
        %4645 = vmatmul.mubr.bf16.gmra.mrb[0].mxu0 %v3899
        %v4646 = vpop.f32.mrb[0].mxu0
        %v4647 = vadd.f32 0.0, %v4646
        %v4648 = vpop.f32.mrb[0].mxu0
        %v4649 = vpop.f32.mrb[0].mxu0
        %v4650 = vadd.f32 0.0, %v4649
        %v4651 = vpop.f32.mrb[0].mxu0
        %4652 = vmatprep.mubr.bf16.mxu0 %v3909
        %4653 = vmatmul.mubr.bf16.gmra.mrb[0].mxu0 %v3908
        %v4654 = vpop.f32.mrb[0].mxu0
        %v4655 = vadd.f32 0.0, %v4654
        %v4656 = vpop.f32.mrb[0].mxu0
        %v4657 = vpop.f32.mrb[0].mxu0
        %v4658 = vadd.f32 0.0, %v4657
        %v4659 = vpop.f32.mrb[0].mxu0
        %4660 = vmatprep.mubr.bf16.mxu0 %v3918
        %4661 = vmatmul.mubr.bf16.gmra.mrb[0].mxu0 %v3917
        %v4662 = vpop.f32.mrb[0].mxu0
        %v4663 = vadd.f32 0.0, %v4662
        %v4664 = vpop.f32.mrb[0].mxu0
        %v4665 = vpop.f32.mrb[0].mxu0
        %v4666 = vadd.f32 0.0, %v4665
        %v4667 = vpop.f32.mrb[0].mxu0
        %4668 = vmatprep.mubr.bf16.mxu0 %v3927
        %4669 = vmatmul.mubr.bf16.gmra.mrb[0].mxu0 %v3926
        %v4670 = vpop.f32.mrb[0].mxu0
        %v4671 = vadd.f32 0.0, %v4670
        %v4672 = vpop.f32.mrb[0].mxu0
        %v4673 = vpop.f32.mrb[0].mxu0
        %v4674 = vadd.f32 0.0, %v4673
        %v4675 = vpop.f32.mrb[0].mxu0
        %4676 = vmatprep.mubr.bf16.mxu0 %v3936
        %4677 = vmatmul.mubr.bf16.gmra.mrb[0].mxu0 %v3935
        %v4678 = vpop.f32.mrb[0].mxu0
        %v4679 = vadd.f32 0.0, %v4678
        %v4680 = vpop.f32.mrb[0].mxu0
        %v4681 = vpop.f32.mrb[0].mxu0
        %v4682 = vadd.f32 0.0, %v4681
        %v4683 = vpop.f32.mrb[0].mxu0
        %4684 = vmatprep.mubr.bf16.mxu0 %v3945
        %4685 = vmatmul.mubr.bf16.gmra.mrb[0].mxu0 %v3944
        %v4686 = vpop.f32.mrb[0].mxu0
        %v4687 = vadd.f32 0.0, %v4686
        %v4688 = vpop.f32.mrb[0].mxu0
        %v4689 = vpop.f32.mrb[0].mxu0
        %v4690 = vadd.f32 0.0, %v4689
        %v4691 = vpop.f32.mrb[0].mxu0
        %4692 = vmatprep.mubr.bf16.mxu0 %v3954
        %4693 = vmatmul.mubr.bf16.gmra.mrb[0].mxu0 %v3953
        %v4694 = vpop.f32.mrb[0].mxu0
        %v4695 = vadd.f32 0.0, %v4694
        %v4696 = vpop.f32.mrb[0].mxu0
        %v4697 = vpop.f32.mrb[0].mxu0
        %v4698 = vadd.f32 0.0, %v4697
        %v4699 = vpop.f32.mrb[0].mxu0
        %4700 = vmatprep.mubr.bf16.mxu0 %v3963
        %4701 = vmatmul.mubr.bf16.gmra.mrb[0].mxu0 %v3962
        %v4702 = vpop.f32.mrb[0].mxu0
        %v4703 = vadd.f32 0.0, %v4702
        %v4704 = vpop.f32.mrb[0].mxu0
        %v4705 = vpop.f32.mrb[0].mxu0
        %v4706 = vadd.f32 0.0, %v4705
        %v4707 = vpop.f32.mrb[0].mxu0
        %4708 = vmatprep.mubr.bf16.mxu0 %v3972
        %4709 = vmatmul.mubr.bf16.gmra.mrb[0].mxu0 %v3971
        %v4710 = vpop.f32.mrb[0].mxu0
        %v4711 = vadd.f32 0.0, %v4710
        %v4712 = vpop.f32.mrb[0].mxu0
        %v4713 = vpop.f32.mrb[0].mxu0
        %v4714 = vadd.f32 0.0, %v4713
        %v4715 = vpop.f32.mrb[0].mxu0
        %4716 = vdwg.mxu0
        %4717 = vmatprep.subr.bf16.mxu0 0
        %4718 = vmatpush1.bf16.msra.mxu0 %v4428
        %4719 = vmatprep.subr.bf16.mxu0 0
        %4720 = vmatpush1.bf16.msra.mxu0 %v4429
        %4721 = vmatprep.subr.bf16.mxu0 0
        %4722 = vmatpush1.bf16.msra.mxu0 %v4430
        %4723 = vmatprep.subr.bf16.mxu0 0
        %4724 = vmatpush1.bf16.msra.mxu0 %v4431
        %4725 = vmatprep.subr.bf16.mxu0 0
        %4726 = vmatpush1.bf16.msra.mxu0 %v4432
        %4727 = vmatprep.subr.bf16.mxu0 0
        %4728 = vmatpush1.bf16.msra.mxu0 %v4433
        %4729 = vmatprep.subr.bf16.mxu0 0
        %4730 = vmatpush1.bf16.msra.mxu0 %v4434
        %4731 = vmatprep.subr.bf16.mxu0 0
        %4732 = vmatpush1.bf16.msra.mxu0 %v4435
        %4733 = vmatprep.subr.bf16.mxu0 0
        %4734 = vmatpush1.bf16.msra.mxu0 %v4436
        %4735 = vmatprep.subr.bf16.mxu0 0
        %4736 = vmatpush1.bf16.msra.mxu0 %v4437
        %4737 = vmatprep.subr.bf16.mxu0 0
        %4738 = vmatpush1.bf16.msra.mxu0 %v4438
        %4739 = vmatprep.subr.bf16.mxu0 0
        %4740 = vmatpush1.bf16.msra.mxu0 %v4439
        %4741 = vmatprep.subr.bf16.mxu0 0
        %4742 = vmatpush1.bf16.msra.mxu0 %v4440
        %4743 = vmatprep.subr.bf16.mxu0 0
        %4744 = vmatpush1.bf16.msra.mxu0 %v4441
        %4745 = vmatprep.subr.bf16.mxu0 0
        %4746 = vmatpush1.bf16.msra.mxu0 %v4442
        %4747 = vmatprep.subr.bf16.mxu0 0
        %4748 = vmatpush1.bf16.msra.mxu0 %v4443
        %4749 = vmatprep.mubr.bf16.mxu0 %v3839
        %4750 = vmatmul.mubr.bf16.gmra.mrb[0].mxu0 %v3838
        %v4751 = vpop.f32.mrb[0].mxu0
        %v4752 = vadd.f32 %v4591, %v4751
        %v4753 = vpop.f32.mrb[0].mxu0
        %v4754 = vpop.f32.mrb[0].mxu0
        %v4755 = vadd.f32 %v4594, %v4754
        %v4756 = vpop.f32.mrb[0].mxu0
        %4757 = vmatprep.mubr.bf16.mxu0 %v3848
        %4758 = vmatmul.mubr.bf16.gmra.mrb[0].mxu0 %v3847
        %v4759 = vpop.f32.mrb[0].mxu0
        %v4760 = vadd.f32 %v4599, %v4759
        %v4761 = vpop.f32.mrb[0].mxu0
        %v4762 = vpop.f32.mrb[0].mxu0
        %v4763 = vadd.f32 %v4602, %v4762
        %v4764 = vpop.f32.mrb[0].mxu0
        %4765 = vmatprep.mubr.bf16.mxu0 %v3857
        %4766 = vmatmul.mubr.bf16.gmra.mrb[0].mxu0 %v3856
        %v4767 = vpop.f32.mrb[0].mxu0
        %v4768 = vadd.f32 %v4607, %v4767
        %v4769 = vpop.f32.mrb[0].mxu0
        %v4770 = vpop.f32.mrb[0].mxu0
        %v4771 = vadd.f32 %v4610, %v4770
        %v4772 = vpop.f32.mrb[0].mxu0
        %4773 = vmatprep.mubr.bf16.mxu0 %v3866
        %4774 = vmatmul.mubr.bf16.gmra.mrb[0].mxu0 %v3865
        %v4775 = vpop.f32.mrb[0].mxu0
        %v4776 = vadd.f32 %v4615, %v4775
        %v4777 = vpop.f32.mrb[0].mxu0
        %v4778 = vpop.f32.mrb[0].mxu0
        %v4779 = vadd.f32 %v4618, %v4778
        %v4780 = vpop.f32.mrb[0].mxu0
        %4781 = vmatprep.mubr.bf16.mxu0 %v3875
        %4782 = vmatmul.mubr.bf16.gmra.mrb[0].mxu0 %v3874
        %v4783 = vpop.f32.mrb[0].mxu0
        %v4784 = vadd.f32 %v4623, %v4783
        %v4785 = vpop.f32.mrb[0].mxu0
        %v4786 = vpop.f32.mrb[0].mxu0
        %v4787 = vadd.f32 %v4626, %v4786
        %v4788 = vpop.f32.mrb[0].mxu0
        %4789 = vmatprep.mubr.bf16.mxu0 %v3884
        %4790 = vmatmul.mubr.bf16.gmra.mrb[0].mxu0 %v3883
        %v4791 = vpop.f32.mrb[0].mxu0
        %v4792 = vadd.f32 %v4631, %v4791
        %v4793 = vpop.f32.mrb[0].mxu0
        %v4794 = vpop.f32.mrb[0].mxu0
        %v4795 = vadd.f32 %v4634, %v4794
        %v4796 = vpop.f32.mrb[0].mxu0
        %4797 = vmatprep.mubr.bf16.mxu0 %v3893
        %4798 = vmatmul.mubr.bf16.gmra.mrb[0].mxu0 %v3892
        %v4799 = vpop.f32.mrb[0].mxu0
        %v4800 = vadd.f32 %v4639, %v4799
        %v4801 = vpop.f32.mrb[0].mxu0
        %v4802 = vpop.f32.mrb[0].mxu0
        %v4803 = vadd.f32 %v4642, %v4802
        %v4804 = vpop.f32.mrb[0].mxu0
        %4805 = vmatprep.mubr.bf16.mxu0 %v3902
        %4806 = vmatmul.mubr.bf16.gmra.mrb[0].mxu0 %v3901
        %v4807 = vpop.f32.mrb[0].mxu0
        %v4808 = vadd.f32 %v4647, %v4807
        %v4809 = vpop.f32.mrb[0].mxu0
        %v4810 = vpop.f32.mrb[0].mxu0
        %v4811 = vadd.f32 %v4650, %v4810
        %v4812 = vpop.f32.mrb[0].mxu0
        %4813 = vmatprep.mubr.bf16.mxu0 %v3911
        %4814 = vmatmul.mubr.bf16.gmra.mrb[0].mxu0 %v3910
        %v4815 = vpop.f32.mrb[0].mxu0
        %v4816 = vadd.f32 %v4655, %v4815
        %v4817 = vpop.f32.mrb[0].mxu0
        %v4818 = vpop.f32.mrb[0].mxu0
        %v4819 = vadd.f32 %v4658, %v4818
        %v4820 = vpop.f32.mrb[0].mxu0
        %4821 = vmatprep.mubr.bf16.mxu0 %v3920
        %4822 = vmatmul.mubr.bf16.gmra.mrb[0].mxu0 %v3919
        %v4823 = vpop.f32.mrb[0].mxu0
        %v4824 = vadd.f32 %v4663, %v4823
        %v4825 = vpop.f32.mrb[0].mxu0
        %v4826 = vpop.f32.mrb[0].mxu0
        %v4827 = vadd.f32 %v4666, %v4826
        %v4828 = vpop.f32.mrb[0].mxu0
        %4829 = vmatprep.mubr.bf16.mxu0 %v3929
        %4830 = vmatmul.mubr.bf16.gmra.mrb[0].mxu0 %v3928
        %v4831 = vpop.f32.mrb[0].mxu0
        %v4832 = vadd.f32 %v4671, %v4831
        %v4833 = vpop.f32.mrb[0].mxu0
        %v4834 = vpop.f32.mrb[0].mxu0
        %v4835 = vadd.f32 %v4674, %v4834
        %v4836 = vpop.f32.mrb[0].mxu0
        %4837 = vmatprep.mubr.bf16.mxu0 %v3938
        %4838 = vmatmul.mubr.bf16.gmra.mrb[0].mxu0 %v3937
        %v4839 = vpop.f32.mrb[0].mxu0
        %v4840 = vadd.f32 %v4679, %v4839
        %v4841 = vpop.f32.mrb[0].mxu0
        %v4842 = vpop.f32.mrb[0].mxu0
        %v4843 = vadd.f32 %v4682, %v4842
        %v4844 = vpop.f32.mrb[0].mxu0
        %4845 = vmatprep.mubr.bf16.mxu0 %v3947
        %4846 = vmatmul.mubr.bf16.gmra.mrb[0].mxu0 %v3946
        %v4847 = vpop.f32.mrb[0].mxu0
        %v4848 = vadd.f32 %v4687, %v4847
        %v4849 = vpop.f32.mrb[0].mxu0
        %v4850 = vpop.f32.mrb[0].mxu0
        %v4851 = vadd.f32 %v4690, %v4850
        %v4852 = vpop.f32.mrb[0].mxu0
        %4853 = vmatprep.mubr.bf16.mxu0 %v3956
        %4854 = vmatmul.mubr.bf16.gmra.mrb[0].mxu0 %v3955
        %v4855 = vpop.f32.mrb[0].mxu0
        %v4856 = vadd.f32 %v4695, %v4855
        %v4857 = vpop.f32.mrb[0].mxu0
        %v4858 = vpop.f32.mrb[0].mxu0
        %v4859 = vadd.f32 %v4698, %v4858
        %v4860 = vpop.f32.mrb[0].mxu0
        %4861 = vmatprep.mubr.bf16.mxu0 %v3965
        %4862 = vmatmul.mubr.bf16.gmra.mrb[0].mxu0 %v3964
        %v4863 = vpop.f32.mrb[0].mxu0
        %v4864 = vadd.f32 %v4703, %v4863
        %v4865 = vpop.f32.mrb[0].mxu0
        %v4866 = vpop.f32.mrb[0].mxu0
        %v4867 = vadd.f32 %v4706, %v4866
        %v4868 = vpop.f32.mrb[0].mxu0
        %4869 = vmatprep.mubr.bf16.mxu0 %v3974
        %4870 = vmatmul.mubr.bf16.gmra.mrb[0].mxu0 %v3973
        %v4871 = vpop.f32.mrb[0].mxu0
        %v4872 = vadd.f32 %v4711, %v4871
        %v4873 = vpop.f32.mrb[0].mxu0
        %v4874 = vpop.f32.mrb[0].mxu0
        %v4875 = vadd.f32 %v4714, %v4874
        %v4876 = vpop.f32.mrb[0].mxu0
        %4877 = vdwg.mxu0
        %4878 = vmatprep.subr.bf16.mxu0 0
        %4879 = vmatpush1.bf16.msra.mxu0 %v4444
        %4880 = vmatprep.subr.bf16.mxu0 0
        %4881 = vmatpush1.bf16.msra.mxu0 %v4445
        %4882 = vmatprep.subr.bf16.mxu0 0
        %4883 = vmatpush1.bf16.msra.mxu0 %v4446
        %4884 = vmatprep.subr.bf16.mxu0 0
        %4885 = vmatpush1.bf16.msra.mxu0 %v4447
        %4886 = vmatprep.subr.bf16.mxu0 0
        %4887 = vmatpush1.bf16.msra.mxu0 %v4448
        %4888 = vmatprep.subr.bf16.mxu0 0
        %4889 = vmatpush1.bf16.msra.mxu0 %v4449
        %4890 = vmatprep.subr.bf16.mxu0 0
        %4891 = vmatpush1.bf16.msra.mxu0 %v4450
        %4892 = vmatprep.subr.bf16.mxu0 0
        %4893 = vmatpush1.bf16.msra.mxu0 %v4451
        %4894 = vmatprep.subr.bf16.mxu0 0
        %4895 = vmatpush1.bf16.msra.mxu0 %v4452
        %4896 = vmatprep.subr.bf16.mxu0 0
        %4897 = vmatpush1.bf16.msra.mxu0 %v4453
        %4898 = vmatprep.subr.bf16.mxu0 0
        %4899 = vmatpush1.bf16.msra.mxu0 %v4454
        %4900 = vmatprep.subr.bf16.mxu0 0
        %4901 = vmatpush1.bf16.msra.mxu0 %v4455
        %4902 = vmatprep.subr.bf16.mxu0 0
        %4903 = vmatpush1.bf16.msra.mxu0 %v4456
        %4904 = vmatprep.subr.bf16.mxu0 0
        %4905 = vmatpush1.bf16.msra.mxu0 %v4457
        %4906 = vmatprep.subr.bf16.mxu0 0
        %4907 = vmatpush1.bf16.msra.mxu0 %v4458
        %4908 = vmatprep.subr.bf16.mxu0 0
        %4909 = vmatpush1.bf16.msra.mxu0 %v4459
        %4910 = vmatprep.mubr.bf16.mxu0 %v3841
        %4911 = vmatmul.mubr.bf16.gmra.mrb[0].mxu0 %v3840
        %v4912 = vpop.f32.mrb[0].mxu0
        %v4913 = vadd.f32 %v4752, %v4912
        %v4914 = vpop.f32.mrb[0].mxu0
        %v4915 = vpop.f32.mrb[0].mxu0
        %v4916 = vadd.f32 %v4755, %v4915
        %v4917 = vpop.f32.mrb[0].mxu0
        %4918 = vmatprep.mubr.bf16.mxu0 %v3850
        %4919 = vmatmul.mubr.bf16.gmra.mrb[0].mxu0 %v3849
        %v4920 = vpop.f32.mrb[0].mxu0
        %v4921 = vadd.f32 %v4760, %v4920
        %v4922 = vpop.f32.mrb[0].mxu0
        %v4923 = vpop.f32.mrb[0].mxu0
        %v4924 = vadd.f32 %v4763, %v4923
        %v4925 = vpop.f32.mrb[0].mxu0
        %4926 = vmatprep.mubr.bf16.mxu0 %v3859
        %4927 = vmatmul.mubr.bf16.gmra.mrb[0].mxu0 %v3858
        %v4928 = vpop.f32.mrb[0].mxu0
        %v4929 = vadd.f32 %v4768, %v4928
        %v4930 = vpop.f32.mrb[0].mxu0
        %v4931 = vpop.f32.mrb[0].mxu0
        %v4932 = vadd.f32 %v4771, %v4931
        %v4933 = vpop.f32.mrb[0].mxu0
        %4934 = vmatprep.mubr.bf16.mxu0 %v3868
        %4935 = vmatmul.mubr.bf16.gmra.mrb[0].mxu0 %v3867
        %v4936 = vpop.f32.mrb[0].mxu0
        %v4937 = vadd.f32 %v4776, %v4936
        %v4938 = vpop.f32.mrb[0].mxu0
        %v4939 = vpop.f32.mrb[0].mxu0
        %v4940 = vadd.f32 %v4779, %v4939
        %v4941 = vpop.f32.mrb[0].mxu0
        %4942 = vmatprep.mubr.bf16.mxu0 %v3877
        %4943 = vmatmul.mubr.bf16.gmra.mrb[0].mxu0 %v3876
        %v4944 = vpop.f32.mrb[0].mxu0
        %v4945 = vadd.f32 %v4784, %v4944
        %v4946 = vpop.f32.mrb[0].mxu0
        %v4947 = vpop.f32.mrb[0].mxu0
        %v4948 = vadd.f32 %v4787, %v4947
        %v4949 = vpop.f32.mrb[0].mxu0
        %4950 = vmatprep.mubr.bf16.mxu0 %v3886
        %4951 = vmatmul.mubr.bf16.gmra.mrb[0].mxu0 %v3885
        %v4952 = vpop.f32.mrb[0].mxu0
        %v4953 = vadd.f32 %v4792, %v4952
        %v4954 = vpop.f32.mrb[0].mxu0
        %v4955 = vpop.f32.mrb[0].mxu0
        %v4956 = vadd.f32 %v4795, %v4955
        %v4957 = vpop.f32.mrb[0].mxu0
        %4958 = vmatprep.mubr.bf16.mxu0 %v3895
        %4959 = vmatmul.mubr.bf16.gmra.mrb[0].mxu0 %v3894
        %v4960 = vpop.f32.mrb[0].mxu0
        %v4961 = vadd.f32 %v4800, %v4960
        %v4962 = vpop.f32.mrb[0].mxu0
        %v4963 = vpop.f32.mrb[0].mxu0
        %v4964 = vadd.f32 %v4803, %v4963
        %v4965 = vpop.f32.mrb[0].mxu0
        %4966 = vmatprep.mubr.bf16.mxu0 %v3904
        %4967 = vmatmul.mubr.bf16.gmra.mrb[0].mxu0 %v3903
        %v4968 = vpop.f32.mrb[0].mxu0
        %v4969 = vadd.f32 %v4808, %v4968
        %v4970 = vpop.f32.mrb[0].mxu0
        %v4971 = vpop.f32.mrb[0].mxu0
        %v4972 = vadd.f32 %v4811, %v4971
        %v4973 = vpop.f32.mrb[0].mxu0
        %4974 = vmatprep.mubr.bf16.mxu0 %v3913
        %4975 = vmatmul.mubr.bf16.gmra.mrb[0].mxu0 %v3912
        %v4976 = vpop.f32.mrb[0].mxu0
        %v4977 = vadd.f32 %v4816, %v4976
        %v4978 = vpop.f32.mrb[0].mxu0
        %v4979 = vpop.f32.mrb[0].mxu0
        %v4980 = vadd.f32 %v4819, %v4979
        %v4981 = vpop.f32.mrb[0].mxu0
        %4982 = vmatprep.mubr.bf16.mxu0 %v3922
        %4983 = vmatmul.mubr.bf16.gmra.mrb[0].mxu0 %v3921
        %v4984 = vpop.f32.mrb[0].mxu0
        %v4985 = vadd.f32 %v4824, %v4984
        %v4986 = vpop.f32.mrb[0].mxu0
        %v4987 = vpop.f32.mrb[0].mxu0
        %v4988 = vadd.f32 %v4827, %v4987
        %v4989 = vpop.f32.mrb[0].mxu0
        %4990 = vmatprep.mubr.bf16.mxu0 %v3931
        %4991 = vmatmul.mubr.bf16.gmra.mrb[0].mxu0 %v3930
        %v4992 = vpop.f32.mrb[0].mxu0
        %v4993 = vadd.f32 %v4832, %v4992
        %v4994 = vpop.f32.mrb[0].mxu0
        %v4995 = vpop.f32.mrb[0].mxu0
        %v4996 = vadd.f32 %v4835, %v4995
        %v4997 = vpop.f32.mrb[0].mxu0
        %4998 = vmatprep.mubr.bf16.mxu0 %v3940
        %4999 = vmatmul.mubr.bf16.gmra.mrb[0].mxu0 %v3939
        %v5000 = vpop.f32.mrb[0].mxu0
        %v5001 = vadd.f32 %v4840, %v5000
        %v5002 = vpop.f32.mrb[0].mxu0
        %v5003 = vpop.f32.mrb[0].mxu0
        %v5004 = vadd.f32 %v4843, %v5003
        %v5005 = vpop.f32.mrb[0].mxu0
        %5006 = vmatprep.mubr.bf16.mxu0 %v3949
        %5007 = vmatmul.mubr.bf16.gmra.mrb[0].mxu0 %v3948
        %v5008 = vpop.f32.mrb[0].mxu0
        %v5009 = vadd.f32 %v4848, %v5008
        %v5010 = vpop.f32.mrb[0].mxu0
        %v5011 = vpop.f32.mrb[0].mxu0
        %v5012 = vadd.f32 %v4851, %v5011
        %v5013 = vpop.f32.mrb[0].mxu0
        %5014 = vmatprep.mubr.bf16.mxu0 %v3958
        %5015 = vmatmul.mubr.bf16.gmra.mrb[0].mxu0 %v3957
        %v5016 = vpop.f32.mrb[0].mxu0
        %v5017 = vadd.f32 %v4856, %v5016
        %v5018 = vpop.f32.mrb[0].mxu0
        %v5019 = vpop.f32.mrb[0].mxu0
        %v5020 = vadd.f32 %v4859, %v5019
        %v5021 = vpop.f32.mrb[0].mxu0
        %5022 = vmatprep.mubr.bf16.mxu0 %v3967
        %5023 = vmatmul.mubr.bf16.gmra.mrb[0].mxu0 %v3966
        %v5024 = vpop.f32.mrb[0].mxu0
        %v5025 = vadd.f32 %v4864, %v5024
        %v5026 = vpop.f32.mrb[0].mxu0
        %v5027 = vpop.f32.mrb[0].mxu0
        %v5028 = vadd.f32 %v4867, %v5027
        %v5029 = vpop.f32.mrb[0].mxu0
        %5030 = vmatprep.mubr.bf16.mxu0 %v3976
        %5031 = vmatmul.mubr.bf16.gmra.mrb[0].mxu0 %v3975
        %v5032 = vpop.f32.mrb[0].mxu0
        %v5033 = vadd.f32 %v4872, %v5032
        %v5034 = vpop.f32.mrb[0].mxu0
        %v5035 = vpop.f32.mrb[0].mxu0
        %v5036 = vadd.f32 %v4875, %v5035
        %v5037 = vpop.f32.mrb[0].mxu0
        %5038 = vdwg.mxu0
        %5039 = vmatprep.subr.bf16.mxu0 0
        %5040 = vmatpush1.bf16.msra.mxu0 %v4460
        %5041 = vmatprep.subr.bf16.mxu0 0
        %5042 = vmatpush1.bf16.msra.mxu0 %v4461
        %5043 = vmatprep.subr.bf16.mxu0 0
        %5044 = vmatpush1.bf16.msra.mxu0 %v4462
        %5045 = vmatprep.subr.bf16.mxu0 0
        %5046 = vmatpush1.bf16.msra.mxu0 %v4463
        %5047 = vmatprep.subr.bf16.mxu0 0
        %5048 = vmatpush1.bf16.msra.mxu0 %v4464
        %5049 = vmatprep.subr.bf16.mxu0 0
        %5050 = vmatpush1.bf16.msra.mxu0 %v4465
        %5051 = vmatprep.subr.bf16.mxu0 0
        %5052 = vmatpush1.bf16.msra.mxu0 %v4466
        %5053 = vmatprep.subr.bf16.mxu0 0
        %5054 = vmatpush1.bf16.msra.mxu0 %v4467
        %5055 = vmatprep.subr.bf16.mxu0 0
        %5056 = vmatpush1.bf16.msra.mxu0 %v4468
        %5057 = vmatprep.subr.bf16.mxu0 0
        %5058 = vmatpush1.bf16.msra.mxu0 %v4469
        %5059 = vmatprep.subr.bf16.mxu0 0
        %5060 = vmatpush1.bf16.msra.mxu0 %v4470
        %5061 = vmatprep.subr.bf16.mxu0 0
        %5062 = vmatpush1.bf16.msra.mxu0 %v4471
        %5063 = vmatprep.subr.bf16.mxu0 0
        %5064 = vmatpush1.bf16.msra.mxu0 %v4472
        %5065 = vmatprep.subr.bf16.mxu0 0
        %5066 = vmatpush1.bf16.msra.mxu0 %v4473
        %5067 = vmatprep.subr.bf16.mxu0 0
        %5068 = vmatpush1.bf16.msra.mxu0 %v4474
        %5069 = vmatprep.subr.bf16.mxu0 0
        %5070 = vmatpush1.bf16.msra.mxu0 %v4475
        %5071 = vmatprep.mubr.bf16.mxu0 %v3843
        %5072 = vmatmul.mubr.bf16.gmra.mrb[0].mxu0 %v3842
        %v5073 = vpop.f32.mrb[0].mxu0
        %v5074 = vadd.f32 %v4913, %v5073
        %v5075 = vpop.f32.mrb[0].mxu0
        %v5076 = vpop.f32.mrb[0].mxu0
        %v5077 = vadd.f32 %v4916, %v5076
        %v5078 = vpop.f32.mrb[0].mxu0
        %5079 = vmatprep.mubr.bf16.mxu0 %v3852
        %5080 = vmatmul.mubr.bf16.gmra.mrb[0].mxu0 %v3851
        %v5081 = vpop.f32.mrb[0].mxu0
        %v5082 = vadd.f32 %v4921, %v5081
        %v5083 = vpop.f32.mrb[0].mxu0
        %v5084 = vpop.f32.mrb[0].mxu0
        %v5085 = vadd.f32 %v4924, %v5084
        %v5086 = vpop.f32.mrb[0].mxu0
        %5087 = vmatprep.mubr.bf16.mxu0 %v3861
        %5088 = vmatmul.mubr.bf16.gmra.mrb[0].mxu0 %v3860
        %v5089 = vpop.f32.mrb[0].mxu0
        %v5090 = vadd.f32 %v4929, %v5089
        %v5091 = vpop.f32.mrb[0].mxu0
        %v5092 = vpop.f32.mrb[0].mxu0
        %v5093 = vadd.f32 %v4932, %v5092
        %v5094 = vpop.f32.mrb[0].mxu0
        %5095 = vmatprep.mubr.bf16.mxu0 %v3870
        %5096 = vmatmul.mubr.bf16.gmra.mrb[0].mxu0 %v3869
        %v5097 = vpop.f32.mrb[0].mxu0
        %v5098 = vadd.f32 %v4937, %v5097
        %v5099 = vpop.f32.mrb[0].mxu0
        %v5100 = vpop.f32.mrb[0].mxu0
        %v5101 = vadd.f32 %v4940, %v5100
        %v5102 = vpop.f32.mrb[0].mxu0
        %5103 = vmatprep.mubr.bf16.mxu0 %v3879
        %5104 = vmatmul.mubr.bf16.gmra.mrb[0].mxu0 %v3878
        %v5105 = vpop.f32.mrb[0].mxu0
        %v5106 = vadd.f32 %v4945, %v5105
        %v5107 = vpop.f32.mrb[0].mxu0
        %v5108 = vpop.f32.mrb[0].mxu0
        %v5109 = vadd.f32 %v4948, %v5108
        %v5110 = vpop.f32.mrb[0].mxu0
        %5111 = vmatprep.mubr.bf16.mxu0 %v3888
        %5112 = vmatmul.mubr.bf16.gmra.mrb[0].mxu0 %v3887
        %v5113 = vpop.f32.mrb[0].mxu0
        %v5114 = vadd.f32 %v4953, %v5113
        %v5115 = vpop.f32.mrb[0].mxu0
        %v5116 = vpop.f32.mrb[0].mxu0
        %v5117 = vadd.f32 %v4956, %v5116
        %v5118 = vpop.f32.mrb[0].mxu0
        %5119 = vmatprep.mubr.bf16.mxu0 %v3897
        %5120 = vmatmul.mubr.bf16.gmra.mrb[0].mxu0 %v3896
        %v5121 = vpop.f32.mrb[0].mxu0
        %v5122 = vadd.f32 %v4961, %v5121
        %v5123 = vpop.f32.mrb[0].mxu0
        %v5124 = vpop.f32.mrb[0].mxu0
        %v5125 = vadd.f32 %v4964, %v5124
        %v5126 = vpop.f32.mrb[0].mxu0
        %5127 = vmatprep.mubr.bf16.mxu0 %v3906
        %5128 = vmatmul.mubr.bf16.gmra.mrb[0].mxu0 %v3905
        %v5129 = vpop.f32.mrb[0].mxu0
        %v5130 = vadd.f32 %v4969, %v5129
        %v5131 = vpop.f32.mrb[0].mxu0
        %v5132 = vpop.f32.mrb[0].mxu0
        %v5133 = vadd.f32 %v4972, %v5132
        %v5134 = vpop.f32.mrb[0].mxu0
        %5135 = vmatprep.mubr.bf16.mxu0 %v3915
        %5136 = vmatmul.mubr.bf16.gmra.mrb[0].mxu0 %v3914
        %v5137 = vpop.f32.mrb[0].mxu0
        %v5138 = vadd.f32 %v4977, %v5137
        %v5139 = vpop.f32.mrb[0].mxu0
        %v5140 = vpop.f32.mrb[0].mxu0
        %v5141 = vadd.f32 %v4980, %v5140
        %v5142 = vpop.f32.mrb[0].mxu0
        %5143 = vmatprep.mubr.bf16.mxu0 %v3924
        %5144 = vmatmul.mubr.bf16.gmra.mrb[0].mxu0 %v3923
        %v5145 = vpop.f32.mrb[0].mxu0
        %v5146 = vadd.f32 %v4985, %v5145
        %v5147 = vpop.f32.mrb[0].mxu0
        %v5148 = vpop.f32.mrb[0].mxu0
        %v5149 = vadd.f32 %v4988, %v5148
        %v5150 = vpop.f32.mrb[0].mxu0
        %5151 = vmatprep.mubr.bf16.mxu0 %v3933
        %5152 = vmatmul.mubr.bf16.gmra.mrb[0].mxu0 %v3932
        %v5153 = vpop.f32.mrb[0].mxu0
        %v5154 = vadd.f32 %v4993, %v5153
        %v5155 = vpop.f32.mrb[0].mxu0
        %v5156 = vpop.f32.mrb[0].mxu0
        %v5157 = vadd.f32 %v4996, %v5156
        %v5158 = vpop.f32.mrb[0].mxu0
        %5159 = vmatprep.mubr.bf16.mxu0 %v3942
        %5160 = vmatmul.mubr.bf16.gmra.mrb[0].mxu0 %v3941
        %v5161 = vpop.f32.mrb[0].mxu0
        %v5162 = vadd.f32 %v5001, %v5161
        %v5163 = vpop.f32.mrb[0].mxu0
        %v5164 = vpop.f32.mrb[0].mxu0
        %v5165 = vadd.f32 %v5004, %v5164
        %v5166 = vpop.f32.mrb[0].mxu0
        %5167 = vmatprep.mubr.bf16.mxu0 %v3951
        %5168 = vmatmul.mubr.bf16.gmra.mrb[0].mxu0 %v3950
        %v5169 = vpop.f32.mrb[0].mxu0
        %v5170 = vadd.f32 %v5009, %v5169
        %v5171 = vpop.f32.mrb[0].mxu0
        %v5172 = vpop.f32.mrb[0].mxu0
        %v5173 = vadd.f32 %v5012, %v5172
        %v5174 = vpop.f32.mrb[0].mxu0
        %5175 = vmatprep.mubr.bf16.mxu0 %v3960
        %5176 = vmatmul.mubr.bf16.gmra.mrb[0].mxu0 %v3959
        %v5177 = vpop.f32.mrb[0].mxu0
        %v5178 = vadd.f32 %v5017, %v5177
        %v5179 = vpop.f32.mrb[0].mxu0
        %v5180 = vpop.f32.mrb[0].mxu0
        %v5181 = vadd.f32 %v5020, %v5180
        %v5182 = vpop.f32.mrb[0].mxu0
        %5183 = vmatprep.mubr.bf16.mxu0 %v3969
        %5184 = vmatmul.mubr.bf16.gmra.mrb[0].mxu0 %v3968
        %v5185 = vpop.f32.mrb[0].mxu0
        %v5186 = vadd.f32 %v5025, %v5185
        %v5187 = vpop.f32.mrb[0].mxu0
        %v5188 = vpop.f32.mrb[0].mxu0
        %v5189 = vadd.f32 %v5028, %v5188
        %v5190 = vpop.f32.mrb[0].mxu0
        %5191 = vmatprep.mubr.bf16.mxu0 %v3978
        %5192 = vmatmul.mubr.bf16.gmra.mrb[0].mxu0 %v3977
        %v5193 = vpop.f32.mrb[0].mxu0
        %v5194 = vadd.f32 %v5033, %v5193
        %v5195 = vpop.f32.mrb[0].mxu0
        %v5196 = vpop.f32.mrb[0].mxu0
        %v5197 = vadd.f32 %v5036, %v5196
        %v5198 = vpop.f32.mrb[0].mxu0
        %5199 = vdwg.mxu0
        %5200 = vmatprep.subr.bf16.mxu0 0
        %5201 = vmatpush1.bf16.msra.mxu0 %v4476
        %5202 = vmatprep.subr.bf16.mxu0 0
        %5203 = vmatpush1.bf16.msra.mxu0 %v4477
        %5204 = vmatprep.subr.bf16.mxu0 0
        %5205 = vmatpush1.bf16.msra.mxu0 %v4478
        %5206 = vmatprep.subr.bf16.mxu0 0
        %5207 = vmatpush1.bf16.msra.mxu0 %v4479
        %5208 = vmatprep.subr.bf16.mxu0 0
        %5209 = vmatpush1.bf16.msra.mxu0 %v4480
        %5210 = vmatprep.subr.bf16.mxu0 0
        %5211 = vmatpush1.bf16.msra.mxu0 %v4481
        %5212 = vmatprep.subr.bf16.mxu0 0
        %5213 = vmatpush1.bf16.msra.mxu0 %v4482
        %5214 = vmatprep.subr.bf16.mxu0 0
        %5215 = vmatpush1.bf16.msra.mxu0 %v4483
        %5216 = vmatprep.subr.bf16.mxu0 0
        %5217 = vmatpush1.bf16.msra.mxu0 0
        %5218 = vmatprep.subr.bf16.mxu0 0
        %5219 = vmatpush1.bf16.msra.mxu0 0
        %5220 = vmatprep.subr.bf16.mxu0 0
        %5221 = vmatpush1.bf16.msra.mxu0 0
        %5222 = vmatprep.subr.bf16.mxu0 0
        %5223 = vmatpush1.bf16.msra.mxu0 0
        %5224 = vmatprep.subr.bf16.mxu0 0
        %5225 = vmatpush1.bf16.msra.mxu0 0
        %5226 = vmatprep.subr.bf16.mxu0 0
        %5227 = vmatpush1.bf16.msra.mxu0 0
        %5228 = vmatprep.subr.bf16.mxu0 0
        %5229 = vmatpush1.bf16.msra.mxu0 0
        %5230 = vmatprep.subr.bf16.mxu0 0
        %5231 = vmatpush1.bf16.msra.mxu0 0
        %5232 = vmatprep.mubr.bf16.mxu0 0
        %5233 = vmatmul.mubr.bf16.gmra.mrb[0].mxu0 %v3844
        %v5234 = vpop.f32.mrb[0].mxu0
        %v5235 = vadd.f32 %v5074, %v5234
        %v5236 = vpop.f32.mrb[0].mxu0
        %v5237 = vpop.f32.mrb[0].mxu0
        %v5238 = vadd.f32 %v5077, %v5237
        %v5239 = vpop.f32.mrb[0].mxu0
        %5240 = vmatprep.mubr.bf16.mxu0 0
        %5241 = vmatmul.mubr.bf16.gmra.mrb[0].mxu0 %v3853
        %v5242 = vpop.f32.mrb[0].mxu0
        %v5243 = vadd.f32 %v5082, %v5242
        %v5244 = vpop.f32.mrb[0].mxu0
        %v5245 = vpop.f32.mrb[0].mxu0
        %v5246 = vadd.f32 %v5085, %v5245
        %v5247 = vpop.f32.mrb[0].mxu0
        %5248 = vmatprep.mubr.bf16.mxu0 0
        %5249 = vmatmul.mubr.bf16.gmra.mrb[0].mxu0 %v3862
        %v5250 = vpop.f32.mrb[0].mxu0
        %v5251 = vadd.f32 %v5090, %v5250
        %v5252 = vpop.f32.mrb[0].mxu0
        %v5253 = vpop.f32.mrb[0].mxu0
        %v5254 = vadd.f32 %v5093, %v5253
        %v5255 = vpop.f32.mrb[0].mxu0
        %5256 = vmatprep.mubr.bf16.mxu0 0
        %5257 = vmatmul.mubr.bf16.gmra.mrb[0].mxu0 %v3871
        %v5258 = vpop.f32.mrb[0].mxu0
        %v5259 = vadd.f32 %v5098, %v5258
        %v5260 = vpop.f32.mrb[0].mxu0
        %v5261 = vpop.f32.mrb[0].mxu0
        %v5262 = vadd.f32 %v5101, %v5261
        %v5263 = vpop.f32.mrb[0].mxu0
        %5264 = vmatprep.mubr.bf16.mxu0 0
        %5265 = vmatmul.mubr.bf16.gmra.mrb[0].mxu0 %v3880
        %v5266 = vpop.f32.mrb[0].mxu0
        %v5267 = vadd.f32 %v5106, %v5266
        %v5268 = vpop.f32.mrb[0].mxu0
        %v5269 = vpop.f32.mrb[0].mxu0
        %v5270 = vadd.f32 %v5109, %v5269
        %v5271 = vpop.f32.mrb[0].mxu0
        %5272 = vmatprep.mubr.bf16.mxu0 0
        %5273 = vmatmul.mubr.bf16.gmra.mrb[0].mxu0 %v3889
        %v5274 = vpop.f32.mrb[0].mxu0
        %v5275 = vadd.f32 %v5114, %v5274
        %v5276 = vpop.f32.mrb[0].mxu0
        %v5277 = vpop.f32.mrb[0].mxu0
        %v5278 = vadd.f32 %v5117, %v5277
        %v5279 = vpop.f32.mrb[0].mxu0
        %5280 = vmatprep.mubr.bf16.mxu0 0
        %5281 = vmatmul.mubr.bf16.gmra.mrb[0].mxu0 %v3898
        %v5282 = vpop.f32.mrb[0].mxu0
        %v5283 = vadd.f32 %v5122, %v5282
        %v5284 = vpop.f32.mrb[0].mxu0
        %v5285 = vpop.f32.mrb[0].mxu0
        %v5286 = vadd.f32 %v5125, %v5285
        %v5287 = vpop.f32.mrb[0].mxu0
        %5288 = vmatprep.mubr.bf16.mxu0 0
        %5289 = vmatmul.mubr.bf16.gmra.mrb[0].mxu0 %v3907
        %v5290 = vpop.f32.mrb[0].mxu0
        %v5291 = vadd.f32 %v5130, %v5290
        %v5292 = vpop.f32.mrb[0].mxu0
        %v5293 = vpop.f32.mrb[0].mxu0
        %v5294 = vadd.f32 %v5133, %v5293
        %v5295 = vpop.f32.mrb[0].mxu0
        %5296 = vmatprep.mubr.bf16.mxu0 0
        %5297 = vmatmul.mubr.bf16.gmra.mrb[0].mxu0 %v3916
        %v5298 = vpop.f32.mrb[0].mxu0
        %v5299 = vadd.f32 %v5138, %v5298
        %v5300 = vpop.f32.mrb[0].mxu0
        %v5301 = vpop.f32.mrb[0].mxu0
        %v5302 = vadd.f32 %v5141, %v5301
        %v5303 = vpop.f32.mrb[0].mxu0
        %5304 = vmatprep.mubr.bf16.mxu0 0
        %5305 = vmatmul.mubr.bf16.gmra.mrb[0].mxu0 %v3925
        %v5306 = vpop.f32.mrb[0].mxu0
        %v5307 = vadd.f32 %v5146, %v5306
        %v5308 = vpop.f32.mrb[0].mxu0
        %v5309 = vpop.f32.mrb[0].mxu0
        %v5310 = vadd.f32 %v5149, %v5309
        %v5311 = vpop.f32.mrb[0].mxu0
        %5312 = vmatprep.mubr.bf16.mxu0 0
        %5313 = vmatmul.mubr.bf16.gmra.mrb[0].mxu0 %v3934
        %v5314 = vpop.f32.mrb[0].mxu0
        %v5315 = vadd.f32 %v5154, %v5314
        %v5316 = vpop.f32.mrb[0].mxu0
        %v5317 = vpop.f32.mrb[0].mxu0
        %v5318 = vadd.f32 %v5157, %v5317
        %v5319 = vpop.f32.mrb[0].mxu0
        %5320 = vmatprep.mubr.bf16.mxu0 0
        %5321 = vmatmul.mubr.bf16.gmra.mrb[0].mxu0 %v3943
        %v5322 = vpop.f32.mrb[0].mxu0
        %v5323 = vadd.f32 %v5162, %v5322
        %v5324 = vpop.f32.mrb[0].mxu0
        %v5325 = vpop.f32.mrb[0].mxu0
        %v5326 = vadd.f32 %v5165, %v5325
        %v5327 = vpop.f32.mrb[0].mxu0
        %5328 = vmatprep.mubr.bf16.mxu0 0
        %5329 = vmatmul.mubr.bf16.gmra.mrb[0].mxu0 %v3952
        %v5330 = vpop.f32.mrb[0].mxu0
        %v5331 = vadd.f32 %v5170, %v5330
        %v5332 = vpop.f32.mrb[0].mxu0
        %v5333 = vpop.f32.mrb[0].mxu0
        %v5334 = vadd.f32 %v5173, %v5333
        %v5335 = vpop.f32.mrb[0].mxu0
        %5336 = vmatprep.mubr.bf16.mxu0 0
        %5337 = vmatmul.mubr.bf16.gmra.mrb[0].mxu0 %v3961
        %v5338 = vpop.f32.mrb[0].mxu0
        %v5339 = vadd.f32 %v5178, %v5338
        %v5340 = vpop.f32.mrb[0].mxu0
        %v5341 = vpop.f32.mrb[0].mxu0
        %v5342 = vadd.f32 %v5181, %v5341
        %v5343 = vpop.f32.mrb[0].mxu0
        %5344 = vmatprep.mubr.bf16.mxu0 0
        %5345 = vmatmul.mubr.bf16.gmra.mrb[0].mxu0 %v3970
        %v5346 = vpop.f32.mrb[0].mxu0
        %v5347 = vadd.f32 %v5186, %v5346
        %v5348 = vpop.f32.mrb[0].mxu0
        %v5349 = vpop.f32.mrb[0].mxu0
        %v5350 = vadd.f32 %v5189, %v5349
        %v5351 = vpop.f32.mrb[0].mxu0
        %5352 = vmatprep.mubr.bf16.mxu0 0
        %5353 = vmatmul.mubr.bf16.gmra.mrb[0].mxu0 %v3979
        %v5354 = vpop.f32.mrb[0].mxu0
        %v5355 = vadd.f32 %v5194, %v5354
        %v5356 = vpop.f32.mrb[0].mxu0
        %v5357 = vpop.f32.mrb[0].mxu0
        %v5358 = vadd.f32 %v5197, %v5357
        %v5359 = vpop.f32.mrb[0].mxu0
        %5360 = vdwg.mxu0
        %5361 = vst [vmem:[#allocation4] sm:$0xff] %v5235
        %5362 = vst [vmem:[#allocation4 + $0x8] sm:$0xff] %v5238
        %5363 = vst [vmem:[#allocation4 + $0x10] sm:$0xff] %v5243
        %5364 = vst [vmem:[#allocation4 + $0x18] sm:$0xff] %v5246
        %5365 = vst [vmem:[#allocation4 + $0x20] sm:$0xff] %v5251
        %5366 = vst [vmem:[#allocation4 + $0x28] sm:$0xff] %v5254
        %5367 = vst [vmem:[#allocation4 + $0x30] sm:$0xff] %v5259
        %5368 = vst [vmem:[#allocation4 + $0x38] sm:$0xff] %v5262
        %5369 = vst [vmem:[#allocation4 + $0x40] sm:$0xff] %v5267
        %5370 = vst [vmem:[#allocation4 + $0x48] sm:$0xff] %v5270
        %5371 = vst [vmem:[#allocation4 + $0x50] sm:$0xff] %v5275
        %5372 = vst [vmem:[#allocation4 + $0x58] sm:$0xff] %v5278
        %5373 = vst [vmem:[#allocation4 + $0x60] sm:$0xff] %v5283
        %5374 = vst [vmem:[#allocation4 + $0x68] sm:$0xff] %v5286
        %5375 = vst [vmem:[#allocation4 + $0x70] sm:$0xff] %v5291
        %5376 = vst [vmem:[#allocation4 + $0x78] sm:$0xff] %v5294
        %5377 = vst [vmem:[#allocation4 + $0x80] sm:$0xff] %v5299
        %5378 = vst [vmem:[#allocation4 + $0x88] sm:$0xff] %v5302
        %5379 = vst [vmem:[#allocation4 + $0x90] sm:$0xff] %v5307
        %5380 = vst [vmem:[#allocation4 + $0x98] sm:$0xff] %v5310
        %5381 = vst [vmem:[#allocation4 + $0xa0] sm:$0xff] %v5315
        %5382 = vst [vmem:[#allocation4 + $0xa8] sm:$0xff] %v5318
        %5383 = vst [vmem:[#allocation4 + $0xb0] sm:$0xff] %v5323
        %5384 = vst [vmem:[#allocation4 + $0xb8] sm:$0xff] %v5326
        %5385 = vst [vmem:[#allocation4 + $0xc0] sm:$0xff] %v5331
        %5386 = vst [vmem:[#allocation4 + $0xc8] sm:$0xff] %v5334
        %5387 = vst [vmem:[#allocation4 + $0xd0] sm:$0xff] %v5339
        %5388 = vst [vmem:[#allocation4 + $0xd8] sm:$0xff] %v5342
        %5389 = vst [vmem:[#allocation4 + $0xe0] sm:$0xff] %v5347
        %5390 = vst [vmem:[#allocation4 + $0xe8] sm:$0xff] %v5350
        %5391 = vst [vmem:[#allocation4 + $0xf0] sm:$0xff] %v5355
        %5392 = vst [vmem:[#allocation4 + $0xf8] sm:$0xff] %v5358
        %v5393 = vld [vmem:[#allocation4] sm:$0xff]
        %v5394 = vld [vmem:[#allocation4 + $0x8] sm:$0xff]
        %v5395 = vld [vmem:[#allocation4 + $0x10] sm:$0xff]
        %v5396 = vld [vmem:[#allocation4 + $0x18] sm:$0xff]
        %v5397 = vld [vmem:[#allocation4 + $0x20] sm:$0xff]
        %v5398 = vld [vmem:[#allocation4 + $0x28] sm:$0xff]
        %v5399 = vld [vmem:[#allocation4 + $0x30] sm:$0xff]
        %v5400 = vld [vmem:[#allocation4 + $0x38] sm:$0xff]
        %v5401 = vld [vmem:[#allocation4 + $0x40] sm:$0xff]
        %v5402 = vld [vmem:[#allocation4 + $0x48] sm:$0xff]
        %v5403 = vld [vmem:[#allocation4 + $0x50] sm:$0xff]
        %v5404 = vld [vmem:[#allocation4 + $0x58] sm:$0xff]
        %v5405 = vld [vmem:[#allocation4 + $0x60] sm:$0xff]
        %v5406 = vld [vmem:[#allocation4 + $0x68] sm:$0xff]
        %v5407 = vld [vmem:[#allocation4 + $0x70] sm:$0xff]
        %v5408 = vld [vmem:[#allocation4 + $0x78] sm:$0xff]
        %v5409 = vld [vmem:[#allocation4 + $0x80] sm:$0xff]
        %v5410 = vld [vmem:[#allocation4 + $0x88] sm:$0xff]
        %v5411 = vld [vmem:[#allocation4 + $0x90] sm:$0xff]
        %v5412 = vld [vmem:[#allocation4 + $0x98] sm:$0xff]
        %v5413 = vld [vmem:[#allocation4 + $0xa0] sm:$0xff]
        %v5414 = vld [vmem:[#allocation4 + $0xa8] sm:$0xff]
        %v5415 = vld [vmem:[#allocation4 + $0xb0] sm:$0xff]
        %v5416 = vld [vmem:[#allocation4 + $0xb8] sm:$0xff]
        %v5417 = vld [vmem:[#allocation4 + $0xc0] sm:$0xff]
        %v5418 = vld [vmem:[#allocation4 + $0xc8] sm:$0xff]
        %v5419 = vld [vmem:[#allocation4 + $0xd0] sm:$0xff]
        %v5420 = vld [vmem:[#allocation4 + $0xd8] sm:$0xff]
        %v5421 = vld [vmem:[#allocation4 + $0xe0] sm:$0xff]
        %v5422 = vld [vmem:[#allocation4 + $0xe8] sm:$0xff]
        %v5423 = vld [vmem:[#allocation4 + $0xf0] sm:$0xff]
        %v5424 = vld [vmem:[#allocation4 + $0xf8] sm:$0xff]
        %v5425 = vld [vmem:[%s4] sm:$0x1]
        %v5427 = vlaneseq
        %v5428 = vshrl.u32 %v5427, 7
        %v5429 = vsub.s32 0, %v5428
        %v5430 = vrot.slane %v5425, %v5429
        %v5432 = vmul.f32 %v5393, %v5430
        %v5433 = vmul.f32 %v5394, %v5430
        %v5434 = vmul.f32 %v5395, %v5430
        %v5435 = vmul.f32 %v5396, %v5430
        %v5436 = vmul.f32 %v5397, %v5430
        %v5437 = vmul.f32 %v5398, %v5430
        %v5438 = vmul.f32 %v5399, %v5430
        %v5439 = vmul.f32 %v5400, %v5430
        %v5440 = vmul.f32 %v5401, %v5430
        %v5441 = vmul.f32 %v5402, %v5430
        %v5442 = vmul.f32 %v5403, %v5430
        %v5443 = vmul.f32 %v5404, %v5430
        %v5444 = vmul.f32 %v5405, %v5430
        %v5445 = vmul.f32 %v5406, %v5430
        %v5446 = vmul.f32 %v5407, %v5430
        %v5447 = vmul.f32 %v5408, %v5430
        %v5448 = vmul.f32 %v5409, %v5430
        %v5449 = vmul.f32 %v5410, %v5430
        %v5450 = vmul.f32 %v5411, %v5430
        %v5451 = vmul.f32 %v5412, %v5430
        %v5452 = vmul.f32 %v5413, %v5430
        %v5453 = vmul.f32 %v5414, %v5430
        %v5454 = vmul.f32 %v5415, %v5430
        %v5455 = vmul.f32 %v5416, %v5430
        %v5456 = vmul.f32 %v5417, %v5430
        %v5457 = vmul.f32 %v5418, %v5430
        %v5458 = vmul.f32 %v5419, %v5430
        %v5459 = vmul.f32 %v5420, %v5430
        %v5460 = vmul.f32 %v5421, %v5430
        %v5461 = vmul.f32 %v5422, %v5430
        %v5462 = vmul.f32 %v5423, %v5430
        %v5463 = vmul.f32 %v5424, %v5430
        %v5464 = vld [vmem:[%s5] sm:$0x1]
        %v5466 = vlaneseq
        %v5467 = vshrl.u32 %v5466, 7
        %v5468 = vsub.s32 0, %v5467
        %v5469 = vrot.slane %v5464, %v5468
        %v5471 = vadd.f32 %v5432, %v5469
        %v5472 = vadd.f32 %v5433, %v5469
        %v5473 = vadd.f32 %v5434, %v5469
        %v5474 = vadd.f32 %v5435, %v5469
        %v5475 = vadd.f32 %v5436, %v5469
        %v5476 = vadd.f32 %v5437, %v5469
        %v5477 = vadd.f32 %v5438, %v5469
        %v5478 = vadd.f32 %v5439, %v5469
        %v5479 = vadd.f32 %v5440, %v5469
        %v5480 = vadd.f32 %v5441, %v5469
        %v5481 = vadd.f32 %v5442, %v5469
        %v5482 = vadd.f32 %v5443, %v5469
        %v5483 = vadd.f32 %v5444, %v5469
        %v5484 = vadd.f32 %v5445, %v5469
        %v5485 = vadd.f32 %v5446, %v5469
        %v5486 = vadd.f32 %v5447, %v5469
        %v5487 = vadd.f32 %v5448, %v5469
        %v5488 = vadd.f32 %v5449, %v5469
        %v5489 = vadd.f32 %v5450, %v5469
        %v5490 = vadd.f32 %v5451, %v5469
        %v5491 = vadd.f32 %v5452, %v5469
        %v5492 = vadd.f32 %v5453, %v5469
        %v5493 = vadd.f32 %v5454, %v5469
        %v5494 = vadd.f32 %v5455, %v5469
        %v5495 = vadd.f32 %v5456, %v5469
        %v5496 = vadd.f32 %v5457, %v5469
        %v5497 = vadd.f32 %v5458, %v5469
        %v5498 = vadd.f32 %v5459, %v5469
        %v5499 = vadd.f32 %v5460, %v5469
        %v5500 = vadd.f32 %v5461, %v5469
        %v5501 = vadd.f32 %v5462, %v5469
        %v5502 = vadd.f32 %v5463, %v5469
        %v5503 = vmax.f32 %v5471, 0.0
        %v5504 = vmax.f32 %v5472, 0.0
        %v5505 = vmax.f32 %v5473, 0.0
        %v5506 = vmax.f32 %v5474, 0.0
        %v5507 = vmax.f32 %v5475, 0.0
        %v5508 = vmax.f32 %v5476, 0.0
        %v5509 = vmax.f32 %v5477, 0.0
        %v5510 = vmax.f32 %v5478, 0.0
        %v5511 = vmax.f32 %v5479, 0.0
        %v5512 = vmax.f32 %v5480, 0.0
        %v5513 = vmax.f32 %v5481, 0.0
        %v5514 = vmax.f32 %v5482, 0.0
        %v5515 = vmax.f32 %v5483, 0.0
        %v5516 = vmax.f32 %v5484, 0.0
        %v5517 = vmax.f32 %v5485, 0.0
        %v5518 = vmax.f32 %v5486, 0.0
        %v5519 = vmax.f32 %v5487, 0.0
        %v5520 = vmax.f32 %v5488, 0.0
        %v5521 = vmax.f32 %v5489, 0.0
        %v5522 = vmax.f32 %v5490, 0.0
        %v5523 = vmax.f32 %v5491, 0.0
        %v5524 = vmax.f32 %v5492, 0.0
        %v5525 = vmax.f32 %v5493, 0.0
        %v5526 = vmax.f32 %v5494, 0.0
        %v5527 = vmax.f32 %v5495, 0.0
        %v5528 = vmax.f32 %v5496, 0.0
        %v5529 = vmax.f32 %v5497, 0.0
        %v5530 = vmax.f32 %v5498, 0.0
        %v5531 = vmax.f32 %v5499, 0.0
        %v5532 = vmax.f32 %v5500, 0.0
        %v5533 = vmax.f32 %v5501, 0.0
        %v5534 = vmax.f32 %v5502, 0.0
        %v5535 = vpack.c.bf16 %v5504, %v5503
        %v5536 = vpack.c.bf16 %v5506, %v5505
        %v5537 = vpack.c.bf16 %v5508, %v5507
        %v5538 = vpack.c.bf16 %v5510, %v5509
        %v5539 = vpack.c.bf16 %v5512, %v5511
        %v5540 = vpack.c.bf16 %v5514, %v5513
        %v5541 = vpack.c.bf16 %v5516, %v5515
        %v5542 = vpack.c.bf16 %v5518, %v5517
        %v5543 = vpack.c.bf16 %v5520, %v5519
        %v5544 = vpack.c.bf16 %v5522, %v5521
        %v5545 = vpack.c.bf16 %v5524, %v5523
        %v5546 = vpack.c.bf16 %v5526, %v5525
        %v5547 = vpack.c.bf16 %v5528, %v5527
        %v5548 = vpack.c.bf16 %v5530, %v5529
        %v5549 = vpack.c.bf16 %v5532, %v5531
        %v5550 = vpack.c.bf16 %v5534, %v5533
        %v5567 = vunpack.c.l.b16 %v5535
        %v5568 = vunpack.c.h.b16 %v5535
        %v5569 = vunpack.c.l.b16 %v5536
        %v5570 = vunpack.c.h.b16 %v5536
        %v5571 = vunpack.c.l.b16 %v5537
        %v5572 = vunpack.c.h.b16 %v5537
        %v5573 = vunpack.c.l.b16 %v5538
        %v5574 = vunpack.c.h.b16 %v5538
        %v5575 = vunpack.c.l.b16 %v5539
        %v5576 = vunpack.c.h.b16 %v5539
        %v5577 = vunpack.c.l.b16 %v5540
        %v5578 = vunpack.c.h.b16 %v5540
        %v5579 = vunpack.c.l.b16 %v5541
        %v5580 = vunpack.c.h.b16 %v5541
        %v5581 = vunpack.c.l.b16 %v5542
        %v5582 = vunpack.c.h.b16 %v5542
        %v5583 = vunpack.c.l.b16 %v5543
        %v5584 = vunpack.c.h.b16 %v5543
        %v5585 = vunpack.c.l.b16 %v5544
        %v5586 = vunpack.c.h.b16 %v5544
        %v5587 = vunpack.c.l.b16 %v5545
        %v5588 = vunpack.c.h.b16 %v5545
        %v5589 = vunpack.c.l.b16 %v5546
        %v5590 = vunpack.c.h.b16 %v5546
        %v5591 = vunpack.c.l.b16 %v5547
        %v5592 = vunpack.c.h.b16 %v5547
        %v5593 = vunpack.c.l.b16 %v5548
        %v5594 = vunpack.c.h.b16 %v5548
        %v5595 = vunpack.c.l.b16 %v5549
        %v5596 = vunpack.c.h.b16 %v5549
        %v5597 = vunpack.c.l.b16 %v5550
        %v5598 = vunpack.c.h.b16 %v5550
        %v5599 = vpack.c.b16 %v5567, %v5567
        %v5600 = vpack.c.b16 %v5568, %v5568
        %v5601 = vpack.c.b16 %v5569, %v5569
        %v5602 = vpack.c.b16 %v5570, %v5570
        %v5603 = vpack.c.b16 %v5571, %v5571
        %v5604 = vpack.c.b16 %v5572, %v5572
        %v5605 = vpack.c.b16 %v5573, %v5573
        %v5606 = vpack.c.b16 %v5574, %v5574
        %v5607 = vpack.c.b16 %v5575, %v5575
        %v5608 = vpack.c.b16 %v5576, %v5576
        %v5609 = vpack.c.b16 %v5577, %v5577
        %v5610 = vpack.c.b16 %v5578, %v5578
        %v5611 = vpack.c.b16 %v5579, %v5579
        %v5612 = vpack.c.b16 %v5580, %v5580
        %v5613 = vpack.c.b16 %v5581, %v5581
        %v5614 = vpack.c.b16 %v5582, %v5582
        %v5615 = vpack.c.b16 %v5583, %v5583
        %v5616 = vpack.c.b16 %v5584, %v5584
        %v5617 = vpack.c.b16 %v5585, %v5585
        %v5618 = vpack.c.b16 %v5586, %v5586
        %v5619 = vpack.c.b16 %v5587, %v5587
        %v5620 = vpack.c.b16 %v5588, %v5588
        %v5621 = vpack.c.b16 %v5589, %v5589
        %v5622 = vpack.c.b16 %v5590, %v5590
        %v5623 = vpack.c.b16 %v5591, %v5591
        %v5624 = vpack.c.b16 %v5592, %v5592
        %v5625 = vpack.c.b16 %v5593, %v5593
        %v5626 = vpack.c.b16 %v5594, %v5594
        %v5627 = vpack.c.b16 %v5595, %v5595
        %v5628 = vpack.c.b16 %v5596, %v5596
        %v5629 = vpack.c.b16 %v5597, %v5597
        %v5630 = vpack.c.b16 %v5598, %v5598
        %5663 = vst [vmem:[%s728 + $0x8] sm:$0xf] %v5599
        %5664 = vst [vmem:[%s728 + $0xc] sm:$0xf] %v5600
        %5665 = vst [vmem:[%s728 + $0x1c] sm:$0xf] %v5601
        %5666 = vst [vmem:[%s728 + $0x20] sm:$0xf] %v5602
        %5667 = vst [vmem:[%s728 + $0x30] sm:$0xf] %v5603
        %5668 = vst [vmem:[%s728 + $0x34] sm:$0xf] %v5604
        %5669 = vst [vmem:[%s728 + $0x44] sm:$0xf] %v5605
        %5670 = vst [vmem:[%s728 + $0x48] sm:$0xf] %v5606
        %5671 = vst [vmem:[%s728 + $0x58] sm:$0xf] %v5607
        %5672 = vst [vmem:[%s728 + $0x5c] sm:$0xf] %v5608
        %5673 = vst [vmem:[%s728 + $0x6c] sm:$0xf] %v5609
        %5674 = vst [vmem:[%s728 + $0x70] sm:$0xf] %v5610
        %5675 = vst [vmem:[%s728 + $0x80] sm:$0xf] %v5611
        %5676 = vst [vmem:[%s728 + $0x84] sm:$0xf] %v5612
        %5677 = vst [vmem:[%s728 + $0x94] sm:$0xf] %v5613
        %5678 = vst [vmem:[%s728 + $0x98] sm:$0xf] %v5614
        %5679 = vst [vmem:[%s728 + $0xa8] sm:$0xf] %v5615
        %5680 = vst [vmem:[%s728 + $0xac] sm:$0xf] %v5616
        %5681 = vst [vmem:[%s728 + $0xbc] sm:$0xf] %v5617
        %5682 = vst [vmem:[%s728 + $0xc0] sm:$0xf] %v5618
        %5683 = vst [vmem:[%s728 + $0xd0] sm:$0xf] %v5619
        %5684 = vst [vmem:[%s728 + $0xd4] sm:$0xf] %v5620
        %5685 = vst [vmem:[%s728 + $0xe4] sm:$0xf] %v5621
        %5686 = vst [vmem:[%s728 + $0xe8] sm:$0xf] %v5622
        %5687 = vst [vmem:[%s728 + $0xf8] sm:$0xf] %v5623
        %5688 = vst [vmem:[%s728 + $0xfc] sm:$0xf] %v5624
        %5689 = vst [vmem:[%s728 + $0x10c] sm:$0xf] %v5625
        %5690 = vst [vmem:[%s728 + $0x110] sm:$0xf] %v5626
        %5691 = vst [vmem:[%s728 + $0x120] sm:$0xf] %v5627
        %5692 = vst [vmem:[%s728 + $0x124] sm:$0xf] %v5628
        %5693 = vst [vmem:[%s728 + $0x134] sm:$0xf] %v5629
        %5694 = vst [vmem:[%s728 + $0x138] sm:$0xf] %v5630
        %v5695 = vld [vmem:[#allocation2 + $0x4] sm:$0x8]
        %v5696 = vld [vmem:[#allocation2 + $0x8] sm:$0xf]
        %v5697 = vld [vmem:[#allocation2 + $0xc] sm:$0xf]
        %v5698 = vld [vmem:[#allocation2 + $0x18] sm:$0x8]
        %v5699 = vld [vmem:[#allocation2 + $0x1c] sm:$0xf]
        %v5700 = vld [vmem:[#allocation2 + $0x20] sm:$0xf]
        %v5701 = vld [vmem:[#allocation2 + $0x2c] sm:$0x8]
        %v5702 = vld [vmem:[#allocation2 + $0x30] sm:$0xf]
        %v5703 = vld [vmem:[#allocation2 + $0x34] sm:$0xf]
        %v5704 = vld [vmem:[#allocation2 + $0x40] sm:$0x8]
        %v5705 = vld [vmem:[#allocation2 + $0x44] sm:$0xf]
        %v5706 = vld [vmem:[#allocation2 + $0x48] sm:$0xf]
        %v5707 = vld [vmem:[#allocation2 + $0x54] sm:$0x8]
        %v5708 = vld [vmem:[#allocation2 + $0x58] sm:$0xf]
        %v5709 = vld [vmem:[#allocation2 + $0x5c] sm:$0xf]
        %v5710 = vld [vmem:[#allocation2 + $0x68] sm:$0x8]
        %v5711 = vld [vmem:[#allocation2 + $0x6c] sm:$0xf]
        %v5712 = vld [vmem:[#allocation2 + $0x70] sm:$0xf]
        %v5713 = vld [vmem:[#allocation2 + $0x7c] sm:$0x8]
        %v5714 = vld [vmem:[#allocation2 + $0x80] sm:$0xf]
        %v5715 = vld [vmem:[#allocation2 + $0x84] sm:$0xf]
        %v5716 = vld [vmem:[#allocation2 + $0x90] sm:$0x8]
        %v5717 = vld [vmem:[#allocation2 + $0x94] sm:$0xf]
        %v5718 = vld [vmem:[#allocation2 + $0x98] sm:$0xf]
        %v5719 = vld [vmem:[#allocation2 + $0xa4] sm:$0x8]
        %v5720 = vld [vmem:[#allocation2 + $0xa8] sm:$0xf]
        %v5721 = vld [vmem:[#allocation2 + $0xac] sm:$0xf]
        %v5722 = vld [vmem:[#allocation2 + $0xb8] sm:$0x8]
        %v5723 = vld [vmem:[#allocation2 + $0xbc] sm:$0xf]
        %v5724 = vld [vmem:[#allocation2 + $0xc0] sm:$0xf]
        %v5725 = vld [vmem:[#allocation2 + $0xcc] sm:$0x8]
        %v5726 = vld [vmem:[#allocation2 + $0xd0] sm:$0xf]
        %v5727 = vld [vmem:[#allocation2 + $0xd4] sm:$0xf]
        %v5728 = vld [vmem:[#allocation2 + $0xe0] sm:$0x8]
        %v5729 = vld [vmem:[#allocation2 + $0xe4] sm:$0xf]
        %v5730 = vld [vmem:[#allocation2 + $0xe8] sm:$0xf]
        %v5731 = vld [vmem:[#allocation2 + $0xf4] sm:$0x8]
        %v5732 = vld [vmem:[#allocation2 + $0xf8] sm:$0xf]
        %v5733 = vld [vmem:[#allocation2 + $0xfc] sm:$0xf]
        %v5734 = vld [vmem:[#allocation2 + $0x108] sm:$0x8]
        %v5735 = vld [vmem:[#allocation2 + $0x10c] sm:$0xf]
        %v5736 = vld [vmem:[#allocation2 + $0x110] sm:$0xf]
        %v5737 = vld [vmem:[#allocation2 + $0x11c] sm:$0x8]
        %v5738 = vld [vmem:[#allocation2 + $0x120] sm:$0xf]
        %v5739 = vld [vmem:[#allocation2 + $0x124] sm:$0xf]
        %v5740 = vld [vmem:[#allocation2 + $0x130] sm:$0x8]
        %v5741 = vld [vmem:[#allocation2 + $0x134] sm:$0xf]
        %v5742 = vld [vmem:[#allocation2 + $0x138] sm:$0xf]
        %v5791 = vunpack.c.l.b16 %v5695
        %v5792 = vunpack.c.l.b16 %v5696
        %v5793 = vunpack.c.l.b16 %v5697
        %v5794 = vunpack.c.l.b16 %v5698
        %v5795 = vunpack.c.l.b16 %v5699
        %v5796 = vunpack.c.l.b16 %v5700
        %v5797 = vunpack.c.l.b16 %v5701
        %v5798 = vunpack.c.l.b16 %v5702
        %v5799 = vunpack.c.l.b16 %v5703
        %v5800 = vunpack.c.l.b16 %v5704
        %v5801 = vunpack.c.l.b16 %v5705
        %v5802 = vunpack.c.l.b16 %v5706
        %v5803 = vunpack.c.l.b16 %v5707
        %v5804 = vunpack.c.l.b16 %v5708
        %v5805 = vunpack.c.l.b16 %v5709
        %v5806 = vunpack.c.l.b16 %v5710
        %v5807 = vunpack.c.l.b16 %v5711
        %v5808 = vunpack.c.l.b16 %v5712
        %v5809 = vunpack.c.l.b16 %v5713
        %v5810 = vunpack.c.l.b16 %v5714
        %v5811 = vunpack.c.l.b16 %v5715
        %v5812 = vunpack.c.l.b16 %v5716
        %v5813 = vunpack.c.l.b16 %v5717
        %v5814 = vunpack.c.l.b16 %v5718
        %v5815 = vunpack.c.l.b16 %v5719
        %v5816 = vunpack.c.l.b16 %v5720
        %v5817 = vunpack.c.l.b16 %v5721
        %v5818 = vunpack.c.l.b16 %v5722
        %v5819 = vunpack.c.l.b16 %v5723
        %v5820 = vunpack.c.l.b16 %v5724
        %v5821 = vunpack.c.l.b16 %v5725
        %v5822 = vunpack.c.l.b16 %v5726
        %v5823 = vunpack.c.l.b16 %v5727
        %v5824 = vunpack.c.l.b16 %v5728
        %v5825 = vunpack.c.l.b16 %v5729
        %v5826 = vunpack.c.l.b16 %v5730
        %v5827 = vunpack.c.l.b16 %v5731
        %v5828 = vunpack.c.l.b16 %v5732
        %v5829 = vunpack.c.l.b16 %v5733
        %v5830 = vunpack.c.l.b16 %v5734
        %v5831 = vunpack.c.l.b16 %v5735
        %v5832 = vunpack.c.l.b16 %v5736
        %v5833 = vunpack.c.l.b16 %v5737
        %v5834 = vunpack.c.l.b16 %v5738
        %v5835 = vunpack.c.l.b16 %v5739
        %v5836 = vunpack.c.l.b16 %v5740
        %v5837 = vunpack.c.l.b16 %v5741
        %v5838 = vunpack.c.l.b16 %v5742
        %v5839 = vpack.c.b16 %v5792, %v5791
        %v5840 = vpack.c.b16 %v5793, %v5793
        %v5841 = vpack.c.b16 %v5795, %v5794
        %v5842 = vpack.c.b16 %v5796, %v5796
        %v5843 = vpack.c.b16 %v5798, %v5797
        %v5844 = vpack.c.b16 %v5799, %v5799
        %v5845 = vpack.c.b16 %v5801, %v5800
        %v5846 = vpack.c.b16 %v5802, %v5802
        %v5847 = vpack.c.b16 %v5804, %v5803
        %v5848 = vpack.c.b16 %v5805, %v5805
        %v5849 = vpack.c.b16 %v5807, %v5806
        %v5850 = vpack.c.b16 %v5808, %v5808
        %v5851 = vpack.c.b16 %v5810, %v5809
        %v5852 = vpack.c.b16 %v5811, %v5811
        %v5853 = vpack.c.b16 %v5813, %v5812
        %v5854 = vpack.c.b16 %v5814, %v5814
        %v5855 = vpack.c.b16 %v5816, %v5815
        %v5856 = vpack.c.b16 %v5817, %v5817
        %v5857 = vpack.c.b16 %v5819, %v5818
        %v5858 = vpack.c.b16 %v5820, %v5820
        %v5859 = vpack.c.b16 %v5822, %v5821
        %v5860 = vpack.c.b16 %v5823, %v5823
        %v5861 = vpack.c.b16 %v5825, %v5824
        %v5862 = vpack.c.b16 %v5826, %v5826
        %v5863 = vpack.c.b16 %v5828, %v5827
        %v5864 = vpack.c.b16 %v5829, %v5829
        %v5865 = vpack.c.b16 %v5831, %v5830
        %v5866 = vpack.c.b16 %v5832, %v5832
        %v5867 = vpack.c.b16 %v5834, %v5833
        %v5868 = vpack.c.b16 %v5835, %v5835
        %v5869 = vpack.c.b16 %v5837, %v5836
        %v5870 = vpack.c.b16 %v5838, %v5838
        %v5872 = vshrl.u32 %v5839, 16
        %v5874 = vrot.slane %v5872, 3
        %v5875 = vshll.u32 %v5839, 16
        %v5877 = vrot.slane %v5875, 4
        %v5878 = vor.u32 %v5874, %v5877
        %v5880 = vshrl.u32 %v5840, 16
        %v5882 = vrot.slane %v5880, 3
        %v5883 = vshll.u32 %v5840, 16
        %v5885 = vrot.slane %v5883, 4
        %v5886 = vor.u32 %v5882, %v5885
        %v5887 = vsel %vm937, %v5878, %v5886
        %v5889 = vshrl.u32 %v5841, 16
        %v5891 = vrot.slane %v5889, 3
        %v5892 = vshll.u32 %v5841, 16
        %v5894 = vrot.slane %v5892, 4
        %v5895 = vor.u32 %v5891, %v5894
        %v5897 = vshrl.u32 %v5842, 16
        %v5899 = vrot.slane %v5897, 3
        %v5900 = vshll.u32 %v5842, 16
        %v5902 = vrot.slane %v5900, 4
        %v5903 = vor.u32 %v5899, %v5902
        %v5904 = vsel %vm937, %v5895, %v5903
        %v5906 = vshrl.u32 %v5843, 16
        %v5908 = vrot.slane %v5906, 3
        %v5909 = vshll.u32 %v5843, 16
        %v5911 = vrot.slane %v5909, 4
        %v5912 = vor.u32 %v5908, %v5911
        %v5914 = vshrl.u32 %v5844, 16
        %v5916 = vrot.slane %v5914, 3
        %v5917 = vshll.u32 %v5844, 16
        %v5919 = vrot.slane %v5917, 4
        %v5920 = vor.u32 %v5916, %v5919
        %v5921 = vsel %vm937, %v5912, %v5920
        %v5923 = vshrl.u32 %v5845, 16
        %v5925 = vrot.slane %v5923, 3
        %v5926 = vshll.u32 %v5845, 16
        %v5928 = vrot.slane %v5926, 4
        %v5929 = vor.u32 %v5925, %v5928
        %v5931 = vshrl.u32 %v5846, 16
        %v5933 = vrot.slane %v5931, 3
        %v5934 = vshll.u32 %v5846, 16
        %v5936 = vrot.slane %v5934, 4
        %v5937 = vor.u32 %v5933, %v5936
        %v5938 = vsel %vm937, %v5929, %v5937
        %v5940 = vshrl.u32 %v5847, 16
        %v5942 = vrot.slane %v5940, 3
        %v5943 = vshll.u32 %v5847, 16
        %v5945 = vrot.slane %v5943, 4
        %v5946 = vor.u32 %v5942, %v5945
        %v5948 = vshrl.u32 %v5848, 16
        %v5950 = vrot.slane %v5948, 3
        %v5951 = vshll.u32 %v5848, 16
        %v5953 = vrot.slane %v5951, 4
        %v5954 = vor.u32 %v5950, %v5953
        %v5955 = vsel %vm937, %v5946, %v5954
        %v5957 = vshrl.u32 %v5849, 16
        %v5959 = vrot.slane %v5957, 3
        %v5960 = vshll.u32 %v5849, 16
        %v5962 = vrot.slane %v5960, 4
        %v5963 = vor.u32 %v5959, %v5962
        %v5965 = vshrl.u32 %v5850, 16
        %v5967 = vrot.slane %v5965, 3
        %v5968 = vshll.u32 %v5850, 16
        %v5970 = vrot.slane %v5968, 4
        %v5971 = vor.u32 %v5967, %v5970
        %v5972 = vsel %vm937, %v5963, %v5971
        %v5974 = vshrl.u32 %v5851, 16
        %v5976 = vrot.slane %v5974, 3
        %v5977 = vshll.u32 %v5851, 16
        %v5979 = vrot.slane %v5977, 4
        %v5980 = vor.u32 %v5976, %v5979
        %v5982 = vshrl.u32 %v5852, 16
        %v5984 = vrot.slane %v5982, 3
        %v5985 = vshll.u32 %v5852, 16
        %v5987 = vrot.slane %v5985, 4
        %v5988 = vor.u32 %v5984, %v5987
        %v5989 = vsel %vm937, %v5980, %v5988
        %v5991 = vshrl.u32 %v5853, 16
        %v5993 = vrot.slane %v5991, 3
        %v5994 = vshll.u32 %v5853, 16
        %v5996 = vrot.slane %v5994, 4
        %v5997 = vor.u32 %v5993, %v5996
        %v5999 = vshrl.u32 %v5854, 16
        %v6001 = vrot.slane %v5999, 3
        %v6002 = vshll.u32 %v5854, 16
        %v6004 = vrot.slane %v6002, 4
        %v6005 = vor.u32 %v6001, %v6004
        %v6006 = vsel %vm937, %v5997, %v6005
        %v6008 = vshrl.u32 %v5855, 16
        %v6010 = vrot.slane %v6008, 3
        %v6011 = vshll.u32 %v5855, 16
        %v6013 = vrot.slane %v6011, 4
        %v6014 = vor.u32 %v6010, %v6013
        %v6016 = vshrl.u32 %v5856, 16
        %v6018 = vrot.slane %v6016, 3
        %v6019 = vshll.u32 %v5856, 16
        %v6021 = vrot.slane %v6019, 4
        %v6022 = vor.u32 %v6018, %v6021
        %v6023 = vsel %vm937, %v6014, %v6022
        %v6025 = vshrl.u32 %v5857, 16
        %v6027 = vrot.slane %v6025, 3
        %v6028 = vshll.u32 %v5857, 16
        %v6030 = vrot.slane %v6028, 4
        %v6031 = vor.u32 %v6027, %v6030
        %v6033 = vshrl.u32 %v5858, 16
        %v6035 = vrot.slane %v6033, 3
        %v6036 = vshll.u32 %v5858, 16
        %v6038 = vrot.slane %v6036, 4
        %v6039 = vor.u32 %v6035, %v6038
        %v6040 = vsel %vm937, %v6031, %v6039
        %v6042 = vshrl.u32 %v5859, 16
        %v6044 = vrot.slane %v6042, 3
        %v6045 = vshll.u32 %v5859, 16
        %v6047 = vrot.slane %v6045, 4
        %v6048 = vor.u32 %v6044, %v6047
        %v6050 = vshrl.u32 %v5860, 16
        %v6052 = vrot.slane %v6050, 3
        %v6053 = vshll.u32 %v5860, 16
        %v6055 = vrot.slane %v6053, 4
        %v6056 = vor.u32 %v6052, %v6055
        %v6057 = vsel %vm937, %v6048, %v6056
        %v6059 = vshrl.u32 %v5861, 16
        %v6061 = vrot.slane %v6059, 3
        %v6062 = vshll.u32 %v5861, 16
        %v6064 = vrot.slane %v6062, 4
        %v6065 = vor.u32 %v6061, %v6064
        %v6067 = vshrl.u32 %v5862, 16
        %v6069 = vrot.slane %v6067, 3
        %v6070 = vshll.u32 %v5862, 16
        %v6072 = vrot.slane %v6070, 4
        %v6073 = vor.u32 %v6069, %v6072
        %v6074 = vsel %vm937, %v6065, %v6073
        %v6076 = vshrl.u32 %v5863, 16
        %v6078 = vrot.slane %v6076, 3
        %v6079 = vshll.u32 %v5863, 16
        %v6081 = vrot.slane %v6079, 4
        %v6082 = vor.u32 %v6078, %v6081
        %v6084 = vshrl.u32 %v5864, 16
        %v6086 = vrot.slane %v6084, 3
        %v6087 = vshll.u32 %v5864, 16
        %v6089 = vrot.slane %v6087, 4
        %v6090 = vor.u32 %v6086, %v6089
        %v6091 = vsel %vm937, %v6082, %v6090
        %v6093 = vshrl.u32 %v5865, 16
        %v6095 = vrot.slane %v6093, 3
        %v6096 = vshll.u32 %v5865, 16
        %v6098 = vrot.slane %v6096, 4
        %v6099 = vor.u32 %v6095, %v6098
        %v6101 = vshrl.u32 %v5866, 16
        %v6103 = vrot.slane %v6101, 3
        %v6104 = vshll.u32 %v5866, 16
        %v6106 = vrot.slane %v6104, 4
        %v6107 = vor.u32 %v6103, %v6106
        %v6108 = vsel %vm937, %v6099, %v6107
        %v6110 = vshrl.u32 %v5867, 16
        %v6112 = vrot.slane %v6110, 3
        %v6113 = vshll.u32 %v5867, 16
        %v6115 = vrot.slane %v6113, 4
        %v6116 = vor.u32 %v6112, %v6115
        %v6118 = vshrl.u32 %v5868, 16
        %v6120 = vrot.slane %v6118, 3
        %v6121 = vshll.u32 %v5868, 16
        %v6123 = vrot.slane %v6121, 4
        %v6124 = vor.u32 %v6120, %v6123
        %v6125 = vsel %vm937, %v6116, %v6124
        %v6127 = vshrl.u32 %v5869, 16
        %v6129 = vrot.slane %v6127, 3
        %v6130 = vshll.u32 %v5869, 16
        %v6132 = vrot.slane %v6130, 4
        %v6133 = vor.u32 %v6129, %v6132
        %v6135 = vshrl.u32 %v5870, 16
        %v6137 = vrot.slane %v6135, 3
        %v6138 = vshll.u32 %v5870, 16
        %v6140 = vrot.slane %v6138, 4
        %v6141 = vor.u32 %v6137, %v6140
        %v6142 = vsel %vm937, %v6133, %v6141
        %6159 = vst [vmem:[#allocation3] sm:$0xff] %v5887
        %6160 = vst [vmem:[#allocation3 + $0x48] sm:$0xff] %v5904
        %6161 = vst [vmem:[#allocation3 + $0x90] sm:$0xff] %v5921
        %6162 = vst [vmem:[#allocation3 + $0xd8] sm:$0xff] %v5938
        %6163 = vst [vmem:[#allocation3 + $0x120] sm:$0xff] %v5955
        %6164 = vst [vmem:[#allocation3 + $0x168] sm:$0xff] %v5972
        %6165 = vst [vmem:[#allocation3 + $0x1b0] sm:$0xff] %v5989
        %6166 = vst [vmem:[#allocation3 + $0x1f8] sm:$0xff] %v6006
        %6167 = vst [vmem:[#allocation3 + $0x240] sm:$0xff] %v6023
        %6168 = vst [vmem:[#allocation3 + $0x288] sm:$0xff] %v6040
        %6169 = vst [vmem:[#allocation3 + $0x2d0] sm:$0xff] %v6057
        %6170 = vst [vmem:[#allocation3 + $0x318] sm:$0xff] %v6074
        %6171 = vst [vmem:[#allocation3 + $0x360] sm:$0xff] %v6091
        %6172 = vst [vmem:[#allocation3 + $0x3a8] sm:$0xff] %v6108
        %6173 = vst [vmem:[#allocation3 + $0x3f0] sm:$0xff] %v6125
        %6174 = vst [vmem:[#allocation3 + $0x438] sm:$0xff] %v6142
        %v6175 = vld [vmem:[#allocation2 + $0x8] sm:$0xf]
        %v6176 = vld [vmem:[#allocation2 + $0xc] sm:$0xf]
        %v6177 = vld [vmem:[#allocation2 + $0x1c] sm:$0xf]
        %v6178 = vld [vmem:[#allocation2 + $0x20] sm:$0xf]
        %v6179 = vld [vmem:[#allocation2 + $0x30] sm:$0xf]
        %v6180 = vld [vmem:[#allocation2 + $0x34] sm:$0xf]
        %v6181 = vld [vmem:[#allocation2 + $0x44] sm:$0xf]
        %v6182 = vld [vmem:[#allocation2 + $0x48] sm:$0xf]
        %v6183 = vld [vmem:[#allocation2 + $0x58] sm:$0xf]
        %v6184 = vld [vmem:[#allocation2 + $0x5c] sm:$0xf]
        %v6185 = vld [vmem:[#allocation2 + $0x6c] sm:$0xf]
        %v6186 = vld [vmem:[#allocation2 + $0x70] sm:$0xf]
        %v6187 = vld [vmem:[#allocation2 + $0x80] sm:$0xf]
        %v6188 = vld [vmem:[#allocation2 + $0x84] sm:$0xf]
        %v6189 = vld [vmem:[#allocation2 + $0x94] sm:$0xf]
        %v6190 = vld [vmem:[#allocation2 + $0x98] sm:$0xf]
        %v6191 = vld [vmem:[#allocation2 + $0xa8] sm:$0xf]
        %v6192 = vld [vmem:[#allocation2 + $0xac] sm:$0xf]
        %v6193 = vld [vmem:[#allocation2 + $0xbc] sm:$0xf]
        %v6194 = vld [vmem:[#allocation2 + $0xc0] sm:$0xf]
        %v6195 = vld [vmem:[#allocation2 + $0xd0] sm:$0xf]
        %v6196 = vld [vmem:[#allocation2 + $0xd4] sm:$0xf]
        %v6197 = vld [vmem:[#allocation2 + $0xe4] sm:$0xf]
        %v6198 = vld [vmem:[#allocation2 + $0xe8] sm:$0xf]
        %v6199 = vld [vmem:[#allocation2 + $0xf8] sm:$0xf]
        %v6200 = vld [vmem:[#allocation2 + $0xfc] sm:$0xf]
        %v6201 = vld [vmem:[#allocation2 + $0x10c] sm:$0xf]
        %v6202 = vld [vmem:[#allocation2 + $0x110] sm:$0xf]
        %v6203 = vld [vmem:[#allocation2 + $0x120] sm:$0xf]
        %v6204 = vld [vmem:[#allocation2 + $0x124] sm:$0xf]
        %v6205 = vld [vmem:[#allocation2 + $0x134] sm:$0xf]
        %v6206 = vld [vmem:[#allocation2 + $0x138] sm:$0xf]
        %v6239 = vunpack.c.l.b16 %v6175
        %v6240 = vunpack.c.l.b16 %v6176
        %v6241 = vunpack.c.l.b16 %v6177
        %v6242 = vunpack.c.l.b16 %v6178
        %v6243 = vunpack.c.l.b16 %v6179
        %v6244 = vunpack.c.l.b16 %v6180
        %v6245 = vunpack.c.l.b16 %v6181
        %v6246 = vunpack.c.l.b16 %v6182
        %v6247 = vunpack.c.l.b16 %v6183
        %v6248 = vunpack.c.l.b16 %v6184
        %v6249 = vunpack.c.l.b16 %v6185
        %v6250 = vunpack.c.l.b16 %v6186
        %v6251 = vunpack.c.l.b16 %v6187
        %v6252 = vunpack.c.l.b16 %v6188
        %v6253 = vunpack.c.l.b16 %v6189
        %v6254 = vunpack.c.l.b16 %v6190
        %v6255 = vunpack.c.l.b16 %v6191
        %v6256 = vunpack.c.l.b16 %v6192
        %v6257 = vunpack.c.l.b16 %v6193
        %v6258 = vunpack.c.l.b16 %v6194
        %v6259 = vunpack.c.l.b16 %v6195
        %v6260 = vunpack.c.l.b16 %v6196
        %v6261 = vunpack.c.l.b16 %v6197
        %v6262 = vunpack.c.l.b16 %v6198
        %v6263 = vunpack.c.l.b16 %v6199
        %v6264 = vunpack.c.l.b16 %v6200
        %v6265 = vunpack.c.l.b16 %v6201
        %v6266 = vunpack.c.l.b16 %v6202
        %v6267 = vunpack.c.l.b16 %v6203
        %v6268 = vunpack.c.l.b16 %v6204
        %v6269 = vunpack.c.l.b16 %v6205
        %v6270 = vunpack.c.l.b16 %v6206
        %v6271 = vpack.c.b16 %v6240, %v6239
        %v6272 = vpack.c.b16 %v6242, %v6241
        %v6273 = vpack.c.b16 %v6244, %v6243
        %v6274 = vpack.c.b16 %v6246, %v6245
        %v6275 = vpack.c.b16 %v6248, %v6247
        %v6276 = vpack.c.b16 %v6250, %v6249
        %v6277 = vpack.c.b16 %v6252, %v6251
        %v6278 = vpack.c.b16 %v6254, %v6253
        %v6279 = vpack.c.b16 %v6256, %v6255
        %v6280 = vpack.c.b16 %v6258, %v6257
        %v6281 = vpack.c.b16 %v6260, %v6259
        %v6282 = vpack.c.b16 %v6262, %v6261
        %v6283 = vpack.c.b16 %v6264, %v6263
        %v6284 = vpack.c.b16 %v6266, %v6265
        %v6285 = vpack.c.b16 %v6268, %v6267
        %v6286 = vpack.c.b16 %v6270, %v6269
        %6303 = vst [vmem:[#allocation3 + $0x8] sm:$0xff] %v6271
        %6304 = vst [vmem:[#allocation3 + $0x50] sm:$0xff] %v6272
        %6305 = vst [vmem:[#allocation3 + $0x98] sm:$0xff] %v6273
        %6306 = vst [vmem:[#allocation3 + $0xe0] sm:$0xff] %v6274
        %6307 = vst [vmem:[#allocation3 + $0x128] sm:$0xff] %v6275
        %6308 = vst [vmem:[#allocation3 + $0x170] sm:$0xff] %v6276
        %6309 = vst [vmem:[#allocation3 + $0x1b8] sm:$0xff] %v6277
        %6310 = vst [vmem:[#allocation3 + $0x200] sm:$0xff] %v6278
        %6311 = vst [vmem:[#allocation3 + $0x248] sm:$0xff] %v6279
        %6312 = vst [vmem:[#allocation3 + $0x290] sm:$0xff] %v6280
        %6313 = vst [vmem:[#allocation3 + $0x2d8] sm:$0xff] %v6281
        %6314 = vst [vmem:[#allocation3 + $0x320] sm:$0xff] %v6282
        %6315 = vst [vmem:[#allocation3 + $0x368] sm:$0xff] %v6283
        %6316 = vst [vmem:[#allocation3 + $0x3b0] sm:$0xff] %v6284
        %6317 = vst [vmem:[#allocation3 + $0x3f8] sm:$0xff] %v6285
        %6318 = vst [vmem:[#allocation3 + $0x440] sm:$0xff] %v6286
        %v6319 = vld [vmem:[#allocation2 + $0x8] sm:$0xf]
        %v6320 = vld [vmem:[#allocation2 + $0xc] sm:$0xf]
        %v6321 = vld [vmem:[#allocation2 + $0x10] sm:$0x1]
        %v6322 = vld [vmem:[#allocation2 + $0x1c] sm:$0xf]
        %v6323 = vld [vmem:[#allocation2 + $0x20] sm:$0xf]
        %v6324 = vld [vmem:[#allocation2 + $0x24] sm:$0x1]
        %v6325 = vld [vmem:[#allocation2 + $0x30] sm:$0xf]
        %v6326 = vld [vmem:[#allocation2 + $0x34] sm:$0xf]
        %v6327 = vld [vmem:[#allocation2 + $0x38] sm:$0x1]
        %v6328 = vld [vmem:[#allocation2 + $0x44] sm:$0xf]
        %v6329 = vld [vmem:[#allocation2 + $0x48] sm:$0xf]
        %v6330 = vld [vmem:[#allocation2 + $0x4c] sm:$0x1]
        %v6331 = vld [vmem:[#allocation2 + $0x58] sm:$0xf]
        %v6332 = vld [vmem:[#allocation2 + $0x5c] sm:$0xf]
        %v6333 = vld [vmem:[#allocation2 + $0x60] sm:$0x1]
        %v6334 = vld [vmem:[#allocation2 + $0x6c] sm:$0xf]
        %v6335 = vld [vmem:[#allocation2 + $0x70] sm:$0xf]
        %v6336 = vld [vmem:[#allocation2 + $0x74] sm:$0x1]
        %v6337 = vld [vmem:[#allocation2 + $0x80] sm:$0xf]
        %v6338 = vld [vmem:[#allocation2 + $0x84] sm:$0xf]
        %v6339 = vld [vmem:[#allocation2 + $0x88] sm:$0x1]
        %v6340 = vld [vmem:[#allocation2 + $0x94] sm:$0xf]
        %v6341 = vld [vmem:[#allocation2 + $0x98] sm:$0xf]
        %v6342 = vld [vmem:[#allocation2 + $0x9c] sm:$0x1]
        %v6343 = vld [vmem:[#allocation2 + $0xa8] sm:$0xf]
        %v6344 = vld [vmem:[#allocation2 + $0xac] sm:$0xf]
        %v6345 = vld [vmem:[#allocation2 + $0xb0] sm:$0x1]
        %v6346 = vld [vmem:[#allocation2 + $0xbc] sm:$0xf]
        %v6347 = vld [vmem:[#allocation2 + $0xc0] sm:$0xf]
        %v6348 = vld [vmem:[#allocation2 + $0xc4] sm:$0x1]
        %v6349 = vld [vmem:[#allocation2 + $0xd0] sm:$0xf]
        %v6350 = vld [vmem:[#allocation2 + $0xd4] sm:$0xf]
        %v6351 = vld [vmem:[#allocation2 + $0xd8] sm:$0x1]
        %v6352 = vld [vmem:[#allocation2 + $0xe4] sm:$0xf]
        %v6353 = vld [vmem:[#allocation2 + $0xe8] sm:$0xf]
        %v6354 = vld [vmem:[#allocation2 + $0xec] sm:$0x1]
        %v6355 = vld [vmem:[#allocation2 + $0xf8] sm:$0xf]
        %v6356 = vld [vmem:[#allocation2 + $0xfc] sm:$0xf]
        %v6357 = vld [vmem:[#allocation2 + $0x100] sm:$0x1]
        %v6358 = vld [vmem:[#allocation2 + $0x10c] sm:$0xf]
        %v6359 = vld [vmem:[#allocation2 + $0x110] sm:$0xf]
        %v6360 = vld [vmem:[#allocation2 + $0x114] sm:$0x1]
        %v6361 = vld [vmem:[#allocation2 + $0x120] sm:$0xf]
        %v6362 = vld [vmem:[#allocation2 + $0x124] sm:$0xf]
        %v6363 = vld [vmem:[#allocation2 + $0x128] sm:$0x1]
        %v6364 = vld [vmem:[#allocation2 + $0x134] sm:$0xf]
        %v6365 = vld [vmem:[#allocation2 + $0x138] sm:$0xf]
        %v6366 = vld [vmem:[#allocation2 + $0x13c] sm:$0x1]
        %v6415 = vunpack.c.l.b16 %v6319
        %v6416 = vunpack.c.l.b16 %v6320
        %v6417 = vunpack.c.l.b16 %v6321
        %v6418 = vunpack.c.l.b16 %v6322
        %v6419 = vunpack.c.l.b16 %v6323
        %v6420 = vunpack.c.l.b16 %v6324
        %v6421 = vunpack.c.l.b16 %v6325
        %v6422 = vunpack.c.l.b16 %v6326
        %v6423 = vunpack.c.l.b16 %v6327
        %v6424 = vunpack.c.l.b16 %v6328
        %v6425 = vunpack.c.l.b16 %v6329
        %v6426 = vunpack.c.l.b16 %v6330
        %v6427 = vunpack.c.l.b16 %v6331
        %v6428 = vunpack.c.l.b16 %v6332
        %v6429 = vunpack.c.l.b16 %v6333
        %v6430 = vunpack.c.l.b16 %v6334
        %v6431 = vunpack.c.l.b16 %v6335
        %v6432 = vunpack.c.l.b16 %v6336
        %v6433 = vunpack.c.l.b16 %v6337
        %v6434 = vunpack.c.l.b16 %v6338
        %v6435 = vunpack.c.l.b16 %v6339
        %v6436 = vunpack.c.l.b16 %v6340
        %v6437 = vunpack.c.l.b16 %v6341
        %v6438 = vunpack.c.l.b16 %v6342
        %v6439 = vunpack.c.l.b16 %v6343
        %v6440 = vunpack.c.l.b16 %v6344
        %v6441 = vunpack.c.l.b16 %v6345
        %v6442 = vunpack.c.l.b16 %v6346
        %v6443 = vunpack.c.l.b16 %v6347
        %v6444 = vunpack.c.l.b16 %v6348
        %v6445 = vunpack.c.l.b16 %v6349
        %v6446 = vunpack.c.l.b16 %v6350
        %v6447 = vunpack.c.l.b16 %v6351
        %v6448 = vunpack.c.l.b16 %v6352
        %v6449 = vunpack.c.l.b16 %v6353
        %v6450 = vunpack.c.l.b16 %v6354
        %v6451 = vunpack.c.l.b16 %v6355
        %v6452 = vunpack.c.l.b16 %v6356
        %v6453 = vunpack.c.l.b16 %v6357
        %v6454 = vunpack.c.l.b16 %v6358
        %v6455 = vunpack.c.l.b16 %v6359
        %v6456 = vunpack.c.l.b16 %v6360
        %v6457 = vunpack.c.l.b16 %v6361
        %v6458 = vunpack.c.l.b16 %v6362
        %v6459 = vunpack.c.l.b16 %v6363
        %v6460 = vunpack.c.l.b16 %v6364
        %v6461 = vunpack.c.l.b16 %v6365
        %v6462 = vunpack.c.l.b16 %v6366
        %v6463 = vpack.c.b16 %v6416, %v6415
        %v6464 = vpack.c.b16 %v6417, %v6417
        %v6465 = vpack.c.b16 %v6419, %v6418
        %v6466 = vpack.c.b16 %v6420, %v6420
        %v6467 = vpack.c.b16 %v6422, %v6421
        %v6468 = vpack.c.b16 %v6423, %v6423
        %v6469 = vpack.c.b16 %v6425, %v6424
        %v6470 = vpack.c.b16 %v6426, %v6426
        %v6471 = vpack.c.b16 %v6428, %v6427
        %v6472 = vpack.c.b16 %v6429, %v6429
        %v6473 = vpack.c.b16 %v6431, %v6430
        %v6474 = vpack.c.b16 %v6432, %v6432
        %v6475 = vpack.c.b16 %v6434, %v6433
        %v6476 = vpack.c.b16 %v6435, %v6435
        %v6477 = vpack.c.b16 %v6437, %v6436
        %v6478 = vpack.c.b16 %v6438, %v6438
        %v6479 = vpack.c.b16 %v6440, %v6439
        %v6480 = vpack.c.b16 %v6441, %v6441
        %v6481 = vpack.c.b16 %v6443, %v6442
        %v6482 = vpack.c.b16 %v6444, %v6444
        %v6483 = vpack.c.b16 %v6446, %v6445
        %v6484 = vpack.c.b16 %v6447, %v6447
        %v6485 = vpack.c.b16 %v6449, %v6448
        %v6486 = vpack.c.b16 %v6450, %v6450
        %v6487 = vpack.c.b16 %v6452, %v6451
        %v6488 = vpack.c.b16 %v6453, %v6453
        %v6489 = vpack.c.b16 %v6455, %v6454
        %v6490 = vpack.c.b16 %v6456, %v6456
        %v6491 = vpack.c.b16 %v6458, %v6457
        %v6492 = vpack.c.b16 %v6459, %v6459
        %v6493 = vpack.c.b16 %v6461, %v6460
        %v6494 = vpack.c.b16 %v6462, %v6462
        %v6496 = vshrl.u32 %v6463, 16
        %v6498 = vshll.u32 %v6463, 16
        %v6500 = vrot.slane %v6498, 1
        %v6501 = vor.u32 %v6496, %v6500
        %v6503 = vshll.u32 %v6464, 16
        %v6505 = vrot.slane %v6503, 1
        %v6506 = vsel %vm1562, %v6501, %v6505
        %v6508 = vshrl.u32 %v6465, 16
        %v6510 = vshll.u32 %v6465, 16
        %v6512 = vrot.slane %v6510, 1
        %v6513 = vor.u32 %v6508, %v6512
        %v6515 = vshll.u32 %v6466, 16
        %v6517 = vrot.slane %v6515, 1
        %v6518 = vsel %vm1562, %v6513, %v6517
        %v6520 = vshrl.u32 %v6467, 16
        %v6522 = vshll.u32 %v6467, 16
        %v6524 = vrot.slane %v6522, 1
        %v6525 = vor.u32 %v6520, %v6524
        %v6527 = vshll.u32 %v6468, 16
        %v6529 = vrot.slane %v6527, 1
        %v6530 = vsel %vm1562, %v6525, %v6529
        %v6532 = vshrl.u32 %v6469, 16
        %v6534 = vshll.u32 %v6469, 16
        %v6536 = vrot.slane %v6534, 1
        %v6537 = vor.u32 %v6532, %v6536
        %v6539 = vshll.u32 %v6470, 16
        %v6541 = vrot.slane %v6539, 1
        %v6542 = vsel %vm1562, %v6537, %v6541
        %v6544 = vshrl.u32 %v6471, 16
        %v6546 = vshll.u32 %v6471, 16
        %v6548 = vrot.slane %v6546, 1
        %v6549 = vor.u32 %v6544, %v6548
        %v6551 = vshll.u32 %v6472, 16
        %v6553 = vrot.slane %v6551, 1
        %v6554 = vsel %vm1562, %v6549, %v6553
        %v6556 = vshrl.u32 %v6473, 16
        %v6558 = vshll.u32 %v6473, 16
        %v6560 = vrot.slane %v6558, 1
        %v6561 = vor.u32 %v6556, %v6560
        %v6563 = vshll.u32 %v6474, 16
        %v6565 = vrot.slane %v6563, 1
        %v6566 = vsel %vm1562, %v6561, %v6565
        %v6568 = vshrl.u32 %v6475, 16
        %v6570 = vshll.u32 %v6475, 16
        %v6572 = vrot.slane %v6570, 1
        %v6573 = vor.u32 %v6568, %v6572
        %v6575 = vshll.u32 %v6476, 16
        %v6577 = vrot.slane %v6575, 1
        %v6578 = vsel %vm1562, %v6573, %v6577
        %v6580 = vshrl.u32 %v6477, 16
        %v6582 = vshll.u32 %v6477, 16
        %v6584 = vrot.slane %v6582, 1
        %v6585 = vor.u32 %v6580, %v6584
        %v6587 = vshll.u32 %v6478, 16
        %v6589 = vrot.slane %v6587, 1
        %v6590 = vsel %vm1562, %v6585, %v6589
        %v6592 = vshrl.u32 %v6479, 16
        %v6594 = vshll.u32 %v6479, 16
        %v6596 = vrot.slane %v6594, 1
        %v6597 = vor.u32 %v6592, %v6596
        %v6599 = vshll.u32 %v6480, 16
        %v6601 = vrot.slane %v6599, 1
        %v6602 = vsel %vm1562, %v6597, %v6601
        %v6604 = vshrl.u32 %v6481, 16
        %v6606 = vshll.u32 %v6481, 16
        %v6608 = vrot.slane %v6606, 1
        %v6609 = vor.u32 %v6604, %v6608
        %v6611 = vshll.u32 %v6482, 16
        %v6613 = vrot.slane %v6611, 1
        %v6614 = vsel %vm1562, %v6609, %v6613
        %v6616 = vshrl.u32 %v6483, 16
        %v6618 = vshll.u32 %v6483, 16
        %v6620 = vrot.slane %v6618, 1
        %v6621 = vor.u32 %v6616, %v6620
        %v6623 = vshll.u32 %v6484, 16
        %v6625 = vrot.slane %v6623, 1
        %v6626 = vsel %vm1562, %v6621, %v6625
        %v6628 = vshrl.u32 %v6485, 16
        %v6630 = vshll.u32 %v6485, 16
        %v6632 = vrot.slane %v6630, 1
        %v6633 = vor.u32 %v6628, %v6632
        %v6635 = vshll.u32 %v6486, 16
        %v6637 = vrot.slane %v6635, 1
        %v6638 = vsel %vm1562, %v6633, %v6637
        %v6640 = vshrl.u32 %v6487, 16
        %v6642 = vshll.u32 %v6487, 16
        %v6644 = vrot.slane %v6642, 1
        %v6645 = vor.u32 %v6640, %v6644
        %v6647 = vshll.u32 %v6488, 16
        %v6649 = vrot.slane %v6647, 1
        %v6650 = vsel %vm1562, %v6645, %v6649
        %v6652 = vshrl.u32 %v6489, 16
        %v6654 = vshll.u32 %v6489, 16
        %v6656 = vrot.slane %v6654, 1
        %v6657 = vor.u32 %v6652, %v6656
        %v6659 = vshll.u32 %v6490, 16
        %v6661 = vrot.slane %v6659, 1
        %v6662 = vsel %vm1562, %v6657, %v6661
        %v6664 = vshrl.u32 %v6491, 16
        %v6666 = vshll.u32 %v6491, 16
        %v6668 = vrot.slane %v6666, 1
        %v6669 = vor.u32 %v6664, %v6668
        %v6671 = vshll.u32 %v6492, 16
        %v6673 = vrot.slane %v6671, 1
        %v6674 = vsel %vm1562, %v6669, %v6673
        %v6676 = vshrl.u32 %v6493, 16
        %v6678 = vshll.u32 %v6493, 16
        %v6680 = vrot.slane %v6678, 1
        %v6681 = vor.u32 %v6676, %v6680
        %v6683 = vshll.u32 %v6494, 16
        %v6685 = vrot.slane %v6683, 1
        %v6686 = vsel %vm1562, %v6681, %v6685
        %6703 = vst [vmem:[#allocation3 + $0x10] sm:$0xff] %v6506
        %6704 = vst [vmem:[#allocation3 + $0x58] sm:$0xff] %v6518
        %6705 = vst [vmem:[#allocation3 + $0xa0] sm:$0xff] %v6530
        %6706 = vst [vmem:[#allocation3 + $0xe8] sm:$0xff] %v6542
        %6707 = vst [vmem:[#allocation3 + $0x130] sm:$0xff] %v6554
        %6708 = vst [vmem:[#allocation3 + $0x178] sm:$0xff] %v6566
        %6709 = vst [vmem:[#allocation3 + $0x1c0] sm:$0xff] %v6578
        %6710 = vst [vmem:[#allocation3 + $0x208] sm:$0xff] %v6590
        %6711 = vst [vmem:[#allocation3 + $0x250] sm:$0xff] %v6602
        %6712 = vst [vmem:[#allocation3 + $0x298] sm:$0xff] %v6614
        %6713 = vst [vmem:[#allocation3 + $0x2e0] sm:$0xff] %v6626
        %6714 = vst [vmem:[#allocation3 + $0x328] sm:$0xff] %v6638
        %6715 = vst [vmem:[#allocation3 + $0x370] sm:$0xff] %v6650
        %6716 = vst [vmem:[#allocation3 + $0x3b8] sm:$0xff] %v6662
        %6717 = vst [vmem:[#allocation3 + $0x400] sm:$0xff] %v6674
        %6718 = vst [vmem:[#allocation3 + $0x448] sm:$0xff] %v6686
        %v6719 = vld [vmem:[%s728 + $0x4] sm:$0x8]
        %v6720 = vld [vmem:[%s728 + $0x8] sm:$0xf]
        %v6721 = vld [vmem:[%s728 + $0xc] sm:$0xf]
        %v6722 = vld [vmem:[%s728 + $0x18] sm:$0x8]
        %v6723 = vld [vmem:[%s728 + $0x1c] sm:$0xf]
        %v6724 = vld [vmem:[%s728 + $0x20] sm:$0xf]
        %v6725 = vld [vmem:[%s728 + $0x2c] sm:$0x8]
        %v6726 = vld [vmem:[%s728 + $0x30] sm:$0xf]
        %v6727 = vld [vmem:[%s728 + $0x34] sm:$0xf]
        %v6728 = vld [vmem:[%s728 + $0x40] sm:$0x8]
        %v6729 = vld [vmem:[%s728 + $0x44] sm:$0xf]
        %v6730 = vld [vmem:[%s728 + $0x48] sm:$0xf]
        %v6731 = vld [vmem:[%s728 + $0x54] sm:$0x8]
        %v6732 = vld [vmem:[%s728 + $0x58] sm:$0xf]
        %v6733 = vld [vmem:[%s728 + $0x5c] sm:$0xf]
        %v6734 = vld [vmem:[%s728 + $0x68] sm:$0x8]
        %v6735 = vld [vmem:[%s728 + $0x6c] sm:$0xf]
        %v6736 = vld [vmem:[%s728 + $0x70] sm:$0xf]
        %v6737 = vld [vmem:[%s728 + $0x7c] sm:$0x8]
        %v6738 = vld [vmem:[%s728 + $0x80] sm:$0xf]
        %v6739 = vld [vmem:[%s728 + $0x84] sm:$0xf]
        %v6740 = vld [vmem:[%s728 + $0x90] sm:$0x8]
        %v6741 = vld [vmem:[%s728 + $0x94] sm:$0xf]
        %v6742 = vld [vmem:[%s728 + $0x98] sm:$0xf]
        %v6743 = vld [vmem:[%s728 + $0xa4] sm:$0x8]
        %v6744 = vld [vmem:[%s728 + $0xa8] sm:$0xf]
        %v6745 = vld [vmem:[%s728 + $0xac] sm:$0xf]
        %v6746 = vld [vmem:[%s728 + $0xb8] sm:$0x8]
        %v6747 = vld [vmem:[%s728 + $0xbc] sm:$0xf]
        %v6748 = vld [vmem:[%s728 + $0xc0] sm:$0xf]
        %v6749 = vld [vmem:[%s728 + $0xcc] sm:$0x8]
        %v6750 = vld [vmem:[%s728 + $0xd0] sm:$0xf]
        %v6751 = vld [vmem:[%s728 + $0xd4] sm:$0xf]
        %v6752 = vld [vmem:[%s728 + $0xe0] sm:$0x8]
        %v6753 = vld [vmem:[%s728 + $0xe4] sm:$0xf]
        %v6754 = vld [vmem:[%s728 + $0xe8] sm:$0xf]
        %v6755 = vld [vmem:[%s728 + $0xf4] sm:$0x8]
        %v6756 = vld [vmem:[%s728 + $0xf8] sm:$0xf]
        %v6757 = vld [vmem:[%s728 + $0xfc] sm:$0xf]
        %v6758 = vld [vmem:[%s728 + $0x108] sm:$0x8]
        %v6759 = vld [vmem:[%s728 + $0x10c] sm:$0xf]
        %v6760 = vld [vmem:[%s728 + $0x110] sm:$0xf]
        %v6761 = vld [vmem:[%s728 + $0x11c] sm:$0x8]
        %v6762 = vld [vmem:[%s728 + $0x120] sm:$0xf]
        %v6763 = vld [vmem:[%s728 + $0x124] sm:$0xf]
        %v6764 = vld [vmem:[%s728 + $0x130] sm:$0x8]
        %v6765 = vld [vmem:[%s728 + $0x134] sm:$0xf]
        %v6766 = vld [vmem:[%s728 + $0x138] sm:$0xf]
        %v6815 = vunpack.c.l.b16 %v6719
        %v6816 = vunpack.c.l.b16 %v6720
        %v6817 = vunpack.c.l.b16 %v6721
        %v6818 = vunpack.c.l.b16 %v6722
        %v6819 = vunpack.c.l.b16 %v6723
        %v6820 = vunpack.c.l.b16 %v6724
        %v6821 = vunpack.c.l.b16 %v6725
        %v6822 = vunpack.c.l.b16 %v6726
        %v6823 = vunpack.c.l.b16 %v6727
        %v6824 = vunpack.c.l.b16 %v6728
        %v6825 = vunpack.c.l.b16 %v6729
        %v6826 = vunpack.c.l.b16 %v6730
        %v6827 = vunpack.c.l.b16 %v6731
        %v6828 = vunpack.c.l.b16 %v6732
        %v6829 = vunpack.c.l.b16 %v6733
        %v6830 = vunpack.c.l.b16 %v6734
        %v6831 = vunpack.c.l.b16 %v6735
        %v6832 = vunpack.c.l.b16 %v6736
        %v6833 = vunpack.c.l.b16 %v6737
        %v6834 = vunpack.c.l.b16 %v6738
        %v6835 = vunpack.c.l.b16 %v6739
        %v6836 = vunpack.c.l.b16 %v6740
        %v6837 = vunpack.c.l.b16 %v6741
        %v6838 = vunpack.c.l.b16 %v6742
        %v6839 = vunpack.c.l.b16 %v6743
        %v6840 = vunpack.c.l.b16 %v6744
        %v6841 = vunpack.c.l.b16 %v6745
        %v6842 = vunpack.c.l.b16 %v6746
        %v6843 = vunpack.c.l.b16 %v6747
        %v6844 = vunpack.c.l.b16 %v6748
        %v6845 = vunpack.c.l.b16 %v6749
        %v6846 = vunpack.c.l.b16 %v6750
        %v6847 = vunpack.c.l.b16 %v6751
        %v6848 = vunpack.c.l.b16 %v6752
        %v6849 = vunpack.c.l.b16 %v6753
        %v6850 = vunpack.c.l.b16 %v6754
        %v6851 = vunpack.c.l.b16 %v6755
        %v6852 = vunpack.c.l.b16 %v6756
        %v6853 = vunpack.c.l.b16 %v6757
        %v6854 = vunpack.c.l.b16 %v6758
        %v6855 = vunpack.c.l.b16 %v6759
        %v6856 = vunpack.c.l.b16 %v6760
        %v6857 = vunpack.c.l.b16 %v6761
        %v6858 = vunpack.c.l.b16 %v6762
        %v6859 = vunpack.c.l.b16 %v6763
        %v6860 = vunpack.c.l.b16 %v6764
        %v6861 = vunpack.c.l.b16 %v6765
        %v6862 = vunpack.c.l.b16 %v6766
        %v6863 = vpack.c.b16 %v6816, %v6815
        %v6864 = vpack.c.b16 %v6817, %v6817
        %v6865 = vpack.c.b16 %v6819, %v6818
        %v6866 = vpack.c.b16 %v6820, %v6820
        %v6867 = vpack.c.b16 %v6822, %v6821
        %v6868 = vpack.c.b16 %v6823, %v6823
        %v6869 = vpack.c.b16 %v6825, %v6824
        %v6870 = vpack.c.b16 %v6826, %v6826
        %v6871 = vpack.c.b16 %v6828, %v6827
        %v6872 = vpack.c.b16 %v6829, %v6829
        %v6873 = vpack.c.b16 %v6831, %v6830
        %v6874 = vpack.c.b16 %v6832, %v6832
        %v6875 = vpack.c.b16 %v6834, %v6833
        %v6876 = vpack.c.b16 %v6835, %v6835
        %v6877 = vpack.c.b16 %v6837, %v6836
        %v6878 = vpack.c.b16 %v6838, %v6838
        %v6879 = vpack.c.b16 %v6840, %v6839
        %v6880 = vpack.c.b16 %v6841, %v6841
        %v6881 = vpack.c.b16 %v6843, %v6842
        %v6882 = vpack.c.b16 %v6844, %v6844
        %v6883 = vpack.c.b16 %v6846, %v6845
        %v6884 = vpack.c.b16 %v6847, %v6847
        %v6885 = vpack.c.b16 %v6849, %v6848
        %v6886 = vpack.c.b16 %v6850, %v6850
        %v6887 = vpack.c.b16 %v6852, %v6851
        %v6888 = vpack.c.b16 %v6853, %v6853
        %v6889 = vpack.c.b16 %v6855, %v6854
        %v6890 = vpack.c.b16 %v6856, %v6856
        %v6891 = vpack.c.b16 %v6858, %v6857
        %v6892 = vpack.c.b16 %v6859, %v6859
        %v6893 = vpack.c.b16 %v6861, %v6860
        %v6894 = vpack.c.b16 %v6862, %v6862
        %v6896 = vshrl.u32 %v6863, 16
        %v6898 = vrot.slane %v6896, 3
        %v6899 = vshll.u32 %v6863, 16
        %v6901 = vrot.slane %v6899, 4
        %v6902 = vor.u32 %v6898, %v6901
        %v6904 = vshrl.u32 %v6864, 16
        %v6906 = vrot.slane %v6904, 3
        %v6907 = vshll.u32 %v6864, 16
        %v6909 = vrot.slane %v6907, 4
        %v6910 = vor.u32 %v6906, %v6909
        %v6911 = vsel %vm937, %v6902, %v6910
        %v6913 = vshrl.u32 %v6865, 16
        %v6915 = vrot.slane %v6913, 3
        %v6916 = vshll.u32 %v6865, 16
        %v6918 = vrot.slane %v6916, 4
        %v6919 = vor.u32 %v6915, %v6918
        %v6921 = vshrl.u32 %v6866, 16
        %v6923 = vrot.slane %v6921, 3
        %v6924 = vshll.u32 %v6866, 16
        %v6926 = vrot.slane %v6924, 4
        %v6927 = vor.u32 %v6923, %v6926
        %v6928 = vsel %vm937, %v6919, %v6927
        %v6930 = vshrl.u32 %v6867, 16
        %v6932 = vrot.slane %v6930, 3
        %v6933 = vshll.u32 %v6867, 16
        %v6935 = vrot.slane %v6933, 4
        %v6936 = vor.u32 %v6932, %v6935
        %v6938 = vshrl.u32 %v6868, 16
        %v6940 = vrot.slane %v6938, 3
        %v6941 = vshll.u32 %v6868, 16
        %v6943 = vrot.slane %v6941, 4
        %v6944 = vor.u32 %v6940, %v6943
        %v6945 = vsel %vm937, %v6936, %v6944
        %v6947 = vshrl.u32 %v6869, 16
        %v6949 = vrot.slane %v6947, 3
        %v6950 = vshll.u32 %v6869, 16
        %v6952 = vrot.slane %v6950, 4
        %v6953 = vor.u32 %v6949, %v6952
        %v6955 = vshrl.u32 %v6870, 16
        %v6957 = vrot.slane %v6955, 3
        %v6958 = vshll.u32 %v6870, 16
        %v6960 = vrot.slane %v6958, 4
        %v6961 = vor.u32 %v6957, %v6960
        %v6962 = vsel %vm937, %v6953, %v6961
        %v6964 = vshrl.u32 %v6871, 16
        %v6966 = vrot.slane %v6964, 3
        %v6967 = vshll.u32 %v6871, 16
        %v6969 = vrot.slane %v6967, 4
        %v6970 = vor.u32 %v6966, %v6969
        %v6972 = vshrl.u32 %v6872, 16
        %v6974 = vrot.slane %v6972, 3
        %v6975 = vshll.u32 %v6872, 16
        %v6977 = vrot.slane %v6975, 4
        %v6978 = vor.u32 %v6974, %v6977
        %v6979 = vsel %vm937, %v6970, %v6978
        %v6981 = vshrl.u32 %v6873, 16
        %v6983 = vrot.slane %v6981, 3
        %v6984 = vshll.u32 %v6873, 16
        %v6986 = vrot.slane %v6984, 4
        %v6987 = vor.u32 %v6983, %v6986
        %v6989 = vshrl.u32 %v6874, 16
        %v6991 = vrot.slane %v6989, 3
        %v6992 = vshll.u32 %v6874, 16
        %v6994 = vrot.slane %v6992, 4
        %v6995 = vor.u32 %v6991, %v6994
        %v6996 = vsel %vm937, %v6987, %v6995
        %v6998 = vshrl.u32 %v6875, 16
        %v7000 = vrot.slane %v6998, 3
        %v7001 = vshll.u32 %v6875, 16
        %v7003 = vrot.slane %v7001, 4
        %v7004 = vor.u32 %v7000, %v7003
        %v7006 = vshrl.u32 %v6876, 16
        %v7008 = vrot.slane %v7006, 3
        %v7009 = vshll.u32 %v6876, 16
        %v7011 = vrot.slane %v7009, 4
        %v7012 = vor.u32 %v7008, %v7011
        %v7013 = vsel %vm937, %v7004, %v7012
        %v7015 = vshrl.u32 %v6877, 16
        %v7017 = vrot.slane %v7015, 3
        %v7018 = vshll.u32 %v6877, 16
        %v7020 = vrot.slane %v7018, 4
        %v7021 = vor.u32 %v7017, %v7020
        %v7023 = vshrl.u32 %v6878, 16
        %v7025 = vrot.slane %v7023, 3
        %v7026 = vshll.u32 %v6878, 16
        %v7028 = vrot.slane %v7026, 4
        %v7029 = vor.u32 %v7025, %v7028
        %v7030 = vsel %vm937, %v7021, %v7029
        %v7032 = vshrl.u32 %v6879, 16
        %v7034 = vrot.slane %v7032, 3
        %v7035 = vshll.u32 %v6879, 16
        %v7037 = vrot.slane %v7035, 4
        %v7038 = vor.u32 %v7034, %v7037
        %v7040 = vshrl.u32 %v6880, 16
        %v7042 = vrot.slane %v7040, 3
        %v7043 = vshll.u32 %v6880, 16
        %v7045 = vrot.slane %v7043, 4
        %v7046 = vor.u32 %v7042, %v7045
        %v7047 = vsel %vm937, %v7038, %v7046
        %v7049 = vshrl.u32 %v6881, 16
        %v7051 = vrot.slane %v7049, 3
        %v7052 = vshll.u32 %v6881, 16
        %v7054 = vrot.slane %v7052, 4
        %v7055 = vor.u32 %v7051, %v7054
        %v7057 = vshrl.u32 %v6882, 16
        %v7059 = vrot.slane %v7057, 3
        %v7060 = vshll.u32 %v6882, 16
        %v7062 = vrot.slane %v7060, 4
        %v7063 = vor.u32 %v7059, %v7062
        %v7064 = vsel %vm937, %v7055, %v7063
        %v7066 = vshrl.u32 %v6883, 16
        %v7068 = vrot.slane %v7066, 3
        %v7069 = vshll.u32 %v6883, 16
        %v7071 = vrot.slane %v7069, 4
        %v7072 = vor.u32 %v7068, %v7071
        %v7074 = vshrl.u32 %v6884, 16
        %v7076 = vrot.slane %v7074, 3
        %v7077 = vshll.u32 %v6884, 16
        %v7079 = vrot.slane %v7077, 4
        %v7080 = vor.u32 %v7076, %v7079
        %v7081 = vsel %vm937, %v7072, %v7080
        %v7083 = vshrl.u32 %v6885, 16
        %v7085 = vrot.slane %v7083, 3
        %v7086 = vshll.u32 %v6885, 16
        %v7088 = vrot.slane %v7086, 4
        %v7089 = vor.u32 %v7085, %v7088
        %v7091 = vshrl.u32 %v6886, 16
        %v7093 = vrot.slane %v7091, 3
        %v7094 = vshll.u32 %v6886, 16
        %v7096 = vrot.slane %v7094, 4
        %v7097 = vor.u32 %v7093, %v7096
        %v7098 = vsel %vm937, %v7089, %v7097
        %v7100 = vshrl.u32 %v6887, 16
        %v7102 = vrot.slane %v7100, 3
        %v7103 = vshll.u32 %v6887, 16
        %v7105 = vrot.slane %v7103, 4
        %v7106 = vor.u32 %v7102, %v7105
        %v7108 = vshrl.u32 %v6888, 16
        %v7110 = vrot.slane %v7108, 3
        %v7111 = vshll.u32 %v6888, 16
        %v7113 = vrot.slane %v7111, 4
        %v7114 = vor.u32 %v7110, %v7113
        %v7115 = vsel %vm937, %v7106, %v7114
        %v7117 = vshrl.u32 %v6889, 16
        %v7119 = vrot.slane %v7117, 3
        %v7120 = vshll.u32 %v6889, 16
        %v7122 = vrot.slane %v7120, 4
        %v7123 = vor.u32 %v7119, %v7122
        %v7125 = vshrl.u32 %v6890, 16
        %v7127 = vrot.slane %v7125, 3
        %v7128 = vshll.u32 %v6890, 16
        %v7130 = vrot.slane %v7128, 4
        %v7131 = vor.u32 %v7127, %v7130
        %v7132 = vsel %vm937, %v7123, %v7131
        %v7134 = vshrl.u32 %v6891, 16
        %v7136 = vrot.slane %v7134, 3
        %v7137 = vshll.u32 %v6891, 16
        %v7139 = vrot.slane %v7137, 4
        %v7140 = vor.u32 %v7136, %v7139
        %v7142 = vshrl.u32 %v6892, 16
        %v7144 = vrot.slane %v7142, 3
        %v7145 = vshll.u32 %v6892, 16
        %v7147 = vrot.slane %v7145, 4
        %v7148 = vor.u32 %v7144, %v7147
        %v7149 = vsel %vm937, %v7140, %v7148
        %v7151 = vshrl.u32 %v6893, 16
        %v7153 = vrot.slane %v7151, 3
        %v7154 = vshll.u32 %v6893, 16
        %v7156 = vrot.slane %v7154, 4
        %v7157 = vor.u32 %v7153, %v7156
        %v7159 = vshrl.u32 %v6894, 16
        %v7161 = vrot.slane %v7159, 3
        %v7162 = vshll.u32 %v6894, 16
        %v7164 = vrot.slane %v7162, 4
        %v7165 = vor.u32 %v7161, %v7164
        %v7166 = vsel %vm937, %v7157, %v7165
        %7183 = vst [vmem:[#allocation3 + $0x18] sm:$0xff] %v6911
        %7184 = vst [vmem:[#allocation3 + $0x60] sm:$0xff] %v6928
        %7185 = vst [vmem:[#allocation3 + $0xa8] sm:$0xff] %v6945
        %7186 = vst [vmem:[#allocation3 + $0xf0] sm:$0xff] %v6962
        %7187 = vst [vmem:[#allocation3 + $0x138] sm:$0xff] %v6979
        %7188 = vst [vmem:[#allocation3 + $0x180] sm:$0xff] %v6996
        %7189 = vst [vmem:[#allocation3 + $0x1c8] sm:$0xff] %v7013
        %7190 = vst [vmem:[#allocation3 + $0x210] sm:$0xff] %v7030
        %7191 = vst [vmem:[#allocation3 + $0x258] sm:$0xff] %v7047
        %7192 = vst [vmem:[#allocation3 + $0x2a0] sm:$0xff] %v7064
        %7193 = vst [vmem:[#allocation3 + $0x2e8] sm:$0xff] %v7081
        %7194 = vst [vmem:[#allocation3 + $0x330] sm:$0xff] %v7098
        %7195 = vst [vmem:[#allocation3 + $0x378] sm:$0xff] %v7115
        %7196 = vst [vmem:[#allocation3 + $0x3c0] sm:$0xff] %v7132
        %7197 = vst [vmem:[#allocation3 + $0x408] sm:$0xff] %v7149
        %7198 = vst [vmem:[#allocation3 + $0x450] sm:$0xff] %v7166
        %v7199 = vld [vmem:[%s728 + $0x8] sm:$0xf]
        %v7200 = vld [vmem:[%s728 + $0xc] sm:$0xf]
        %v7201 = vld [vmem:[%s728 + $0x1c] sm:$0xf]
        %v7202 = vld [vmem:[%s728 + $0x20] sm:$0xf]
        %v7203 = vld [vmem:[%s728 + $0x30] sm:$0xf]
        %v7204 = vld [vmem:[%s728 + $0x34] sm:$0xf]
        %v7205 = vld [vmem:[%s728 + $0x44] sm:$0xf]
        %v7206 = vld [vmem:[%s728 + $0x48] sm:$0xf]
        %v7207 = vld [vmem:[%s728 + $0x58] sm:$0xf]
        %v7208 = vld [vmem:[%s728 + $0x5c] sm:$0xf]
        %v7209 = vld [vmem:[%s728 + $0x6c] sm:$0xf]
        %v7210 = vld [vmem:[%s728 + $0x70] sm:$0xf]
        %v7211 = vld [vmem:[%s728 + $0x80] sm:$0xf]
        %v7212 = vld [vmem:[%s728 + $0x84] sm:$0xf]
        %v7213 = vld [vmem:[%s728 + $0x94] sm:$0xf]
        %v7214 = vld [vmem:[%s728 + $0x98] sm:$0xf]
        %v7215 = vld [vmem:[%s728 + $0xa8] sm:$0xf]
        %v7216 = vld [vmem:[%s728 + $0xac] sm:$0xf]
        %v7217 = vld [vmem:[%s728 + $0xbc] sm:$0xf]
        %v7218 = vld [vmem:[%s728 + $0xc0] sm:$0xf]
        %v7219 = vld [vmem:[%s728 + $0xd0] sm:$0xf]
        %v7220 = vld [vmem:[%s728 + $0xd4] sm:$0xf]
        %v7221 = vld [vmem:[%s728 + $0xe4] sm:$0xf]
        %v7222 = vld [vmem:[%s728 + $0xe8] sm:$0xf]
        %v7223 = vld [vmem:[%s728 + $0xf8] sm:$0xf]
        %v7224 = vld [vmem:[%s728 + $0xfc] sm:$0xf]
        %v7225 = vld [vmem:[%s728 + $0x10c] sm:$0xf]
        %v7226 = vld [vmem:[%s728 + $0x110] sm:$0xf]
        %v7227 = vld [vmem:[%s728 + $0x120] sm:$0xf]
        %v7228 = vld [vmem:[%s728 + $0x124] sm:$0xf]
        %v7229 = vld [vmem:[%s728 + $0x134] sm:$0xf]
        %v7230 = vld [vmem:[%s728 + $0x138] sm:$0xf]
        %v7263 = vunpack.c.l.b16 %v7199
        %v7264 = vunpack.c.l.b16 %v7200
        %v7265 = vunpack.c.l.b16 %v7201
        %v7266 = vunpack.c.l.b16 %v7202
        %v7267 = vunpack.c.l.b16 %v7203
        %v7268 = vunpack.c.l.b16 %v7204
        %v7269 = vunpack.c.l.b16 %v7205
        %v7270 = vunpack.c.l.b16 %v7206
        %v7271 = vunpack.c.l.b16 %v7207
        %v7272 = vunpack.c.l.b16 %v7208
        %v7273 = vunpack.c.l.b16 %v7209
        %v7274 = vunpack.c.l.b16 %v7210
        %v7275 = vunpack.c.l.b16 %v7211
        %v7276 = vunpack.c.l.b16 %v7212
        %v7277 = vunpack.c.l.b16 %v7213
        %v7278 = vunpack.c.l.b16 %v7214
        %v7279 = vunpack.c.l.b16 %v7215
        %v7280 = vunpack.c.l.b16 %v7216
        %v7281 = vunpack.c.l.b16 %v7217
        %v7282 = vunpack.c.l.b16 %v7218
        %v7283 = vunpack.c.l.b16 %v7219
        %v7284 = vunpack.c.l.b16 %v7220
        %v7285 = vunpack.c.l.b16 %v7221
        %v7286 = vunpack.c.l.b16 %v7222
        %v7287 = vunpack.c.l.b16 %v7223
        %v7288 = vunpack.c.l.b16 %v7224
        %v7289 = vunpack.c.l.b16 %v7225
        %v7290 = vunpack.c.l.b16 %v7226
        %v7291 = vunpack.c.l.b16 %v7227
        %v7292 = vunpack.c.l.b16 %v7228
        %v7293 = vunpack.c.l.b16 %v7229
        %v7294 = vunpack.c.l.b16 %v7230
        %v7295 = vpack.c.b16 %v7264, %v7263
        %v7296 = vpack.c.b16 %v7266, %v7265
        %v7297 = vpack.c.b16 %v7268, %v7267
        %v7298 = vpack.c.b16 %v7270, %v7269
        %v7299 = vpack.c.b16 %v7272, %v7271
        %v7300 = vpack.c.b16 %v7274, %v7273
        %v7301 = vpack.c.b16 %v7276, %v7275
        %v7302 = vpack.c.b16 %v7278, %v7277
        %v7303 = vpack.c.b16 %v7280, %v7279
        %v7304 = vpack.c.b16 %v7282, %v7281
        %v7305 = vpack.c.b16 %v7284, %v7283
        %v7306 = vpack.c.b16 %v7286, %v7285
        %v7307 = vpack.c.b16 %v7288, %v7287
        %v7308 = vpack.c.b16 %v7290, %v7289
        %v7309 = vpack.c.b16 %v7292, %v7291
        %v7310 = vpack.c.b16 %v7294, %v7293
        %7327 = vst [vmem:[#allocation3 + $0x20] sm:$0xff] %v7295
        %7328 = vst [vmem:[#allocation3 + $0x68] sm:$0xff] %v7296
        %7329 = vst [vmem:[#allocation3 + $0xb0] sm:$0xff] %v7297
        %7330 = vst [vmem:[#allocation3 + $0xf8] sm:$0xff] %v7298
        %7331 = vst [vmem:[#allocation3 + $0x140] sm:$0xff] %v7299
        %7332 = vst [vmem:[#allocation3 + $0x188] sm:$0xff] %v7300
        %7333 = vst [vmem:[#allocation3 + $0x1d0] sm:$0xff] %v7301
        %7334 = vst [vmem:[#allocation3 + $0x218] sm:$0xff] %v7302
        %7335 = vst [vmem:[#allocation3 + $0x260] sm:$0xff] %v7303
        %7336 = vst [vmem:[#allocation3 + $0x2a8] sm:$0xff] %v7304
        %7337 = vst [vmem:[#allocation3 + $0x2f0] sm:$0xff] %v7305
        %7338 = vst [vmem:[#allocation3 + $0x338] sm:$0xff] %v7306
        %7339 = vst [vmem:[#allocation3 + $0x380] sm:$0xff] %v7307
        %7340 = vst [vmem:[#allocation3 + $0x3c8] sm:$0xff] %v7308
        %7341 = vst [vmem:[#allocation3 + $0x410] sm:$0xff] %v7309
        %7342 = vst [vmem:[#allocation3 + $0x458] sm:$0xff] %v7310
        %v7343 = vld [vmem:[%s728 + $0x8] sm:$0xf]
        %v7344 = vld [vmem:[%s728 + $0xc] sm:$0xf]
        %v7345 = vld [vmem:[%s728 + $0x10] sm:$0x1]
        %v7346 = vld [vmem:[%s728 + $0x1c] sm:$0xf]
        %v7347 = vld [vmem:[%s728 + $0x20] sm:$0xf]
        %v7348 = vld [vmem:[%s728 + $0x24] sm:$0x1]
        %v7349 = vld [vmem:[%s728 + $0x30] sm:$0xf]
        %v7350 = vld [vmem:[%s728 + $0x34] sm:$0xf]
        %v7351 = vld [vmem:[%s728 + $0x38] sm:$0x1]
        %v7352 = vld [vmem:[%s728 + $0x44] sm:$0xf]
        %v7353 = vld [vmem:[%s728 + $0x48] sm:$0xf]
        %v7354 = vld [vmem:[%s728 + $0x4c] sm:$0x1]
        %v7355 = vld [vmem:[%s728 + $0x58] sm:$0xf]
        %v7356 = vld [vmem:[%s728 + $0x5c] sm:$0xf]
        %v7357 = vld [vmem:[%s728 + $0x60] sm:$0x1]
        %v7358 = vld [vmem:[%s728 + $0x6c] sm:$0xf]
        %v7359 = vld [vmem:[%s728 + $0x70] sm:$0xf]
        %v7360 = vld [vmem:[%s728 + $0x74] sm:$0x1]
        %v7361 = vld [vmem:[%s728 + $0x80] sm:$0xf]
        %v7362 = vld [vmem:[%s728 + $0x84] sm:$0xf]
        %v7363 = vld [vmem:[%s728 + $0x88] sm:$0x1]
        %v7364 = vld [vmem:[%s728 + $0x94] sm:$0xf]
        %v7365 = vld [vmem:[%s728 + $0x98] sm:$0xf]
        %v7366 = vld [vmem:[%s728 + $0x9c] sm:$0x1]
        %v7367 = vld [vmem:[%s728 + $0xa8] sm:$0xf]
        %v7368 = vld [vmem:[%s728 + $0xac] sm:$0xf]
        %v7369 = vld [vmem:[%s728 + $0xb0] sm:$0x1]
        %v7370 = vld [vmem:[%s728 + $0xbc] sm:$0xf]
        %v7371 = vld [vmem:[%s728 + $0xc0] sm:$0xf]
        %v7372 = vld [vmem:[%s728 + $0xc4] sm:$0x1]
        %v7373 = vld [vmem:[%s728 + $0xd0] sm:$0xf]
        %v7374 = vld [vmem:[%s728 + $0xd4] sm:$0xf]
        %v7375 = vld [vmem:[%s728 + $0xd8] sm:$0x1]
        %v7376 = vld [vmem:[%s728 + $0xe4] sm:$0xf]
        %v7377 = vld [vmem:[%s728 + $0xe8] sm:$0xf]
        %v7378 = vld [vmem:[%s728 + $0xec] sm:$0x1]
        %v7379 = vld [vmem:[%s728 + $0xf8] sm:$0xf]
        %v7380 = vld [vmem:[%s728 + $0xfc] sm:$0xf]
        %v7381 = vld [vmem:[%s728 + $0x100] sm:$0x1]
        %v7382 = vld [vmem:[%s728 + $0x10c] sm:$0xf]
        %v7383 = vld [vmem:[%s728 + $0x110] sm:$0xf]
        %v7384 = vld [vmem:[%s728 + $0x114] sm:$0x1]
        %v7385 = vld [vmem:[%s728 + $0x120] sm:$0xf]
        %v7386 = vld [vmem:[%s728 + $0x124] sm:$0xf]
        %v7387 = vld [vmem:[%s728 + $0x128] sm:$0x1]
        %v7388 = vld [vmem:[%s728 + $0x134] sm:$0xf]
        %v7389 = vld [vmem:[%s728 + $0x138] sm:$0xf]
        %v7390 = vld [vmem:[%s728 + $0x13c] sm:$0x1]
        %v7439 = vunpack.c.l.b16 %v7343
        %v7440 = vunpack.c.l.b16 %v7344
        %v7441 = vunpack.c.l.b16 %v7345
        %v7442 = vunpack.c.l.b16 %v7346
        %v7443 = vunpack.c.l.b16 %v7347
        %v7444 = vunpack.c.l.b16 %v7348
        %v7445 = vunpack.c.l.b16 %v7349
        %v7446 = vunpack.c.l.b16 %v7350
        %v7447 = vunpack.c.l.b16 %v7351
        %v7448 = vunpack.c.l.b16 %v7352
        %v7449 = vunpack.c.l.b16 %v7353
        %v7450 = vunpack.c.l.b16 %v7354
        %v7451 = vunpack.c.l.b16 %v7355
        %v7452 = vunpack.c.l.b16 %v7356
        %v7453 = vunpack.c.l.b16 %v7357
        %v7454 = vunpack.c.l.b16 %v7358
        %v7455 = vunpack.c.l.b16 %v7359
        %v7456 = vunpack.c.l.b16 %v7360
        %v7457 = vunpack.c.l.b16 %v7361
        %v7458 = vunpack.c.l.b16 %v7362
        %v7459 = vunpack.c.l.b16 %v7363
        %v7460 = vunpack.c.l.b16 %v7364
        %v7461 = vunpack.c.l.b16 %v7365
        %v7462 = vunpack.c.l.b16 %v7366
        %v7463 = vunpack.c.l.b16 %v7367
        %v7464 = vunpack.c.l.b16 %v7368
        %v7465 = vunpack.c.l.b16 %v7369
        %v7466 = vunpack.c.l.b16 %v7370
        %v7467 = vunpack.c.l.b16 %v7371
        %v7468 = vunpack.c.l.b16 %v7372
        %v7469 = vunpack.c.l.b16 %v7373
        %v7470 = vunpack.c.l.b16 %v7374
        %v7471 = vunpack.c.l.b16 %v7375
        %v7472 = vunpack.c.l.b16 %v7376
        %v7473 = vunpack.c.l.b16 %v7377
        %v7474 = vunpack.c.l.b16 %v7378
        %v7475 = vunpack.c.l.b16 %v7379
        %v7476 = vunpack.c.l.b16 %v7380
        %v7477 = vunpack.c.l.b16 %v7381
        %v7478 = vunpack.c.l.b16 %v7382
        %v7479 = vunpack.c.l.b16 %v7383
        %v7480 = vunpack.c.l.b16 %v7384
        %v7481 = vunpack.c.l.b16 %v7385
        %v7482 = vunpack.c.l.b16 %v7386
        %v7483 = vunpack.c.l.b16 %v7387
        %v7484 = vunpack.c.l.b16 %v7388
        %v7485 = vunpack.c.l.b16 %v7389
        %v7486 = vunpack.c.l.b16 %v7390
        %v7487 = vpack.c.b16 %v7440, %v7439
        %v7488 = vpack.c.b16 %v7441, %v7441
        %v7489 = vpack.c.b16 %v7443, %v7442
        %v7490 = vpack.c.b16 %v7444, %v7444
        %v7491 = vpack.c.b16 %v7446, %v7445
        %v7492 = vpack.c.b16 %v7447, %v7447
        %v7493 = vpack.c.b16 %v7449, %v7448
        %v7494 = vpack.c.b16 %v7450, %v7450
        %v7495 = vpack.c.b16 %v7452, %v7451
        %v7496 = vpack.c.b16 %v7453, %v7453
        %v7497 = vpack.c.b16 %v7455, %v7454
        %v7498 = vpack.c.b16 %v7456, %v7456
        %v7499 = vpack.c.b16 %v7458, %v7457
        %v7500 = vpack.c.b16 %v7459, %v7459
        %v7501 = vpack.c.b16 %v7461, %v7460
        %v7502 = vpack.c.b16 %v7462, %v7462
        %v7503 = vpack.c.b16 %v7464, %v7463
        %v7504 = vpack.c.b16 %v7465, %v7465
        %v7505 = vpack.c.b16 %v7467, %v7466
        %v7506 = vpack.c.b16 %v7468, %v7468
        %v7507 = vpack.c.b16 %v7470, %v7469
        %v7508 = vpack.c.b16 %v7471, %v7471
        %v7509 = vpack.c.b16 %v7473, %v7472
        %v7510 = vpack.c.b16 %v7474, %v7474
        %v7511 = vpack.c.b16 %v7476, %v7475
        %v7512 = vpack.c.b16 %v7477, %v7477
        %v7513 = vpack.c.b16 %v7479, %v7478
        %v7514 = vpack.c.b16 %v7480, %v7480
        %v7515 = vpack.c.b16 %v7482, %v7481
        %v7516 = vpack.c.b16 %v7483, %v7483
        %v7517 = vpack.c.b16 %v7485, %v7484
        %v7518 = vpack.c.b16 %v7486, %v7486
        %v7520 = vshrl.u32 %v7487, 16
        %v7522 = vshll.u32 %v7487, 16
        %v7524 = vrot.slane %v7522, 1
        %v7525 = vor.u32 %v7520, %v7524
        %v7527 = vshll.u32 %v7488, 16
        %v7529 = vrot.slane %v7527, 1
        %v7530 = vsel %vm1562, %v7525, %v7529
        %v7532 = vshrl.u32 %v7489, 16
        %v7534 = vshll.u32 %v7489, 16
        %v7536 = vrot.slane %v7534, 1
        %v7537 = vor.u32 %v7532, %v7536
        %v7539 = vshll.u32 %v7490, 16
        %v7541 = vrot.slane %v7539, 1
        %v7542 = vsel %vm1562, %v7537, %v7541
        %v7544 = vshrl.u32 %v7491, 16
        %v7546 = vshll.u32 %v7491, 16
        %v7548 = vrot.slane %v7546, 1
        %v7549 = vor.u32 %v7544, %v7548
        %v7551 = vshll.u32 %v7492, 16
        %v7553 = vrot.slane %v7551, 1
        %v7554 = vsel %vm1562, %v7549, %v7553
        %v7556 = vshrl.u32 %v7493, 16
        %v7558 = vshll.u32 %v7493, 16
        %v7560 = vrot.slane %v7558, 1
        %v7561 = vor.u32 %v7556, %v7560
        %v7563 = vshll.u32 %v7494, 16
        %v7565 = vrot.slane %v7563, 1
        %v7566 = vsel %vm1562, %v7561, %v7565
        %v7568 = vshrl.u32 %v7495, 16
        %v7570 = vshll.u32 %v7495, 16
        %v7572 = vrot.slane %v7570, 1
        %v7573 = vor.u32 %v7568, %v7572
        %v7575 = vshll.u32 %v7496, 16
        %v7577 = vrot.slane %v7575, 1
        %v7578 = vsel %vm1562, %v7573, %v7577
        %v7580 = vshrl.u32 %v7497, 16
        %v7582 = vshll.u32 %v7497, 16
        %v7584 = vrot.slane %v7582, 1
        %v7585 = vor.u32 %v7580, %v7584
        %v7587 = vshll.u32 %v7498, 16
        %v7589 = vrot.slane %v7587, 1
        %v7590 = vsel %vm1562, %v7585, %v7589
        %v7592 = vshrl.u32 %v7499, 16
        %v7594 = vshll.u32 %v7499, 16
        %v7596 = vrot.slane %v7594, 1
        %v7597 = vor.u32 %v7592, %v7596
        %v7599 = vshll.u32 %v7500, 16
        %v7601 = vrot.slane %v7599, 1
        %v7602 = vsel %vm1562, %v7597, %v7601
        %v7604 = vshrl.u32 %v7501, 16
        %v7606 = vshll.u32 %v7501, 16
        %v7608 = vrot.slane %v7606, 1
        %v7609 = vor.u32 %v7604, %v7608
        %v7611 = vshll.u32 %v7502, 16
        %v7613 = vrot.slane %v7611, 1
        %v7614 = vsel %vm1562, %v7609, %v7613
        %v7616 = vshrl.u32 %v7503, 16
        %v7618 = vshll.u32 %v7503, 16
        %v7620 = vrot.slane %v7618, 1
        %v7621 = vor.u32 %v7616, %v7620
        %v7623 = vshll.u32 %v7504, 16
        %v7625 = vrot.slane %v7623, 1
        %v7626 = vsel %vm1562, %v7621, %v7625
        %v7628 = vshrl.u32 %v7505, 16
        %v7630 = vshll.u32 %v7505, 16
        %v7632 = vrot.slane %v7630, 1
        %v7633 = vor.u32 %v7628, %v7632
        %v7635 = vshll.u32 %v7506, 16
        %v7637 = vrot.slane %v7635, 1
        %v7638 = vsel %vm1562, %v7633, %v7637
        %v7640 = vshrl.u32 %v7507, 16
        %v7642 = vshll.u32 %v7507, 16
        %v7644 = vrot.slane %v7642, 1
        %v7645 = vor.u32 %v7640, %v7644
        %v7647 = vshll.u32 %v7508, 16
        %v7649 = vrot.slane %v7647, 1
        %v7650 = vsel %vm1562, %v7645, %v7649
        %v7652 = vshrl.u32 %v7509, 16
        %v7654 = vshll.u32 %v7509, 16
        %v7656 = vrot.slane %v7654, 1
        %v7657 = vor.u32 %v7652, %v7656
        %v7659 = vshll.u32 %v7510, 16
        %v7661 = vrot.slane %v7659, 1
        %v7662 = vsel %vm1562, %v7657, %v7661
        %v7664 = vshrl.u32 %v7511, 16
        %v7666 = vshll.u32 %v7511, 16
        %v7668 = vrot.slane %v7666, 1
        %v7669 = vor.u32 %v7664, %v7668
        %v7671 = vshll.u32 %v7512, 16
        %v7673 = vrot.slane %v7671, 1
        %v7674 = vsel %vm1562, %v7669, %v7673
        %v7676 = vshrl.u32 %v7513, 16
        %v7678 = vshll.u32 %v7513, 16
        %v7680 = vrot.slane %v7678, 1
        %v7681 = vor.u32 %v7676, %v7680
        %v7683 = vshll.u32 %v7514, 16
        %v7685 = vrot.slane %v7683, 1
        %v7686 = vsel %vm1562, %v7681, %v7685
        %v7688 = vshrl.u32 %v7515, 16
        %v7690 = vshll.u32 %v7515, 16
        %v7692 = vrot.slane %v7690, 1
        %v7693 = vor.u32 %v7688, %v7692
        %v7695 = vshll.u32 %v7516, 16
        %v7697 = vrot.slane %v7695, 1
        %v7698 = vsel %vm1562, %v7693, %v7697
        %v7700 = vshrl.u32 %v7517, 16
        %v7702 = vshll.u32 %v7517, 16
        %v7704 = vrot.slane %v7702, 1
        %v7705 = vor.u32 %v7700, %v7704
        %v7707 = vshll.u32 %v7518, 16
        %v7709 = vrot.slane %v7707, 1
        %v7710 = vsel %vm1562, %v7705, %v7709
        %7727 = vst [vmem:[#allocation3 + $0x28] sm:$0xff] %v7530
        %7728 = vst [vmem:[#allocation3 + $0x70] sm:$0xff] %v7542
        %7729 = vst [vmem:[#allocation3 + $0xb8] sm:$0xff] %v7554
        %7730 = vst [vmem:[#allocation3 + $0x100] sm:$0xff] %v7566
        %7731 = vst [vmem:[#allocation3 + $0x148] sm:$0xff] %v7578
        %7732 = vst [vmem:[#allocation3 + $0x190] sm:$0xff] %v7590
        %7733 = vst [vmem:[#allocation3 + $0x1d8] sm:$0xff] %v7602
        %7734 = vst [vmem:[#allocation3 + $0x220] sm:$0xff] %v7614
        %7735 = vst [vmem:[#allocation3 + $0x268] sm:$0xff] %v7626
        %7736 = vst [vmem:[#allocation3 + $0x2b0] sm:$0xff] %v7638
        %7737 = vst [vmem:[#allocation3 + $0x2f8] sm:$0xff] %v7650
        %7738 = vst [vmem:[#allocation3 + $0x340] sm:$0xff] %v7662
        %7739 = vst [vmem:[#allocation3 + $0x388] sm:$0xff] %v7674
        %7740 = vst [vmem:[#allocation3 + $0x3d0] sm:$0xff] %v7686
        %7741 = vst [vmem:[#allocation3 + $0x418] sm:$0xff] %v7698
        %7742 = vst [vmem:[#allocation3 + $0x460] sm:$0xff] %v7710
        %v7743 = vld [vmem:[%s2811 + $0x4] sm:$0x8]
        %v7744 = vld [vmem:[%s2811 + $0x8] sm:$0xf]
        %v7745 = vld [vmem:[%s2811 + $0xc] sm:$0xf]
        %v7746 = vld [vmem:[%s2811 + $0x18] sm:$0x8]
        %v7747 = vld [vmem:[%s2811 + $0x1c] sm:$0xf]
        %v7748 = vld [vmem:[%s2811 + $0x20] sm:$0xf]
        %v7749 = vld [vmem:[%s2811 + $0x2c] sm:$0x8]
        %v7750 = vld [vmem:[%s2811 + $0x30] sm:$0xf]
        %v7751 = vld [vmem:[%s2811 + $0x34] sm:$0xf]
        %v7752 = vld [vmem:[%s2811 + $0x40] sm:$0x8]
        %v7753 = vld [vmem:[%s2811 + $0x44] sm:$0xf]
        %v7754 = vld [vmem:[%s2811 + $0x48] sm:$0xf]
        %v7755 = vld [vmem:[%s2811 + $0x54] sm:$0x8]
        %v7756 = vld [vmem:[%s2811 + $0x58] sm:$0xf]
        %v7757 = vld [vmem:[%s2811 + $0x5c] sm:$0xf]
        %v7758 = vld [vmem:[%s2811 + $0x68] sm:$0x8]
        %v7759 = vld [vmem:[%s2811 + $0x6c] sm:$0xf]
        %v7760 = vld [vmem:[%s2811 + $0x70] sm:$0xf]
        %v7761 = vld [vmem:[%s2811 + $0x7c] sm:$0x8]
        %v7762 = vld [vmem:[%s2811 + $0x80] sm:$0xf]
        %v7763 = vld [vmem:[%s2811 + $0x84] sm:$0xf]
        %v7764 = vld [vmem:[%s2811 + $0x90] sm:$0x8]
        %v7765 = vld [vmem:[%s2811 + $0x94] sm:$0xf]
        %v7766 = vld [vmem:[%s2811 + $0x98] sm:$0xf]
        %v7767 = vld [vmem:[%s2811 + $0xa4] sm:$0x8]
        %v7768 = vld [vmem:[%s2811 + $0xa8] sm:$0xf]
        %v7769 = vld [vmem:[%s2811 + $0xac] sm:$0xf]
        %v7770 = vld [vmem:[%s2811 + $0xb8] sm:$0x8]
        %v7771 = vld [vmem:[%s2811 + $0xbc] sm:$0xf]
        %v7772 = vld [vmem:[%s2811 + $0xc0] sm:$0xf]
        %v7773 = vld [vmem:[%s2811 + $0xcc] sm:$0x8]
        %v7774 = vld [vmem:[%s2811 + $0xd0] sm:$0xf]
        %v7775 = vld [vmem:[%s2811 + $0xd4] sm:$0xf]
        %v7776 = vld [vmem:[%s2811 + $0xe0] sm:$0x8]
        %v7777 = vld [vmem:[%s2811 + $0xe4] sm:$0xf]
        %v7778 = vld [vmem:[%s2811 + $0xe8] sm:$0xf]
        %v7779 = vld [vmem:[%s2811 + $0xf4] sm:$0x8]
        %v7780 = vld [vmem:[%s2811 + $0xf8] sm:$0xf]
        %v7781 = vld [vmem:[%s2811 + $0xfc] sm:$0xf]
        %v7782 = vld [vmem:[%s2811 + $0x108] sm:$0x8]
        %v7783 = vld [vmem:[%s2811 + $0x10c] sm:$0xf]
        %v7784 = vld [vmem:[%s2811 + $0x110] sm:$0xf]
        %v7785 = vld [vmem:[%s2811 + $0x11c] sm:$0x8]
        %v7786 = vld [vmem:[%s2811 + $0x120] sm:$0xf]
        %v7787 = vld [vmem:[%s2811 + $0x124] sm:$0xf]
        %v7788 = vld [vmem:[%s2811 + $0x130] sm:$0x8]
        %v7789 = vld [vmem:[%s2811 + $0x134] sm:$0xf]
        %v7790 = vld [vmem:[%s2811 + $0x138] sm:$0xf]
        %v7839 = vunpack.c.l.b16 %v7743
        %v7840 = vunpack.c.l.b16 %v7744
        %v7841 = vunpack.c.l.b16 %v7745
        %v7842 = vunpack.c.l.b16 %v7746
        %v7843 = vunpack.c.l.b16 %v7747
        %v7844 = vunpack.c.l.b16 %v7748
        %v7845 = vunpack.c.l.b16 %v7749
        %v7846 = vunpack.c.l.b16 %v7750
        %v7847 = vunpack.c.l.b16 %v7751
        %v7848 = vunpack.c.l.b16 %v7752
        %v7849 = vunpack.c.l.b16 %v7753
        %v7850 = vunpack.c.l.b16 %v7754
        %v7851 = vunpack.c.l.b16 %v7755
        %v7852 = vunpack.c.l.b16 %v7756
        %v7853 = vunpack.c.l.b16 %v7757
        %v7854 = vunpack.c.l.b16 %v7758
        %v7855 = vunpack.c.l.b16 %v7759
        %v7856 = vunpack.c.l.b16 %v7760
        %v7857 = vunpack.c.l.b16 %v7761
        %v7858 = vunpack.c.l.b16 %v7762
        %v7859 = vunpack.c.l.b16 %v7763
        %v7860 = vunpack.c.l.b16 %v7764
        %v7861 = vunpack.c.l.b16 %v7765
        %v7862 = vunpack.c.l.b16 %v7766
        %v7863 = vunpack.c.l.b16 %v7767
        %v7864 = vunpack.c.l.b16 %v7768
        %v7865 = vunpack.c.l.b16 %v7769
        %v7866 = vunpack.c.l.b16 %v7770
        %v7867 = vunpack.c.l.b16 %v7771
        %v7868 = vunpack.c.l.b16 %v7772
        %v7869 = vunpack.c.l.b16 %v7773
        %v7870 = vunpack.c.l.b16 %v7774
        %v7871 = vunpack.c.l.b16 %v7775
        %v7872 = vunpack.c.l.b16 %v7776
        %v7873 = vunpack.c.l.b16 %v7777
        %v7874 = vunpack.c.l.b16 %v7778
        %v7875 = vunpack.c.l.b16 %v7779
        %v7876 = vunpack.c.l.b16 %v7780
        %v7877 = vunpack.c.l.b16 %v7781
        %v7878 = vunpack.c.l.b16 %v7782
        %v7879 = vunpack.c.l.b16 %v7783
        %v7880 = vunpack.c.l.b16 %v7784
        %v7881 = vunpack.c.l.b16 %v7785
        %v7882 = vunpack.c.l.b16 %v7786
        %v7883 = vunpack.c.l.b16 %v7787
        %v7884 = vunpack.c.l.b16 %v7788
        %v7885 = vunpack.c.l.b16 %v7789
        %v7886 = vunpack.c.l.b16 %v7790
        %v7887 = vpack.c.b16 %v7840, %v7839
        %v7888 = vpack.c.b16 %v7841, %v7841
        %v7889 = vpack.c.b16 %v7843, %v7842
        %v7890 = vpack.c.b16 %v7844, %v7844
        %v7891 = vpack.c.b16 %v7846, %v7845
        %v7892 = vpack.c.b16 %v7847, %v7847
        %v7893 = vpack.c.b16 %v7849, %v7848
        %v7894 = vpack.c.b16 %v7850, %v7850
        %v7895 = vpack.c.b16 %v7852, %v7851
        %v7896 = vpack.c.b16 %v7853, %v7853
        %v7897 = vpack.c.b16 %v7855, %v7854
        %v7898 = vpack.c.b16 %v7856, %v7856
        %v7899 = vpack.c.b16 %v7858, %v7857
        %v7900 = vpack.c.b16 %v7859, %v7859
        %v7901 = vpack.c.b16 %v7861, %v7860
        %v7902 = vpack.c.b16 %v7862, %v7862
        %v7903 = vpack.c.b16 %v7864, %v7863
        %v7904 = vpack.c.b16 %v7865, %v7865
        %v7905 = vpack.c.b16 %v7867, %v7866
        %v7906 = vpack.c.b16 %v7868, %v7868
        %v7907 = vpack.c.b16 %v7870, %v7869
        %v7908 = vpack.c.b16 %v7871, %v7871
        %v7909 = vpack.c.b16 %v7873, %v7872
        %v7910 = vpack.c.b16 %v7874, %v7874
        %v7911 = vpack.c.b16 %v7876, %v7875
        %v7912 = vpack.c.b16 %v7877, %v7877
        %v7913 = vpack.c.b16 %v7879, %v7878
        %v7914 = vpack.c.b16 %v7880, %v7880
        %v7915 = vpack.c.b16 %v7882, %v7881
        %v7916 = vpack.c.b16 %v7883, %v7883
        %v7917 = vpack.c.b16 %v7885, %v7884
        %v7918 = vpack.c.b16 %v7886, %v7886
        %v7920 = vshrl.u32 %v7887, 16
        %v7922 = vrot.slane %v7920, 3
        %v7923 = vshll.u32 %v7887, 16
        %v7925 = vrot.slane %v7923, 4
        %v7926 = vor.u32 %v7922, %v7925
        %v7928 = vshrl.u32 %v7888, 16
        %v7930 = vrot.slane %v7928, 3
        %v7931 = vshll.u32 %v7888, 16
        %v7933 = vrot.slane %v7931, 4
        %v7934 = vor.u32 %v7930, %v7933
        %v7935 = vsel %vm937, %v7926, %v7934
        %v7937 = vshrl.u32 %v7889, 16
        %v7939 = vrot.slane %v7937, 3
        %v7940 = vshll.u32 %v7889, 16
        %v7942 = vrot.slane %v7940, 4
        %v7943 = vor.u32 %v7939, %v7942
        %v7945 = vshrl.u32 %v7890, 16
        %v7947 = vrot.slane %v7945, 3
        %v7948 = vshll.u32 %v7890, 16
        %v7950 = vrot.slane %v7948, 4
        %v7951 = vor.u32 %v7947, %v7950
        %v7952 = vsel %vm937, %v7943, %v7951
        %v7954 = vshrl.u32 %v7891, 16
        %v7956 = vrot.slane %v7954, 3
        %v7957 = vshll.u32 %v7891, 16
        %v7959 = vrot.slane %v7957, 4
        %v7960 = vor.u32 %v7956, %v7959
        %v7962 = vshrl.u32 %v7892, 16
        %v7964 = vrot.slane %v7962, 3
        %v7965 = vshll.u32 %v7892, 16
        %v7967 = vrot.slane %v7965, 4
        %v7968 = vor.u32 %v7964, %v7967
        %v7969 = vsel %vm937, %v7960, %v7968
        %v7971 = vshrl.u32 %v7893, 16
        %v7973 = vrot.slane %v7971, 3
        %v7974 = vshll.u32 %v7893, 16
        %v7976 = vrot.slane %v7974, 4
        %v7977 = vor.u32 %v7973, %v7976
        %v7979 = vshrl.u32 %v7894, 16
        %v7981 = vrot.slane %v7979, 3
        %v7982 = vshll.u32 %v7894, 16
        %v7984 = vrot.slane %v7982, 4
        %v7985 = vor.u32 %v7981, %v7984
        %v7986 = vsel %vm937, %v7977, %v7985
        %v7988 = vshrl.u32 %v7895, 16
        %v7990 = vrot.slane %v7988, 3
        %v7991 = vshll.u32 %v7895, 16
        %v7993 = vrot.slane %v7991, 4
        %v7994 = vor.u32 %v7990, %v7993
        %v7996 = vshrl.u32 %v7896, 16
        %v7998 = vrot.slane %v7996, 3
        %v7999 = vshll.u32 %v7896, 16
        %v8001 = vrot.slane %v7999, 4
        %v8002 = vor.u32 %v7998, %v8001
        %v8003 = vsel %vm937, %v7994, %v8002
        %v8005 = vshrl.u32 %v7897, 16
        %v8007 = vrot.slane %v8005, 3
        %v8008 = vshll.u32 %v7897, 16
        %v8010 = vrot.slane %v8008, 4
        %v8011 = vor.u32 %v8007, %v8010
        %v8013 = vshrl.u32 %v7898, 16
        %v8015 = vrot.slane %v8013, 3
        %v8016 = vshll.u32 %v7898, 16
        %v8018 = vrot.slane %v8016, 4
        %v8019 = vor.u32 %v8015, %v8018
        %v8020 = vsel %vm937, %v8011, %v8019
        %v8022 = vshrl.u32 %v7899, 16
        %v8024 = vrot.slane %v8022, 3
        %v8025 = vshll.u32 %v7899, 16
        %v8027 = vrot.slane %v8025, 4
        %v8028 = vor.u32 %v8024, %v8027
        %v8030 = vshrl.u32 %v7900, 16
        %v8032 = vrot.slane %v8030, 3
        %v8033 = vshll.u32 %v7900, 16
        %v8035 = vrot.slane %v8033, 4
        %v8036 = vor.u32 %v8032, %v8035
        %v8037 = vsel %vm937, %v8028, %v8036
        %v8039 = vshrl.u32 %v7901, 16
        %v8041 = vrot.slane %v8039, 3
        %v8042 = vshll.u32 %v7901, 16
        %v8044 = vrot.slane %v8042, 4
        %v8045 = vor.u32 %v8041, %v8044
        %v8047 = vshrl.u32 %v7902, 16
        %v8049 = vrot.slane %v8047, 3
        %v8050 = vshll.u32 %v7902, 16
        %v8052 = vrot.slane %v8050, 4
        %v8053 = vor.u32 %v8049, %v8052
        %v8054 = vsel %vm937, %v8045, %v8053
        %v8056 = vshrl.u32 %v7903, 16
        %v8058 = vrot.slane %v8056, 3
        %v8059 = vshll.u32 %v7903, 16
        %v8061 = vrot.slane %v8059, 4
        %v8062 = vor.u32 %v8058, %v8061
        %v8064 = vshrl.u32 %v7904, 16
        %v8066 = vrot.slane %v8064, 3
        %v8067 = vshll.u32 %v7904, 16
        %v8069 = vrot.slane %v8067, 4
        %v8070 = vor.u32 %v8066, %v8069
        %v8071 = vsel %vm937, %v8062, %v8070
        %v8073 = vshrl.u32 %v7905, 16
        %v8075 = vrot.slane %v8073, 3
        %v8076 = vshll.u32 %v7905, 16
        %v8078 = vrot.slane %v8076, 4
        %v8079 = vor.u32 %v8075, %v8078
        %v8081 = vshrl.u32 %v7906, 16
        %v8083 = vrot.slane %v8081, 3
        %v8084 = vshll.u32 %v7906, 16
        %v8086 = vrot.slane %v8084, 4
        %v8087 = vor.u32 %v8083, %v8086
        %v8088 = vsel %vm937, %v8079, %v8087
        %v8090 = vshrl.u32 %v7907, 16
        %v8092 = vrot.slane %v8090, 3
        %v8093 = vshll.u32 %v7907, 16
        %v8095 = vrot.slane %v8093, 4
        %v8096 = vor.u32 %v8092, %v8095
        %v8098 = vshrl.u32 %v7908, 16
        %v8100 = vrot.slane %v8098, 3
        %v8101 = vshll.u32 %v7908, 16
        %v8103 = vrot.slane %v8101, 4
        %v8104 = vor.u32 %v8100, %v8103
        %v8105 = vsel %vm937, %v8096, %v8104
        %v8107 = vshrl.u32 %v7909, 16
        %v8109 = vrot.slane %v8107, 3
        %v8110 = vshll.u32 %v7909, 16
        %v8112 = vrot.slane %v8110, 4
        %v8113 = vor.u32 %v8109, %v8112
        %v8115 = vshrl.u32 %v7910, 16
        %v8117 = vrot.slane %v8115, 3
        %v8118 = vshll.u32 %v7910, 16
        %v8120 = vrot.slane %v8118, 4
        %v8121 = vor.u32 %v8117, %v8120
        %v8122 = vsel %vm937, %v8113, %v8121
        %v8124 = vshrl.u32 %v7911, 16
        %v8126 = vrot.slane %v8124, 3
        %v8127 = vshll.u32 %v7911, 16
        %v8129 = vrot.slane %v8127, 4
        %v8130 = vor.u32 %v8126, %v8129
        %v8132 = vshrl.u32 %v7912, 16
        %v8134 = vrot.slane %v8132, 3
        %v8135 = vshll.u32 %v7912, 16
        %v8137 = vrot.slane %v8135, 4
        %v8138 = vor.u32 %v8134, %v8137
        %v8139 = vsel %vm937, %v8130, %v8138
        %v8141 = vshrl.u32 %v7913, 16
        %v8143 = vrot.slane %v8141, 3
        %v8144 = vshll.u32 %v7913, 16
        %v8146 = vrot.slane %v8144, 4
        %v8147 = vor.u32 %v8143, %v8146
        %v8149 = vshrl.u32 %v7914, 16
        %v8151 = vrot.slane %v8149, 3
        %v8152 = vshll.u32 %v7914, 16
        %v8154 = vrot.slane %v8152, 4
        %v8155 = vor.u32 %v8151, %v8154
        %v8156 = vsel %vm937, %v8147, %v8155
        %v8158 = vshrl.u32 %v7915, 16
        %v8160 = vrot.slane %v8158, 3
        %v8161 = vshll.u32 %v7915, 16
        %v8163 = vrot.slane %v8161, 4
        %v8164 = vor.u32 %v8160, %v8163
        %v8166 = vshrl.u32 %v7916, 16
        %v8168 = vrot.slane %v8166, 3
        %v8169 = vshll.u32 %v7916, 16
        %v8171 = vrot.slane %v8169, 4
        %v8172 = vor.u32 %v8168, %v8171
        %v8173 = vsel %vm937, %v8164, %v8172
        %v8175 = vshrl.u32 %v7917, 16
        %v8177 = vrot.slane %v8175, 3
        %v8178 = vshll.u32 %v7917, 16
        %v8180 = vrot.slane %v8178, 4
        %v8181 = vor.u32 %v8177, %v8180
        %v8183 = vshrl.u32 %v7918, 16
        %v8185 = vrot.slane %v8183, 3
        %v8186 = vshll.u32 %v7918, 16
        %v8188 = vrot.slane %v8186, 4
        %v8189 = vor.u32 %v8185, %v8188
        %v8190 = vsel %vm937, %v8181, %v8189
        %8207 = vst [vmem:[#allocation3 + $0x30] sm:$0xff] %v7935
        %8208 = vst [vmem:[#allocation3 + $0x78] sm:$0xff] %v7952
        %8209 = vst [vmem:[#allocation3 + $0xc0] sm:$0xff] %v7969
        %8210 = vst [vmem:[#allocation3 + $0x108] sm:$0xff] %v7986
        %8211 = vst [vmem:[#allocation3 + $0x150] sm:$0xff] %v8003
        %8212 = vst [vmem:[#allocation3 + $0x198] sm:$0xff] %v8020
        %8213 = vst [vmem:[#allocation3 + $0x1e0] sm:$0xff] %v8037
        %8214 = vst [vmem:[#allocation3 + $0x228] sm:$0xff] %v8054
        %8215 = vst [vmem:[#allocation3 + $0x270] sm:$0xff] %v8071
        %8216 = vst [vmem:[#allocation3 + $0x2b8] sm:$0xff] %v8088
        %8217 = vst [vmem:[#allocation3 + $0x300] sm:$0xff] %v8105
        %8218 = vst [vmem:[#allocation3 + $0x348] sm:$0xff] %v8122
        %8219 = vst [vmem:[#allocation3 + $0x390] sm:$0xff] %v8139
        %8220 = vst [vmem:[#allocation3 + $0x3d8] sm:$0xff] %v8156
        %8221 = vst [vmem:[#allocation3 + $0x420] sm:$0xff] %v8173
        %8222 = vst [vmem:[#allocation3 + $0x468] sm:$0xff] %v8190
        %v8223 = vld [vmem:[%s2811 + $0x8] sm:$0xf]
        %v8224 = vld [vmem:[%s2811 + $0xc] sm:$0xf]
        %v8225 = vld [vmem:[%s2811 + $0x1c] sm:$0xf]
        %v8226 = vld [vmem:[%s2811 + $0x20] sm:$0xf]
        %v8227 = vld [vmem:[%s2811 + $0x30] sm:$0xf]
        %v8228 = vld [vmem:[%s2811 + $0x34] sm:$0xf]
        %v8229 = vld [vmem:[%s2811 + $0x44] sm:$0xf]
        %v8230 = vld [vmem:[%s2811 + $0x48] sm:$0xf]
        %v8231 = vld [vmem:[%s2811 + $0x58] sm:$0xf]
        %v8232 = vld [vmem:[%s2811 + $0x5c] sm:$0xf]
        %v8233 = vld [vmem:[%s2811 + $0x6c] sm:$0xf]
        %v8234 = vld [vmem:[%s2811 + $0x70] sm:$0xf]
        %v8235 = vld [vmem:[%s2811 + $0x80] sm:$0xf]
        %v8236 = vld [vmem:[%s2811 + $0x84] sm:$0xf]
        %v8237 = vld [vmem:[%s2811 + $0x94] sm:$0xf]
        %v8238 = vld [vmem:[%s2811 + $0x98] sm:$0xf]
        %v8239 = vld [vmem:[%s2811 + $0xa8] sm:$0xf]
        %v8240 = vld [vmem:[%s2811 + $0xac] sm:$0xf]
        %v8241 = vld [vmem:[%s2811 + $0xbc] sm:$0xf]
        %v8242 = vld [vmem:[%s2811 + $0xc0] sm:$0xf]
        %v8243 = vld [vmem:[%s2811 + $0xd0] sm:$0xf]
        %v8244 = vld [vmem:[%s2811 + $0xd4] sm:$0xf]
        %v8245 = vld [vmem:[%s2811 + $0xe4] sm:$0xf]
        %v8246 = vld [vmem:[%s2811 + $0xe8] sm:$0xf]
        %v8247 = vld [vmem:[%s2811 + $0xf8] sm:$0xf]
        %v8248 = vld [vmem:[%s2811 + $0xfc] sm:$0xf]
        %v8249 = vld [vmem:[%s2811 + $0x10c] sm:$0xf]
        %v8250 = vld [vmem:[%s2811 + $0x110] sm:$0xf]
        %v8251 = vld [vmem:[%s2811 + $0x120] sm:$0xf]
        %v8252 = vld [vmem:[%s2811 + $0x124] sm:$0xf]
        %v8253 = vld [vmem:[%s2811 + $0x134] sm:$0xf]
        %v8254 = vld [vmem:[%s2811 + $0x138] sm:$0xf]
        %v8287 = vunpack.c.l.b16 %v8223
        %v8288 = vunpack.c.l.b16 %v8224
        %v8289 = vunpack.c.l.b16 %v8225
        %v8290 = vunpack.c.l.b16 %v8226
        %v8291 = vunpack.c.l.b16 %v8227
        %v8292 = vunpack.c.l.b16 %v8228
        %v8293 = vunpack.c.l.b16 %v8229
        %v8294 = vunpack.c.l.b16 %v8230
        %v8295 = vunpack.c.l.b16 %v8231
        %v8296 = vunpack.c.l.b16 %v8232
        %v8297 = vunpack.c.l.b16 %v8233
        %v8298 = vunpack.c.l.b16 %v8234
        %v8299 = vunpack.c.l.b16 %v8235
        %v8300 = vunpack.c.l.b16 %v8236
        %v8301 = vunpack.c.l.b16 %v8237
        %v8302 = vunpack.c.l.b16 %v8238
        %v8303 = vunpack.c.l.b16 %v8239
        %v8304 = vunpack.c.l.b16 %v8240
        %v8305 = vunpack.c.l.b16 %v8241
        %v8306 = vunpack.c.l.b16 %v8242
        %v8307 = vunpack.c.l.b16 %v8243
        %v8308 = vunpack.c.l.b16 %v8244
        %v8309 = vunpack.c.l.b16 %v8245
        %v8310 = vunpack.c.l.b16 %v8246
        %v8311 = vunpack.c.l.b16 %v8247
        %v8312 = vunpack.c.l.b16 %v8248
        %v8313 = vunpack.c.l.b16 %v8249
        %v8314 = vunpack.c.l.b16 %v8250
        %v8315 = vunpack.c.l.b16 %v8251
        %v8316 = vunpack.c.l.b16 %v8252
        %v8317 = vunpack.c.l.b16 %v8253
        %v8318 = vunpack.c.l.b16 %v8254
        %v8319 = vpack.c.b16 %v8288, %v8287
        %v8320 = vpack.c.b16 %v8290, %v8289
        %v8321 = vpack.c.b16 %v8292, %v8291
        %v8322 = vpack.c.b16 %v8294, %v8293
        %v8323 = vpack.c.b16 %v8296, %v8295
        %v8324 = vpack.c.b16 %v8298, %v8297
        %v8325 = vpack.c.b16 %v8300, %v8299
        %v8326 = vpack.c.b16 %v8302, %v8301
        %v8327 = vpack.c.b16 %v8304, %v8303
        %v8328 = vpack.c.b16 %v8306, %v8305
        %v8329 = vpack.c.b16 %v8308, %v8307
        %v8330 = vpack.c.b16 %v8310, %v8309
        %v8331 = vpack.c.b16 %v8312, %v8311
        %v8332 = vpack.c.b16 %v8314, %v8313
        %v8333 = vpack.c.b16 %v8316, %v8315
        %v8334 = vpack.c.b16 %v8318, %v8317
        %8351 = vst [vmem:[#allocation3 + $0x38] sm:$0xff] %v8319
        %8352 = vst [vmem:[#allocation3 + $0x80] sm:$0xff] %v8320
        %8353 = vst [vmem:[#allocation3 + $0xc8] sm:$0xff] %v8321
        %8354 = vst [vmem:[#allocation3 + $0x110] sm:$0xff] %v8322
        %8355 = vst [vmem:[#allocation3 + $0x158] sm:$0xff] %v8323
        %8356 = vst [vmem:[#allocation3 + $0x1a0] sm:$0xff] %v8324
        %8357 = vst [vmem:[#allocation3 + $0x1e8] sm:$0xff] %v8325
        %8358 = vst [vmem:[#allocation3 + $0x230] sm:$0xff] %v8326
        %8359 = vst [vmem:[#allocation3 + $0x278] sm:$0xff] %v8327
        %8360 = vst [vmem:[#allocation3 + $0x2c0] sm:$0xff] %v8328
        %8361 = vst [vmem:[#allocation3 + $0x308] sm:$0xff] %v8329
        %8362 = vst [vmem:[#allocation3 + $0x350] sm:$0xff] %v8330
        %8363 = vst [vmem:[#allocation3 + $0x398] sm:$0xff] %v8331
        %8364 = vst [vmem:[#allocation3 + $0x3e0] sm:$0xff] %v8332
        %8365 = vst [vmem:[#allocation3 + $0x428] sm:$0xff] %v8333
        %8366 = vst [vmem:[#allocation3 + $0x470] sm:$0xff] %v8334
        %v8367 = vld [vmem:[%s2811 + $0x8] sm:$0xf]
        %v8368 = vld [vmem:[%s2811 + $0xc] sm:$0xf]
        %v8369 = vld [vmem:[%s2811 + $0x10] sm:$0x1]
        %v8370 = vld [vmem:[%s2811 + $0x1c] sm:$0xf]
        %v8371 = vld [vmem:[%s2811 + $0x20] sm:$0xf]
        %v8372 = vld [vmem:[%s2811 + $0x24] sm:$0x1]
        %v8373 = vld [vmem:[%s2811 + $0x30] sm:$0xf]
        %v8374 = vld [vmem:[%s2811 + $0x34] sm:$0xf]
        %v8375 = vld [vmem:[%s2811 + $0x38] sm:$0x1]
        %v8376 = vld [vmem:[%s2811 + $0x44] sm:$0xf]
        %v8377 = vld [vmem:[%s2811 + $0x48] sm:$0xf]
        %v8378 = vld [vmem:[%s2811 + $0x4c] sm:$0x1]
        %v8379 = vld [vmem:[%s2811 + $0x58] sm:$0xf]
        %v8380 = vld [vmem:[%s2811 + $0x5c] sm:$0xf]
        %v8381 = vld [vmem:[%s2811 + $0x60] sm:$0x1]
        %v8382 = vld [vmem:[%s2811 + $0x6c] sm:$0xf]
        %v8383 = vld [vmem:[%s2811 + $0x70] sm:$0xf]
        %v8384 = vld [vmem:[%s2811 + $0x74] sm:$0x1]
        %v8385 = vld [vmem:[%s2811 + $0x80] sm:$0xf]
        %v8386 = vld [vmem:[%s2811 + $0x84] sm:$0xf]
        %v8387 = vld [vmem:[%s2811 + $0x88] sm:$0x1]
        %v8388 = vld [vmem:[%s2811 + $0x94] sm:$0xf]
        %v8389 = vld [vmem:[%s2811 + $0x98] sm:$0xf]
        %v8390 = vld [vmem:[%s2811 + $0x9c] sm:$0x1]
        %v8391 = vld [vmem:[%s2811 + $0xa8] sm:$0xf]
        %v8392 = vld [vmem:[%s2811 + $0xac] sm:$0xf]
        %v8393 = vld [vmem:[%s2811 + $0xb0] sm:$0x1]
        %v8394 = vld [vmem:[%s2811 + $0xbc] sm:$0xf]
        %v8395 = vld [vmem:[%s2811 + $0xc0] sm:$0xf]
        %v8396 = vld [vmem:[%s2811 + $0xc4] sm:$0x1]
        %v8397 = vld [vmem:[%s2811 + $0xd0] sm:$0xf]
        %v8398 = vld [vmem:[%s2811 + $0xd4] sm:$0xf]
        %v8399 = vld [vmem:[%s2811 + $0xd8] sm:$0x1]
        %v8400 = vld [vmem:[%s2811 + $0xe4] sm:$0xf]
        %v8401 = vld [vmem:[%s2811 + $0xe8] sm:$0xf]
        %v8402 = vld [vmem:[%s2811 + $0xec] sm:$0x1]
        %v8403 = vld [vmem:[%s2811 + $0xf8] sm:$0xf]
        %v8404 = vld [vmem:[%s2811 + $0xfc] sm:$0xf]
        %v8405 = vld [vmem:[%s2811 + $0x100] sm:$0x1]
        %v8406 = vld [vmem:[%s2811 + $0x10c] sm:$0xf]
        %v8407 = vld [vmem:[%s2811 + $0x110] sm:$0xf]
        %v8408 = vld [vmem:[%s2811 + $0x114] sm:$0x1]
        %v8409 = vld [vmem:[%s2811 + $0x120] sm:$0xf]
        %v8410 = vld [vmem:[%s2811 + $0x124] sm:$0xf]
        %v8411 = vld [vmem:[%s2811 + $0x128] sm:$0x1]
        %v8412 = vld [vmem:[%s2811 + $0x134] sm:$0xf]
        %v8413 = vld [vmem:[%s2811 + $0x138] sm:$0xf]
        %v8414 = vld [vmem:[%s2811 + $0x13c] sm:$0x1]
        %v8463 = vunpack.c.l.b16 %v8367
        %v8464 = vunpack.c.l.b16 %v8368
        %v8465 = vunpack.c.l.b16 %v8369
        %v8466 = vunpack.c.l.b16 %v8370
        %v8467 = vunpack.c.l.b16 %v8371
        %v8468 = vunpack.c.l.b16 %v8372
        %v8469 = vunpack.c.l.b16 %v8373
        %v8470 = vunpack.c.l.b16 %v8374
        %v8471 = vunpack.c.l.b16 %v8375
        %v8472 = vunpack.c.l.b16 %v8376
        %v8473 = vunpack.c.l.b16 %v8377
        %v8474 = vunpack.c.l.b16 %v8378
        %v8475 = vunpack.c.l.b16 %v8379
        %v8476 = vunpack.c.l.b16 %v8380
        %v8477 = vunpack.c.l.b16 %v8381
        %v8478 = vunpack.c.l.b16 %v8382
        %v8479 = vunpack.c.l.b16 %v8383
        %v8480 = vunpack.c.l.b16 %v8384
        %v8481 = vunpack.c.l.b16 %v8385
        %v8482 = vunpack.c.l.b16 %v8386
        %v8483 = vunpack.c.l.b16 %v8387
        %v8484 = vunpack.c.l.b16 %v8388
        %v8485 = vunpack.c.l.b16 %v8389
        %v8486 = vunpack.c.l.b16 %v8390
        %v8487 = vunpack.c.l.b16 %v8391
        %v8488 = vunpack.c.l.b16 %v8392
        %v8489 = vunpack.c.l.b16 %v8393
        %v8490 = vunpack.c.l.b16 %v8394
        %v8491 = vunpack.c.l.b16 %v8395
        %v8492 = vunpack.c.l.b16 %v8396
        %v8493 = vunpack.c.l.b16 %v8397
        %v8494 = vunpack.c.l.b16 %v8398
        %v8495 = vunpack.c.l.b16 %v8399
        %v8496 = vunpack.c.l.b16 %v8400
        %v8497 = vunpack.c.l.b16 %v8401
        %v8498 = vunpack.c.l.b16 %v8402
        %v8499 = vunpack.c.l.b16 %v8403
        %v8500 = vunpack.c.l.b16 %v8404
        %v8501 = vunpack.c.l.b16 %v8405
        %v8502 = vunpack.c.l.b16 %v8406
        %v8503 = vunpack.c.l.b16 %v8407
        %v8504 = vunpack.c.l.b16 %v8408
        %v8505 = vunpack.c.l.b16 %v8409
        %v8506 = vunpack.c.l.b16 %v8410
        %v8507 = vunpack.c.l.b16 %v8411
        %v8508 = vunpack.c.l.b16 %v8412
        %v8509 = vunpack.c.l.b16 %v8413
        %v8510 = vunpack.c.l.b16 %v8414
        %v8511 = vpack.c.b16 %v8464, %v8463
        %v8512 = vpack.c.b16 %v8465, %v8465
        %v8513 = vpack.c.b16 %v8467, %v8466
        %v8514 = vpack.c.b16 %v8468, %v8468
        %v8515 = vpack.c.b16 %v8470, %v8469
        %v8516 = vpack.c.b16 %v8471, %v8471
        %v8517 = vpack.c.b16 %v8473, %v8472
        %v8518 = vpack.c.b16 %v8474, %v8474
        %v8519 = vpack.c.b16 %v8476, %v8475
        %v8520 = vpack.c.b16 %v8477, %v8477
        %v8521 = vpack.c.b16 %v8479, %v8478
        %v8522 = vpack.c.b16 %v8480, %v8480
        %v8523 = vpack.c.b16 %v8482, %v8481
        %v8524 = vpack.c.b16 %v8483, %v8483
        %v8525 = vpack.c.b16 %v8485, %v8484
        %v8526 = vpack.c.b16 %v8486, %v8486
        %v8527 = vpack.c.b16 %v8488, %v8487
        %v8528 = vpack.c.b16 %v8489, %v8489
        %v8529 = vpack.c.b16 %v8491, %v8490
        %v8530 = vpack.c.b16 %v8492, %v8492
        %v8531 = vpack.c.b16 %v8494, %v8493
        %v8532 = vpack.c.b16 %v8495, %v8495
        %v8533 = vpack.c.b16 %v8497, %v8496
        %v8534 = vpack.c.b16 %v8498, %v8498
        %v8535 = vpack.c.b16 %v8500, %v8499
        %v8536 = vpack.c.b16 %v8501, %v8501
        %v8537 = vpack.c.b16 %v8503, %v8502
        %v8538 = vpack.c.b16 %v8504, %v8504
        %v8539 = vpack.c.b16 %v8506, %v8505
        %v8540 = vpack.c.b16 %v8507, %v8507
        %v8541 = vpack.c.b16 %v8509, %v8508
        %v8542 = vpack.c.b16 %v8510, %v8510
        %v8544 = vshrl.u32 %v8511, 16
        %v8546 = vshll.u32 %v8511, 16
        %v8548 = vrot.slane %v8546, 1
        %v8549 = vor.u32 %v8544, %v8548
        %v8551 = vshll.u32 %v8512, 16
        %v8553 = vrot.slane %v8551, 1
        %v8554 = vsel %vm1562, %v8549, %v8553
        %v8556 = vshrl.u32 %v8513, 16
        %v8558 = vshll.u32 %v8513, 16
        %v8560 = vrot.slane %v8558, 1
        %v8561 = vor.u32 %v8556, %v8560
        %v8563 = vshll.u32 %v8514, 16
        %v8565 = vrot.slane %v8563, 1
        %v8566 = vsel %vm1562, %v8561, %v8565
        %v8568 = vshrl.u32 %v8515, 16
        %v8570 = vshll.u32 %v8515, 16
        %v8572 = vrot.slane %v8570, 1
        %v8573 = vor.u32 %v8568, %v8572
        %v8575 = vshll.u32 %v8516, 16
        %v8577 = vrot.slane %v8575, 1
        %v8578 = vsel %vm1562, %v8573, %v8577
        %v8580 = vshrl.u32 %v8517, 16
        %v8582 = vshll.u32 %v8517, 16
        %v8584 = vrot.slane %v8582, 1
        %v8585 = vor.u32 %v8580, %v8584
        %v8587 = vshll.u32 %v8518, 16
        %v8589 = vrot.slane %v8587, 1
        %v8590 = vsel %vm1562, %v8585, %v8589
        %v8592 = vshrl.u32 %v8519, 16
        %v8594 = vshll.u32 %v8519, 16
        %v8596 = vrot.slane %v8594, 1
        %v8597 = vor.u32 %v8592, %v8596
        %v8599 = vshll.u32 %v8520, 16
        %v8601 = vrot.slane %v8599, 1
        %v8602 = vsel %vm1562, %v8597, %v8601
        %v8604 = vshrl.u32 %v8521, 16
        %v8606 = vshll.u32 %v8521, 16
        %v8608 = vrot.slane %v8606, 1
        %v8609 = vor.u32 %v8604, %v8608
        %v8611 = vshll.u32 %v8522, 16
        %v8613 = vrot.slane %v8611, 1
        %v8614 = vsel %vm1562, %v8609, %v8613
        %v8616 = vshrl.u32 %v8523, 16
        %v8618 = vshll.u32 %v8523, 16
        %v8620 = vrot.slane %v8618, 1
        %v8621 = vor.u32 %v8616, %v8620
        %v8623 = vshll.u32 %v8524, 16
        %v8625 = vrot.slane %v8623, 1
        %v8626 = vsel %vm1562, %v8621, %v8625
        %v8628 = vshrl.u32 %v8525, 16
        %v8630 = vshll.u32 %v8525, 16
        %v8632 = vrot.slane %v8630, 1
        %v8633 = vor.u32 %v8628, %v8632
        %v8635 = vshll.u32 %v8526, 16
        %v8637 = vrot.slane %v8635, 1
        %v8638 = vsel %vm1562, %v8633, %v8637
        %v8640 = vshrl.u32 %v8527, 16
        %v8642 = vshll.u32 %v8527, 16
        %v8644 = vrot.slane %v8642, 1
        %v8645 = vor.u32 %v8640, %v8644
        %v8647 = vshll.u32 %v8528, 16
        %v8649 = vrot.slane %v8647, 1
        %v8650 = vsel %vm1562, %v8645, %v8649
        %v8652 = vshrl.u32 %v8529, 16
        %v8654 = vshll.u32 %v8529, 16
        %v8656 = vrot.slane %v8654, 1
        %v8657 = vor.u32 %v8652, %v8656
        %v8659 = vshll.u32 %v8530, 16
        %v8661 = vrot.slane %v8659, 1
        %v8662 = vsel %vm1562, %v8657, %v8661
        %v8664 = vshrl.u32 %v8531, 16
        %v8666 = vshll.u32 %v8531, 16
        %v8668 = vrot.slane %v8666, 1
        %v8669 = vor.u32 %v8664, %v8668
        %v8671 = vshll.u32 %v8532, 16
        %v8673 = vrot.slane %v8671, 1
        %v8674 = vsel %vm1562, %v8669, %v8673
        %v8676 = vshrl.u32 %v8533, 16
        %v8678 = vshll.u32 %v8533, 16
        %v8680 = vrot.slane %v8678, 1
        %v8681 = vor.u32 %v8676, %v8680
        %v8683 = vshll.u32 %v8534, 16
        %v8685 = vrot.slane %v8683, 1
        %v8686 = vsel %vm1562, %v8681, %v8685
        %v8688 = vshrl.u32 %v8535, 16
        %v8690 = vshll.u32 %v8535, 16
        %v8692 = vrot.slane %v8690, 1
        %v8693 = vor.u32 %v8688, %v8692
        %v8695 = vshll.u32 %v8536, 16
        %v8697 = vrot.slane %v8695, 1
        %v8698 = vsel %vm1562, %v8693, %v8697
        %v8700 = vshrl.u32 %v8537, 16
        %v8702 = vshll.u32 %v8537, 16
        %v8704 = vrot.slane %v8702, 1
        %v8705 = vor.u32 %v8700, %v8704
        %v8707 = vshll.u32 %v8538, 16
        %v8709 = vrot.slane %v8707, 1
        %v8710 = vsel %vm1562, %v8705, %v8709
        %v8712 = vshrl.u32 %v8539, 16
        %v8714 = vshll.u32 %v8539, 16
        %v8716 = vrot.slane %v8714, 1
        %v8717 = vor.u32 %v8712, %v8716
        %v8719 = vshll.u32 %v8540, 16
        %v8721 = vrot.slane %v8719, 1
        %v8722 = vsel %vm1562, %v8717, %v8721
        %v8724 = vshrl.u32 %v8541, 16
        %v8726 = vshll.u32 %v8541, 16
        %v8728 = vrot.slane %v8726, 1
        %v8729 = vor.u32 %v8724, %v8728
        %v8731 = vshll.u32 %v8542, 16
        %v8733 = vrot.slane %v8731, 1
        %v8734 = vsel %vm1562, %v8729, %v8733
        %8751 = vst [vmem:[#allocation3 + $0x40] sm:$0xff] %v8554
        %8752 = vst [vmem:[#allocation3 + $0x88] sm:$0xff] %v8566
        %8753 = vst [vmem:[#allocation3 + $0xd0] sm:$0xff] %v8578
        %8754 = vst [vmem:[#allocation3 + $0x118] sm:$0xff] %v8590
        %8755 = vst [vmem:[#allocation3 + $0x160] sm:$0xff] %v8602
        %8756 = vst [vmem:[#allocation3 + $0x1a8] sm:$0xff] %v8614
        %8757 = vst [vmem:[#allocation3 + $0x1f0] sm:$0xff] %v8626
        %8758 = vst [vmem:[#allocation3 + $0x238] sm:$0xff] %v8638
        %8759 = vst [vmem:[#allocation3 + $0x280] sm:$0xff] %v8650
        %8760 = vst [vmem:[#allocation3 + $0x2c8] sm:$0xff] %v8662
        %8761 = vst [vmem:[#allocation3 + $0x310] sm:$0xff] %v8674
        %8762 = vst [vmem:[#allocation3 + $0x358] sm:$0xff] %v8686
        %8763 = vst [vmem:[#allocation3 + $0x3a0] sm:$0xff] %v8698
        %8764 = vst [vmem:[#allocation3 + $0x3e8] sm:$0xff] %v8710
        %8765 = vst [vmem:[#allocation3 + $0x430] sm:$0xff] %v8722
        %8766 = vst [vmem:[#allocation3 + $0x478] sm:$0xff] %v8734
        %v8767 = vld [vmem:[#allocation3] sm:$0xff]
        %v8768 = vld [vmem:[#allocation3 + $0x8] sm:$0xff]
        %v8769 = vld [vmem:[#allocation3 + $0x10] sm:$0xff]
        %v8770 = vld [vmem:[#allocation3 + $0x18] sm:$0xff]
        %v8771 = vld [vmem:[#allocation3 + $0x20] sm:$0xff]
        %v8772 = vld [vmem:[#allocation3 + $0x28] sm:$0xff]
        %v8773 = vld [vmem:[#allocation3 + $0x30] sm:$0xff]
        %v8774 = vld [vmem:[#allocation3 + $0x38] sm:$0xff]
        %v8775 = vld [vmem:[#allocation3 + $0x40] sm:$0xff]
        %v8776 = vld [vmem:[#allocation3 + $0x48] sm:$0xff]
        %v8777 = vld [vmem:[#allocation3 + $0x50] sm:$0xff]
        %v8778 = vld [vmem:[#allocation3 + $0x58] sm:$0xff]
        %v8779 = vld [vmem:[#allocation3 + $0x60] sm:$0xff]
        %v8780 = vld [vmem:[#allocation3 + $0x68] sm:$0xff]
        %v8781 = vld [vmem:[#allocation3 + $0x70] sm:$0xff]
        %v8782 = vld [vmem:[#allocation3 + $0x78] sm:$0xff]
        %v8783 = vld [vmem:[#allocation3 + $0x80] sm:$0xff]
        %v8784 = vld [vmem:[#allocation3 + $0x88] sm:$0xff]
        %v8785 = vld [vmem:[#allocation3 + $0x90] sm:$0xff]
        %v8786 = vld [vmem:[#allocation3 + $0x98] sm:$0xff]
        %v8787 = vld [vmem:[#allocation3 + $0xa0] sm:$0xff]
        %v8788 = vld [vmem:[#allocation3 + $0xa8] sm:$0xff]
        %v8789 = vld [vmem:[#allocation3 + $0xb0] sm:$0xff]
        %v8790 = vld [vmem:[#allocation3 + $0xb8] sm:$0xff]
        %v8791 = vld [vmem:[#allocation3 + $0xc0] sm:$0xff]
        %v8792 = vld [vmem:[#allocation3 + $0xc8] sm:$0xff]
        %v8793 = vld [vmem:[#allocation3 + $0xd0] sm:$0xff]
        %v8794 = vld [vmem:[#allocation3 + $0xd8] sm:$0xff]
        %v8795 = vld [vmem:[#allocation3 + $0xe0] sm:$0xff]
        %v8796 = vld [vmem:[#allocation3 + $0xe8] sm:$0xff]
        %v8797 = vld [vmem:[#allocation3 + $0xf0] sm:$0xff]
        %v8798 = vld [vmem:[#allocation3 + $0xf8] sm:$0xff]
        %v8799 = vld [vmem:[#allocation3 + $0x100] sm:$0xff]
        %v8800 = vld [vmem:[#allocation3 + $0x108] sm:$0xff]
        %v8801 = vld [vmem:[#allocation3 + $0x110] sm:$0xff]
        %v8802 = vld [vmem:[#allocation3 + $0x118] sm:$0xff]
        %v8803 = vld [vmem:[#allocation3 + $0x120] sm:$0xff]
        %v8804 = vld [vmem:[#allocation3 + $0x128] sm:$0xff]
        %v8805 = vld [vmem:[#allocation3 + $0x130] sm:$0xff]
        %v8806 = vld [vmem:[#allocation3 + $0x138] sm:$0xff]
        %v8807 = vld [vmem:[#allocation3 + $0x140] sm:$0xff]
        %v8808 = vld [vmem:[#allocation3 + $0x148] sm:$0xff]
        %v8809 = vld [vmem:[#allocation3 + $0x150] sm:$0xff]
        %v8810 = vld [vmem:[#allocation3 + $0x158] sm:$0xff]
        %v8811 = vld [vmem:[#allocation3 + $0x160] sm:$0xff]
        %v8812 = vld [vmem:[#allocation3 + $0x168] sm:$0xff]
        %v8813 = vld [vmem:[#allocation3 + $0x170] sm:$0xff]
        %v8814 = vld [vmem:[#allocation3 + $0x178] sm:$0xff]
        %v8815 = vld [vmem:[#allocation3 + $0x180] sm:$0xff]
        %v8816 = vld [vmem:[#allocation3 + $0x188] sm:$0xff]
        %v8817 = vld [vmem:[#allocation3 + $0x190] sm:$0xff]
        %v8818 = vld [vmem:[#allocation3 + $0x198] sm:$0xff]
        %v8819 = vld [vmem:[#allocation3 + $0x1a0] sm:$0xff]
        %v8820 = vld [vmem:[#allocation3 + $0x1a8] sm:$0xff]
        %v8821 = vld [vmem:[#allocation3 + $0x1b0] sm:$0xff]
        %v8822 = vld [vmem:[#allocation3 + $0x1b8] sm:$0xff]
        %v8823 = vld [vmem:[#allocation3 + $0x1c0] sm:$0xff]
        %v8824 = vld [vmem:[#allocation3 + $0x1c8] sm:$0xff]
        %v8825 = vld [vmem:[#allocation3 + $0x1d0] sm:$0xff]
        %v8826 = vld [vmem:[#allocation3 + $0x1d8] sm:$0xff]
        %v8827 = vld [vmem:[#allocation3 + $0x1e0] sm:$0xff]
        %v8828 = vld [vmem:[#allocation3 + $0x1e8] sm:$0xff]
        %v8829 = vld [vmem:[#allocation3 + $0x1f0] sm:$0xff]
        %v8830 = vld [vmem:[#allocation3 + $0x1f8] sm:$0xff]
        %v8831 = vld [vmem:[#allocation3 + $0x200] sm:$0xff]
        %v8832 = vld [vmem:[#allocation3 + $0x208] sm:$0xff]
        %v8833 = vld [vmem:[#allocation3 + $0x210] sm:$0xff]
        %v8834 = vld [vmem:[#allocation3 + $0x218] sm:$0xff]
        %v8835 = vld [vmem:[#allocation3 + $0x220] sm:$0xff]
        %v8836 = vld [vmem:[#allocation3 + $0x228] sm:$0xff]
        %v8837 = vld [vmem:[#allocation3 + $0x230] sm:$0xff]
        %v8838 = vld [vmem:[#allocation3 + $0x238] sm:$0xff]
        %v8839 = vld [vmem:[#allocation3 + $0x240] sm:$0xff]
        %v8840 = vld [vmem:[#allocation3 + $0x248] sm:$0xff]
        %v8841 = vld [vmem:[#allocation3 + $0x250] sm:$0xff]
        %v8842 = vld [vmem:[#allocation3 + $0x258] sm:$0xff]
        %v8843 = vld [vmem:[#allocation3 + $0x260] sm:$0xff]
        %v8844 = vld [vmem:[#allocation3 + $0x268] sm:$0xff]
        %v8845 = vld [vmem:[#allocation3 + $0x270] sm:$0xff]
        %v8846 = vld [vmem:[#allocation3 + $0x278] sm:$0xff]
        %v8847 = vld [vmem:[#allocation3 + $0x280] sm:$0xff]
        %v8848 = vld [vmem:[#allocation3 + $0x288] sm:$0xff]
        %v8849 = vld [vmem:[#allocation3 + $0x290] sm:$0xff]
        %v8850 = vld [vmem:[#allocation3 + $0x298] sm:$0xff]
        %v8851 = vld [vmem:[#allocation3 + $0x2a0] sm:$0xff]
        %v8852 = vld [vmem:[#allocation3 + $0x2a8] sm:$0xff]
        %v8853 = vld [vmem:[#allocation3 + $0x2b0] sm:$0xff]
        %v8854 = vld [vmem:[#allocation3 + $0x2b8] sm:$0xff]
        %v8855 = vld [vmem:[#allocation3 + $0x2c0] sm:$0xff]
        %v8856 = vld [vmem:[#allocation3 + $0x2c8] sm:$0xff]
        %v8857 = vld [vmem:[#allocation3 + $0x2d0] sm:$0xff]
        %v8858 = vld [vmem:[#allocation3 + $0x2d8] sm:$0xff]
        %v8859 = vld [vmem:[#allocation3 + $0x2e0] sm:$0xff]
        %v8860 = vld [vmem:[#allocation3 + $0x2e8] sm:$0xff]
        %v8861 = vld [vmem:[#allocation3 + $0x2f0] sm:$0xff]
        %v8862 = vld [vmem:[#allocation3 + $0x2f8] sm:$0xff]
        %v8863 = vld [vmem:[#allocation3 + $0x300] sm:$0xff]
        %v8864 = vld [vmem:[#allocation3 + $0x308] sm:$0xff]
        %v8865 = vld [vmem:[#allocation3 + $0x310] sm:$0xff]
        %v8866 = vld [vmem:[#allocation3 + $0x318] sm:$0xff]
        %v8867 = vld [vmem:[#allocation3 + $0x320] sm:$0xff]
        %v8868 = vld [vmem:[#allocation3 + $0x328] sm:$0xff]
        %v8869 = vld [vmem:[#allocation3 + $0x330] sm:$0xff]
        %v8870 = vld [vmem:[#allocation3 + $0x338] sm:$0xff]
        %v8871 = vld [vmem:[#allocation3 + $0x340] sm:$0xff]
        %v8872 = vld [vmem:[#allocation3 + $0x348] sm:$0xff]
        %v8873 = vld [vmem:[#allocation3 + $0x350] sm:$0xff]
        %v8874 = vld [vmem:[#allocation3 + $0x358] sm:$0xff]
        %v8875 = vld [vmem:[#allocation3 + $0x360] sm:$0xff]
        %v8876 = vld [vmem:[#allocation3 + $0x368] sm:$0xff]
        %v8877 = vld [vmem:[#allocation3 + $0x370] sm:$0xff]
        %v8878 = vld [vmem:[#allocation3 + $0x378] sm:$0xff]
        %v8879 = vld [vmem:[#allocation3 + $0x380] sm:$0xff]
        %v8880 = vld [vmem:[#allocation3 + $0x388] sm:$0xff]
        %v8881 = vld [vmem:[#allocation3 + $0x390] sm:$0xff]
        %v8882 = vld [vmem:[#allocation3 + $0x398] sm:$0xff]
        %v8883 = vld [vmem:[#allocation3 + $0x3a0] sm:$0xff]
        %v8884 = vld [vmem:[#allocation3 + $0x3a8] sm:$0xff]
        %v8885 = vld [vmem:[#allocation3 + $0x3b0] sm:$0xff]
        %v8886 = vld [vmem:[#allocation3 + $0x3b8] sm:$0xff]
        %v8887 = vld [vmem:[#allocation3 + $0x3c0] sm:$0xff]
        %v8888 = vld [vmem:[#allocation3 + $0x3c8] sm:$0xff]
        %v8889 = vld [vmem:[#allocation3 + $0x3d0] sm:$0xff]
        %v8890 = vld [vmem:[#allocation3 + $0x3d8] sm:$0xff]
        %v8891 = vld [vmem:[#allocation3 + $0x3e0] sm:$0xff]
        %v8892 = vld [vmem:[#allocation3 + $0x3e8] sm:$0xff]
        %v8893 = vld [vmem:[#allocation3 + $0x3f0] sm:$0xff]
        %v8894 = vld [vmem:[#allocation3 + $0x3f8] sm:$0xff]
        %v8895 = vld [vmem:[#allocation3 + $0x400] sm:$0xff]
        %v8896 = vld [vmem:[#allocation3 + $0x408] sm:$0xff]
        %v8897 = vld [vmem:[#allocation3 + $0x410] sm:$0xff]
        %v8898 = vld [vmem:[#allocation3 + $0x418] sm:$0xff]
        %v8899 = vld [vmem:[#allocation3 + $0x420] sm:$0xff]
        %v8900 = vld [vmem:[#allocation3 + $0x428] sm:$0xff]
        %v8901 = vld [vmem:[#allocation3 + $0x430] sm:$0xff]
        %v8902 = vld [vmem:[#allocation3 + $0x438] sm:$0xff]
        %v8903 = vld [vmem:[#allocation3 + $0x440] sm:$0xff]
        %v8904 = vld [vmem:[#allocation3 + $0x448] sm:$0xff]
        %v8905 = vld [vmem:[#allocation3 + $0x450] sm:$0xff]
        %v8906 = vld [vmem:[#allocation3 + $0x458] sm:$0xff]
        %v8907 = vld [vmem:[#allocation3 + $0x460] sm:$0xff]
        %v8908 = vld [vmem:[#allocation3 + $0x468] sm:$0xff]
        %v8909 = vld [vmem:[#allocation3 + $0x470] sm:$0xff]
        %v8910 = vld [vmem:[#allocation3 + $0x478] sm:$0xff]
        %v8911 = vld [vmem:[#allocation10] sm:$0xf]
        %v8912 = vld [vmem:[#allocation10 + $0x4] sm:$0xf]
        %v8913 = vld [vmem:[#allocation10 + $0x8] sm:$0xf]
        %v8914 = vld [vmem:[#allocation10 + $0xc] sm:$0xf]
        %v8915 = vld [vmem:[#allocation10 + $0x10] sm:$0xf]
        %v8916 = vld [vmem:[#allocation10 + $0x14] sm:$0xf]
        %v8917 = vld [vmem:[#allocation10 + $0x18] sm:$0xf]
        %v8918 = vld [vmem:[#allocation10 + $0x1c] sm:$0xf]
        %v8919 = vld [vmem:[#allocation10 + $0x20] sm:$0xf]
        %v8920 = vld [vmem:[#allocation10 + $0x24] sm:$0xf]
        %v8921 = vld [vmem:[#allocation10 + $0x28] sm:$0xf]
        %v8922 = vld [vmem:[#allocation10 + $0x2c] sm:$0xf]
        %v8923 = vld [vmem:[#allocation10 + $0x30] sm:$0xf]
        %v8924 = vld [vmem:[#allocation10 + $0x34] sm:$0xf]
        %v8925 = vld [vmem:[#allocation10 + $0x38] sm:$0xf]
        %v8926 = vld [vmem:[#allocation10 + $0x3c] sm:$0xf]
        %v8927 = vld [vmem:[#allocation10 + $0x40] sm:$0xf]
        %v8928 = vld [vmem:[#allocation10 + $0x44] sm:$0xf]
        %v8929 = vld [vmem:[#allocation10 + $0x48] sm:$0xf]
        %v8930 = vld [vmem:[#allocation10 + $0x4c] sm:$0xf]
        %v8931 = vld [vmem:[#allocation10 + $0x50] sm:$0xf]
        %v8932 = vld [vmem:[#allocation10 + $0x54] sm:$0xf]
        %v8933 = vld [vmem:[#allocation10 + $0x58] sm:$0xf]
        %v8934 = vld [vmem:[#allocation10 + $0x5c] sm:$0xf]
        %v8935 = vld [vmem:[#allocation10 + $0x60] sm:$0xf]
        %v8936 = vld [vmem:[#allocation10 + $0x64] sm:$0xf]
        %v8937 = vld [vmem:[#allocation10 + $0x68] sm:$0xf]
        %v8938 = vld [vmem:[#allocation10 + $0x6c] sm:$0xf]
        %v8939 = vld [vmem:[#allocation10 + $0x70] sm:$0xf]
        %v8940 = vld [vmem:[#allocation10 + $0x74] sm:$0xf]
        %v8941 = vld [vmem:[#allocation10 + $0x78] sm:$0xf]
        %v8942 = vld [vmem:[#allocation10 + $0x7c] sm:$0xf]
        %v8943 = vld [vmem:[#allocation10 + $0x80] sm:$0xf]
        %v8944 = vld [vmem:[#allocation10 + $0x84] sm:$0xf]
        %v8945 = vld [vmem:[#allocation10 + $0x88] sm:$0xf]
        %v8946 = vld [vmem:[#allocation10 + $0x8c] sm:$0xf]
        %v8947 = vld [vmem:[#allocation10 + $0x90] sm:$0xf]
        %v8948 = vld [vmem:[#allocation10 + $0x94] sm:$0xf]
        %v8949 = vld [vmem:[#allocation10 + $0x98] sm:$0xf]
        %v8950 = vld [vmem:[#allocation10 + $0x9c] sm:$0xf]
        %v8951 = vld [vmem:[#allocation10 + $0xa0] sm:$0xf]
        %v8952 = vld [vmem:[#allocation10 + $0xa4] sm:$0xf]
        %v8953 = vld [vmem:[#allocation10 + $0xa8] sm:$0xf]
        %v8954 = vld [vmem:[#allocation10 + $0xac] sm:$0xf]
        %v8955 = vld [vmem:[#allocation10 + $0xb0] sm:$0xf]
        %v8956 = vld [vmem:[#allocation10 + $0xb4] sm:$0xf]
        %v8957 = vld [vmem:[#allocation10 + $0xb8] sm:$0xf]
        %v8958 = vld [vmem:[#allocation10 + $0xbc] sm:$0xf]
        %v8959 = vld [vmem:[#allocation10 + $0xc0] sm:$0xf]
        %v8960 = vld [vmem:[#allocation10 + $0xc4] sm:$0xf]
        %v8961 = vld [vmem:[#allocation10 + $0xc8] sm:$0xf]
        %v8962 = vld [vmem:[#allocation10 + $0xcc] sm:$0xf]
        %v8963 = vld [vmem:[#allocation10 + $0xd0] sm:$0xf]
        %v8964 = vld [vmem:[#allocation10 + $0xd4] sm:$0xf]
        %v8965 = vld [vmem:[#allocation10 + $0xd8] sm:$0xf]
        %v8966 = vld [vmem:[#allocation10 + $0xdc] sm:$0xf]
        %v8967 = vld [vmem:[#allocation10 + $0xe0] sm:$0xf]
        %v8968 = vld [vmem:[#allocation10 + $0xe4] sm:$0xf]
        %v8969 = vld [vmem:[#allocation10 + $0xe8] sm:$0xf]
        %v8970 = vld [vmem:[#allocation10 + $0xec] sm:$0xf]
        %v8971 = vld [vmem:[#allocation10 + $0xf0] sm:$0xf]
        %v8972 = vld [vmem:[#allocation10 + $0xf4] sm:$0xf]
        %v8973 = vld [vmem:[#allocation10 + $0xf8] sm:$0xf]
        %v8974 = vld [vmem:[#allocation10 + $0xfc] sm:$0xf]
        %v8975 = vld [vmem:[#allocation10 + $0x100] sm:$0xf]
        %v8976 = vld [vmem:[#allocation10 + $0x104] sm:$0xf]
        %v8977 = vld [vmem:[#allocation10 + $0x108] sm:$0xf]
        %v8978 = vld [vmem:[#allocation10 + $0x10c] sm:$0xf]
        %v8979 = vld [vmem:[#allocation10 + $0x110] sm:$0xf]
        %v8980 = vld [vmem:[#allocation10 + $0x114] sm:$0xf]
        %v8981 = vld [vmem:[#allocation10 + $0x118] sm:$0xf]
        %v8982 = vld [vmem:[#allocation10 + $0x11c] sm:$0xf]
        %v8983 = vld [vmem:[#allocation10 + $0x120] sm:$0xf]
        %v8984 = vld [vmem:[#allocation10 + $0x124] sm:$0xf]
        %v8985 = vld [vmem:[#allocation10 + $0x128] sm:$0xf]
        %v8986 = vld [vmem:[#allocation10 + $0x12c] sm:$0xf]
        %v8987 = vld [vmem:[#allocation10 + $0x130] sm:$0xf]
        %v8988 = vld [vmem:[#allocation10 + $0x134] sm:$0xf]
        %v8989 = vld [vmem:[#allocation10 + $0x138] sm:$0xf]
        %v8990 = vld [vmem:[#allocation10 + $0x13c] sm:$0xf]
        %v8991 = vld [vmem:[#allocation10 + $0x140] sm:$0xf]
        %v8992 = vld [vmem:[#allocation10 + $0x144] sm:$0xf]
        %v8993 = vld [vmem:[#allocation10 + $0x148] sm:$0xf]
        %v8994 = vld [vmem:[#allocation10 + $0x14c] sm:$0xf]
        %v8995 = vld [vmem:[#allocation10 + $0x150] sm:$0xf]
        %v8996 = vld [vmem:[#allocation10 + $0x154] sm:$0xf]
        %v8997 = vld [vmem:[#allocation10 + $0x158] sm:$0xf]
        %v8998 = vld [vmem:[#allocation10 + $0x15c] sm:$0xf]
        %v8999 = vld [vmem:[#allocation10 + $0x160] sm:$0xf]
        %v9000 = vld [vmem:[#allocation10 + $0x164] sm:$0xf]
        %v9001 = vld [vmem:[#allocation10 + $0x168] sm:$0xf]
        %v9002 = vld [vmem:[#allocation10 + $0x16c] sm:$0xf]
        %v9003 = vld [vmem:[#allocation10 + $0x170] sm:$0xf]
        %v9004 = vld [vmem:[#allocation10 + $0x174] sm:$0xf]
        %v9005 = vld [vmem:[#allocation10 + $0x178] sm:$0xf]
        %v9006 = vld [vmem:[#allocation10 + $0x17c] sm:$0xf]
        %v9007 = vld [vmem:[#allocation10 + $0x180] sm:$0xf]
        %v9008 = vld [vmem:[#allocation10 + $0x184] sm:$0xf]
        %v9009 = vld [vmem:[#allocation10 + $0x188] sm:$0xf]
        %v9010 = vld [vmem:[#allocation10 + $0x18c] sm:$0xf]
        %v9011 = vld [vmem:[#allocation10 + $0x190] sm:$0xf]
        %v9012 = vld [vmem:[#allocation10 + $0x194] sm:$0xf]
        %v9013 = vld [vmem:[#allocation10 + $0x198] sm:$0xf]
        %v9014 = vld [vmem:[#allocation10 + $0x19c] sm:$0xf]
        %v9015 = vld [vmem:[#allocation10 + $0x1a0] sm:$0xf]
        %v9016 = vld [vmem:[#allocation10 + $0x1a4] sm:$0xf]
        %v9017 = vld [vmem:[#allocation10 + $0x1a8] sm:$0xf]
        %v9018 = vld [vmem:[#allocation10 + $0x1ac] sm:$0xf]
        %v9019 = vld [vmem:[#allocation10 + $0x1b0] sm:$0xf]
        %v9020 = vld [vmem:[#allocation10 + $0x1b4] sm:$0xf]
        %v9021 = vld [vmem:[#allocation10 + $0x1b8] sm:$0xf]
        %v9022 = vld [vmem:[#allocation10 + $0x1bc] sm:$0xf]
        %v9023 = vld [vmem:[#allocation10 + $0x1c0] sm:$0xf]
        %v9024 = vld [vmem:[#allocation10 + $0x1c4] sm:$0xf]
        %v9025 = vld [vmem:[#allocation10 + $0x1c8] sm:$0xf]
        %v9026 = vld [vmem:[#allocation10 + $0x1cc] sm:$0xf]
        %v9027 = vld [vmem:[#allocation10 + $0x1d0] sm:$0xf]
        %v9028 = vld [vmem:[#allocation10 + $0x1d4] sm:$0xf]
        %v9029 = vld [vmem:[#allocation10 + $0x1d8] sm:$0xf]
        %v9030 = vld [vmem:[#allocation10 + $0x1dc] sm:$0xf]
        %v9031 = vld [vmem:[#allocation10 + $0x1e0] sm:$0xf]
        %v9032 = vld [vmem:[#allocation10 + $0x1e4] sm:$0xf]
        %v9033 = vld [vmem:[#allocation10 + $0x1e8] sm:$0xf]
        %v9034 = vld [vmem:[#allocation10 + $0x1ec] sm:$0xf]
        %v9035 = vld [vmem:[#allocation10 + $0x1f0] sm:$0xf]
        %v9036 = vld [vmem:[#allocation10 + $0x1f4] sm:$0xf]
        %v9037 = vld [vmem:[#allocation10 + $0x1f8] sm:$0xf]
        %v9038 = vld [vmem:[#allocation10 + $0x1fc] sm:$0xf]
        %v9039 = vld [vmem:[#allocation10 + $0x200] sm:$0xf]
        %v9040 = vld [vmem:[#allocation10 + $0x204] sm:$0xf]
        %v9041 = vld [vmem:[#allocation10 + $0x208] sm:$0xf]
        %v9042 = vld [vmem:[#allocation10 + $0x20c] sm:$0xf]
        %v9043 = vld [vmem:[#allocation10 + $0x210] sm:$0xf]
        %v9044 = vld [vmem:[#allocation10 + $0x214] sm:$0xf]
        %v9045 = vld [vmem:[#allocation10 + $0x218] sm:$0xf]
        %v9046 = vld [vmem:[#allocation10 + $0x21c] sm:$0xf]
        %v9047 = vld [vmem:[#allocation10 + $0x220] sm:$0xf]
        %v9048 = vld [vmem:[#allocation10 + $0x224] sm:$0xf]
        %v9049 = vld [vmem:[#allocation10 + $0x228] sm:$0xf]
        %v9050 = vld [vmem:[#allocation10 + $0x22c] sm:$0xf]
        %v9051 = vld [vmem:[#allocation10 + $0x230] sm:$0xf]
        %v9052 = vld [vmem:[#allocation10 + $0x234] sm:$0xf]
        %v9053 = vld [vmem:[#allocation10 + $0x238] sm:$0xf]
        %v9054 = vld [vmem:[#allocation10 + $0x23c] sm:$0xf]
        %v9199 = vunpack.c.l.b16 %v8911
        %v9200 = vunpack.c.l.b16 %v8912
        %v9201 = vunpack.c.l.b16 %v8913
        %v9202 = vunpack.c.l.b16 %v8914
        %v9203 = vunpack.c.l.b16 %v8915
        %v9204 = vunpack.c.l.b16 %v8916
        %v9205 = vunpack.c.l.b16 %v8917
        %v9206 = vunpack.c.l.b16 %v8918
        %v9207 = vunpack.c.l.b16 %v8919
        %v9208 = vunpack.c.l.b16 %v8920
        %v9209 = vunpack.c.l.b16 %v8921
        %v9210 = vunpack.c.l.b16 %v8922
        %v9211 = vunpack.c.l.b16 %v8923
        %v9212 = vunpack.c.l.b16 %v8924
        %v9213 = vunpack.c.l.b16 %v8925
        %v9214 = vunpack.c.l.b16 %v8926
        %v9215 = vunpack.c.l.b16 %v8927
        %v9216 = vunpack.c.l.b16 %v8928
        %v9217 = vunpack.c.l.b16 %v8929
        %v9218 = vunpack.c.l.b16 %v8930
        %v9219 = vunpack.c.l.b16 %v8931
        %v9220 = vunpack.c.l.b16 %v8932
        %v9221 = vunpack.c.l.b16 %v8933
        %v9222 = vunpack.c.l.b16 %v8934
        %v9223 = vunpack.c.l.b16 %v8935
        %v9224 = vunpack.c.l.b16 %v8936
        %v9225 = vunpack.c.l.b16 %v8937
        %v9226 = vunpack.c.l.b16 %v8938
        %v9227 = vunpack.c.l.b16 %v8939
        %v9228 = vunpack.c.l.b16 %v8940
        %v9229 = vunpack.c.l.b16 %v8941
        %v9230 = vunpack.c.l.b16 %v8942
        %v9231 = vunpack.c.l.b16 %v8943
        %v9232 = vunpack.c.l.b16 %v8944
        %v9233 = vunpack.c.l.b16 %v8945
        %v9234 = vunpack.c.l.b16 %v8946
        %v9235 = vunpack.c.l.b16 %v8947
        %v9236 = vunpack.c.l.b16 %v8948
        %v9237 = vunpack.c.l.b16 %v8949
        %v9238 = vunpack.c.l.b16 %v8950
        %v9239 = vunpack.c.l.b16 %v8951
        %v9240 = vunpack.c.l.b16 %v8952
        %v9241 = vunpack.c.l.b16 %v8953
        %v9242 = vunpack.c.l.b16 %v8954
        %v9243 = vunpack.c.l.b16 %v8955
        %v9244 = vunpack.c.l.b16 %v8956
        %v9245 = vunpack.c.l.b16 %v8957
        %v9246 = vunpack.c.l.b16 %v8958
        %v9247 = vunpack.c.l.b16 %v8959
        %v9248 = vunpack.c.l.b16 %v8960
        %v9249 = vunpack.c.l.b16 %v8961
        %v9250 = vunpack.c.l.b16 %v8962
        %v9251 = vunpack.c.l.b16 %v8963
        %v9252 = vunpack.c.l.b16 %v8964
        %v9253 = vunpack.c.l.b16 %v8965
        %v9254 = vunpack.c.l.b16 %v8966
        %v9255 = vunpack.c.l.b16 %v8967
        %v9256 = vunpack.c.l.b16 %v8968
        %v9257 = vunpack.c.l.b16 %v8969
        %v9258 = vunpack.c.l.b16 %v8970
        %v9259 = vunpack.c.l.b16 %v8971
        %v9260 = vunpack.c.l.b16 %v8972
        %v9261 = vunpack.c.l.b16 %v8973
        %v9262 = vunpack.c.l.b16 %v8974
        %v9263 = vunpack.c.l.b16 %v8975
        %v9264 = vunpack.c.l.b16 %v8976
        %v9265 = vunpack.c.l.b16 %v8977
        %v9266 = vunpack.c.l.b16 %v8978
        %v9267 = vunpack.c.l.b16 %v8979
        %v9268 = vunpack.c.l.b16 %v8980
        %v9269 = vunpack.c.l.b16 %v8981
        %v9270 = vunpack.c.l.b16 %v8982
        %v9271 = vunpack.c.l.b16 %v8983
        %v9272 = vunpack.c.l.b16 %v8984
        %v9273 = vunpack.c.l.b16 %v8985
        %v9274 = vunpack.c.l.b16 %v8986
        %v9275 = vunpack.c.l.b16 %v8987
        %v9276 = vunpack.c.l.b16 %v8988
        %v9277 = vunpack.c.l.b16 %v8989
        %v9278 = vunpack.c.l.b16 %v8990
        %v9279 = vunpack.c.l.b16 %v8991
        %v9280 = vunpack.c.l.b16 %v8992
        %v9281 = vunpack.c.l.b16 %v8993
        %v9282 = vunpack.c.l.b16 %v8994
        %v9283 = vunpack.c.l.b16 %v8995
        %v9284 = vunpack.c.l.b16 %v8996
        %v9285 = vunpack.c.l.b16 %v8997
        %v9286 = vunpack.c.l.b16 %v8998
        %v9287 = vunpack.c.l.b16 %v8999
        %v9288 = vunpack.c.l.b16 %v9000
        %v9289 = vunpack.c.l.b16 %v9001
        %v9290 = vunpack.c.l.b16 %v9002
        %v9291 = vunpack.c.l.b16 %v9003
        %v9292 = vunpack.c.l.b16 %v9004
        %v9293 = vunpack.c.l.b16 %v9005
        %v9294 = vunpack.c.l.b16 %v9006
        %v9295 = vunpack.c.l.b16 %v9007
        %v9296 = vunpack.c.l.b16 %v9008
        %v9297 = vunpack.c.l.b16 %v9009
        %v9298 = vunpack.c.l.b16 %v9010
        %v9299 = vunpack.c.l.b16 %v9011
        %v9300 = vunpack.c.l.b16 %v9012
        %v9301 = vunpack.c.l.b16 %v9013
        %v9302 = vunpack.c.l.b16 %v9014
        %v9303 = vunpack.c.l.b16 %v9015
        %v9304 = vunpack.c.l.b16 %v9016
        %v9305 = vunpack.c.l.b16 %v9017
        %v9306 = vunpack.c.l.b16 %v9018
        %v9307 = vunpack.c.l.b16 %v9019
        %v9308 = vunpack.c.l.b16 %v9020
        %v9309 = vunpack.c.l.b16 %v9021
        %v9310 = vunpack.c.l.b16 %v9022
        %v9311 = vunpack.c.l.b16 %v9023
        %v9312 = vunpack.c.l.b16 %v9024
        %v9313 = vunpack.c.l.b16 %v9025
        %v9314 = vunpack.c.l.b16 %v9026
        %v9315 = vunpack.c.l.b16 %v9027
        %v9316 = vunpack.c.l.b16 %v9028
        %v9317 = vunpack.c.l.b16 %v9029
        %v9318 = vunpack.c.l.b16 %v9030
        %v9319 = vunpack.c.l.b16 %v9031
        %v9320 = vunpack.c.l.b16 %v9032
        %v9321 = vunpack.c.l.b16 %v9033
        %v9322 = vunpack.c.l.b16 %v9034
        %v9323 = vunpack.c.l.b16 %v9035
        %v9324 = vunpack.c.l.b16 %v9036
        %v9325 = vunpack.c.l.b16 %v9037
        %v9326 = vunpack.c.l.b16 %v9038
        %v9327 = vunpack.c.l.b16 %v9039
        %v9328 = vunpack.c.l.b16 %v9040
        %v9329 = vunpack.c.l.b16 %v9041
        %v9330 = vunpack.c.l.b16 %v9042
        %v9331 = vunpack.c.l.b16 %v9043
        %v9332 = vunpack.c.l.b16 %v9044
        %v9333 = vunpack.c.l.b16 %v9045
        %v9334 = vunpack.c.l.b16 %v9046
        %v9335 = vunpack.c.l.b16 %v9047
        %v9336 = vunpack.c.l.b16 %v9048
        %v9337 = vunpack.c.l.b16 %v9049
        %v9338 = vunpack.c.l.b16 %v9050
        %v9339 = vunpack.c.l.b16 %v9051
        %v9340 = vunpack.c.l.b16 %v9052
        %v9341 = vunpack.c.l.b16 %v9053
        %v9342 = vunpack.c.l.b16 %v9054
        %v9343 = vpack.c.b16 %v9200, %v9199
        %v9344 = vpack.c.b16 %v9202, %v9201
        %v9345 = vpack.c.b16 %v9204, %v9203
        %v9346 = vpack.c.b16 %v9206, %v9205
        %v9347 = vpack.c.b16 %v9208, %v9207
        %v9348 = vpack.c.b16 %v9210, %v9209
        %v9349 = vpack.c.b16 %v9212, %v9211
        %v9350 = vpack.c.b16 %v9214, %v9213
        %v9351 = vpack.c.b16 %v9216, %v9215
        %v9352 = vpack.c.b16 %v9218, %v9217
        %v9353 = vpack.c.b16 %v9220, %v9219
        %v9354 = vpack.c.b16 %v9222, %v9221
        %v9355 = vpack.c.b16 %v9224, %v9223
        %v9356 = vpack.c.b16 %v9226, %v9225
        %v9357 = vpack.c.b16 %v9228, %v9227
        %v9358 = vpack.c.b16 %v9230, %v9229
        %v9359 = vpack.c.b16 %v9232, %v9231
        %v9360 = vpack.c.b16 %v9234, %v9233
        %v9361 = vpack.c.b16 %v9236, %v9235
        %v9362 = vpack.c.b16 %v9238, %v9237
        %v9363 = vpack.c.b16 %v9240, %v9239
        %v9364 = vpack.c.b16 %v9242, %v9241
        %v9365 = vpack.c.b16 %v9244, %v9243
        %v9366 = vpack.c.b16 %v9246, %v9245
        %v9367 = vpack.c.b16 %v9248, %v9247
        %v9368 = vpack.c.b16 %v9250, %v9249
        %v9369 = vpack.c.b16 %v9252, %v9251
        %v9370 = vpack.c.b16 %v9254, %v9253
        %v9371 = vpack.c.b16 %v9256, %v9255
        %v9372 = vpack.c.b16 %v9258, %v9257
        %v9373 = vpack.c.b16 %v9260, %v9259
        %v9374 = vpack.c.b16 %v9262, %v9261
        %v9375 = vpack.c.b16 %v9264, %v9263
        %v9376 = vpack.c.b16 %v9266, %v9265
        %v9377 = vpack.c.b16 %v9268, %v9267
        %v9378 = vpack.c.b16 %v9270, %v9269
        %v9379 = vpack.c.b16 %v9272, %v9271
        %v9380 = vpack.c.b16 %v9274, %v9273
        %v9381 = vpack.c.b16 %v9276, %v9275
        %v9382 = vpack.c.b16 %v9278, %v9277
        %v9383 = vpack.c.b16 %v9280, %v9279
        %v9384 = vpack.c.b16 %v9282, %v9281
        %v9385 = vpack.c.b16 %v9284, %v9283
        %v9386 = vpack.c.b16 %v9286, %v9285
        %v9387 = vpack.c.b16 %v9288, %v9287
        %v9388 = vpack.c.b16 %v9290, %v9289
        %v9389 = vpack.c.b16 %v9292, %v9291
        %v9390 = vpack.c.b16 %v9294, %v9293
        %v9391 = vpack.c.b16 %v9296, %v9295
        %v9392 = vpack.c.b16 %v9298, %v9297
        %v9393 = vpack.c.b16 %v9300, %v9299
        %v9394 = vpack.c.b16 %v9302, %v9301
        %v9395 = vpack.c.b16 %v9304, %v9303
        %v9396 = vpack.c.b16 %v9306, %v9305
        %v9397 = vpack.c.b16 %v9308, %v9307
        %v9398 = vpack.c.b16 %v9310, %v9309
        %v9399 = vpack.c.b16 %v9312, %v9311
        %v9400 = vpack.c.b16 %v9314, %v9313
        %v9401 = vpack.c.b16 %v9316, %v9315
        %v9402 = vpack.c.b16 %v9318, %v9317
        %v9403 = vpack.c.b16 %v9320, %v9319
        %v9404 = vpack.c.b16 %v9322, %v9321
        %v9405 = vpack.c.b16 %v9324, %v9323
        %v9406 = vpack.c.b16 %v9326, %v9325
        %v9407 = vpack.c.b16 %v9328, %v9327
        %v9408 = vpack.c.b16 %v9330, %v9329
        %v9409 = vpack.c.b16 %v9332, %v9331
        %v9410 = vpack.c.b16 %v9334, %v9333
        %v9411 = vpack.c.b16 %v9336, %v9335
        %v9412 = vpack.c.b16 %v9338, %v9337
        %v9413 = vpack.c.b16 %v9340, %v9339
        %v9414 = vpack.c.b16 %v9342, %v9341
        %9487 = vmatprep.subr.bf16.mxu0 0
        %9488 = vmatpush1.bf16.msra.mxu0 %v9343
        %9489 = vmatprep.subr.bf16.mxu0 0
        %9490 = vmatpush1.bf16.msra.mxu0 %v9344
        %9491 = vmatprep.subr.bf16.mxu0 0
        %9492 = vmatpush1.bf16.msra.mxu0 %v9345
        %9493 = vmatprep.subr.bf16.mxu0 0
        %9494 = vmatpush1.bf16.msra.mxu0 %v9346
        %9495 = vmatprep.subr.bf16.mxu0 0
        %9496 = vmatpush1.bf16.msra.mxu0 %v9347
        %9497 = vmatprep.subr.bf16.mxu0 0
        %9498 = vmatpush1.bf16.msra.mxu0 %v9348
        %9499 = vmatprep.subr.bf16.mxu0 0
        %9500 = vmatpush1.bf16.msra.mxu0 %v9349
        %9501 = vmatprep.subr.bf16.mxu0 0
        %9502 = vmatpush1.bf16.msra.mxu0 %v9350
        %9503 = vmatprep.subr.bf16.mxu0 0
        %9504 = vmatpush1.bf16.msra.mxu0 %v9351
        %9505 = vmatprep.subr.bf16.mxu0 0
        %9506 = vmatpush1.bf16.msra.mxu0 %v9352
        %9507 = vmatprep.subr.bf16.mxu0 0
        %9508 = vmatpush1.bf16.msra.mxu0 %v9353
        %9509 = vmatprep.subr.bf16.mxu0 0
        %9510 = vmatpush1.bf16.msra.mxu0 %v9354
        %9511 = vmatprep.subr.bf16.mxu0 0
        %9512 = vmatpush1.bf16.msra.mxu0 %v9355
        %9513 = vmatprep.subr.bf16.mxu0 0
        %9514 = vmatpush1.bf16.msra.mxu0 %v9356
        %9515 = vmatprep.subr.bf16.mxu0 0
        %9516 = vmatpush1.bf16.msra.mxu0 %v9357
        %9517 = vmatprep.subr.bf16.mxu0 0
        %9518 = vmatpush1.bf16.msra.mxu0 %v9358
        %9519 = vmatprep.mubr.bf16.mxu0 %v8768
        %9520 = vmatmul.mubr.bf16.gmra.mrb[0].mxu0 %v8767
        %v9521 = vpop.f32.mrb[0].mxu0
        %v9522 = vadd.f32 0.0, %v9521
        %v9523 = vpop.f32.mrb[0].mxu0
        %v9524 = vpop.f32.mrb[0].mxu0
        %v9525 = vadd.f32 0.0, %v9524
        %v9526 = vpop.f32.mrb[0].mxu0
        %9527 = vmatprep.mubr.bf16.mxu0 %v8777
        %9528 = vmatmul.mubr.bf16.gmra.mrb[0].mxu0 %v8776
        %v9529 = vpop.f32.mrb[0].mxu0
        %v9530 = vadd.f32 0.0, %v9529
        %v9531 = vpop.f32.mrb[0].mxu0
        %v9532 = vpop.f32.mrb[0].mxu0
        %v9533 = vadd.f32 0.0, %v9532
        %v9534 = vpop.f32.mrb[0].mxu0
        %9535 = vmatprep.mubr.bf16.mxu0 %v8786
        %9536 = vmatmul.mubr.bf16.gmra.mrb[0].mxu0 %v8785
        %v9537 = vpop.f32.mrb[0].mxu0
        %v9538 = vadd.f32 0.0, %v9537
        %v9539 = vpop.f32.mrb[0].mxu0
        %v9540 = vpop.f32.mrb[0].mxu0
        %v9541 = vadd.f32 0.0, %v9540
        %v9542 = vpop.f32.mrb[0].mxu0
        %9543 = vmatprep.mubr.bf16.mxu0 %v8795
        %9544 = vmatmul.mubr.bf16.gmra.mrb[0].mxu0 %v8794
        %v9545 = vpop.f32.mrb[0].mxu0
        %v9546 = vadd.f32 0.0, %v9545
        %v9547 = vpop.f32.mrb[0].mxu0
        %v9548 = vpop.f32.mrb[0].mxu0
        %v9549 = vadd.f32 0.0, %v9548
        %v9550 = vpop.f32.mrb[0].mxu0
        %9551 = vmatprep.mubr.bf16.mxu0 %v8804
        %9552 = vmatmul.mubr.bf16.gmra.mrb[0].mxu0 %v8803
        %v9553 = vpop.f32.mrb[0].mxu0
        %v9554 = vadd.f32 0.0, %v9553
        %v9555 = vpop.f32.mrb[0].mxu0
        %v9556 = vpop.f32.mrb[0].mxu0
        %v9557 = vadd.f32 0.0, %v9556
        %v9558 = vpop.f32.mrb[0].mxu0
        %9559 = vmatprep.mubr.bf16.mxu0 %v8813
        %9560 = vmatmul.mubr.bf16.gmra.mrb[0].mxu0 %v8812
        %v9561 = vpop.f32.mrb[0].mxu0
        %v9562 = vadd.f32 0.0, %v9561
        %v9563 = vpop.f32.mrb[0].mxu0
        %v9564 = vpop.f32.mrb[0].mxu0
        %v9565 = vadd.f32 0.0, %v9564
        %v9566 = vpop.f32.mrb[0].mxu0
        %9567 = vmatprep.mubr.bf16.mxu0 %v8822
        %9568 = vmatmul.mubr.bf16.gmra.mrb[0].mxu0 %v8821
        %v9569 = vpop.f32.mrb[0].mxu0
        %v9570 = vadd.f32 0.0, %v9569
        %v9571 = vpop.f32.mrb[0].mxu0
        %v9572 = vpop.f32.mrb[0].mxu0
        %v9573 = vadd.f32 0.0, %v9572
        %v9574 = vpop.f32.mrb[0].mxu0
        %9575 = vmatprep.mubr.bf16.mxu0 %v8831
        %9576 = vmatmul.mubr.bf16.gmra.mrb[0].mxu0 %v8830
        %v9577 = vpop.f32.mrb[0].mxu0
        %v9578 = vadd.f32 0.0, %v9577
        %v9579 = vpop.f32.mrb[0].mxu0
        %v9580 = vpop.f32.mrb[0].mxu0
        %v9581 = vadd.f32 0.0, %v9580
        %v9582 = vpop.f32.mrb[0].mxu0
        %9583 = vmatprep.mubr.bf16.mxu0 %v8840
        %9584 = vmatmul.mubr.bf16.gmra.mrb[0].mxu0 %v8839
        %v9585 = vpop.f32.mrb[0].mxu0
        %v9586 = vadd.f32 0.0, %v9585
        %v9587 = vpop.f32.mrb[0].mxu0
        %v9588 = vpop.f32.mrb[0].mxu0
        %v9589 = vadd.f32 0.0, %v9588
        %v9590 = vpop.f32.mrb[0].mxu0
        %9591 = vmatprep.mubr.bf16.mxu0 %v8849
        %9592 = vmatmul.mubr.bf16.gmra.mrb[0].mxu0 %v8848
        %v9593 = vpop.f32.mrb[0].mxu0
        %v9594 = vadd.f32 0.0, %v9593
        %v9595 = vpop.f32.mrb[0].mxu0
        %v9596 = vpop.f32.mrb[0].mxu0
        %v9597 = vadd.f32 0.0, %v9596
        %v9598 = vpop.f32.mrb[0].mxu0
        %9599 = vmatprep.mubr.bf16.mxu0 %v8858
        %9600 = vmatmul.mubr.bf16.gmra.mrb[0].mxu0 %v8857
        %v9601 = vpop.f32.mrb[0].mxu0
        %v9602 = vadd.f32 0.0, %v9601
        %v9603 = vpop.f32.mrb[0].mxu0
        %v9604 = vpop.f32.mrb[0].mxu0
        %v9605 = vadd.f32 0.0, %v9604
        %v9606 = vpop.f32.mrb[0].mxu0
        %9607 = vmatprep.mubr.bf16.mxu0 %v8867
        %9608 = vmatmul.mubr.bf16.gmra.mrb[0].mxu0 %v8866
        %v9609 = vpop.f32.mrb[0].mxu0
        %v9610 = vadd.f32 0.0, %v9609
        %v9611 = vpop.f32.mrb[0].mxu0
        %v9612 = vpop.f32.mrb[0].mxu0
        %v9613 = vadd.f32 0.0, %v9612
        %v9614 = vpop.f32.mrb[0].mxu0
        %9615 = vmatprep.mubr.bf16.mxu0 %v8876
        %9616 = vmatmul.mubr.bf16.gmra.mrb[0].mxu0 %v8875
        %v9617 = vpop.f32.mrb[0].mxu0
        %v9618 = vadd.f32 0.0, %v9617
        %v9619 = vpop.f32.mrb[0].mxu0
        %v9620 = vpop.f32.mrb[0].mxu0
        %v9621 = vadd.f32 0.0, %v9620
        %v9622 = vpop.f32.mrb[0].mxu0
        %9623 = vmatprep.mubr.bf16.mxu0 %v8885
        %9624 = vmatmul.mubr.bf16.gmra.mrb[0].mxu0 %v8884
        %v9625 = vpop.f32.mrb[0].mxu0
        %v9626 = vadd.f32 0.0, %v9625
        %v9627 = vpop.f32.mrb[0].mxu0
        %v9628 = vpop.f32.mrb[0].mxu0
        %v9629 = vadd.f32 0.0, %v9628
        %v9630 = vpop.f32.mrb[0].mxu0
        %9631 = vmatprep.mubr.bf16.mxu0 %v8894
        %9632 = vmatmul.mubr.bf16.gmra.mrb[0].mxu0 %v8893
        %v9633 = vpop.f32.mrb[0].mxu0
        %v9634 = vadd.f32 0.0, %v9633
        %v9635 = vpop.f32.mrb[0].mxu0
        %v9636 = vpop.f32.mrb[0].mxu0
        %v9637 = vadd.f32 0.0, %v9636
        %v9638 = vpop.f32.mrb[0].mxu0
        %9639 = vmatprep.mubr.bf16.mxu0 %v8903
        %9640 = vmatmul.mubr.bf16.gmra.mrb[0].mxu0 %v8902
        %v9641 = vpop.f32.mrb[0].mxu0
        %v9642 = vadd.f32 0.0, %v9641
        %v9643 = vpop.f32.mrb[0].mxu0
        %v9644 = vpop.f32.mrb[0].mxu0
        %v9645 = vadd.f32 0.0, %v9644
        %v9646 = vpop.f32.mrb[0].mxu0
        %9647 = vdwg.mxu0
        %9648 = vmatprep.subr.bf16.mxu0 0
        %9649 = vmatpush1.bf16.msra.mxu0 %v9359
        %9650 = vmatprep.subr.bf16.mxu0 0
        %9651 = vmatpush1.bf16.msra.mxu0 %v9360
        %9652 = vmatprep.subr.bf16.mxu0 0
        %9653 = vmatpush1.bf16.msra.mxu0 %v9361
        %9654 = vmatprep.subr.bf16.mxu0 0
        %9655 = vmatpush1.bf16.msra.mxu0 %v9362
        %9656 = vmatprep.subr.bf16.mxu0 0
        %9657 = vmatpush1.bf16.msra.mxu0 %v9363
        %9658 = vmatprep.subr.bf16.mxu0 0
        %9659 = vmatpush1.bf16.msra.mxu0 %v9364
        %9660 = vmatprep.subr.bf16.mxu0 0
        %9661 = vmatpush1.bf16.msra.mxu0 %v9365
        %9662 = vmatprep.subr.bf16.mxu0 0
        %9663 = vmatpush1.bf16.msra.mxu0 %v9366
        %9664 = vmatprep.subr.bf16.mxu0 0
        %9665 = vmatpush1.bf16.msra.mxu0 %v9367
        %9666 = vmatprep.subr.bf16.mxu0 0
        %9667 = vmatpush1.bf16.msra.mxu0 %v9368
        %9668 = vmatprep.subr.bf16.mxu0 0
        %9669 = vmatpush1.bf16.msra.mxu0 %v9369
        %9670 = vmatprep.subr.bf16.mxu0 0
        %9671 = vmatpush1.bf16.msra.mxu0 %v9370
        %9672 = vmatprep.subr.bf16.mxu0 0
        %9673 = vmatpush1.bf16.msra.mxu0 %v9371
        %9674 = vmatprep.subr.bf16.mxu0 0
        %9675 = vmatpush1.bf16.msra.mxu0 %v9372
        %9676 = vmatprep.subr.bf16.mxu0 0
        %9677 = vmatpush1.bf16.msra.mxu0 %v9373
        %9678 = vmatprep.subr.bf16.mxu0 0
        %9679 = vmatpush1.bf16.msra.mxu0 %v9374
        %9680 = vmatprep.mubr.bf16.mxu0 %v8770
        %9681 = vmatmul.mubr.bf16.gmra.mrb[0].mxu0 %v8769
        %v9682 = vpop.f32.mrb[0].mxu0
        %v9683 = vadd.f32 %v9522, %v9682
        %v9684 = vpop.f32.mrb[0].mxu0
        %v9685 = vpop.f32.mrb[0].mxu0
        %v9686 = vadd.f32 %v9525, %v9685
        %v9687 = vpop.f32.mrb[0].mxu0
        %9688 = vmatprep.mubr.bf16.mxu0 %v8779
        %9689 = vmatmul.mubr.bf16.gmra.mrb[0].mxu0 %v8778
        %v9690 = vpop.f32.mrb[0].mxu0
        %v9691 = vadd.f32 %v9530, %v9690
        %v9692 = vpop.f32.mrb[0].mxu0
        %v9693 = vpop.f32.mrb[0].mxu0
        %v9694 = vadd.f32 %v9533, %v9693
        %v9695 = vpop.f32.mrb[0].mxu0
        %9696 = vmatprep.mubr.bf16.mxu0 %v8788
        %9697 = vmatmul.mubr.bf16.gmra.mrb[0].mxu0 %v8787
        %v9698 = vpop.f32.mrb[0].mxu0
        %v9699 = vadd.f32 %v9538, %v9698
        %v9700 = vpop.f32.mrb[0].mxu0
        %v9701 = vpop.f32.mrb[0].mxu0
        %v9702 = vadd.f32 %v9541, %v9701
        %v9703 = vpop.f32.mrb[0].mxu0
        %9704 = vmatprep.mubr.bf16.mxu0 %v8797
        %9705 = vmatmul.mubr.bf16.gmra.mrb[0].mxu0 %v8796
        %v9706 = vpop.f32.mrb[0].mxu0
        %v9707 = vadd.f32 %v9546, %v9706
        %v9708 = vpop.f32.mrb[0].mxu0
        %v9709 = vpop.f32.mrb[0].mxu0
        %v9710 = vadd.f32 %v9549, %v9709
        %v9711 = vpop.f32.mrb[0].mxu0
        %9712 = vmatprep.mubr.bf16.mxu0 %v8806
        %9713 = vmatmul.mubr.bf16.gmra.mrb[0].mxu0 %v8805
        %v9714 = vpop.f32.mrb[0].mxu0
        %v9715 = vadd.f32 %v9554, %v9714
        %v9716 = vpop.f32.mrb[0].mxu0
        %v9717 = vpop.f32.mrb[0].mxu0
        %v9718 = vadd.f32 %v9557, %v9717
        %v9719 = vpop.f32.mrb[0].mxu0
        %9720 = vmatprep.mubr.bf16.mxu0 %v8815
        %9721 = vmatmul.mubr.bf16.gmra.mrb[0].mxu0 %v8814
        %v9722 = vpop.f32.mrb[0].mxu0
        %v9723 = vadd.f32 %v9562, %v9722
        %v9724 = vpop.f32.mrb[0].mxu0
        %v9725 = vpop.f32.mrb[0].mxu0
        %v9726 = vadd.f32 %v9565, %v9725
        %v9727 = vpop.f32.mrb[0].mxu0
        %9728 = vmatprep.mubr.bf16.mxu0 %v8824
        %9729 = vmatmul.mubr.bf16.gmra.mrb[0].mxu0 %v8823
        %v9730 = vpop.f32.mrb[0].mxu0
        %v9731 = vadd.f32 %v9570, %v9730
        %v9732 = vpop.f32.mrb[0].mxu0
        %v9733 = vpop.f32.mrb[0].mxu0
        %v9734 = vadd.f32 %v9573, %v9733
        %v9735 = vpop.f32.mrb[0].mxu0
        %9736 = vmatprep.mubr.bf16.mxu0 %v8833
        %9737 = vmatmul.mubr.bf16.gmra.mrb[0].mxu0 %v8832
        %v9738 = vpop.f32.mrb[0].mxu0
        %v9739 = vadd.f32 %v9578, %v9738
        %v9740 = vpop.f32.mrb[0].mxu0
        %v9741 = vpop.f32.mrb[0].mxu0
        %v9742 = vadd.f32 %v9581, %v9741
        %v9743 = vpop.f32.mrb[0].mxu0
        %9744 = vmatprep.mubr.bf16.mxu0 %v8842
        %9745 = vmatmul.mubr.bf16.gmra.mrb[0].mxu0 %v8841
        %v9746 = vpop.f32.mrb[0].mxu0
        %v9747 = vadd.f32 %v9586, %v9746
        %v9748 = vpop.f32.mrb[0].mxu0
        %v9749 = vpop.f32.mrb[0].mxu0
        %v9750 = vadd.f32 %v9589, %v9749
        %v9751 = vpop.f32.mrb[0].mxu0
        %9752 = vmatprep.mubr.bf16.mxu0 %v8851
        %9753 = vmatmul.mubr.bf16.gmra.mrb[0].mxu0 %v8850
        %v9754 = vpop.f32.mrb[0].mxu0
        %v9755 = vadd.f32 %v9594, %v9754
        %v9756 = vpop.f32.mrb[0].mxu0
        %v9757 = vpop.f32.mrb[0].mxu0
        %v9758 = vadd.f32 %v9597, %v9757
        %v9759 = vpop.f32.mrb[0].mxu0
        %9760 = vmatprep.mubr.bf16.mxu0 %v8860
        %9761 = vmatmul.mubr.bf16.gmra.mrb[0].mxu0 %v8859
        %v9762 = vpop.f32.mrb[0].mxu0
        %v9763 = vadd.f32 %v9602, %v9762
        %v9764 = vpop.f32.mrb[0].mxu0
        %v9765 = vpop.f32.mrb[0].mxu0
        %v9766 = vadd.f32 %v9605, %v9765
        %v9767 = vpop.f32.mrb[0].mxu0
        %9768 = vmatprep.mubr.bf16.mxu0 %v8869
        %9769 = vmatmul.mubr.bf16.gmra.mrb[0].mxu0 %v8868
        %v9770 = vpop.f32.mrb[0].mxu0
        %v9771 = vadd.f32 %v9610, %v9770
        %v9772 = vpop.f32.mrb[0].mxu0
        %v9773 = vpop.f32.mrb[0].mxu0
        %v9774 = vadd.f32 %v9613, %v9773
        %v9775 = vpop.f32.mrb[0].mxu0
        %9776 = vmatprep.mubr.bf16.mxu0 %v8878
        %9777 = vmatmul.mubr.bf16.gmra.mrb[0].mxu0 %v8877
        %v9778 = vpop.f32.mrb[0].mxu0
        %v9779 = vadd.f32 %v9618, %v9778
        %v9780 = vpop.f32.mrb[0].mxu0
        %v9781 = vpop.f32.mrb[0].mxu0
        %v9782 = vadd.f32 %v9621, %v9781
        %v9783 = vpop.f32.mrb[0].mxu0
        %9784 = vmatprep.mubr.bf16.mxu0 %v8887
        %9785 = vmatmul.mubr.bf16.gmra.mrb[0].mxu0 %v8886
        %v9786 = vpop.f32.mrb[0].mxu0
        %v9787 = vadd.f32 %v9626, %v9786
        %v9788 = vpop.f32.mrb[0].mxu0
        %v9789 = vpop.f32.mrb[0].mxu0
        %v9790 = vadd.f32 %v9629, %v9789
        %v9791 = vpop.f32.mrb[0].mxu0
        %9792 = vmatprep.mubr.bf16.mxu0 %v8896
        %9793 = vmatmul.mubr.bf16.gmra.mrb[0].mxu0 %v8895
        %v9794 = vpop.f32.mrb[0].mxu0
        %v9795 = vadd.f32 %v9634, %v9794
        %v9796 = vpop.f32.mrb[0].mxu0
        %v9797 = vpop.f32.mrb[0].mxu0
        %v9798 = vadd.f32 %v9637, %v9797
        %v9799 = vpop.f32.mrb[0].mxu0
        %9800 = vmatprep.mubr.bf16.mxu0 %v8905
        %9801 = vmatmul.mubr.bf16.gmra.mrb[0].mxu0 %v8904
        %v9802 = vpop.f32.mrb[0].mxu0
        %v9803 = vadd.f32 %v9642, %v9802
        %v9804 = vpop.f32.mrb[0].mxu0
        %v9805 = vpop.f32.mrb[0].mxu0
        %v9806 = vadd.f32 %v9645, %v9805
        %v9807 = vpop.f32.mrb[0].mxu0
        %9808 = vdwg.mxu0
        %9809 = vmatprep.subr.bf16.mxu0 0
        %9810 = vmatpush1.bf16.msra.mxu0 %v9375
        %9811 = vmatprep.subr.bf16.mxu0 0
        %9812 = vmatpush1.bf16.msra.mxu0 %v9376
        %9813 = vmatprep.subr.bf16.mxu0 0
        %9814 = vmatpush1.bf16.msra.mxu0 %v9377
        %9815 = vmatprep.subr.bf16.mxu0 0
        %9816 = vmatpush1.bf16.msra.mxu0 %v9378
        %9817 = vmatprep.subr.bf16.mxu0 0
        %9818 = vmatpush1.bf16.msra.mxu0 %v9379
        %9819 = vmatprep.subr.bf16.mxu0 0
        %9820 = vmatpush1.bf16.msra.mxu0 %v9380
        %9821 = vmatprep.subr.bf16.mxu0 0
        %9822 = vmatpush1.bf16.msra.mxu0 %v9381
        %9823 = vmatprep.subr.bf16.mxu0 0
        %9824 = vmatpush1.bf16.msra.mxu0 %v9382
        %9825 = vmatprep.subr.bf16.mxu0 0
        %9826 = vmatpush1.bf16.msra.mxu0 %v9383
        %9827 = vmatprep.subr.bf16.mxu0 0
        %9828 = vmatpush1.bf16.msra.mxu0 %v9384
        %9829 = vmatprep.subr.bf16.mxu0 0
        %9830 = vmatpush1.bf16.msra.mxu0 %v9385
        %9831 = vmatprep.subr.bf16.mxu0 0
        %9832 = vmatpush1.bf16.msra.mxu0 %v9386
        %9833 = vmatprep.subr.bf16.mxu0 0
        %9834 = vmatpush1.bf16.msra.mxu0 %v9387
        %9835 = vmatprep.subr.bf16.mxu0 0
        %9836 = vmatpush1.bf16.msra.mxu0 %v9388
        %9837 = vmatprep.subr.bf16.mxu0 0
        %9838 = vmatpush1.bf16.msra.mxu0 %v9389
        %9839 = vmatprep.subr.bf16.mxu0 0
        %9840 = vmatpush1.bf16.msra.mxu0 %v9390
        %9841 = vmatprep.mubr.bf16.mxu0 %v8772
        %9842 = vmatmul.mubr.bf16.gmra.mrb[0].mxu0 %v8771
        %v9843 = vpop.f32.mrb[0].mxu0
        %v9844 = vadd.f32 %v9683, %v9843
        %v9845 = vpop.f32.mrb[0].mxu0
        %v9846 = vpop.f32.mrb[0].mxu0
        %v9847 = vadd.f32 %v9686, %v9846
        %v9848 = vpop.f32.mrb[0].mxu0
        %9849 = vmatprep.mubr.bf16.mxu0 %v8781
        %9850 = vmatmul.mubr.bf16.gmra.mrb[0].mxu0 %v8780
        %v9851 = vpop.f32.mrb[0].mxu0
        %v9852 = vadd.f32 %v9691, %v9851
        %v9853 = vpop.f32.mrb[0].mxu0
        %v9854 = vpop.f32.mrb[0].mxu0
        %v9855 = vadd.f32 %v9694, %v9854
        %v9856 = vpop.f32.mrb[0].mxu0
        %9857 = vmatprep.mubr.bf16.mxu0 %v8790
        %9858 = vmatmul.mubr.bf16.gmra.mrb[0].mxu0 %v8789
        %v9859 = vpop.f32.mrb[0].mxu0
        %v9860 = vadd.f32 %v9699, %v9859
        %v9861 = vpop.f32.mrb[0].mxu0
        %v9862 = vpop.f32.mrb[0].mxu0
        %v9863 = vadd.f32 %v9702, %v9862
        %v9864 = vpop.f32.mrb[0].mxu0
        %9865 = vmatprep.mubr.bf16.mxu0 %v8799
        %9866 = vmatmul.mubr.bf16.gmra.mrb[0].mxu0 %v8798
        %v9867 = vpop.f32.mrb[0].mxu0
        %v9868 = vadd.f32 %v9707, %v9867
        %v9869 = vpop.f32.mrb[0].mxu0
        %v9870 = vpop.f32.mrb[0].mxu0
        %v9871 = vadd.f32 %v9710, %v9870
        %v9872 = vpop.f32.mrb[0].mxu0
        %9873 = vmatprep.mubr.bf16.mxu0 %v8808
        %9874 = vmatmul.mubr.bf16.gmra.mrb[0].mxu0 %v8807
        %v9875 = vpop.f32.mrb[0].mxu0
        %v9876 = vadd.f32 %v9715, %v9875
        %v9877 = vpop.f32.mrb[0].mxu0
        %v9878 = vpop.f32.mrb[0].mxu0
        %v9879 = vadd.f32 %v9718, %v9878
        %v9880 = vpop.f32.mrb[0].mxu0
        %9881 = vmatprep.mubr.bf16.mxu0 %v8817
        %9882 = vmatmul.mubr.bf16.gmra.mrb[0].mxu0 %v8816
        %v9883 = vpop.f32.mrb[0].mxu0
        %v9884 = vadd.f32 %v9723, %v9883
        %v9885 = vpop.f32.mrb[0].mxu0
        %v9886 = vpop.f32.mrb[0].mxu0
        %v9887 = vadd.f32 %v9726, %v9886
        %v9888 = vpop.f32.mrb[0].mxu0
        %9889 = vmatprep.mubr.bf16.mxu0 %v8826
        %9890 = vmatmul.mubr.bf16.gmra.mrb[0].mxu0 %v8825
        %v9891 = vpop.f32.mrb[0].mxu0
        %v9892 = vadd.f32 %v9731, %v9891
        %v9893 = vpop.f32.mrb[0].mxu0
        %v9894 = vpop.f32.mrb[0].mxu0
        %v9895 = vadd.f32 %v9734, %v9894
        %v9896 = vpop.f32.mrb[0].mxu0
        %9897 = vmatprep.mubr.bf16.mxu0 %v8835
        %9898 = vmatmul.mubr.bf16.gmra.mrb[0].mxu0 %v8834
        %v9899 = vpop.f32.mrb[0].mxu0
        %v9900 = vadd.f32 %v9739, %v9899
        %v9901 = vpop.f32.mrb[0].mxu0
        %v9902 = vpop.f32.mrb[0].mxu0
        %v9903 = vadd.f32 %v9742, %v9902
        %v9904 = vpop.f32.mrb[0].mxu0
        %9905 = vmatprep.mubr.bf16.mxu0 %v8844
        %9906 = vmatmul.mubr.bf16.gmra.mrb[0].mxu0 %v8843
        %v9907 = vpop.f32.mrb[0].mxu0
        %v9908 = vadd.f32 %v9747, %v9907
        %v9909 = vpop.f32.mrb[0].mxu0
        %v9910 = vpop.f32.mrb[0].mxu0
        %v9911 = vadd.f32 %v9750, %v9910
        %v9912 = vpop.f32.mrb[0].mxu0
        %9913 = vmatprep.mubr.bf16.mxu0 %v8853
        %9914 = vmatmul.mubr.bf16.gmra.mrb[0].mxu0 %v8852
        %v9915 = vpop.f32.mrb[0].mxu0
        %v9916 = vadd.f32 %v9755, %v9915
        %v9917 = vpop.f32.mrb[0].mxu0
        %v9918 = vpop.f32.mrb[0].mxu0
        %v9919 = vadd.f32 %v9758, %v9918
        %v9920 = vpop.f32.mrb[0].mxu0
        %9921 = vmatprep.mubr.bf16.mxu0 %v8862
        %9922 = vmatmul.mubr.bf16.gmra.mrb[0].mxu0 %v8861
        %v9923 = vpop.f32.mrb[0].mxu0
        %v9924 = vadd.f32 %v9763, %v9923
        %v9925 = vpop.f32.mrb[0].mxu0
        %v9926 = vpop.f32.mrb[0].mxu0
        %v9927 = vadd.f32 %v9766, %v9926
        %v9928 = vpop.f32.mrb[0].mxu0
        %9929 = vmatprep.mubr.bf16.mxu0 %v8871
        %9930 = vmatmul.mubr.bf16.gmra.mrb[0].mxu0 %v8870
        %v9931 = vpop.f32.mrb[0].mxu0
        %v9932 = vadd.f32 %v9771, %v9931
        %v9933 = vpop.f32.mrb[0].mxu0
        %v9934 = vpop.f32.mrb[0].mxu0
        %v9935 = vadd.f32 %v9774, %v9934
        %v9936 = vpop.f32.mrb[0].mxu0
        %9937 = vmatprep.mubr.bf16.mxu0 %v8880
        %9938 = vmatmul.mubr.bf16.gmra.mrb[0].mxu0 %v8879
        %v9939 = vpop.f32.mrb[0].mxu0
        %v9940 = vadd.f32 %v9779, %v9939
        %v9941 = vpop.f32.mrb[0].mxu0
        %v9942 = vpop.f32.mrb[0].mxu0
        %v9943 = vadd.f32 %v9782, %v9942
        %v9944 = vpop.f32.mrb[0].mxu0
        %9945 = vmatprep.mubr.bf16.mxu0 %v8889
        %9946 = vmatmul.mubr.bf16.gmra.mrb[0].mxu0 %v8888
        %v9947 = vpop.f32.mrb[0].mxu0
        %v9948 = vadd.f32 %v9787, %v9947
        %v9949 = vpop.f32.mrb[0].mxu0
        %v9950 = vpop.f32.mrb[0].mxu0
        %v9951 = vadd.f32 %v9790, %v9950
        %v9952 = vpop.f32.mrb[0].mxu0
        %9953 = vmatprep.mubr.bf16.mxu0 %v8898
        %9954 = vmatmul.mubr.bf16.gmra.mrb[0].mxu0 %v8897
        %v9955 = vpop.f32.mrb[0].mxu0
        %v9956 = vadd.f32 %v9795, %v9955
        %v9957 = vpop.f32.mrb[0].mxu0
        %v9958 = vpop.f32.mrb[0].mxu0
        %v9959 = vadd.f32 %v9798, %v9958
        %v9960 = vpop.f32.mrb[0].mxu0
        %9961 = vmatprep.mubr.bf16.mxu0 %v8907
        %9962 = vmatmul.mubr.bf16.gmra.mrb[0].mxu0 %v8906
        %v9963 = vpop.f32.mrb[0].mxu0
        %v9964 = vadd.f32 %v9803, %v9963
        %v9965 = vpop.f32.mrb[0].mxu0
        %v9966 = vpop.f32.mrb[0].mxu0
        %v9967 = vadd.f32 %v9806, %v9966
        %v9968 = vpop.f32.mrb[0].mxu0
        %9969 = vdwg.mxu0
        %9970 = vmatprep.subr.bf16.mxu0 0
        %9971 = vmatpush1.bf16.msra.mxu0 %v9391
        %9972 = vmatprep.subr.bf16.mxu0 0
        %9973 = vmatpush1.bf16.msra.mxu0 %v9392
        %9974 = vmatprep.subr.bf16.mxu0 0
        %9975 = vmatpush1.bf16.msra.mxu0 %v9393
        %9976 = vmatprep.subr.bf16.mxu0 0
        %9977 = vmatpush1.bf16.msra.mxu0 %v9394
        %9978 = vmatprep.subr.bf16.mxu0 0
        %9979 = vmatpush1.bf16.msra.mxu0 %v9395
        %9980 = vmatprep.subr.bf16.mxu0 0
        %9981 = vmatpush1.bf16.msra.mxu0 %v9396
        %9982 = vmatprep.subr.bf16.mxu0 0
        %9983 = vmatpush1.bf16.msra.mxu0 %v9397
        %9984 = vmatprep.subr.bf16.mxu0 0
        %9985 = vmatpush1.bf16.msra.mxu0 %v9398
        %9986 = vmatprep.subr.bf16.mxu0 0
        %9987 = vmatpush1.bf16.msra.mxu0 %v9399
        %9988 = vmatprep.subr.bf16.mxu0 0
        %9989 = vmatpush1.bf16.msra.mxu0 %v9400
        %9990 = vmatprep.subr.bf16.mxu0 0
        %9991 = vmatpush1.bf16.msra.mxu0 %v9401
        %9992 = vmatprep.subr.bf16.mxu0 0
        %9993 = vmatpush1.bf16.msra.mxu0 %v9402
        %9994 = vmatprep.subr.bf16.mxu0 0
        %9995 = vmatpush1.bf16.msra.mxu0 %v9403
        %9996 = vmatprep.subr.bf16.mxu0 0
        %9997 = vmatpush1.bf16.msra.mxu0 %v9404
        %9998 = vmatprep.subr.bf16.mxu0 0
        %9999 = vmatpush1.bf16.msra.mxu0 %v9405
        %10000 = vmatprep.subr.bf16.mxu0 0
        %10001 = vmatpush1.bf16.msra.mxu0 %v9406
        %10002 = vmatprep.mubr.bf16.mxu0 %v8774
        %10003 = vmatmul.mubr.bf16.gmra.mrb[0].mxu0 %v8773
        %v10004 = vpop.f32.mrb[0].mxu0
        %v10005 = vadd.f32 %v9844, %v10004
        %v10006 = vpop.f32.mrb[0].mxu0
        %v10007 = vpop.f32.mrb[0].mxu0
        %v10008 = vadd.f32 %v9847, %v10007
        %v10009 = vpop.f32.mrb[0].mxu0
        %10010 = vmatprep.mubr.bf16.mxu0 %v8783
        %10011 = vmatmul.mubr.bf16.gmra.mrb[0].mxu0 %v8782
        %v10012 = vpop.f32.mrb[0].mxu0
        %v10013 = vadd.f32 %v9852, %v10012
        %v10014 = vpop.f32.mrb[0].mxu0
        %v10015 = vpop.f32.mrb[0].mxu0
        %v10016 = vadd.f32 %v9855, %v10015
        %v10017 = vpop.f32.mrb[0].mxu0
        %10018 = vmatprep.mubr.bf16.mxu0 %v8792
        %10019 = vmatmul.mubr.bf16.gmra.mrb[0].mxu0 %v8791
        %v10020 = vpop.f32.mrb[0].mxu0
        %v10021 = vadd.f32 %v9860, %v10020
        %v10022 = vpop.f32.mrb[0].mxu0
        %v10023 = vpop.f32.mrb[0].mxu0
        %v10024 = vadd.f32 %v9863, %v10023
        %v10025 = vpop.f32.mrb[0].mxu0
        %10026 = vmatprep.mubr.bf16.mxu0 %v8801
        %10027 = vmatmul.mubr.bf16.gmra.mrb[0].mxu0 %v8800
        %v10028 = vpop.f32.mrb[0].mxu0
        %v10029 = vadd.f32 %v9868, %v10028
        %v10030 = vpop.f32.mrb[0].mxu0
        %v10031 = vpop.f32.mrb[0].mxu0
        %v10032 = vadd.f32 %v9871, %v10031
        %v10033 = vpop.f32.mrb[0].mxu0
        %10034 = vmatprep.mubr.bf16.mxu0 %v8810
        %10035 = vmatmul.mubr.bf16.gmra.mrb[0].mxu0 %v8809
        %v10036 = vpop.f32.mrb[0].mxu0
        %v10037 = vadd.f32 %v9876, %v10036
        %v10038 = vpop.f32.mrb[0].mxu0
        %v10039 = vpop.f32.mrb[0].mxu0
        %v10040 = vadd.f32 %v9879, %v10039
        %v10041 = vpop.f32.mrb[0].mxu0
        %10042 = vmatprep.mubr.bf16.mxu0 %v8819
        %10043 = vmatmul.mubr.bf16.gmra.mrb[0].mxu0 %v8818
        %v10044 = vpop.f32.mrb[0].mxu0
        %v10045 = vadd.f32 %v9884, %v10044
        %v10046 = vpop.f32.mrb[0].mxu0
        %v10047 = vpop.f32.mrb[0].mxu0
        %v10048 = vadd.f32 %v9887, %v10047
        %v10049 = vpop.f32.mrb[0].mxu0
        %10050 = vmatprep.mubr.bf16.mxu0 %v8828
        %10051 = vmatmul.mubr.bf16.gmra.mrb[0].mxu0 %v8827
        %v10052 = vpop.f32.mrb[0].mxu0
        %v10053 = vadd.f32 %v9892, %v10052
        %v10054 = vpop.f32.mrb[0].mxu0
        %v10055 = vpop.f32.mrb[0].mxu0
        %v10056 = vadd.f32 %v9895, %v10055
        %v10057 = vpop.f32.mrb[0].mxu0
        %10058 = vmatprep.mubr.bf16.mxu0 %v8837
        %10059 = vmatmul.mubr.bf16.gmra.mrb[0].mxu0 %v8836
        %v10060 = vpop.f32.mrb[0].mxu0
        %v10061 = vadd.f32 %v9900, %v10060
        %v10062 = vpop.f32.mrb[0].mxu0
        %v10063 = vpop.f32.mrb[0].mxu0
        %v10064 = vadd.f32 %v9903, %v10063
        %v10065 = vpop.f32.mrb[0].mxu0
        %10066 = vmatprep.mubr.bf16.mxu0 %v8846
        %10067 = vmatmul.mubr.bf16.gmra.mrb[0].mxu0 %v8845
        %v10068 = vpop.f32.mrb[0].mxu0
        %v10069 = vadd.f32 %v9908, %v10068
        %v10070 = vpop.f32.mrb[0].mxu0
        %v10071 = vpop.f32.mrb[0].mxu0
        %v10072 = vadd.f32 %v9911, %v10071
        %v10073 = vpop.f32.mrb[0].mxu0
        %10074 = vmatprep.mubr.bf16.mxu0 %v8855
        %10075 = vmatmul.mubr.bf16.gmra.mrb[0].mxu0 %v8854
        %v10076 = vpop.f32.mrb[0].mxu0
        %v10077 = vadd.f32 %v9916, %v10076
        %v10078 = vpop.f32.mrb[0].mxu0
        %v10079 = vpop.f32.mrb[0].mxu0
        %v10080 = vadd.f32 %v9919, %v10079
        %v10081 = vpop.f32.mrb[0].mxu0
        %10082 = vmatprep.mubr.bf16.mxu0 %v8864
        %10083 = vmatmul.mubr.bf16.gmra.mrb[0].mxu0 %v8863
        %v10084 = vpop.f32.mrb[0].mxu0
        %v10085 = vadd.f32 %v9924, %v10084
        %v10086 = vpop.f32.mrb[0].mxu0
        %v10087 = vpop.f32.mrb[0].mxu0
        %v10088 = vadd.f32 %v9927, %v10087
        %v10089 = vpop.f32.mrb[0].mxu0
        %10090 = vmatprep.mubr.bf16.mxu0 %v8873
        %10091 = vmatmul.mubr.bf16.gmra.mrb[0].mxu0 %v8872
        %v10092 = vpop.f32.mrb[0].mxu0
        %v10093 = vadd.f32 %v9932, %v10092
        %v10094 = vpop.f32.mrb[0].mxu0
        %v10095 = vpop.f32.mrb[0].mxu0
        %v10096 = vadd.f32 %v9935, %v10095
        %v10097 = vpop.f32.mrb[0].mxu0
        %10098 = vmatprep.mubr.bf16.mxu0 %v8882
        %10099 = vmatmul.mubr.bf16.gmra.mrb[0].mxu0 %v8881
        %v10100 = vpop.f32.mrb[0].mxu0
        %v10101 = vadd.f32 %v9940, %v10100
        %v10102 = vpop.f32.mrb[0].mxu0
        %v10103 = vpop.f32.mrb[0].mxu0
        %v10104 = vadd.f32 %v9943, %v10103
        %v10105 = vpop.f32.mrb[0].mxu0
        %10106 = vmatprep.mubr.bf16.mxu0 %v8891
        %10107 = vmatmul.mubr.bf16.gmra.mrb[0].mxu0 %v8890
        %v10108 = vpop.f32.mrb[0].mxu0
        %v10109 = vadd.f32 %v9948, %v10108
        %v10110 = vpop.f32.mrb[0].mxu0
        %v10111 = vpop.f32.mrb[0].mxu0
        %v10112 = vadd.f32 %v9951, %v10111
        %v10113 = vpop.f32.mrb[0].mxu0
        %10114 = vmatprep.mubr.bf16.mxu0 %v8900
        %10115 = vmatmul.mubr.bf16.gmra.mrb[0].mxu0 %v8899
        %v10116 = vpop.f32.mrb[0].mxu0
        %v10117 = vadd.f32 %v9956, %v10116
        %v10118 = vpop.f32.mrb[0].mxu0
        %v10119 = vpop.f32.mrb[0].mxu0
        %v10120 = vadd.f32 %v9959, %v10119
        %v10121 = vpop.f32.mrb[0].mxu0
        %10122 = vmatprep.mubr.bf16.mxu0 %v8909
        %10123 = vmatmul.mubr.bf16.gmra.mrb[0].mxu0 %v8908
        %v10124 = vpop.f32.mrb[0].mxu0
        %v10125 = vadd.f32 %v9964, %v10124
        %v10126 = vpop.f32.mrb[0].mxu0
        %v10127 = vpop.f32.mrb[0].mxu0
        %v10128 = vadd.f32 %v9967, %v10127
        %v10129 = vpop.f32.mrb[0].mxu0
        %10130 = vdwg.mxu0
        %10131 = vmatprep.subr.bf16.mxu0 0
        %10132 = vmatpush1.bf16.msra.mxu0 %v9407
        %10133 = vmatprep.subr.bf16.mxu0 0
        %10134 = vmatpush1.bf16.msra.mxu0 %v9408
        %10135 = vmatprep.subr.bf16.mxu0 0
        %10136 = vmatpush1.bf16.msra.mxu0 %v9409
        %10137 = vmatprep.subr.bf16.mxu0 0
        %10138 = vmatpush1.bf16.msra.mxu0 %v9410
        %10139 = vmatprep.subr.bf16.mxu0 0
        %10140 = vmatpush1.bf16.msra.mxu0 %v9411
        %10141 = vmatprep.subr.bf16.mxu0 0
        %10142 = vmatpush1.bf16.msra.mxu0 %v9412
        %10143 = vmatprep.subr.bf16.mxu0 0
        %10144 = vmatpush1.bf16.msra.mxu0 %v9413
        %10145 = vmatprep.subr.bf16.mxu0 0
        %10146 = vmatpush1.bf16.msra.mxu0 %v9414
        %10147 = vmatprep.subr.bf16.mxu0 0
        %10148 = vmatpush1.bf16.msra.mxu0 0
        %10149 = vmatprep.subr.bf16.mxu0 0
        %10150 = vmatpush1.bf16.msra.mxu0 0
        %10151 = vmatprep.subr.bf16.mxu0 0
        %10152 = vmatpush1.bf16.msra.mxu0 0
        %10153 = vmatprep.subr.bf16.mxu0 0
        %10154 = vmatpush1.bf16.msra.mxu0 0
        %10155 = vmatprep.subr.bf16.mxu0 0
        %10156 = vmatpush1.bf16.msra.mxu0 0
        %10157 = vmatprep.subr.bf16.mxu0 0
        %10158 = vmatpush1.bf16.msra.mxu0 0
        %10159 = vmatprep.subr.bf16.mxu0 0
        %10160 = vmatpush1.bf16.msra.mxu0 0
        %10161 = vmatprep.subr.bf16.mxu0 0
        %10162 = vmatpush1.bf16.msra.mxu0 0
        %10163 = vmatprep.mubr.bf16.mxu0 0
        %10164 = vmatmul.mubr.bf16.gmra.mrb[0].mxu0 %v8775
        %v10165 = vpop.f32.mrb[0].mxu0
        %v10166 = vadd.f32 %v10005, %v10165
        %v10167 = vpop.f32.mrb[0].mxu0
        %v10168 = vpop.f32.mrb[0].mxu0
        %v10169 = vadd.f32 %v10008, %v10168
        %v10170 = vpop.f32.mrb[0].mxu0
        %10171 = vmatprep.mubr.bf16.mxu0 0
        %10172 = vmatmul.mubr.bf16.gmra.mrb[0].mxu0 %v8784
        %v10173 = vpop.f32.mrb[0].mxu0
        %v10174 = vadd.f32 %v10013, %v10173
        %v10175 = vpop.f32.mrb[0].mxu0
        %v10176 = vpop.f32.mrb[0].mxu0
        %v10177 = vadd.f32 %v10016, %v10176
        %v10178 = vpop.f32.mrb[0].mxu0
        %10179 = vmatprep.mubr.bf16.mxu0 0
        %10180 = vmatmul.mubr.bf16.gmra.mrb[0].mxu0 %v8793
        %v10181 = vpop.f32.mrb[0].mxu0
        %v10182 = vadd.f32 %v10021, %v10181
        %v10183 = vpop.f32.mrb[0].mxu0
        %v10184 = vpop.f32.mrb[0].mxu0
        %v10185 = vadd.f32 %v10024, %v10184
        %v10186 = vpop.f32.mrb[0].mxu0
        %10187 = vmatprep.mubr.bf16.mxu0 0
        %10188 = vmatmul.mubr.bf16.gmra.mrb[0].mxu0 %v8802
        %v10189 = vpop.f32.mrb[0].mxu0
        %v10190 = vadd.f32 %v10029, %v10189
        %v10191 = vpop.f32.mrb[0].mxu0
        %v10192 = vpop.f32.mrb[0].mxu0
        %v10193 = vadd.f32 %v10032, %v10192
        %v10194 = vpop.f32.mrb[0].mxu0
        %10195 = vmatprep.mubr.bf16.mxu0 0
        %10196 = vmatmul.mubr.bf16.gmra.mrb[0].mxu0 %v8811
        %v10197 = vpop.f32.mrb[0].mxu0
        %v10198 = vadd.f32 %v10037, %v10197
        %v10199 = vpop.f32.mrb[0].mxu0
        %v10200 = vpop.f32.mrb[0].mxu0
        %v10201 = vadd.f32 %v10040, %v10200
        %v10202 = vpop.f32.mrb[0].mxu0
        %10203 = vmatprep.mubr.bf16.mxu0 0
        %10204 = vmatmul.mubr.bf16.gmra.mrb[0].mxu0 %v8820
        %v10205 = vpop.f32.mrb[0].mxu0
        %v10206 = vadd.f32 %v10045, %v10205
        %v10207 = vpop.f32.mrb[0].mxu0
        %v10208 = vpop.f32.mrb[0].mxu0
        %v10209 = vadd.f32 %v10048, %v10208
        %v10210 = vpop.f32.mrb[0].mxu0
        %10211 = vmatprep.mubr.bf16.mxu0 0
        %10212 = vmatmul.mubr.bf16.gmra.mrb[0].mxu0 %v8829
        %v10213 = vpop.f32.mrb[0].mxu0
        %v10214 = vadd.f32 %v10053, %v10213
        %v10215 = vpop.f32.mrb[0].mxu0
        %v10216 = vpop.f32.mrb[0].mxu0
        %v10217 = vadd.f32 %v10056, %v10216
        %v10218 = vpop.f32.mrb[0].mxu0
        %10219 = vmatprep.mubr.bf16.mxu0 0
        %10220 = vmatmul.mubr.bf16.gmra.mrb[0].mxu0 %v8838
        %v10221 = vpop.f32.mrb[0].mxu0
        %v10222 = vadd.f32 %v10061, %v10221
        %v10223 = vpop.f32.mrb[0].mxu0
        %v10224 = vpop.f32.mrb[0].mxu0
        %v10225 = vadd.f32 %v10064, %v10224
        %v10226 = vpop.f32.mrb[0].mxu0
        %10227 = vmatprep.mubr.bf16.mxu0 0
        %10228 = vmatmul.mubr.bf16.gmra.mrb[0].mxu0 %v8847
        %v10229 = vpop.f32.mrb[0].mxu0
        %v10230 = vadd.f32 %v10069, %v10229
        %v10231 = vpop.f32.mrb[0].mxu0
        %v10232 = vpop.f32.mrb[0].mxu0
        %v10233 = vadd.f32 %v10072, %v10232
        %v10234 = vpop.f32.mrb[0].mxu0
        %10235 = vmatprep.mubr.bf16.mxu0 0
        %10236 = vmatmul.mubr.bf16.gmra.mrb[0].mxu0 %v8856
        %v10237 = vpop.f32.mrb[0].mxu0
        %v10238 = vadd.f32 %v10077, %v10237
        %v10239 = vpop.f32.mrb[0].mxu0
        %v10240 = vpop.f32.mrb[0].mxu0
        %v10241 = vadd.f32 %v10080, %v10240
        %v10242 = vpop.f32.mrb[0].mxu0
        %10243 = vmatprep.mubr.bf16.mxu0 0
        %10244 = vmatmul.mubr.bf16.gmra.mrb[0].mxu0 %v8865
        %v10245 = vpop.f32.mrb[0].mxu0
        %v10246 = vadd.f32 %v10085, %v10245
        %v10247 = vpop.f32.mrb[0].mxu0
        %v10248 = vpop.f32.mrb[0].mxu0
        %v10249 = vadd.f32 %v10088, %v10248
        %v10250 = vpop.f32.mrb[0].mxu0
        %10251 = vmatprep.mubr.bf16.mxu0 0
        %10252 = vmatmul.mubr.bf16.gmra.mrb[0].mxu0 %v8874
        %v10253 = vpop.f32.mrb[0].mxu0
        %v10254 = vadd.f32 %v10093, %v10253
        %v10255 = vpop.f32.mrb[0].mxu0
        %v10256 = vpop.f32.mrb[0].mxu0
        %v10257 = vadd.f32 %v10096, %v10256
        %v10258 = vpop.f32.mrb[0].mxu0
        %10259 = vmatprep.mubr.bf16.mxu0 0
        %10260 = vmatmul.mubr.bf16.gmra.mrb[0].mxu0 %v8883
        %v10261 = vpop.f32.mrb[0].mxu0
        %v10262 = vadd.f32 %v10101, %v10261
        %v10263 = vpop.f32.mrb[0].mxu0
        %v10264 = vpop.f32.mrb[0].mxu0
        %v10265 = vadd.f32 %v10104, %v10264
        %v10266 = vpop.f32.mrb[0].mxu0
        %10267 = vmatprep.mubr.bf16.mxu0 0
        %10268 = vmatmul.mubr.bf16.gmra.mrb[0].mxu0 %v8892
        %v10269 = vpop.f32.mrb[0].mxu0
        %v10270 = vadd.f32 %v10109, %v10269
        %v10271 = vpop.f32.mrb[0].mxu0
        %v10272 = vpop.f32.mrb[0].mxu0
        %v10273 = vadd.f32 %v10112, %v10272
        %v10274 = vpop.f32.mrb[0].mxu0
        %10275 = vmatprep.mubr.bf16.mxu0 0
        %10276 = vmatmul.mubr.bf16.gmra.mrb[0].mxu0 %v8901
        %v10277 = vpop.f32.mrb[0].mxu0
        %v10278 = vadd.f32 %v10117, %v10277
        %v10279 = vpop.f32.mrb[0].mxu0
        %v10280 = vpop.f32.mrb[0].mxu0
        %v10281 = vadd.f32 %v10120, %v10280
        %v10282 = vpop.f32.mrb[0].mxu0
        %10283 = vmatprep.mubr.bf16.mxu0 0
        %10284 = vmatmul.mubr.bf16.gmra.mrb[0].mxu0 %v8910
        %v10285 = vpop.f32.mrb[0].mxu0
        %v10286 = vadd.f32 %v10125, %v10285
        %v10287 = vpop.f32.mrb[0].mxu0
        %v10288 = vpop.f32.mrb[0].mxu0
        %v10289 = vadd.f32 %v10128, %v10288
        %v10290 = vpop.f32.mrb[0].mxu0
        %10291 = vdwg.mxu0
        %10292 = vst [vmem:[#allocation4] sm:$0xff] %v10166
        %10293 = vst [vmem:[#allocation4 + $0x8] sm:$0xff] %v10169
        %10294 = vst [vmem:[#allocation4 + $0x10] sm:$0xff] %v10174
        %10295 = vst [vmem:[#allocation4 + $0x18] sm:$0xff] %v10177
        %10296 = vst [vmem:[#allocation4 + $0x20] sm:$0xff] %v10182
        %10297 = vst [vmem:[#allocation4 + $0x28] sm:$0xff] %v10185
        %10298 = vst [vmem:[#allocation4 + $0x30] sm:$0xff] %v10190
        %10299 = vst [vmem:[#allocation4 + $0x38] sm:$0xff] %v10193
        %10300 = vst [vmem:[#allocation4 + $0x40] sm:$0xff] %v10198
        %10301 = vst [vmem:[#allocation4 + $0x48] sm:$0xff] %v10201
        %10302 = vst [vmem:[#allocation4 + $0x50] sm:$0xff] %v10206
        %10303 = vst [vmem:[#allocation4 + $0x58] sm:$0xff] %v10209
        %10304 = vst [vmem:[#allocation4 + $0x60] sm:$0xff] %v10214
        %10305 = vst [vmem:[#allocation4 + $0x68] sm:$0xff] %v10217
        %10306 = vst [vmem:[#allocation4 + $0x70] sm:$0xff] %v10222
        %10307 = vst [vmem:[#allocation4 + $0x78] sm:$0xff] %v10225
        %10308 = vst [vmem:[#allocation4 + $0x80] sm:$0xff] %v10230
        %10309 = vst [vmem:[#allocation4 + $0x88] sm:$0xff] %v10233
        %10310 = vst [vmem:[#allocation4 + $0x90] sm:$0xff] %v10238
        %10311 = vst [vmem:[#allocation4 + $0x98] sm:$0xff] %v10241
        %10312 = vst [vmem:[#allocation4 + $0xa0] sm:$0xff] %v10246
        %10313 = vst [vmem:[#allocation4 + $0xa8] sm:$0xff] %v10249
        %10314 = vst [vmem:[#allocation4 + $0xb0] sm:$0xff] %v10254
        %10315 = vst [vmem:[#allocation4 + $0xb8] sm:$0xff] %v10257
        %10316 = vst [vmem:[#allocation4 + $0xc0] sm:$0xff] %v10262
        %10317 = vst [vmem:[#allocation4 + $0xc8] sm:$0xff] %v10265
        %10318 = vst [vmem:[#allocation4 + $0xd0] sm:$0xff] %v10270
        %10319 = vst [vmem:[#allocation4 + $0xd8] sm:$0xff] %v10273
        %10320 = vst [vmem:[#allocation4 + $0xe0] sm:$0xff] %v10278
        %10321 = vst [vmem:[#allocation4 + $0xe8] sm:$0xff] %v10281
        %10322 = vst [vmem:[#allocation4 + $0xf0] sm:$0xff] %v10286
        %10323 = vst [vmem:[#allocation4 + $0xf8] sm:$0xff] %v10289
        %v10324 = vld [vmem:[%s287] sm:$0xff]
        %v10325 = vld [vmem:[%s287 + $0x8] sm:$0xff]
        %v10326 = vld [vmem:[%s287 + $0x10] sm:$0xff]
        %v10327 = vld [vmem:[%s287 + $0x18] sm:$0xff]
        %v10328 = vld [vmem:[%s287 + $0x20] sm:$0xff]
        %v10329 = vld [vmem:[%s287 + $0x28] sm:$0xff]
        %v10330 = vld [vmem:[%s287 + $0x30] sm:$0xff]
        %v10331 = vld [vmem:[%s287 + $0x38] sm:$0xff]
        %v10332 = vld [vmem:[%s287 + $0x40] sm:$0xff]
        %v10333 = vld [vmem:[%s287 + $0x48] sm:$0xff]
        %v10334 = vld [vmem:[%s287 + $0x50] sm:$0xff]
        %v10335 = vld [vmem:[%s287 + $0x58] sm:$0xff]
        %v10336 = vld [vmem:[%s287 + $0x60] sm:$0xff]
        %v10337 = vld [vmem:[%s287 + $0x68] sm:$0xff]
        %v10338 = vld [vmem:[%s287 + $0x70] sm:$0xff]
        %v10339 = vld [vmem:[%s287 + $0x78] sm:$0xff]
        %v10340 = vld [vmem:[%s287 + $0x80] sm:$0xff]
        %v10341 = vld [vmem:[%s287 + $0x88] sm:$0xff]
        %v10342 = vld [vmem:[%s287 + $0x90] sm:$0xff]
        %v10343 = vld [vmem:[%s287 + $0x98] sm:$0xff]
        %v10344 = vld [vmem:[%s287 + $0xa0] sm:$0xff]
        %v10345 = vld [vmem:[%s287 + $0xa8] sm:$0xff]
        %v10346 = vld [vmem:[%s287 + $0xb0] sm:$0xff]
        %v10347 = vld [vmem:[%s287 + $0xb8] sm:$0xff]
        %v10348 = vld [vmem:[%s287 + $0xc0] sm:$0xff]
        %v10349 = vld [vmem:[%s287 + $0xc8] sm:$0xff]
        %v10350 = vld [vmem:[%s287 + $0xd0] sm:$0xff]
        %v10351 = vld [vmem:[%s287 + $0xd8] sm:$0xff]
        %v10352 = vld [vmem:[%s287 + $0xe0] sm:$0xff]
        %v10353 = vld [vmem:[%s287 + $0xe8] sm:$0xff]
        %v10354 = vld [vmem:[%s287 + $0xf0] sm:$0xff]
        %v10355 = vld [vmem:[%s287 + $0xf8] sm:$0xff]
        %v10356 = vld [vmem:[#allocation4] sm:$0xff]
        %v10357 = vld [vmem:[#allocation4 + $0x8] sm:$0xff]
        %v10358 = vld [vmem:[#allocation4 + $0x10] sm:$0xff]
        %v10359 = vld [vmem:[#allocation4 + $0x18] sm:$0xff]
        %v10360 = vld [vmem:[#allocation4 + $0x20] sm:$0xff]
        %v10361 = vld [vmem:[#allocation4 + $0x28] sm:$0xff]
        %v10362 = vld [vmem:[#allocation4 + $0x30] sm:$0xff]
        %v10363 = vld [vmem:[#allocation4 + $0x38] sm:$0xff]
        %v10364 = vld [vmem:[#allocation4 + $0x40] sm:$0xff]
        %v10365 = vld [vmem:[#allocation4 + $0x48] sm:$0xff]
        %v10366 = vld [vmem:[#allocation4 + $0x50] sm:$0xff]
        %v10367 = vld [vmem:[#allocation4 + $0x58] sm:$0xff]
        %v10368 = vld [vmem:[#allocation4 + $0x60] sm:$0xff]
        %v10369 = vld [vmem:[#allocation4 + $0x68] sm:$0xff]
        %v10370 = vld [vmem:[#allocation4 + $0x70] sm:$0xff]
        %v10371 = vld [vmem:[#allocation4 + $0x78] sm:$0xff]
        %v10372 = vld [vmem:[#allocation4 + $0x80] sm:$0xff]
        %v10373 = vld [vmem:[#allocation4 + $0x88] sm:$0xff]
        %v10374 = vld [vmem:[#allocation4 + $0x90] sm:$0xff]
        %v10375 = vld [vmem:[#allocation4 + $0x98] sm:$0xff]
        %v10376 = vld [vmem:[#allocation4 + $0xa0] sm:$0xff]
        %v10377 = vld [vmem:[#allocation4 + $0xa8] sm:$0xff]
        %v10378 = vld [vmem:[#allocation4 + $0xb0] sm:$0xff]
        %v10379 = vld [vmem:[#allocation4 + $0xb8] sm:$0xff]
        %v10380 = vld [vmem:[#allocation4 + $0xc0] sm:$0xff]
        %v10381 = vld [vmem:[#allocation4 + $0xc8] sm:$0xff]
        %v10382 = vld [vmem:[#allocation4 + $0xd0] sm:$0xff]
        %v10383 = vld [vmem:[#allocation4 + $0xd8] sm:$0xff]
        %v10384 = vld [vmem:[#allocation4 + $0xe0] sm:$0xff]
        %v10385 = vld [vmem:[#allocation4 + $0xe8] sm:$0xff]
        %v10386 = vld [vmem:[#allocation4 + $0xf0] sm:$0xff]
        %v10387 = vld [vmem:[#allocation4 + $0xf8] sm:$0xff]
        %v10388 = vadd.f32 %v10324, %v10356
        %v10389 = vadd.f32 %v10325, %v10357
        %v10390 = vadd.f32 %v10326, %v10358
        %v10391 = vadd.f32 %v10327, %v10359
        %v10392 = vadd.f32 %v10328, %v10360
        %v10393 = vadd.f32 %v10329, %v10361
        %v10394 = vadd.f32 %v10330, %v10362
        %v10395 = vadd.f32 %v10331, %v10363
        %v10396 = vadd.f32 %v10332, %v10364
        %v10397 = vadd.f32 %v10333, %v10365
        %v10398 = vadd.f32 %v10334, %v10366
        %v10399 = vadd.f32 %v10335, %v10367
        %v10400 = vadd.f32 %v10336, %v10368
        %v10401 = vadd.f32 %v10337, %v10369
        %v10402 = vadd.f32 %v10338, %v10370
        %v10403 = vadd.f32 %v10339, %v10371
        %v10404 = vadd.f32 %v10340, %v10372
        %v10405 = vadd.f32 %v10341, %v10373
        %v10406 = vadd.f32 %v10342, %v10374
        %v10407 = vadd.f32 %v10343, %v10375
        %v10408 = vadd.f32 %v10344, %v10376
        %v10409 = vadd.f32 %v10345, %v10377
        %v10410 = vadd.f32 %v10346, %v10378
        %v10411 = vadd.f32 %v10347, %v10379
        %v10412 = vadd.f32 %v10348, %v10380
        %v10413 = vadd.f32 %v10349, %v10381
        %v10414 = vadd.f32 %v10350, %v10382
        %v10415 = vadd.f32 %v10351, %v10383
        %v10416 = vadd.f32 %v10352, %v10384
        %v10417 = vadd.f32 %v10353, %v10385
        %v10418 = vadd.f32 %v10354, %v10386
        %v10419 = vadd.f32 %v10355, %v10387
        %10420 = vst [vmem:[%s325] sm:$0xff] %v10388
        %10421 = vst [vmem:[%s325 + $0x8] sm:$0xff] %v10389
        %10422 = vst [vmem:[%s325 + $0x10] sm:$0xff] %v10390
        %10423 = vst [vmem:[%s325 + $0x18] sm:$0xff] %v10391
        %10424 = vst [vmem:[%s325 + $0x20] sm:$0xff] %v10392
        %10425 = vst [vmem:[%s325 + $0x28] sm:$0xff] %v10393
        %10426 = vst [vmem:[%s325 + $0x30] sm:$0xff] %v10394
        %10427 = vst [vmem:[%s325 + $0x38] sm:$0xff] %v10395
        %10428 = vst [vmem:[%s325 + $0x40] sm:$0xff] %v10396
        %10429 = vst [vmem:[%s325 + $0x48] sm:$0xff] %v10397
        %10430 = vst [vmem:[%s325 + $0x50] sm:$0xff] %v10398
        %10431 = vst [vmem:[%s325 + $0x58] sm:$0xff] %v10399
        %10432 = vst [vmem:[%s325 + $0x60] sm:$0xff] %v10400
        %10433 = vst [vmem:[%s325 + $0x68] sm:$0xff] %v10401
        %10434 = vst [vmem:[%s325 + $0x70] sm:$0xff] %v10402
        %10435 = vst [vmem:[%s325 + $0x78] sm:$0xff] %v10403
        %10436 = vst [vmem:[%s325 + $0x80] sm:$0xff] %v10404
        %10437 = vst [vmem:[%s325 + $0x88] sm:$0xff] %v10405
        %10438 = vst [vmem:[%s325 + $0x90] sm:$0xff] %v10406
        %10439 = vst [vmem:[%s325 + $0x98] sm:$0xff] %v10407
        %10440 = vst [vmem:[%s325 + $0xa0] sm:$0xff] %v10408
        %10441 = vst [vmem:[%s325 + $0xa8] sm:$0xff] %v10409
        %10442 = vst [vmem:[%s325 + $0xb0] sm:$0xff] %v10410
        %10443 = vst [vmem:[%s325 + $0xb8] sm:$0xff] %v10411
        %10444 = vst [vmem:[%s325 + $0xc0] sm:$0xff] %v10412
        %10445 = vst [vmem:[%s325 + $0xc8] sm:$0xff] %v10413
        %10446 = vst [vmem:[%s325 + $0xd0] sm:$0xff] %v10414
        %10447 = vst [vmem:[%s325 + $0xd8] sm:$0xff] %v10415
        %10448 = vst [vmem:[%s325 + $0xe0] sm:$0xff] %v10416
        %10449 = vst [vmem:[%s325 + $0xe8] sm:$0xff] %v10417
        %10450 = vst [vmem:[%s325 + $0xf0] sm:$0xff] %v10418
        %10451 = vst [vmem:[%s325 + $0xf8] sm:$0xff] %v10419
        %s10452 = sand.u32 %s185, 1
        %s10453 = scalar_lea.sflag [#allocation7], %s10452
        %s10454 = sand.u32 %s185, 1
        %s10455 = smul.addr %s10454, 256
        %s10456 = scalar_lea.vmem [#allocation11], %s10455
        // Predicated region
        $region61: #{basic_block_pallas_padded_nhwc.1} parent=47 // pred_check
          %p10457 = pneg %p195
        $region62: #{basic_block_pallas_padded_nhwc.1} parent=47 // pred_check_branch
          %10459 = sbr.rel (%p10457) target = $region64
        $region63: #{basic_block_pallas_padded_nhwc.1} parent=47 // pred_region
          %s10461 = ssub.s32 4096, 4096
          %10462 = vsyncadd %s10453, %s10461
          %s10463 = smul.addr %s25, 32
          %s10464 = smul.addr %s10463, 128
          %s10465 = scalar_lea.hbm %s7, %s10464
          %s10466 = sshll.u32 %s10456, 4
          %s10467 = int_to_ptr.vmem [resolvable:$true] %s10466
          %10472 = dma.vmem_to_hbm [thread:$0]  %s10467, 4096, %s10465, %s10453, 128, 128, 8
        $region64: #{basic_block_pallas_padded_nhwc.1} parent=47 // pred_fallthru
          _
      $region48: #{basic_block_pallas_padded_nhwc.1} parent=5 // pred_fallthru
        _
      %p10473 = scmp.le.s32.totalorder 2, %s20
      // Predicated region
      $region65: #{basic_block_pallas_padded_nhwc.1} parent=5 // pred_check
        %p10474 = pneg %p10473
      $region66: #{basic_block_pallas_padded_nhwc.1} parent=5 // pred_check_branch
        %10476 = sbr.rel (%p10474) target = $region68
      $region67: #{basic_block_pallas_padded_nhwc.1} parent=5 // pred_region
        %s10477 = ssub.s32 %s20, 2
        // Predicated region
        $region69: #{basic_block_pallas_padded_nhwc.1} parent=67 // pred_check
          %p10478 = pneg %p201
        $region70: #{basic_block_pallas_padded_nhwc.1} parent=67 // pred_check_branch
          %10480 = sbr.rel (%p10478) target = $region72
        $region71: #{basic_block_pallas_padded_nhwc.1} parent=67 // pred_region
          %s10481 = sand.u32 %s186, 1
          %s10482 = scalar_lea.sflag [#allocation7], %s10481
          %s10483 = sand.u32 %s186, 1
          %s10484 = smul.addr %s10483, 256
          %s10485 = scalar_lea.vmem [#allocation11], %s10484
          %10486 = dma.done %s10482, 4096
        $region72: #{basic_block_pallas_padded_nhwc.1} parent=67 // pred_fallthru
          _
      $region68: #{basic_block_pallas_padded_nhwc.1} parent=5 // pred_fallthru
        _
    $region6: #{basic_block_pallas_padded_nhwc.1} parent=1 // loop_footer
      %s24 = sadd.s32 1, %s20
    $region7: #{basic_block_pallas_padded_nhwc.1} parent=1 // loop_footer_branch
      %19 = sbr.rel target = $region3
    $region8: #{basic_block_pallas_padded_nhwc.1} parent=1 // loop_exit
      _
    %10487 = vsyncpa [#allocation6], 1
    %s10488 = scalar_lea.sflag [#allocation6], 1
    %10489 = vsyncpa %s10488, 1
    %10490 = vsyncpa [#allocation9], 1
    %10491 = vsyncpa [#allocation7], 1
    %s10492 = scalar_lea.sflag [#allocation7], 1
    %10493 = vsyncpa %s10492, 1

</llo_original>
